<compile_context>
chip_gen: v6e
topology: v6e:2x2x1
jax: 0.10.0
libtpu: 0.0.40
codegen_flags: <defaults>
</compile_context>

<pallas_src>
import functools
import numpy as np

import jax
import jax.numpy as jnp
from jax.experimental import pallas as pl
from jax.experimental.pallas import tpu as pltpu


_GELU_C = 0.7978845608028654      # sqrt(2/pi)
_ACT_DTYPE = jnp.bfloat16         # inter-kernel activation dtype


def _default_vmem_limit():
    # v5e / v6e (128 MiB physical VMEM): allow ~100 MiB so full fc1/fc2 weights
    # and 512-row activation blocks stay resident.  v7x (64 MiB) / unknown
    # chips keep the conservative 32 MiB scoped default.
    try:
        kind = jax.devices()[0].device_kind.lower()
    except Exception:
        return 32 * 1024 * 1024
    if 'v5' in kind or 'v6' in kind:
        return 100 * 1024 * 1024
    return 32 * 1024 * 1024


_VMEM_LIMIT = _default_vmem_limit()


def _compiler_params(n_grid_axes=0, semantics=None):
    if n_grid_axes == 0:
        return pltpu.CompilerParams(vmem_limit_bytes=_VMEM_LIMIT)
    if semantics is None:
        semantics = ("parallel",) * n_grid_axes
    return pltpu.CompilerParams(dimension_semantics=semantics,
                                vmem_limit_bytes=_VMEM_LIMIT)


def _block_rows(M, target=512):
    """Largest multiple-of-8 divisor of M that is <= target (or M itself)."""
    if M <= target:
        return M
    for bm in range(target - (target % 8), 7, -8):
        if M % bm == 0:
            return bm
    return M


def _hidden_tile(H, target=512):
    """Multiple-of-128 divisor of H close to target (or H itself)."""
    if H <= target:
        return H
    for th in range(target - (target % 128), 127, -128):
        if H % th == 0:
            return th
    return H


def _windows_per_step(n_windows, n_tokens, target_rows=256):
    """Smallest divisor of n_windows with wb * n_tokens >= target_rows."""
    wb = n_windows
    for cand in range(1, n_windows + 1):
        if n_windows % cand == 0:
            wb = cand
            if cand * n_tokens >= target_rows:
                break
    return wb


def _layernorm_f32(x, g, b, eps):
    mu = jnp.mean(x, axis=-1, keepdims=True)
    xc = x - mu
    var = jnp.mean(xc * xc, axis=-1, keepdims=True)
    return xc * jax.lax.rsqrt(var + eps) * g + b


# ----------------------------- Pallas kernels ------------------------------

def _patch_embed_kernel(x_ref, w_ref, b_ref, g_ref, bt_ref, o_ref, *, eps):
    # fused: patch matmul (bf16 MXU operands, f32 accumulation) + bias + LayerNorm
    x = x_ref[...].astype(jnp.bfloat16)
    y = jnp.dot(x, w_ref[...], preferred_element_type=jnp.float32)
    y = y + b_ref[...].astype(jnp.float32)
    y = _layernorm_f32(y, g_ref[...].astype(jnp.float32),
                       bt_ref[...].astype(jnp.float32), eps)
    o_ref[...] = y.astype(o_ref.dtype)


def _ln_linear_kernel(x_ref, g_ref, b_ref, w_ref, o_ref, *, eps):
    # fused: LayerNorm prologue + bias-less linear (patch merging reduction)
    x = x_ref[...].astype(jnp.float32)
    xn = _layernorm_f32(x, g_ref[...].astype(jnp.float32),
                        b_ref[...].astype(jnp.float32), eps)
    o_ref[...] = jnp.dot(xn.astype(jnp.bfloat16), w_ref[...],
                         preferred_element_type=jnp.float32).astype(o_ref.dtype)


def _mlp_kernel(x_ref, xr_ref, g_ref, b_ref, w1_ref, b1_ref, w2_ref, b2_ref,
                o_ref, xn_s, acc_s, *, eps):
    # fused: (attention residual add) -> LayerNorm -> fc1 -> GELU -> fc2 ->
    # residual add, with the hidden dimension tiled over grid axis 1
    # ("arbitrary").  The (bm, tH) hidden activation never leaves VMEM.
    j = pl.program_id(1)

    @pl.when(j == 0)
    def _():
        s = x_ref[...].astype(jnp.float32) + xr_ref[...].astype(jnp.float32)
        xn = _layernorm_f32(s, g_ref[...].astype(jnp.float32),
                            b_ref[...].astype(jnp.float32), eps)
        xn_s[...] = xn.astype(jnp.bfloat16)
        # initialize the accumulator with the residual + fc2 bias (added once)
        acc_s[...] = s + b2_ref[...].astype(jnp.float32)

    h = jnp.dot(xn_s[...], w1_ref[...],
                preferred_element_type=jnp.float32) + b1_ref[...].astype(jnp.float32)
    # TODO(synk): tanh-approx GELU in-kernel (EUP); timm nn.GELU is exact erf.
    h = 0.5 * h * (1.0 + jnp.tanh(_GELU_C * (h + 0.044715 * h * h * h)))
    acc_s[...] += jnp.dot(h.astype(jnp.bfloat16), w2_ref[...],
                          preferred_element_type=jnp.float32)

    @pl.when(j == pl.num_programs(1) - 1)
    def _():
        o_ref[...] = acc_s[...].astype(o_ref.dtype)


def _window_attn_kernel(x_ref, g_ref, b_ref, qkvw_ref, qkvb_ref,
                        pw_ref, pb_ref, bias_ref, o_ref,
                        *, num_heads, scale, eps, n_groups):
    # fused over WB windows per grid step: LayerNorm -> QKV -> multi-head
    # attention (+VMEM-resident rel-pos/shift bias, selected by pl.ds view) ->
    # output projection (folded per head).
    WB, N, C = x_ref.shape
    D = C // num_heads

    x = x_ref[...].reshape(WB * N, C).astype(jnp.float32)
    xn = _layernorm_f32(x, g_ref[...].astype(jnp.float32),
                        b_ref[...].astype(jnp.float32), eps)
    qkv = jnp.dot(xn.astype(jnp.bfloat16), qkvw_ref[...],
                  preferred_element_type=jnp.float32)
    qkv = qkv + qkvb_ref[...].astype(jnp.float32)               # (WB*N, 3C)

    # WB consecutive within-image windows handled by this step: the whole
    # (nW, heads, N, N) bias table is VMEM-resident; take a dynamic view.
    start = (pl.program_id(0) % n_groups) * WB
    bias = bias_ref[pl.ds(start, WB)].astype(jnp.float32)       # (WB, heads, N, N)

    pw = pw_ref[...]                                            # (C, C) bf16
    acc = jnp.zeros((WB * N, C), jnp.float32)
    # TODO(synk): at Swin-L head counts (up to 48) this unrolled loop should be
    # replaced with a heads-batched einsum to cut code size / vreg pressure.
    for h in range(num_heads):
        q = (qkv[:, h * D:(h + 1) * D] * scale).astype(jnp.bfloat16)
        k = qkv[:, C + h * D:C + (h + 1) * D].astype(jnp.bfloat16)
        v = qkv[:, 2 * C + h * D:2 * C + (h + 1) * D].astype(jnp.bfloat16)
        q = q.reshape(WB, N, D)
        k = k.reshape(WB, N, D)
        v = v.reshape(WB, N, D)
        attn = jnp.einsum('wnd,wmd->wnm', q, k,
                          preferred_element_type=jnp.float32) + bias[:, h]
        attn = attn - jnp.max(attn, axis=-1, keepdims=True)
        pr = jnp.exp(attn)
        pr = pr * pl.reciprocal(jnp.sum(pr, axis=-1, keepdims=True), approx=True)
        oh = jnp.einsum('wnm,wmd->wnd', pr.astype(jnp.bfloat16), v,
                        preferred_element_type=jnp.float32)     # (WB, N, D)
        # fold output projection per head: out @ Wp == sum_h out_h @ Wp[hD:(h+1)D]
        acc = acc + jnp.dot(oh.reshape(WB * N, D).astype(jnp.bfloat16),
                            pw[h * D:(h + 1) * D, :],
                            preferred_element_type=jnp.float32)
    y = acc + pb_ref[...].astype(jnp.float32)
    o_ref[...] = y.reshape(WB, N, C).astype(o_ref.dtype)


def _norm_pool_kernel(x_ref, g_ref, b_ref, o_ref, *, eps):
    # fused final LayerNorm + global average pool over tokens
    x = x_ref[...].astype(jnp.float32)                          # (B, L, C)
    y = _layernorm_f32(x, g_ref[...].astype(jnp.float32),
                       b_ref[...].astype(jnp.float32), eps)
    o_ref[...] = jnp.mean(y, axis=1).astype(o_ref.dtype)


# ----------------------------- Pallas wrappers ------------------------------

def patch_embed(x_patches, w, b, g, bt, eps=1e-5):
    """x_patches: (M, K) -> LayerNorm(x_patches @ w + b): (M, N) bf16."""
    M, K = x_patches.shape
    N = w.shape[1]
    bm = _block_rows(M)
    return pl.pallas_call(
        functools.partial(_patch_embed_kernel, eps=eps),
        out_shape=jax.ShapeDtypeStruct((M, N), _ACT_DTYPE),
        grid=(M // bm,),
        in_specs=[
            pl.BlockSpec((bm, K), lambda i: (i, 0)),
            pl.BlockSpec((K, N), lambda i: (0, 0)),
            pl.BlockSpec((1, N), lambda i: (0, 0)),
            pl.BlockSpec((1, N), lambda i: (0, 0)),
            pl.BlockSpec((1, N), lambda i: (0, 0)),
        ],
        out_specs=pl.BlockSpec((bm, N), lambda i: (i, 0)),
        compiler_params=_compiler_params(1),
    )(x_patches, w, b, g, bt)


def patch_merge(x2d, g, b, w, eps=1e-5):
    """x2d: (M, 4C) -> LN -> @ w (4C, 2C), no bias -> (M, 2C) bf16."""
    M, K = x2d.shape
    N = w.shape[1]
    bm = _block_rows(M)
    return pl.pallas_call(
        functools.partial(_ln_linear_kernel, eps=eps),
        out_shape=jax.ShapeDtypeStruct((M, N), _ACT_DTYPE),
        grid=(M // bm,),
        in_specs=[
            pl.BlockSpec((bm, K), lambda i: (i, 0)),
            pl.BlockSpec((1, K), lambda i: (0, 0)),
            pl.BlockSpec((1, K), lambda i: (0, 0)),
            pl.BlockSpec((K, N), lambda i: (0, 0)),
        ],
        out_specs=pl.BlockSpec((bm, N), lambda i: (i, 0)),
        compiler_params=_compiler_params(1),
    )(x2d, g, b, w)


def mlp_block(x2d, xr2d, p, eps=1e-5):
    """(x2d + xr2d) + fc2(gelu(fc1(LN(x2d + xr2d)))) with hidden-dim tiling."""
    M, C = x2d.shape
    Hh = p['fc1_w'].shape[1]
    bm = _block_rows(M)
    th = _hidden_tile(Hh)
    return pl.pallas_call(
        functools.partial(_mlp_kernel, eps=eps),
        out_shape=jax.ShapeDtypeStruct((M, C), _ACT_DTYPE),
        grid=(M // bm, Hh // th),
        in_specs=[
            pl.BlockSpec((bm, C), lambda i, j: (i, 0)),
            pl.BlockSpec((bm, C), lambda i, j: (i, 0)),
            pl.BlockSpec((1, C), lambda i, j: (0, 0)),
            pl.BlockSpec((1, C), lambda i, j: (0, 0)),
            pl.BlockSpec((C, th), lambda i, j: (0, j)),
            pl.BlockSpec((1, th), lambda i, j: (0, j)),
            pl.BlockSpec((th, C), lambda i, j: (j, 0)),
            pl.BlockSpec((1, C), lambda i, j: (0, 0)),
        ],
        out_specs=pl.BlockSpec((bm, C), lambda i, j: (i, 0)),
        scratch_shapes=[pltpu.VMEM((bm, C), jnp.bfloat16),
                        pltpu.VMEM((bm, C), jnp.float32)],
        compiler_params=_compiler_params(2, ("parallel", "arbitrary")),
    )(x2d, xr2d, p['norm2_g'], p['norm2_b'], p['fc1_w'], p['fc1_b'],
      p['fc2_w'], p['fc2_b'])


def window_attention(xw, p, bias, num_heads, scale, wb, eps=1e-5):
    """xw: (B_, N, C) pre-norm windows; bias: (nW, heads, N, N) -> (B_, N, C)."""
    B_, N, C = xw.shape
    nW = bias.shape[0]
    n_groups = max(nW // wb, 1)
    return pl.pallas_call(
        functools.partial(_window_attn_kernel, num_heads=num_heads,
                          scale=scale, eps=eps, n_groups=n_groups),
        out_shape=jax.ShapeDtypeStruct((B_, N, C), _ACT_DTYPE),
        grid=(B_ // wb,),
        in_specs=[
            pl.BlockSpec((wb, N, C), lambda g: (g, 0, 0)),
            pl.BlockSpec((1, C), lambda g: (0, 0)),
            pl.BlockSpec((1, C), lambda g: (0, 0)),
            pl.BlockSpec((C, 3 * C), lambda g: (0, 0)),
            pl.BlockSpec((1, 3 * C), lambda g: (0, 0)),
            pl.BlockSpec((C, C), lambda g: (0, 0)),
            pl.BlockSpec((1, C), lambda g: (0, 0)),
            # batch-independent bf16 bias table, resident (constant block idx)
            pl.BlockSpec((nW, num_heads, N, N), lambda g: (0, 0, 0, 0)),
        ],
        out_specs=pl.BlockSpec((wb, N, C), lambda g: (g, 0, 0)),
        compiler_params=_compiler_params(1),
    )(xw, p['norm1_g'], p['norm1_b'], p['qkv_w'], p['qkv_b'],
      p['proj_w'], p['proj_b'], bias)


def final_norm_pool(x, g, b, eps=1e-5):
    """x: (B, L, C) -> LN over C, mean over L -> (B, C) f32."""
    B, L, C = x.shape
    return pl.pallas_call(
        functools.partial(_norm_pool_kernel, eps=eps),
        out_shape=jax.ShapeDtypeStruct((B, C), jnp.float32),
        in_specs=[pl.BlockSpec(memory_space=pltpu.MemorySpace.VMEM)] * 3,
        out_specs=pl.BlockSpec(memory_space=pltpu.MemorySpace.VMEM),
        compiler_params=_compiler_params(0),
    )(x, g, b)


# ------------------------------ Swin helpers -------------------------------

def window_partition(x, ws):
    B, H, W, C = x.shape
    x = x.reshape(B, H // ws, ws, W // ws, ws, C)
    return x.transpose(0, 1, 3, 2, 4, 5).reshape(-1, ws * ws, C)


def window_reverse(windows, ws, H, W):
    C = windows.shape[-1]
    B = windows.shape[0] // ((H // ws) * (W // ws))
    x = windows.reshape(B, H // ws, W // ws, ws, ws, C)
    return x.transpose(0, 1, 3, 2, 4, 5).reshape(B, H, W, C)


def rel_pos_index(ws):
    coords = np.stack(np.meshgrid(np.arange(ws), np.arange(ws), indexing='ij'))
    cf = coords.reshape(2, -1)
    rel = (cf[:, :, None] - cf[:, None, :]).transpose(1, 2, 0).astype(np.int64)
    rel[:, :, 0] += ws - 1
    rel[:, :, 1] += ws - 1
    rel[:, :, 0] *= 2 * ws - 1
    return rel.sum(-1)  # (N, N)


def compute_attn_mask(H, W, ws, ss):
    if ss == 0:
        return None
    img_mask = np.zeros((1, H, W, 1), np.float32)
    cnt = 0
    for hs in (slice(0, -ws), slice(-ws, -ss), slice(-ss, None)):
        for wslc in (slice(0, -ws), slice(-ws, -ss), slice(-ss, None)):
            img_mask[:, hs, wslc, :] = cnt
            cnt += 1
    mw = img_mask.reshape(1, H // ws, ws, W // ws, ws, 1)
    mw = mw.transpose(0, 1, 3, 2, 4, 5).reshape(-1, ws * ws)
    am = mw[:, None, :] - mw[:, :, None]
    am = np.where(am != 0, -100.0, 0.0).astype(np.float32)
    return jnp.asarray(am)  # (nW, N, N)


# ------------------------------ Swin forward -------------------------------

def swin_block(x, p, num_heads, ws, shift, shift_mask, rel_idx_flat):
    """x: (B, H, W, C) bf16 -> (B, H, W, C) bf16. 1 attention + 1 MLP kernel."""
    B, H, W, C = x.shape
    N = ws * ws
    nW = (H // ws) * (W // ws)
    head_dim = C // num_heads

    # relative-position bias (+ shift mask), materialized once per block as a
    # batch-independent (nW, heads, N, N) bf16 tensor (never broadcast over
    # batch); VMEM-resident inside the attention kernel.
    rel_bias = p['rel_table'][rel_idx_flat].reshape(N, N, num_heads)
    rel_bias = jnp.transpose(rel_bias, (2, 0, 1))            # (heads, N, N)
    if shift > 0 and shift_mask is not None:
        bias = rel_bias[None, :, :, :] + shift_mask[:, None, :, :]
    else:
        bias = jnp.broadcast_to(rel_bias[None, :, :, :], (nW, num_heads, N, N))
    bias = bias.astype(jnp.bfloat16)

    # TODO(synk): the roll / window partition / reverse layout plumbing stays
    # in XLA; for shift == 0 it could be folded into the attention kernel's
    # index_map as a (1, ws, ws, C) block read.
    xs = jnp.roll(x, (-shift, -shift), axis=(1, 2)) if shift > 0 else x
    xw = window_partition(xs, ws)                            # (B*nW, N, C)
    wb = _windows_per_step(nW, N)
    aw = window_attention(xw, p, bias, num_heads, head_dim ** -0.5, wb)
    xr = window_reverse(aw, ws, H, W)
    if shift > 0:
        xr = jnp.roll(xr, (shift, shift), axis=(1, 2))

    # attention residual is folded into the MLP kernel (s = x + xr in-kernel),
    # followed by fused LN + fc1 + GELU + fc2 + residual.
    x = mlp_block(x.reshape(-1, C), xr.reshape(-1, C), p).reshape(B, H, W, C)
    return x


def swin_forward(x_nchw, params, cfg):
    B, Cin, H, W = x_nchw.shape
    pz = cfg['patch_size']
    Hp, Wp = H // pz, W // pz
    C0 = cfg['embed_dim']

    # patch embedding: Conv2d(k=4, s=4) == non-overlapping patch extract +
    # fused matmul + LayerNorm
    xp = x_nchw.reshape(B, Cin, Hp, pz, Wp, pz).transpose(0, 2, 4, 1, 3, 5)
    xp = xp.reshape(B * Hp * Wp, Cin * pz * pz)              # (C, kh, kw) order
    x = patch_embed(xp, params['patch_w'], params['patch_b'],
                    params['patch_norm_g'], params['patch_norm_b'])
    x = x.reshape(B, Hp, Wp, C0)

    res = Hp
    for si, (depth, heads) in enumerate(zip(cfg['depths'], cfg['num_heads'])):
        stage = params['stages'][si]
        if si > 0:
            # patch merging: 2x2 concat -> fused LayerNorm(4C) + Linear(4C, 2C)
            Bc, Hc, Wc, Cc = x.shape
            xm = x.reshape(Bc, Hc // 2, 2, Wc // 2, 2, Cc).transpose(0, 1, 3, 4, 2, 5)
            xm = xm.reshape(Bc * (Hc // 2) * (Wc // 2), 4 * Cc)
            xm = patch_merge(xm, stage['merge_norm_g'], stage['merge_norm_b'],
                             stage['merge_w'])
            res = Hc // 2
            x = xm.reshape(Bc, res, res, 2 * Cc)

        ws = min(cfg['window_size'], res)
        # hoisted out of the per-block loop (computed once per stage)
        rel_idx_flat = jnp.asarray(rel_pos_index(ws).reshape(-1))
        shift_size = 0 if res <= cfg['window_size'] else cfg['window_size'] // 2
        shift_mask = compute_attn_mask(res, res, ws, shift_size)

        for bi in range(depth):
            shift = 0 if bi % 2 == 0 else shift_size
            x = swin_block(x, stage['blocks'][bi], heads, ws, shift,
                           shift_mask, rel_idx_flat)

    Bc, Hc, Wc, Cc = x.shape
    # num_classes=0 -> head is Identity; fused final LayerNorm + global avg pool
    return final_norm_pool(x.reshape(Bc, Hc * Wc, Cc),
                           params['norm_g'], params['norm_b'])


# --------------------------- deterministic params --------------------------

def init_params(key, cfg):
    keys = iter(jax.random.split(key, 256))
    bf = jnp.bfloat16   # MXU-operand weights stored in bf16 (f32 accumulation)

    def nrm(shape, dtype=jnp.float32):
        return (0.02 * jax.random.normal(next(keys), shape, jnp.float32)).astype(dtype)

    def zeros(shape):
        return jnp.zeros(shape, jnp.float32)

    def ones(shape):
        return jnp.ones(shape, jnp.float32)

    C0, pz, ic = cfg['embed_dim'], cfg['patch_size'], cfg['in_chans']
    p = {
        'patch_w': nrm((ic * pz * pz, C0), bf),
        'patch_b': zeros((1, C0)),
        'patch_norm_g': ones((1, C0)),
        'patch_norm_b': zeros((1, C0)),
        'stages': [],
    }
    res = cfg['img_size'] // pz
    dim = C0
    for si, (depth, heads) in enumerate(zip(cfg['depths'], cfg['num_heads'])):
        stage = {}
        if si > 0:
            in_dim = dim
            stage['merge_norm_g'] = ones((1, 4 * in_dim))
            stage['merge_norm_b'] = zeros((1, 4 * in_dim))
            stage['merge_w'] = nrm((4 * in_dim, 2 * in_dim), bf)
            dim = 2 * in_dim
            res = res // 2
        ws = min(cfg['window_size'], res)
        hidden = int(dim * cfg['mlp_ratio'])
        stage['blocks'] = []
        for _ in range(depth):
            stage['blocks'].append({
                'norm1_g': ones((1, dim)), 'norm1_b': zeros((1, dim)),
                'qkv_w': nrm((dim, 3 * dim), bf), 'qkv_b': zeros((1, 3 * dim)),
                'proj_w': nrm((dim, dim), bf), 'proj_b': zeros((1, dim)),
                'rel_table': nrm(((2 * ws - 1) * (2 * ws - 1), heads)),
                'norm2_g': ones((1, dim)), 'norm2_b': zeros((1, dim)),
                'fc1_w': nrm((dim, hidden), bf), 'fc1_b': zeros((1, hidden)),
                'fc2_w': nrm((hidden, dim), bf), 'fc2_b': zeros((1, dim)),
            })
        p['stages'].append(stage)
    p['norm_g'] = ones((1, dim))
    p['norm_b'] = zeros((1, dim))
    return p


# ---------------------------------- main -----------------------------------

if __name__ == "__main__":
    # small config consistent with the Swin forward (full Swin-L would be
    # img=224, patch=4, window=7, embed_dim=192, depths=(2,2,18,2), heads=(6,12,24,48))
    cfg = dict(img_size=32, patch_size=4, in_chans=3, embed_dim=16,
               depths=(2, 2), num_heads=(2, 4), window_size=4, mlp_ratio=4.0)

    x = jax.random.normal(jax.random.PRNGKey(0),
                          (2, cfg['in_chans'], cfg['img_size'], cfg['img_size']),
                          jnp.float32)
    params = init_params(jax.random.PRNGKey(1), cfg)

    fwd = jax.jit(lambda xx, pp: swin_forward(xx, pp, cfg))
    out = fwd(x, params)
    out = jax.block_until_ready(out)

    num_features = cfg['embed_dim'] * 2 ** (len(cfg['depths']) - 1)
    assert out.shape == (2, num_features), out.shape
    assert bool(jnp.all(jnp.isfinite(out)))
    print("KERNEL_OK")
</pallas_src>

<mosaic_0001>
module attributes {stable_mosaic.version = 11 : i64} {
  func.func @_patch_embed_kernel(%arg0: i32, %arg1: memref<128x48xf32, #tpu.memory_space<vmem>>, %arg2: memref<48x16xbf16, #tpu.memory_space<vmem>>, %arg3: memref<1x16xf32, #tpu.memory_space<vmem>>, %arg4: memref<1x16xf32, #tpu.memory_space<vmem>>, %arg5: memref<1x16xf32, #tpu.memory_space<vmem>>, %arg6: memref<128x16xbf16, #tpu.memory_space<vmem>>) attributes {dimension_semantics = [#tpu.dimension_semantics<parallel>], iteration_bounds = array<i64: 1>, scalar_prefetch = 0 : i64, scratch_operands = 0 : i64, tpu.core_type = #tpu.core_type<tc>, window_params = [{transform_indices = @transform_0, window_bounds = array<i64: 128, 48>}, {pipeline_mode = #tpu.pipeline_mode<synchronous>, transform_indices = @transform_1, window_bounds = array<i64: 48, 16>}, {pipeline_mode = #tpu.pipeline_mode<synchronous>, transform_indices = @transform_2, window_bounds = array<i64: 1, 16>}, {pipeline_mode = #tpu.pipeline_mode<synchronous>, transform_indices = @transform_3, window_bounds = array<i64: 1, 16>}, {pipeline_mode = #tpu.pipeline_mode<synchronous>, transform_indices = @transform_4, window_bounds = array<i64: 1, 16>}, {transform_indices = @transform_5, window_bounds = array<i64: 128, 16>}]} {
    %c0 = arith.constant 0 : index
    %c0_0 = arith.constant 0 : index
    %0 = vector.load %arg1[%c0, %c0_0] : memref<128x48xf32, #tpu.memory_space<vmem>>, vector<128x48xf32>
    %1 = arith.truncf %0 : vector<128x48xf32> to vector<128x48xbf16>
    %c0_1 = arith.constant 0 : index
    %c0_2 = arith.constant 0 : index
    %2 = vector.load %arg2[%c0_1, %c0_2] : memref<48x16xbf16, #tpu.memory_space<vmem>>, vector<48x16xbf16>
    %cst = arith.constant dense<0.000000e+00> : vector<128x16xf32>
    %3 = tpu.matmul %1, %2, %cst {dimension_numbers = #tpu.dot_dimension_numbers<[1], [0], [0], [1], [0, 0, 1, 1], [], []>} : vector<128x48xbf16>, vector<48x16xbf16>, vector<128x16xf32> -> vector<128x16xf32>
    %c0_3 = arith.constant 0 : index
    %c0_4 = arith.constant 0 : index
    %4 = vector.load %arg3[%c0_3, %c0_4] : memref<1x16xf32, #tpu.memory_space<vmem>>, vector<1x16xf32>
    %5 = vector.broadcast %4 : vector<1x16xf32> to vector<128x16xf32>
    %6 = arith.addf %3, %5 : vector<128x16xf32>
    %c0_5 = arith.constant 0 : index
    %c0_6 = arith.constant 0 : index
    %7 = vector.load %arg4[%c0_5, %c0_6] : memref<1x16xf32, #tpu.memory_space<vmem>>, vector<1x16xf32>
    %c0_7 = arith.constant 0 : index
    %c0_8 = arith.constant 0 : index
    %8 = vector.load %arg5[%c0_7, %c0_8] : memref<1x16xf32, #tpu.memory_space<vmem>>, vector<1x16xf32>
    %cst_9 = arith.constant dense<0.000000e+00> : vector<128xf32>
    %9 = vector.multi_reduction <add>, %6, %cst_9 [1] : vector<128x16xf32> to vector<128xf32>
    %10 = vector.shape_cast %9 : vector<128xf32> to vector<128x1xf32>
    %cst_10 = arith.constant 1.600000e+01 : f32
    %11 = vector.broadcast %cst_10 : f32 to vector<128x1xf32>
    %12 = arith.divf %10, %11 : vector<128x1xf32>
    %13 = vector.broadcast %12 : vector<128x1xf32> to vector<128x16xf32>
    %14 = arith.subf %6, %13 : vector<128x16xf32>
    %15 = arith.mulf %14, %14 : vector<128x16xf32>
    %cst_11 = arith.constant dense<0.000000e+00> : vector<128xf32>
    %16 = vector.multi_reduction <add>, %15, %cst_11 [1] : vector<128x16xf32> to vector<128xf32>
    %17 = vector.shape_cast %16 : vector<128xf32> to vector<128x1xf32>
    %cst_12 = arith.constant 1.600000e+01 : f32
    %18 = vector.broadcast %cst_12 : f32 to vector<128x1xf32>
    %19 = arith.divf %17, %18 : vector<128x1xf32>
    %cst_13 = arith.constant 9.99999974E-6 : f32
    %20 = vector.broadcast %cst_13 : f32 to vector<128x1xf32>
    %21 = arith.addf %19, %20 : vector<128x1xf32>
    %22 = math.rsqrt %21 : vector<128x1xf32>
    %23 = vector.broadcast %22 : vector<128x1xf32> to vector<128x16xf32>
    %24 = arith.mulf %14, %23 : vector<128x16xf32>
    %25 = vector.broadcast %7 : vector<1x16xf32> to vector<128x16xf32>
    %26 = arith.mulf %24, %25 : vector<128x16xf32>
    %27 = vector.broadcast %8 : vector<1x16xf32> to vector<128x16xf32>
    %28 = arith.addf %26, %27 : vector<128x16xf32>
    %29 = arith.truncf %28 : vector<128x16xf32> to vector<128x16xbf16>
    %c0_14 = arith.constant 0 : index
    %c0_15 = arith.constant 0 : index
    %30 = vector.load %arg6[%c0_14, %c0_15] : memref<128x16xbf16, #tpu.memory_space<vmem>>, vector<128x16xbf16>
    tpu.vector_store %arg6[%c0_14, %c0_15], %29 {strides = array<i32>} : memref<128x16xbf16, #tpu.memory_space<vmem>>, vector<128x16xbf16>,
    return
  }
  func.func @transform_0(%arg0: i32) -> (i32, i32) {
    %c0_i32 = arith.constant 0 : i32
    %c0_i32_0 = arith.constant 0 : i32
    return %arg0, %c0_i32 : i32, i32
  }
  func.func @transform_1(%arg0: i32) -> (i32, i32) {
    %c0_i32 = arith.constant 0 : i32
    %c0_i32_0 = arith.constant 0 : i32
    %c0_i32_1 = arith.constant 0 : i32
    return %c0_i32, %c0_i32_0 : i32, i32
  }
  func.func @transform_2(%arg0: i32) -> (i32, i32) {
    %c0_i32 = arith.constant 0 : i32
    %c0_i32_0 = arith.constant 0 : i32
    %c0_i32_1 = arith.constant 0 : i32
    return %c0_i32, %c0_i32_0 : i32, i32
  }
  func.func @transform_3(%arg0: i32) -> (i32, i32) {
    %c0_i32 = arith.constant 0 : i32
    %c0_i32_0 = arith.constant 0 : i32
    %c0_i32_1 = arith.constant 0 : i32
    return %c0_i32, %c0_i32_0 : i32, i32
  }
  func.func @transform_4(%arg0: i32) -> (i32, i32) {
    %c0_i32 = arith.constant 0 : i32
    %c0_i32_0 = arith.constant 0 : i32
    %c0_i32_1 = arith.constant 0 : i32
    return %c0_i32, %c0_i32_0 : i32, i32
  }
  func.func @transform_5(%arg0: i32) -> (i32, i32) {
    %c0_i32 = arith.constant 0 : i32
    %c0_i32_0 = arith.constant 0 : i32
    return %arg0, %c0_i32 : i32, i32
  }
}

module attributes {stable_mosaic.version = 11 : i64} {
  func.func @_window_attn_kernel(%arg0: i32, %arg1: memref<4x16x16xbf16, #tpu.memory_space<vmem>>, %arg2: memref<1x16xf32, #tpu.memory_space<vmem>>, %arg3: memref<1x16xf32, #tpu.memory_space<vmem>>, %arg4: memref<16x48xbf16, #tpu.memory_space<vmem>>, %arg5: memref<1x48xf32, #tpu.memory_space<vmem>>, %arg6: memref<16x16xbf16, #tpu.memory_space<vmem>>, %arg7: memref<1x16xf32, #tpu.memory_space<vmem>>, %arg8: memref<4x2x16x16xbf16, #tpu.memory_space<vmem>>, %arg9: memref<4x16x16xbf16, #tpu.memory_space<vmem>>) attributes {dimension_semantics = [#tpu.dimension_semantics<parallel>], iteration_bounds = array<i64: 2>, scalar_prefetch = 0 : i64, scratch_operands = 0 : i64, tpu.core_type = #tpu.core_type<tc>, window_params = [{transform_indices = @transform_0, window_bounds = array<i64: 4, 16, 16>}, {pipeline_mode = #tpu.pipeline_mode<synchronous>, transform_indices = @transform_1, window_bounds = array<i64: 1, 16>}, {pipeline_mode = #tpu.pipeline_mode<synchronous>, transform_indices = @transform_2, window_bounds = array<i64: 1, 16>}, {pipeline_mode = #tpu.pipeline_mode<synchronous>, transform_indices = @transform_3, window_bounds = array<i64: 16, 48>}, {pipeline_mode = #tpu.pipeline_mode<synchronous>, transform_indices = @transform_4, window_bounds = array<i64: 1, 48>}, {pipeline_mode = #tpu.pipeline_mode<synchronous>, transform_indices = @transform_5, window_bounds = array<i64: 16, 16>}, {pipeline_mode = #tpu.pipeline_mode<synchronous>, transform_indices = @transform_6, window_bounds = array<i64: 1, 16>}, {pipeline_mode = #tpu.pipeline_mode<synchronous>, transform_indices = @transform_7, window_bounds = array<i64: 4, 2, 16, 16>}, {transform_indices = @transform_8, window_bounds = array<i64: 4, 16, 16>}]} {
    %c0 = arith.constant 0 : index
    %c0_0 = arith.constant 0 : index
    %c0_1 = arith.constant 0 : index
    %0 = vector.load %arg1[%c0, %c0_0, %c0_1] : memref<4x16x16xbf16, #tpu.memory_space<vmem>>, vector<4x16x16xbf16>
    %1 = vector.shape_cast %0 : vector<4x16x16xbf16> to vector<64x16xbf16>
    %2 = arith.extf %1 : vector<64x16xbf16> to vector<64x16xf32>
    %c0_2 = arith.constant 0 : index
    %c0_3 = arith.constant 0 : index
    %3 = vector.load %arg2[%c0_2, %c0_3] : memref<1x16xf32, #tpu.memory_space<vmem>>, vector<1x16xf32>
    %c0_4 = arith.constant 0 : index
    %c0_5 = arith.constant 0 : index
    %4 = vector.load %arg3[%c0_4, %c0_5] : memref<1x16xf32, #tpu.memory_space<vmem>>, vector<1x16xf32>
    %cst = arith.constant dense<0.000000e+00> : vector<64xf32>
    %5 = vector.multi_reduction <add>, %2, %cst [1] : vector<64x16xf32> to vector<64xf32>
    %6 = vector.shape_cast %5 : vector<64xf32> to vector<64x1xf32>
    %cst_6 = arith.constant 1.600000e+01 : f32
    %7 = vector.broadcast %cst_6 : f32 to vector<64x1xf32>
    %8 = arith.divf %6, %7 : vector<64x1xf32>
    %9 = vector.broadcast %8 : vector<64x1xf32> to vector<64x16xf32>
    %10 = arith.subf %2, %9 : vector<64x16xf32>
    %11 = arith.mulf %10, %10 : vector<64x16xf32>
    %cst_7 = arith.constant dense<0.000000e+00> : vector<64xf32>
    %12 = vector.multi_reduction <add>, %11, %cst_7 [1] : vector<64x16xf32> to vector<64xf32>
    %13 = vector.shape_cast %12 : vector<64xf32> to vector<64x1xf32>
    %cst_8 = arith.constant 1.600000e+01 : f32
    %14 = vector.broadcast %cst_8 : f32 to vector<64x1xf32>
    %15 = arith.divf %13, %14 : vector<64x1xf32>
    %cst_9 = arith.constant 9.99999974E-6 : f32
    %16 = vector.broadcast %cst_9 : f32 to vector<64x1xf32>
    %17 = arith.addf %15, %16 : vector<64x1xf32>
    %18 = math.rsqrt %17 : vector<64x1xf32>
    %19 = vector.broadcast %18 : vector<64x1xf32> to vector<64x16xf32>
    %20 = arith.mulf %10, %19 : vector<64x16xf32>
    %21 = vector.broadcast %3 : vector<1x16xf32> to vector<64x16xf32>
    %22 = arith.mulf %20, %21 : vector<64x16xf32>
    %23 = vector.broadcast %4 : vector<1x16xf32> to vector<64x16xf32>
    %24 = arith.addf %22, %23 : vector<64x16xf32>
    %25 = arith.truncf %24 : vector<64x16xf32> to vector<64x16xbf16>
    %c0_10 = arith.constant 0 : index
    %c0_11 = arith.constant 0 : index
    %26 = vector.load %arg4[%c0_10, %c0_11] : memref<16x48xbf16, #tpu.memory_space<vmem>>, vector<16x48xbf16>
    %cst_12 = arith.constant dense<0.000000e+00> : vector<64x48xf32>
    %27 = tpu.matmul %25, %26, %cst_12 {dimension_numbers = #tpu.dot_dimension_numbers<[1], [0], [0], [1], [0, 0, 1, 1], [], []>} : vector<64x16xbf16>, vector<16x48xbf16>, vector<64x48xf32> -> vector<64x48xf32>
    %c0_13 = arith.constant 0 : index
    %c0_14 = arith.constant 0 : index
    %28 = vector.load %arg5[%c0_13, %c0_14] : memref<1x48xf32, #tpu.memory_space<vmem>>, vector<1x48xf32>
    %29 = vector.broadcast %28 : vector<1x48xf32> to vector<64x48xf32>
    %30 = arith.addf %27, %29 : vector<64x48xf32>
    %c1_i32 = arith.constant 1 : i32
    %c0_i32 = arith.constant 0 : i32
    %31 = arith.cmpi eq, %c1_i32, %c0_i32 : i32
    %c1_i32_15 = arith.constant 1 : i32
    %32 = arith.select %31, %c1_i32_15, %c1_i32 : i32
    %33 = arith.remsi %arg0, %32 : i32
    %c0_i32_16 = arith.constant 0 : i32
    %34 = arith.cmpi ne, %33, %c0_i32_16 : i32
    %c0_i32_17 = arith.constant 0 : i32
    %35 = arith.cmpi slt, %33, %c0_i32_17 : i32
    %c0_i32_18 = arith.constant 0 : i32
    %36 = arith.cmpi slt, %32, %c0_i32_18 : i32
    %37 = arith.xori %35, %36 : i1
    %38 = arith.andi %37, %34 : i1
    %39 = arith.addi %33, %32 : i32
    %40 = arith.select %38, %39, %33 : i32
    %c4_i32 = arith.constant 4 : i32
    %41 = arith.muli %40, %c4_i32 : i32
    %42 = arith.index_cast %41 : i32 to index
    %c0_19 = arith.constant 0 : index
    %c0_20 = arith.constant 0 : index
    %c0_21 = arith.constant 0 : index
    %43 = vector.load %arg8[%42, %c0_19, %c0_20, %c0_21] : memref<4x2x16x16xbf16, #tpu.memory_space<vmem>>, vector<4x2x16x16xbf16>
    %44 = arith.extf %43 : vector<4x2x16x16xbf16> to vector<4x2x16x16xf32>
    %c0_22 = arith.constant 0 : index
    %c0_23 = arith.constant 0 : index
    %45 = vector.load %arg6[%c0_22, %c0_23] : memref<16x16xbf16, #tpu.memory_space<vmem>>, vector<16x16xbf16>
    %cst_24 = arith.constant 0.000000e+00 : f32
    %46 = vector.broadcast %cst_24 : f32 to vector<64x16xf32>
    %47 = vector.extract_strided_slice %30 {offsets = [0, 0], sizes = [64, 8], strides = [1, 1]} : vector<64x48xf32> to vector<64x8xf32>
    %cst_25 = arith.constant 0.353553385 : f32
    %48 = vector.broadcast %cst_25 : f32 to vector<64x8xf32>
    %49 = arith.mulf %47, %48 : vector<64x8xf32>
    %50 = arith.truncf %49 : vector<64x8xf32> to vector<64x8xbf16>
    %51 = vector.extract_strided_slice %30 {offsets = [0, 16], sizes = [64, 8], strides = [1, 1]} : vector<64x48xf32> to vector<64x8xf32>
    %52 = arith.truncf %51 : vector<64x8xf32> to vector<64x8xbf16>
    %53 = vector.extract_strided_slice %30 {offsets = [0, 32], sizes = [64, 8], strides = [1, 1]} : vector<64x48xf32> to vector<64x8xf32>
    %54 = arith.truncf %53 : vector<64x8xf32> to vector<64x8xbf16>
    %55 = vector.shape_cast %50 : vector<64x8xbf16> to vector<4x16x8xbf16>
    %56 = vector.shape_cast %52 : vector<64x8xbf16> to vector<4x16x8xbf16>
    %57 = vector.shape_cast %54 : vector<64x8xbf16> to vector<4x16x8xbf16>
    "tpu.trace_start"() <{level = 10 : i32, message = "wnd,wmd->wnm"}> : () -> ()
    %cst_26 = arith.constant dense<0.000000e+00> : vector<4x16x16xf32>
    %58 = tpu.matmul %55, %56, %cst_26 {dimension_numbers = #tpu.dot_dimension_numbers<[2], [2], [1], [1], [0, 0, 0, 1, 1, 1], [0], [0]>} : vector<4x16x8xbf16>, vector<4x16x8xbf16>, vector<4x16x16xf32> -> vector<4x16x16xf32>
    "tpu.trace_stop"() : () -> ()
    %59 = vector.extract_strided_slice %44 {offsets = [0, 0, 0, 0], sizes = [4, 1, 16, 16], strides = [1, 1, 1, 1]} : vector<4x2x16x16xf32> to vector<4x1x16x16xf32>
    %60 = vector.shape_cast %59 : vector<4x1x16x16xf32> to vector<4x16x16xf32>
    %61 = arith.addf %58, %60 : vector<4x16x16xf32>
    %cst_27 = arith.constant dense<0xFF800000> : vector<4x16xf32>
    %62 = vector.multi_reduction <maximumf>, %61, %cst_27 [2] : vector<4x16x16xf32> to vector<4x16xf32>
    %63 = vector.shape_cast %62 : vector<4x16xf32> to vector<4x16x1xf32>
    %64 = vector.broadcast %63 : vector<4x16x1xf32> to vector<4x16x16xf32>
    %65 = arith.subf %61, %64 : vector<4x16x16xf32>
    %66 = math.exp %65 : vector<4x16x16xf32>
    %cst_28 = arith.constant dense<0.000000e+00> : vector<4x16xf32>
    %67 = vector.multi_reduction <add>, %66, %cst_28 [2] : vector<4x16x16xf32> to vector<4x16xf32>
    %68 = vector.shape_cast %67 : vector<4x16xf32> to vector<4x16x1xf32>
    %69 = tpu.reciprocal %68 {approx = true} : vector<4x16x1xf32> -> vector<4x16x1xf32>
    %70 = vector.broadcast %69 : vector<4x16x1xf32> to vector<4x16x16xf32>
    %71 = arith.mulf %66, %70 : vector<4x16x16xf32>
    %72 = arith.truncf %71 : vector<4x16x16xf32> to vector<4x16x16xbf16>
    "tpu.trace_start"() <{level = 10 : i32, message = "wnm,wmd->wnd"}> : () -> ()
    %cst_29 = arith.constant dense<0.000000e+00> : vector<4x16x8xf32>
    %73 = tpu.matmul %72, %57, %cst_29 {dimension_numbers = #tpu.dot_dimension_numbers<[2], [1], [1], [2], [0, 0, 0, 1, 1, 2], [0], [0]>} : vector<4x16x16xbf16>, vector<4x16x8xbf16>, vector<4x16x8xf32> -> vector<4x16x8xf32>
    "tpu.trace_stop"() : () -> ()
    %74 = vector.shape_cast %73 : vector<4x16x8xf32> to vector<64x8xf32>
    %75 = arith.truncf %74 : vector<64x8xf32> to vector<64x8xbf16>
    %76 = vector.extract_strided_slice %45 {offsets = [0, 0], sizes = [8, 16], strides = [1, 1]} : vector<16x16xbf16> to vector<8x16xbf16>
    %cst_30 = arith.constant dense<0.000000e+00> : vector<64x16xf32>
    %77 = tpu.matmul %75, %76, %cst_30 {dimension_numbers = #tpu.dot_dimension_numbers<[1], [0], [0], [1], [0, 0, 1, 1], [], []>} : vector<64x8xbf16>, vector<8x16xbf16>, vector<64x16xf32> -> vector<64x16xf32>
    %78 = arith.addf %46, %77 : vector<64x16xf32>
    %79 = vector.extract_strided_slice %30 {offsets = [0, 8], sizes = [64, 8], strides = [1, 1]} : vector<64x48xf32> to vector<64x8xf32>
    %cst_31 = arith.constant 0.353553385 : f32
    %80 = vector.broadcast %cst_31 : f32 to vector<64x8xf32>
    %81 = arith.mulf %79, %80 : vector<64x8xf32>
    %82 = arith.truncf %81 : vector<64x8xf32> to vector<64x8xbf16>
    %83 = vector.extract_strided_slice %30 {offsets = [0, 24], sizes = [64, 8], strides = [1, 1]} : vector<64x48xf32> to vector<64x8xf32>
    %84 = arith.truncf %83 : vector<64x8xf32> to vector<64x8xbf16>
    %85 = vector.extract_strided_slice %30 {offsets = [0, 40], sizes = [64, 8], strides = [1, 1]} : vector<64x48xf32> to vector<64x8xf32>
    %86 = arith.truncf %85 : vector<64x8xf32> to vector<64x8xbf16>
    %87 = vector.shape_cast %82 : vector<64x8xbf16> to vector<4x16x8xbf16>
    %88 = vector.shape_cast %84 : vector<64x8xbf16> to vector<4x16x8xbf16>
    %89 = vector.shape_cast %86 : vector<64x8xbf16> to vector<4x16x8xbf16>
    "tpu.trace_start"() <{level = 10 : i32, message = "wnd,wmd->wnm"}> : () -> ()
    %cst_32 = arith.constant dense<0.000000e+00> : vector<4x16x16xf32>
    %90 = tpu.matmul %87, %88, %cst_32 {dimension_numbers = #tpu.dot_dimension_numbers<[2], [2], [1], [1], [0, 0, 0, 1, 1, 1], [0], [0]>} : vector<4x16x8xbf16>, vector<4x16x8xbf16>, vector<4x16x16xf32> -> vector<4x16x16xf32>
    "tpu.trace_stop"() : () -> ()
    %91 = vector.extract_strided_slice %44 {offsets = [0, 1, 0, 0], sizes = [4, 1, 16, 16], strides = [1, 1, 1, 1]} : vector<4x2x16x16xf32> to vector<4x1x16x16xf32>
    %92 = vector.shape_cast %91 : vector<4x1x16x16xf32> to vector<4x16x16xf32>
    %93 = arith.addf %90, %92 : vector<4x16x16xf32>
    %cst_33 = arith.constant dense<0xFF800000> : vector<4x16xf32>
    %94 = vector.multi_reduction <maximumf>, %93, %cst_33 [2] : vector<4x16x16xf32> to vector<4x16xf32>
    %95 = vector.shape_cast %94 : vector<4x16xf32> to vector<4x16x1xf32>
    %96 = vector.broadcast %95 : vector<4x16x1xf32> to vector<4x16x16xf32>
    %97 = arith.subf %93, %96 : vector<4x16x16xf32>
    %98 = math.exp %97 : vector<4x16x16xf32>
    %cst_34 = arith.constant dense<0.000000e+00> : vector<4x16xf32>
    %99 = vector.multi_reduction <add>, %98, %cst_34 [2] : vector<4x16x16xf32> to vector<4x16xf32>
    %100 = vector.shape_cast %99 : vector<4x16xf32> to vector<4x16x1xf32>
    %101 = tpu.reciprocal %100 {approx = true} : vector<4x16x1xf32> -> vector<4x16x1xf32>
    %102 = vector.broadcast %101 : vector<4x16x1xf32> to vector<4x16x16xf32>
    %103 = arith.mulf %98, %102 : vector<4x16x16xf32>
    %104 = arith.truncf %103 : vector<4x16x16xf32> to vector<4x16x16xbf16>
    "tpu.trace_start"() <{level = 10 : i32, message = "wnm,wmd->wnd"}> : () -> ()
    %cst_35 = arith.constant dense<0.000000e+00> : vector<4x16x8xf32>
    %105 = tpu.matmul %104, %89, %cst_35 {dimension_numbers = #tpu.dot_dimension_numbers<[2], [1], [1], [2], [0, 0, 0, 1, 1, 2], [0], [0]>} : vector<4x16x16xbf16>, vector<4x16x8xbf16>, vector<4x16x8xf32> -> vector<4x16x8xf32>
    "tpu.trace_stop"() : () -> ()
    %106 = vector.shape_cast %105 : vector<4x16x8xf32> to vector<64x8xf32>
    %107 = arith.truncf %106 : vector<64x8xf32> to vector<64x8xbf16>
    %108 = vector.extract_strided_slice %45 {offsets = [8, 0], sizes = [8, 16], strides = [1, 1]} : vector<16x16xbf16> to vector<8x16xbf16>
    %cst_36 = arith.constant dense<0.000000e+00> : vector<64x16xf32>
    %109 = tpu.matmul %107, %108, %cst_36 {dimension_numbers = #tpu.dot_dimension_numbers<[1], [0], [0], [1], [0, 0, 1, 1], [], []>} : vector<64x8xbf16>, vector<8x16xbf16>, vector<64x16xf32> -> vector<64x16xf32>
    %110 = arith.addf %78, %109 : vector<64x16xf32>
    %c0_37 = arith.constant 0 : index
    %c0_38 = arith.constant 0 : index
    %111 = vector.load %arg7[%c0_37, %c0_38] : memref<1x16xf32, #tpu.memory_space<vmem>>, vector<1x16xf32>
    %112 = vector.broadcast %111 : vector<1x16xf32> to vector<64x16xf32>
    %113 = arith.addf %110, %112 : vector<64x16xf32>
    %114 = vector.shape_cast %113 : vector<64x16xf32> to vector<4x16x16xf32>
    %115 = arith.truncf %114 : vector<4x16x16xf32> to vector<4x16x16xbf16>
    %c0_39 = arith.constant 0 : index
    %c0_40 = arith.constant 0 : index
    %c0_41 = arith.constant 0 : index
    %116 = vector.load %arg9[%c0_39, %c0_40, %c0_41] : memref<4x16x16xbf16, #tpu.memory_space<vmem>>, vector<4x16x16xbf16>
    tpu.vector_store %arg9[%c0_39, %c0_40, %c0_41], %115 {strides = array<i32>} : memref<4x16x16xbf16, #tpu.memory_space<vmem>>, vector<4x16x16xbf16>,
    return
  }
  func.func @transform_0(%arg0: i32) -> (i32, i32, i32) {
    %c0_i32 = arith.constant 0 : i32
    %c0_i32_0 = arith.constant 0 : i32
    %c0_i32_1 = arith.constant 0 : i32
    return %arg0, %c0_i32, %c0_i32_0 : i32, i32, i32
  }
  func.func @transform_1(%arg0: i32) -> (i32, i32) {
    %c0_i32 = arith.constant 0 : i32
    %c0_i32_0 = arith.constant 0 : i32
    %c0_i32_1 = arith.constant 0 : i32
    return %c0_i32, %c0_i32_0 : i32, i32
  }
  func.func @transform_2(%arg0: i32) -> (i32, i32) {
    %c0_i32 = arith.constant 0 : i32
    %c0_i32_0 = arith.constant 0 : i32
    %c0_i32_1 = arith.constant 0 : i32
    return %c0_i32, %c0_i32_0 : i32, i32
  }
  func.func @transform_3(%arg0: i32) -> (i32, i32) {
    %c0_i32 = arith.constant 0 : i32
    %c0_i32_0 = arith.constant 0 : i32
    %c0_i32_1 = arith.constant 0 : i32
    return %c0_i32, %c0_i32_0 : i32, i32
  }
  func.func @transform_4(%arg0: i32) -> (i32, i32) {
    %c0_i32 = arith.constant 0 : i32
    %c0_i32_0 = arith.constant 0 : i32
    %c0_i32_1 = arith.constant 0 : i32
    return %c0_i32, %c0_i32_0 : i32, i32
  }
  func.func @transform_5(%arg0: i32) -> (i32, i32) {
    %c0_i32 = arith.constant 0 : i32
    %c0_i32_0 = arith.constant 0 : i32
    %c0_i32_1 = arith.constant 0 : i32
    return %c0_i32, %c0_i32_0 : i32, i32
  }
  func.func @transform_6(%arg0: i32) -> (i32, i32) {
    %c0_i32 = arith.constant 0 : i32
    %c0_i32_0 = arith.constant 0 : i32
    %c0_i32_1 = arith.constant 0 : i32
    return %c0_i32, %c0_i32_0 : i32, i32
  }
  func.func @transform_7(%arg0: i32) -> (i32, i32, i32, i32) {
    %c0_i32 = arith.constant 0 : i32
    %c0_i32_0 = arith.constant 0 : i32
    %c0_i32_1 = arith.constant 0 : i32
    %c0_i32_2 = arith.constant 0 : i32
    %c0_i32_3 = arith.constant 0 : i32
    return %c0_i32, %c0_i32_0, %c0_i32_1, %c0_i32_2 : i32, i32, i32, i32
  }
  func.func @transform_8(%arg0: i32) -> (i32, i32, i32) {
    %c0_i32 = arith.constant 0 : i32
    %c0_i32_0 = arith.constant 0 : i32
    %c0_i32_1 = arith.constant 0 : i32
    return %arg0, %c0_i32, %c0_i32_0 : i32, i32, i32
  }
}

module attributes {stable_mosaic.version = 11 : i64} {
  func.func @_mlp_kernel(%arg0: i32, %arg1: i32, %arg2: memref<128x16xbf16, #tpu.memory_space<vmem>>, %arg3: memref<128x16xbf16, #tpu.memory_space<vmem>>, %arg4: memref<1x16xf32, #tpu.memory_space<vmem>>, %arg5: memref<1x16xf32, #tpu.memory_space<vmem>>, %arg6: memref<16x64xbf16, #tpu.memory_space<vmem>>, %arg7: memref<1x64xf32, #tpu.memory_space<vmem>>, %arg8: memref<64x16xbf16, #tpu.memory_space<vmem>>, %arg9: memref<1x16xf32, #tpu.memory_space<vmem>>, %arg10: memref<128x16xbf16, #tpu.memory_space<vmem>>, %arg11: memref<128x16xbf16, #tpu.memory_space<vmem>>, %arg12: memref<128x16xf32, #tpu.memory_space<vmem>>) attributes {dimension_semantics = [#tpu.dimension_semantics<parallel>, #tpu.dimension_semantics<arbitrary>], iteration_bounds = array<i64: 1, 1>, scalar_prefetch = 0 : i64, scratch_operands = 2 : i64, tpu.core_type = #tpu.core_type<tc>, window_params = [{transform_indices = @transform_0, window_bounds = array<i64: 128, 16>}, {transform_indices = @transform_1, window_bounds = array<i64: 128, 16>}, {pipeline_mode = #tpu.pipeline_mode<synchronous>, transform_indices = @transform_2, window_bounds = array<i64: 1, 16>}, {pipeline_mode = #tpu.pipeline_mode<synchronous>, transform_indices = @transform_3, window_bounds = array<i64: 1, 16>}, {transform_indices = @transform_4, window_bounds = array<i64: 16, 64>}, {transform_indices = @transform_5, window_bounds = array<i64: 1, 64>}, {transform_indices = @transform_6, window_bounds = array<i64: 64, 16>}, {pipeline_mode = #tpu.pipeline_mode<synchronous>, transform_indices = @transform_7, window_bounds = array<i64: 1, 16>}, {transform_indices = @transform_8, window_bounds = array<i64: 128, 16>}]} {
    %c0_i32 = arith.constant 0 : i32
    %0 = arith.cmpi eq, %arg1, %c0_i32 : i32
    %1 = arith.extui %0 : i1 to i32
    %c0_i32_0 = arith.constant 0 : i32
    %2 = arith.cmpi ne, %1, %c0_i32_0 : i32
    scf.if %2 {
      %c0_19 = arith.constant 0 : index
      %c0_20 = arith.constant 0 : index
      %31 = vector.load %arg2[%c0_19, %c0_20] : memref<128x16xbf16, #tpu.memory_space<vmem>>, vector<128x16xbf16>
      %32 = arith.extf %31 : vector<128x16xbf16> to vector<128x16xf32>
      %c0_21 = arith.constant 0 : index
      %c0_22 = arith.constant 0 : index
      %33 = vector.load %arg3[%c0_21, %c0_22] : memref<128x16xbf16, #tpu.memory_space<vmem>>, vector<128x16xbf16>
      %34 = arith.extf %33 : vector<128x16xbf16> to vector<128x16xf32>
      %35 = arith.addf %32, %34 : vector<128x16xf32>
      %c0_23 = arith.constant 0 : index
      %c0_24 = arith.constant 0 : index
      %36 = vector.load %arg4[%c0_23, %c0_24] : memref<1x16xf32, #tpu.memory_space<vmem>>, vector<1x16xf32>
      %c0_25 = arith.constant 0 : index
      %c0_26 = arith.constant 0 : index
      %37 = vector.load %arg5[%c0_25, %c0_26] : memref<1x16xf32, #tpu.memory_space<vmem>>, vector<1x16xf32>
      %cst_27 = arith.constant dense<0.000000e+00> : vector<128xf32>
      %38 = vector.multi_reduction <add>, %35, %cst_27 [1] : vector<128x16xf32> to vector<128xf32>
      %39 = vector.shape_cast %38 : vector<128xf32> to vector<128x1xf32>
      %cst_28 = arith.constant 1.600000e+01 : f32
      %40 = vector.broadcast %cst_28 : f32 to vector<128x1xf32>
      %41 = arith.divf %39, %40 : vector<128x1xf32>
      %42 = vector.broadcast %41 : vector<128x1xf32> to vector<128x16xf32>
      %43 = arith.subf %35, %42 : vector<128x16xf32>
      %44 = arith.mulf %43, %43 : vector<128x16xf32>
      %cst_29 = arith.constant dense<0.000000e+00> : vector<128xf32>
      %45 = vector.multi_reduction <add>, %44, %cst_29 [1] : vector<128x16xf32> to vector<128xf32>
      %46 = vector.shape_cast %45 : vector<128xf32> to vector<128x1xf32>
      %cst_30 = arith.constant 1.600000e+01 : f32
      %47 = vector.broadcast %cst_30 : f32 to vector<128x1xf32>
      %48 = arith.divf %46, %47 : vector<128x1xf32>
      %cst_31 = arith.constant 9.99999974E-6 : f32
      %49 = vector.broadcast %cst_31 : f32 to vector<128x1xf32>
      %50 = arith.addf %48, %49 : vector<128x1xf32>
      %51 = math.rsqrt %50 : vector<128x1xf32>
      %52 = vector.broadcast %51 : vector<128x1xf32> to vector<128x16xf32>
      %53 = arith.mulf %43, %52 : vector<128x16xf32>
      %54 = vector.broadcast %36 : vector<1x16xf32> to vector<128x16xf32>
      %55 = arith.mulf %53, %54 : vector<128x16xf32>
      %56 = vector.broadcast %37 : vector<1x16xf32> to vector<128x16xf32>
      %57 = arith.addf %55, %56 : vector<128x16xf32>
      %58 = arith.truncf %57 : vector<128x16xf32> to vector<128x16xbf16>
      %c0_32 = arith.constant 0 : index
      %c0_33 = arith.constant 0 : index
      %59 = vector.load %arg11[%c0_32, %c0_33] : memref<128x16xbf16, #tpu.memory_space<vmem>>, vector<128x16xbf16>
      tpu.vector_store %arg11[%c0_32, %c0_33], %58 {strides = array<i32>} : memref<128x16xbf16, #tpu.memory_space<vmem>>, vector<128x16xbf16>,
      %c0_34 = arith.constant 0 : index
      %c0_35 = arith.constant 0 : index
      %60 = vector.load %arg9[%c0_34, %c0_35] : memref<1x16xf32, #tpu.memory_space<vmem>>, vector<1x16xf32>
      %61 = vector.broadcast %60 : vector<1x16xf32> to vector<128x16xf32>
      %62 = arith.addf %35, %61 : vector<128x16xf32>
      %c0_36 = arith.constant 0 : index
      %c0_37 = arith.constant 0 : index
      %63 = vector.load %arg12[%c0_36, %c0_37] : memref<128x16xf32, #tpu.memory_space<vmem>>, vector<128x16xf32>
      tpu.vector_store %arg12[%c0_36, %c0_37], %62 {strides = array<i32>} : memref<128x16xf32, #tpu.memory_space<vmem>>, vector<128x16xf32>,
    } else {
    }
    %c0 = arith.constant 0 : index
    %c0_1 = arith.constant 0 : index
    %3 = vector.load %arg11[%c0, %c0_1] : memref<128x16xbf16, #tpu.memory_space<vmem>>, vector<128x16xbf16>
    %c0_2 = arith.constant 0 : index
    %c0_3 = arith.constant 0 : index
    %4 = vector.load %arg6[%c0_2, %c0_3] : memref<16x64xbf16, #tpu.memory_space<vmem>>, vector<16x64xbf16>
    %cst = arith.constant dense<0.000000e+00> : vector<128x64xf32>
    %5 = tpu.matmul %3, %4, %cst {dimension_numbers = #tpu.dot_dimension_numbers<[1], [0], [0], [1], [0, 0, 1, 1], [], []>} : vector<128x16xbf16>, vector<16x64xbf16>, vector<128x64xf32> -> vector<128x64xf32>
    %c0_4 = arith.constant 0 : index
    %c0_5 = arith.constant 0 : index
    %6 = vector.load %arg7[%c0_4, %c0_5] : memref<1x64xf32, #tpu.memory_space<vmem>>, vector<1x64xf32>
    %7 = vector.broadcast %6 : vector<1x64xf32> to vector<128x64xf32>
    %8 = arith.addf %5, %7 : vector<128x64xf32>
    %cst_6 = arith.constant 5.000000e-01 : f32
    %9 = vector.broadcast %cst_6 : f32 to vector<128x64xf32>
    %10 = arith.mulf %9, %8 : vector<128x64xf32>
    %cst_7 = arith.constant 4.471500e-02 : f32
    %11 = vector.broadcast %cst_7 : f32 to vector<128x64xf32>
    %12 = arith.mulf %11, %8 : vector<128x64xf32>
    %13 = arith.mulf %12, %8 : vector<128x64xf32>
    %14 = arith.mulf %13, %8 : vector<128x64xf32>
    %15 = arith.addf %8, %14 : vector<128x64xf32>
    %cst_8 = arith.constant 0.797884583 : f32
    %16 = vector.broadcast %cst_8 : f32 to vector<128x64xf32>
    %17 = arith.mulf %16, %15 : vector<128x64xf32>
    %18 = math.tanh %17 : vector<128x64xf32>
    %cst_9 = arith.constant 1.000000e+00 : f32
    %19 = vector.broadcast %cst_9 : f32 to vector<128x64xf32>
    %20 = arith.addf %19, %18 : vector<128x64xf32>
    %21 = arith.mulf %10, %20 : vector<128x64xf32>
    %c0_10 = arith.constant 0 : index
    %c0_11 = arith.constant 0 : index
    %22 = vector.load %arg12[%c0_10, %c0_11] : memref<128x16xf32, #tpu.memory_space<vmem>>, vector<128x16xf32>
    %23 = arith.truncf %21 : vector<128x64xf32> to vector<128x64xbf16>
    %c0_12 = arith.constant 0 : index
    %c0_13 = arith.constant 0 : index
    %24 = vector.load %arg8[%c0_12, %c0_13] : memref<64x16xbf16, #tpu.memory_space<vmem>>, vector<64x16xbf16>
    %cst_14 = arith.constant dense<0.000000e+00> : vector<128x16xf32>
    %25 = tpu.matmul %23, %24, %cst_14 {dimension_numbers = #tpu.dot_dimension_numbers<[1], [0], [0], [1], [0, 0, 1, 1], [], []>} : vector<128x64xbf16>, vector<64x16xbf16>, vector<128x16xf32> -> vector<128x16xf32>
    %26 = arith.addf %22, %25 : vector<128x16xf32>
    %c0_15 = arith.constant 0 : index
    %c0_16 = arith.constant 0 : index
    %27 = vector.load %arg12[%c0_15, %c0_16] : memref<128x16xf32, #tpu.memory_space<vmem>>, vector<128x16xf32>
    tpu.vector_store %arg12[%c0_15, %c0_16], %26 {strides = array<i32>} : memref<128x16xf32, #tpu.memory_space<vmem>>, vector<128x16xf32>,
    %c0_i32_17 = arith.constant 0 : i32
    %28 = arith.cmpi eq, %arg1, %c0_i32_17 : i32
    %29 = arith.extui %28 : i1 to i32
    %c0_i32_18 = arith.constant 0 : i32
    %30 = arith.cmpi ne, %29, %c0_i32_18 : i32
    scf.if %30 {
      %c0_19 = arith.constant 0 : index
      %c0_20 = arith.constant 0 : index
      %31 = vector.load %arg12[%c0_19, %c0_20] : memref<128x16xf32, #tpu.memory_space<vmem>>, vector<128x16xf32>
      %32 = arith.truncf %31 : vector<128x16xf32> to vector<128x16xbf16>
      %c0_21 = arith.constant 0 : index
      %c0_22 = arith.constant 0 : index
      %33 = vector.load %arg10[%c0_21, %c0_22] : memref<128x16xbf16, #tpu.memory_space<vmem>>, vector<128x16xbf16>
      tpu.vector_store %arg10[%c0_21, %c0_22], %32 {strides = array<i32>} : memref<128x16xbf16, #tpu.memory_space<vmem>>, vector<128x16xbf16>,
    } else {
    }
    return
  }
  func.func @transform_0(%arg0: i32, %arg1: i32) -> (i32, i32) {
    %c0_i32 = arith.constant 0 : i32
    %c0_i32_0 = arith.constant 0 : i32
    return %arg0, %c0_i32 : i32, i32
  }
  func.func @transform_1(%arg0: i32, %arg1: i32) -> (i32, i32) {
    %c0_i32 = arith.constant 0 : i32
    %c0_i32_0 = arith.constant 0 : i32
    return %arg0, %c0_i32 : i32, i32
  }
  func.func @transform_2(%arg0: i32, %arg1: i32) -> (i32, i32) {
    %c0_i32 = arith.constant 0 : i32
    %c0_i32_0 = arith.constant 0 : i32
    %c0_i32_1 = arith.constant 0 : i32
    return %c0_i32, %c0_i32_0 : i32, i32
  }
  func.func @transform_3(%arg0: i32, %arg1: i32) -> (i32, i32) {
    %c0_i32 = arith.constant 0 : i32
    %c0_i32_0 = arith.constant 0 : i32
    %c0_i32_1 = arith.constant 0 : i32
    return %c0_i32, %c0_i32_0 : i32, i32
  }
  func.func @transform_4(%arg0: i32, %arg1: i32) -> (i32, i32) {
    %c0_i32 = arith.constant 0 : i32
    %c0_i32_0 = arith.constant 0 : i32
    return %c0_i32, %arg1 : i32, i32
  }
  func.func @transform_5(%arg0: i32, %arg1: i32) -> (i32, i32) {
    %c0_i32 = arith.constant 0 : i32
    %c0_i32_0 = arith.constant 0 : i32
    return %c0_i32, %arg1 : i32, i32
  }
  func.func @transform_6(%arg0: i32, %arg1: i32) -> (i32, i32) {
    %c0_i32 = arith.constant 0 : i32
    %c0_i32_0 = arith.constant 0 : i32
    return %arg1, %c0_i32 : i32, i32
  }
  func.func @transform_7(%arg0: i32, %arg1: i32) -> (i32, i32) {
    %c0_i32 = arith.constant 0 : i32
    %c0_i32_0 = arith.constant 0 : i32
    %c0_i32_1 = arith.constant 0 : i32
    return %c0_i32, %c0_i32_0 : i32, i32
  }
  func.func @transform_8(%arg0: i32, %arg1: i32) -> (i32, i32) {
    %c0_i32 = arith.constant 0 : i32
    %c0_i32_0 = arith.constant 0 : i32
    return %arg0, %c0_i32 : i32, i32
  }
}

module attributes {stable_mosaic.version = 11 : i64} {
  func.func @_ln_linear_kernel(%arg0: i32, %arg1: memref<32x64xbf16, #tpu.memory_space<vmem>>, %arg2: memref<1x64xf32, #tpu.memory_space<vmem>>, %arg3: memref<1x64xf32, #tpu.memory_space<vmem>>, %arg4: memref<64x32xbf16, #tpu.memory_space<vmem>>, %arg5: memref<32x32xbf16, #tpu.memory_space<vmem>>) attributes {dimension_semantics = [#tpu.dimension_semantics<parallel>], iteration_bounds = array<i64: 1>, scalar_prefetch = 0 : i64, scratch_operands = 0 : i64, tpu.core_type = #tpu.core_type<tc>, window_params = [{transform_indices = @transform_0, window_bounds = array<i64: 32, 64>}, {pipeline_mode = #tpu.pipeline_mode<synchronous>, transform_indices = @transform_1, window_bounds = array<i64: 1, 64>}, {pipeline_mode = #tpu.pipeline_mode<synchronous>, transform_indices = @transform_2, window_bounds = array<i64: 1, 64>}, {pipeline_mode = #tpu.pipeline_mode<synchronous>, transform_indices = @transform_3, window_bounds = array<i64: 64, 32>}, {transform_indices = @transform_4, window_bounds = array<i64: 32, 32>}]} {
    %c0 = arith.constant 0 : index
    %c0_0 = arith.constant 0 : index
    %0 = vector.load %arg1[%c0, %c0_0] : memref<32x64xbf16, #tpu.memory_space<vmem>>, vector<32x64xbf16>
    %1 = arith.extf %0 : vector<32x64xbf16> to vector<32x64xf32>
    %c0_1 = arith.constant 0 : index
    %c0_2 = arith.constant 0 : index
    %2 = vector.load %arg2[%c0_1, %c0_2] : memref<1x64xf32, #tpu.memory_space<vmem>>, vector<1x64xf32>
    %c0_3 = arith.constant 0 : index
    %c0_4 = arith.constant 0 : index
    %3 = vector.load %arg3[%c0_3, %c0_4] : memref<1x64xf32, #tpu.memory_space<vmem>>, vector<1x64xf32>
    %cst = arith.constant dense<0.000000e+00> : vector<32xf32>
    %4 = vector.multi_reduction <add>, %1, %cst [1] : vector<32x64xf32> to vector<32xf32>
    %5 = vector.shape_cast %4 : vector<32xf32> to vector<32x1xf32>
    %cst_5 = arith.constant 6.400000e+01 : f32
    %6 = vector.broadcast %cst_5 : f32 to vector<32x1xf32>
    %7 = arith.divf %5, %6 : vector<32x1xf32>
    %8 = vector.broadcast %7 : vector<32x1xf32> to vector<32x64xf32>
    %9 = arith.subf %1, %8 : vector<32x64xf32>
    %10 = arith.mulf %9, %9 : vector<32x64xf32>
    %cst_6 = arith.constant dense<0.000000e+00> : vector<32xf32>
    %11 = vector.multi_reduction <add>, %10, %cst_6 [1] : vector<32x64xf32> to vector<32xf32>
    %12 = vector.shape_cast %11 : vector<32xf32> to vector<32x1xf32>
    %cst_7 = arith.constant 6.400000e+01 : f32
    %13 = vector.broadcast %cst_7 : f32 to vector<32x1xf32>
    %14 = arith.divf %12, %13 : vector<32x1xf32>
    %cst_8 = arith.constant 9.99999974E-6 : f32
    %15 = vector.broadcast %cst_8 : f32 to vector<32x1xf32>
    %16 = arith.addf %14, %15 : vector<32x1xf32>
    %17 = math.rsqrt %16 : vector<32x1xf32>
    %18 = vector.broadcast %17 : vector<32x1xf32> to vector<32x64xf32>
    %19 = arith.mulf %9, %18 : vector<32x64xf32>
    %20 = vector.broadcast %2 : vector<1x64xf32> to vector<32x64xf32>
    %21 = arith.mulf %19, %20 : vector<32x64xf32>
    %22 = vector.broadcast %3 : vector<1x64xf32> to vector<32x64xf32>
    %23 = arith.addf %21, %22 : vector<32x64xf32>
    %24 = arith.truncf %23 : vector<32x64xf32> to vector<32x64xbf16>
    %c0_9 = arith.constant 0 : index
    %c0_10 = arith.constant 0 : index
    %25 = vector.load %arg4[%c0_9, %c0_10] : memref<64x32xbf16, #tpu.memory_space<vmem>>, vector<64x32xbf16>
    %cst_11 = arith.constant dense<0.000000e+00> : vector<32x32xf32>
    %26 = tpu.matmul %24, %25, %cst_11 {dimension_numbers = #tpu.dot_dimension_numbers<[1], [0], [0], [1], [0, 0, 1, 1], [], []>} : vector<32x64xbf16>, vector<64x32xbf16>, vector<32x32xf32> -> vector<32x32xf32>
    %27 = arith.truncf %26 : vector<32x32xf32> to vector<32x32xbf16>
    %c0_12 = arith.constant 0 : index
    %c0_13 = arith.constant 0 : index
    %28 = vector.load %arg5[%c0_12, %c0_13] : memref<32x32xbf16, #tpu.memory_space<vmem>>, vector<32x32xbf16>
    tpu.vector_store %arg5[%c0_12, %c0_13], %27 {strides = array<i32>} : memref<32x32xbf16, #tpu.memory_space<vmem>>, vector<32x32xbf16>,
    return
  }
  func.func @transform_0(%arg0: i32) -> (i32, i32) {
    %c0_i32 = arith.constant 0 : i32
    %c0_i32_0 = arith.constant 0 : i32
    return %arg0, %c0_i32 : i32, i32
  }
  func.func @transform_1(%arg0: i32) -> (i32, i32) {
    %c0_i32 = arith.constant 0 : i32
    %c0_i32_0 = arith.constant 0 : i32
    %c0_i32_1 = arith.constant 0 : i32
    return %c0_i32, %c0_i32_0 : i32, i32
  }
  func.func @transform_2(%arg0: i32) -> (i32, i32) {
    %c0_i32 = arith.constant 0 : i32
    %c0_i32_0 = arith.constant 0 : i32
    %c0_i32_1 = arith.constant 0 : i32
    return %c0_i32, %c0_i32_0 : i32, i32
  }
  func.func @transform_3(%arg0: i32) -> (i32, i32) {
    %c0_i32 = arith.constant 0 : i32
    %c0_i32_0 = arith.constant 0 : i32
    %c0_i32_1 = arith.constant 0 : i32
    return %c0_i32, %c0_i32_0 : i32, i32
  }
  func.func @transform_4(%arg0: i32) -> (i32, i32) {
    %c0_i32 = arith.constant 0 : i32
    %c0_i32_0 = arith.constant 0 : i32
    return %arg0, %c0_i32 : i32, i32
  }
}

module attributes {stable_mosaic.version = 11 : i64} {
  func.func @_window_attn_kernel(%arg0: i32, %arg1: memref<1x16x32xbf16, #tpu.memory_space<vmem>>, %arg2: memref<1x32xf32, #tpu.memory_space<vmem>>, %arg3: memref<1x32xf32, #tpu.memory_space<vmem>>, %arg4: memref<32x96xbf16, #tpu.memory_space<vmem>>, %arg5: memref<1x96xf32, #tpu.memory_space<vmem>>, %arg6: memref<32x32xbf16, #tpu.memory_space<vmem>>, %arg7: memref<1x32xf32, #tpu.memory_space<vmem>>, %arg8: memref<1x4x16x16xbf16, #tpu.memory_space<vmem>>, %arg9: memref<1x16x32xbf16, #tpu.memory_space<vmem>>) attributes {dimension_semantics = [#tpu.dimension_semantics<parallel>], iteration_bounds = array<i64: 2>, scalar_prefetch = 0 : i64, scratch_operands = 0 : i64, tpu.core_type = #tpu.core_type<tc>, window_params = [{transform_indices = @transform_0, window_bounds = array<i64: 1, 16, 32>}, {pipeline_mode = #tpu.pipeline_mode<synchronous>, transform_indices = @transform_1, window_bounds = array<i64: 1, 32>}, {pipeline_mode = #tpu.pipeline_mode<synchronous>, transform_indices = @transform_2, window_bounds = array<i64: 1, 32>}, {pipeline_mode = #tpu.pipeline_mode<synchronous>, transform_indices = @transform_3, window_bounds = array<i64: 32, 96>}, {pipeline_mode = #tpu.pipeline_mode<synchronous>, transform_indices = @transform_4, window_bounds = array<i64: 1, 96>}, {pipeline_mode = #tpu.pipeline_mode<synchronous>, transform_indices = @transform_5, window_bounds = array<i64: 32, 32>}, {pipeline_mode = #tpu.pipeline_mode<synchronous>, transform_indices = @transform_6, window_bounds = array<i64: 1, 32>}, {pipeline_mode = #tpu.pipeline_mode<synchronous>, transform_indices = @transform_7, window_bounds = array<i64: 1, 4, 16, 16>}, {transform_indices = @transform_8, window_bounds = array<i64: 1, 16, 32>}]} {
    %c0 = arith.constant 0 : index
    %c0_0 = arith.constant 0 : index
    %c0_1 = arith.constant 0 : index
    %0 = vector.load %arg1[%c0, %c0_0, %c0_1] : memref<1x16x32xbf16, #tpu.memory_space<vmem>>, vector<1x16x32xbf16>
    %1 = vector.shape_cast %0 : vector<1x16x32xbf16> to vector<16x32xbf16>
    %2 = arith.extf %1 : vector<16x32xbf16> to vector<16x32xf32>
    %c0_2 = arith.constant 0 : index
    %c0_3 = arith.constant 0 : index
    %3 = vector.load %arg2[%c0_2, %c0_3] : memref<1x32xf32, #tpu.memory_space<vmem>>, vector<1x32xf32>
    %c0_4 = arith.constant 0 : index
    %c0_5 = arith.constant 0 : index
    %4 = vector.load %arg3[%c0_4, %c0_5] : memref<1x32xf32, #tpu.memory_space<vmem>>, vector<1x32xf32>
    %cst = arith.constant dense<0.000000e+00> : vector<16xf32>
    %5 = vector.multi_reduction <add>, %2, %cst [1] : vector<16x32xf32> to vector<16xf32>
    %6 = vector.shape_cast %5 : vector<16xf32> to vector<16x1xf32>
    %cst_6 = arith.constant 3.200000e+01 : f32
    %7 = vector.broadcast %cst_6 : f32 to vector<16x1xf32>
    %8 = arith.divf %6, %7 : vector<16x1xf32>
    %9 = vector.broadcast %8 : vector<16x1xf32> to vector<16x32xf32>
    %10 = arith.subf %2, %9 : vector<16x32xf32>
    %11 = arith.mulf %10, %10 : vector<16x32xf32>
    %cst_7 = arith.constant dense<0.000000e+00> : vector<16xf32>
    %12 = vector.multi_reduction <add>, %11, %cst_7 [1] : vector<16x32xf32> to vector<16xf32>
    %13 = vector.shape_cast %12 : vector<16xf32> to vector<16x1xf32>
    %cst_8 = arith.constant 3.200000e+01 : f32
    %14 = vector.broadcast %cst_8 : f32 to vector<16x1xf32>
    %15 = arith.divf %13, %14 : vector<16x1xf32>
    %cst_9 = arith.constant 9.99999974E-6 : f32
    %16 = vector.broadcast %cst_9 : f32 to vector<16x1xf32>
    %17 = arith.addf %15, %16 : vector<16x1xf32>
    %18 = math.rsqrt %17 : vector<16x1xf32>
    %19 = vector.broadcast %18 : vector<16x1xf32> to vector<16x32xf32>
    %20 = arith.mulf %10, %19 : vector<16x32xf32>
    %21 = vector.broadcast %3 : vector<1x32xf32> to vector<16x32xf32>
    %22 = arith.mulf %20, %21 : vector<16x32xf32>
    %23 = vector.broadcast %4 : vector<1x32xf32> to vector<16x32xf32>
    %24 = arith.addf %22, %23 : vector<16x32xf32>
    %25 = arith.truncf %24 : vector<16x32xf32> to vector<16x32xbf16>
    %c0_10 = arith.constant 0 : index
    %c0_11 = arith.constant 0 : index
    %26 = vector.load %arg4[%c0_10, %c0_11] : memref<32x96xbf16, #tpu.memory_space<vmem>>, vector<32x96xbf16>
    %cst_12 = arith.constant dense<0.000000e+00> : vector<16x96xf32>
    %27 = tpu.matmul %25, %26, %cst_12 {dimension_numbers = #tpu.dot_dimension_numbers<[1], [0], [0], [1], [0, 0, 1, 1], [], []>} : vector<16x32xbf16>, vector<32x96xbf16>, vector<16x96xf32> -> vector<16x96xf32>
    %c0_13 = arith.constant 0 : index
    %c0_14 = arith.constant 0 : index
    %28 = vector.load %arg5[%c0_13, %c0_14] : memref<1x96xf32, #tpu.memory_space<vmem>>, vector<1x96xf32>
    %29 = vector.broadcast %28 : vector<1x96xf32> to vector<16x96xf32>
    %30 = arith.addf %27, %29 : vector<16x96xf32>
    %c1_i32 = arith.constant 1 : i32
    %c0_i32 = arith.constant 0 : i32
    %31 = arith.cmpi eq, %c1_i32, %c0_i32 : i32
    %c1_i32_15 = arith.constant 1 : i32
    %32 = arith.select %31, %c1_i32_15, %c1_i32 : i32
    %33 = arith.remsi %arg0, %32 : i32
    %c0_i32_16 = arith.constant 0 : i32
    %34 = arith.cmpi ne, %33, %c0_i32_16 : i32
    %c0_i32_17 = arith.constant 0 : i32
    %35 = arith.cmpi slt, %33, %c0_i32_17 : i32
    %c0_i32_18 = arith.constant 0 : i32
    %36 = arith.cmpi slt, %32, %c0_i32_18 : i32
    %37 = arith.xori %35, %36 : i1
    %38 = arith.andi %37, %34 : i1
    %39 = arith.addi %33, %32 : i32
    %40 = arith.select %38, %39, %33 : i32
    %c1_i32_19 = arith.constant 1 : i32
    %41 = arith.muli %40, %c1_i32_19 : i32
    %42 = arith.index_cast %41 : i32 to index
    %c0_20 = arith.constant 0 : index
    %c0_21 = arith.constant 0 : index
    %c0_22 = arith.constant 0 : index
    %43 = vector.load %arg8[%42, %c0_20, %c0_21, %c0_22] : memref<1x4x16x16xbf16, #tpu.memory_space<vmem>>, vector<1x4x16x16xbf16>
    %44 = arith.extf %43 : vector<1x4x16x16xbf16> to vector<1x4x16x16xf32>
    %c0_23 = arith.constant 0 : index
    %c0_24 = arith.constant 0 : index
    %45 = vector.load %arg6[%c0_23, %c0_24] : memref<32x32xbf16, #tpu.memory_space<vmem>>, vector<32x32xbf16>
    %cst_25 = arith.constant 0.000000e+00 : f32
    %46 = vector.broadcast %cst_25 : f32 to vector<16x32xf32>
    %47 = vector.extract_strided_slice %30 {offsets = [0, 0], sizes = [16, 8], strides = [1, 1]} : vector<16x96xf32> to vector<16x8xf32>
    %cst_26 = arith.constant 0.353553385 : f32
    %48 = vector.broadcast %cst_26 : f32 to vector<16x8xf32>
    %49 = arith.mulf %47, %48 : vector<16x8xf32>
    %50 = arith.truncf %49 : vector<16x8xf32> to vector<16x8xbf16>
    %51 = vector.extract_strided_slice %30 {offsets = [0, 32], sizes = [16, 8], strides = [1, 1]} : vector<16x96xf32> to vector<16x8xf32>
    %52 = arith.truncf %51 : vector<16x8xf32> to vector<16x8xbf16>
    %53 = vector.extract_strided_slice %30 {offsets = [0, 64], sizes = [16, 8], strides = [1, 1]} : vector<16x96xf32> to vector<16x8xf32>
    %54 = arith.truncf %53 : vector<16x8xf32> to vector<16x8xbf16>
    %55 = vector.shape_cast %50 : vector<16x8xbf16> to vector<1x16x8xbf16>
    %56 = vector.shape_cast %52 : vector<16x8xbf16> to vector<1x16x8xbf16>
    %57 = vector.shape_cast %54 : vector<16x8xbf16> to vector<1x16x8xbf16>
    "tpu.trace_start"() <{level = 10 : i32, message = "wnd,wmd->wnm"}> : () -> ()
    %cst_27 = arith.constant dense<0.000000e+00> : vector<1x16x16xf32>
    %58 = tpu.matmul %55, %56, %cst_27 {dimension_numbers = #tpu.dot_dimension_numbers<[2], [2], [1], [1], [0, 0, 0, 1, 1, 1], [0], [0]>} : vector<1x16x8xbf16>, vector<1x16x8xbf16>, vector<1x16x16xf32> -> vector<1x16x16xf32>
    "tpu.trace_stop"() : () -> ()
    %59 = vector.extract_strided_slice %44 {offsets = [0, 0, 0, 0], sizes = [1, 1, 16, 16], strides = [1, 1, 1, 1]} : vector<1x4x16x16xf32> to vector<1x1x16x16xf32>
    %60 = vector.shape_cast %59 : vector<1x1x16x16xf32> to vector<1x16x16xf32>
    %61 = arith.addf %58, %60 : vector<1x16x16xf32>
    %cst_28 = arith.constant dense<0xFF800000> : vector<1x16xf32>
    %62 = vector.multi_reduction <maximumf>, %61, %cst_28 [2] : vector<1x16x16xf32> to vector<1x16xf32>
    %63 = vector.shape_cast %62 : vector<1x16xf32> to vector<1x16x1xf32>
    %64 = vector.broadcast %63 : vector<1x16x1xf32> to vector<1x16x16xf32>
    %65 = arith.subf %61, %64 : vector<1x16x16xf32>
    %66 = math.exp %65 : vector<1x16x16xf32>
    %cst_29 = arith.constant dense<0.000000e+00> : vector<1x16xf32>
    %67 = vector.multi_reduction <add>, %66, %cst_29 [2] : vector<1x16x16xf32> to vector<1x16xf32>
    %68 = vector.shape_cast %67 : vector<1x16xf32> to vector<1x16x1xf32>
    %69 = tpu.reciprocal %68 {approx = true} : vector<1x16x1xf32> -> vector<1x16x1xf32>
    %70 = vector.broadcast %69 : vector<1x16x1xf32> to vector<1x16x16xf32>
    %71 = arith.mulf %66, %70 : vector<1x16x16xf32>
    %72 = arith.truncf %71 : vector<1x16x16xf32> to vector<1x16x16xbf16>
    "tpu.trace_start"() <{level = 10 : i32, message = "wnm,wmd->wnd"}> : () -> ()
    %cst_30 = arith.constant dense<0.000000e+00> : vector<1x16x8xf32>
    %73 = tpu.matmul %72, %57, %cst_30 {dimension_numbers = #tpu.dot_dimension_numbers<[2], [1], [1], [2], [0, 0, 0, 1, 1, 2], [0], [0]>} : vector<1x16x16xbf16>, vector<1x16x8xbf16>, vector<1x16x8xf32> -> vector<1x16x8xf32>
    "tpu.trace_stop"() : () -> ()
    %74 = vector.shape_cast %73 : vector<1x16x8xf32> to vector<16x8xf32>
    %75 = arith.truncf %74 : vector<16x8xf32> to vector<16x8xbf16>
    %76 = vector.extract_strided_slice %45 {offsets = [0, 0], sizes = [8, 32], strides = [1, 1]} : vector<32x32xbf16> to vector<8x32xbf16>
    %cst_31 = arith.constant dense<0.000000e+00> : vector<16x32xf32>
    %77 = tpu.matmul %75, %76, %cst_31 {dimension_numbers = #tpu.dot_dimension_numbers<[1], [0], [0], [1], [0, 0, 1, 1], [], []>} : vector<16x8xbf16>, vector<8x32xbf16>, vector<16x32xf32> -> vector<16x32xf32>
    %78 = arith.addf %46, %77 : vector<16x32xf32>
    %79 = vector.extract_strided_slice %30 {offsets = [0, 8], sizes = [16, 8], strides = [1, 1]} : vector<16x96xf32> to vector<16x8xf32>
    %cst_32 = arith.constant 0.353553385 : f32
    %80 = vector.broadcast %cst_32 : f32 to vector<16x8xf32>
    %81 = arith.mulf %79, %80 : vector<16x8xf32>
    %82 = arith.truncf %81 : vector<16x8xf32> to vector<16x8xbf16>
    %83 = vector.extract_strided_slice %30 {offsets = [0, 40], sizes = [16, 8], strides = [1, 1]} : vector<16x96xf32> to vector<16x8xf32>
    %84 = arith.truncf %83 : vector<16x8xf32> to vector<16x8xbf16>
    %85 = vector.extract_strided_slice %30 {offsets = [0, 72], sizes = [16, 8], strides = [1, 1]} : vector<16x96xf32> to vector<16x8xf32>
    %86 = arith.truncf %85 : vector<16x8xf32> to vector<16x8xbf16>
    %87 = vector.shape_cast %82 : vector<16x8xbf16> to vector<1x16x8xbf16>
    %88 = vector.shape_cast %84 : vector<16x8xbf16> to vector<1x16x8xbf16>
    %89 = vector.shape_cast %86 : vector<16x8xbf16> to vector<1x16x8xbf16>
    "tpu.trace_start"() <{level = 10 : i32, message = "wnd,wmd->wnm"}> : () -> ()
    %cst_33 = arith.constant dense<0.000000e+00> : vector<1x16x16xf32>
    %90 = tpu.matmul %87, %88, %cst_33 {dimension_numbers = #tpu.dot_dimension_numbers<[2], [2], [1], [1], [0, 0, 0, 1, 1, 1], [0], [0]>} : vector<1x16x8xbf16>, vector<1x16x8xbf16>, vector<1x16x16xf32> -> vector<1x16x16xf32>
    "tpu.trace_stop"() : () -> ()
    %91 = vector.extract_strided_slice %44 {offsets = [0, 1, 0, 0], sizes = [1, 1, 16, 16], strides = [1, 1, 1, 1]} : vector<1x4x16x16xf32> to vector<1x1x16x16xf32>
    %92 = vector.shape_cast %91 : vector<1x1x16x16xf32> to vector<1x16x16xf32>
    %93 = arith.addf %90, %92 : vector<1x16x16xf32>
    %cst_34 = arith.constant dense<0xFF800000> : vector<1x16xf32>
    %94 = vector.multi_reduction <maximumf>, %93, %cst_34 [2] : vector<1x16x16xf32> to vector<1x16xf32>
    %95 = vector.shape_cast %94 : vector<1x16xf32> to vector<1x16x1xf32>
    %96 = vector.broadcast %95 : vector<1x16x1xf32> to vector<1x16x16xf32>
    %97 = arith.subf %93, %96 : vector<1x16x16xf32>
    %98 = math.exp %97 : vector<1x16x16xf32>
    %cst_35 = arith.constant dense<0.000000e+00> : vector<1x16xf32>
    %99 = vector.multi_reduction <add>, %98, %cst_35 [2] : vector<1x16x16xf32> to vector<1x16xf32>
    %100 = vector.shape_cast %99 : vector<1x16xf32> to vector<1x16x1xf32>
    %101 = tpu.reciprocal %100 {approx = true} : vector<1x16x1xf32> -> vector<1x16x1xf32>
    %102 = vector.broadcast %101 : vector<1x16x1xf32> to vector<1x16x16xf32>
    %103 = arith.mulf %98, %102 : vector<1x16x16xf32>
    %104 = arith.truncf %103 : vector<1x16x16xf32> to vector<1x16x16xbf16>
    "tpu.trace_start"() <{level = 10 : i32, message = "wnm,wmd->wnd"}> : () -> ()
    %cst_36 = arith.constant dense<0.000000e+00> : vector<1x16x8xf32>
    %105 = tpu.matmul %104, %89, %cst_36 {dimension_numbers = #tpu.dot_dimension_numbers<[2], [1], [1], [2], [0, 0, 0, 1, 1, 2], [0], [0]>} : vector<1x16x16xbf16>, vector<1x16x8xbf16>, vector<1x16x8xf32> -> vector<1x16x8xf32>
    "tpu.trace_stop"() : () -> ()
    %106 = vector.shape_cast %105 : vector<1x16x8xf32> to vector<16x8xf32>
    %107 = arith.truncf %106 : vector<16x8xf32> to vector<16x8xbf16>
    %108 = vector.extract_strided_slice %45 {offsets = [8, 0], sizes = [8, 32], strides = [1, 1]} : vector<32x32xbf16> to vector<8x32xbf16>
    %cst_37 = arith.constant dense<0.000000e+00> : vector<16x32xf32>
    %109 = tpu.matmul %107, %108, %cst_37 {dimension_numbers = #tpu.dot_dimension_numbers<[1], [0], [0], [1], [0, 0, 1, 1], [], []>} : vector<16x8xbf16>, vector<8x32xbf16>, vector<16x32xf32> -> vector<16x32xf32>
    %110 = arith.addf %78, %109 : vector<16x32xf32>
    %111 = vector.extract_strided_slice %30 {offsets = [0, 16], sizes = [16, 8], strides = [1, 1]} : vector<16x96xf32> to vector<16x8xf32>
    %cst_38 = arith.constant 0.353553385 : f32
    %112 = vector.broadcast %cst_38 : f32 to vector<16x8xf32>
    %113 = arith.mulf %111, %112 : vector<16x8xf32>
    %114 = arith.truncf %113 : vector<16x8xf32> to vector<16x8xbf16>
    %115 = vector.extract_strided_slice %30 {offsets = [0, 48], sizes = [16, 8], strides = [1, 1]} : vector<16x96xf32> to vector<16x8xf32>
    %116 = arith.truncf %115 : vector<16x8xf32> to vector<16x8xbf16>
    %117 = vector.extract_strided_slice %30 {offsets = [0, 80], sizes = [16, 8], strides = [1, 1]} : vector<16x96xf32> to vector<16x8xf32>
    %118 = arith.truncf %117 : vector<16x8xf32> to vector<16x8xbf16>
    %119 = vector.shape_cast %114 : vector<16x8xbf16> to vector<1x16x8xbf16>
    %120 = vector.shape_cast %116 : vector<16x8xbf16> to vector<1x16x8xbf16>
    %121 = vector.shape_cast %118 : vector<16x8xbf16> to vector<1x16x8xbf16>
    "tpu.trace_start"() <{level = 10 : i32, message = "wnd,wmd->wnm"}> : () -> ()
    %cst_39 = arith.constant dense<0.000000e+00> : vector<1x16x16xf32>
    %122 = tpu.matmul %119, %120, %cst_39 {dimension_numbers = #tpu.dot_dimension_numbers<[2], [2], [1], [1], [0, 0, 0, 1, 1, 1], [0], [0]>} : vector<1x16x8xbf16>, vector<1x16x8xbf16>, vector<1x16x16xf32> -> vector<1x16x16xf32>
    "tpu.trace_stop"() : () -> ()
    %123 = vector.extract_strided_slice %44 {offsets = [0, 2, 0, 0], sizes = [1, 1, 16, 16], strides = [1, 1, 1, 1]} : vector<1x4x16x16xf32> to vector<1x1x16x16xf32>
    %124 = vector.shape_cast %123 : vector<1x1x16x16xf32> to vector<1x16x16xf32>
    %125 = arith.addf %122, %124 : vector<1x16x16xf32>
    %cst_40 = arith.constant dense<0xFF800000> : vector<1x16xf32>
    %126 = vector.multi_reduction <maximumf>, %125, %cst_40 [2] : vector<1x16x16xf32> to vector<1x16xf32>
    %127 = vector.shape_cast %126 : vector<1x16xf32> to vector<1x16x1xf32>
    %128 = vector.broadcast %127 : vector<1x16x1xf32> to vector<1x16x16xf32>
    %129 = arith.subf %125, %128 : vector<1x16x16xf32>
    %130 = math.exp %129 : vector<1x16x16xf32>
    %cst_41 = arith.constant dense<0.000000e+00> : vector<1x16xf32>
    %131 = vector.multi_reduction <add>, %130, %cst_41 [2] : vector<1x16x16xf32> to vector<1x16xf32>
    %132 = vector.shape_cast %131 : vector<1x16xf32> to vector<1x16x1xf32>
    %133 = tpu.reciprocal %132 {approx = true} : vector<1x16x1xf32> -> vector<1x16x1xf32>
    %134 = vector.broadcast %133 : vector<1x16x1xf32> to vector<1x16x16xf32>
    %135 = arith.mulf %130, %134 : vector<1x16x16xf32>
    %136 = arith.truncf %135 : vector<1x16x16xf32> to vector<1x16x16xbf16>
    "tpu.trace_start"() <{level = 10 : i32, message = "wnm,wmd->wnd"}> : () -> ()
    %cst_42 = arith.constant dense<0.000000e+00> : vector<1x16x8xf32>
    %137 = tpu.matmul %136, %121, %cst_42 {dimension_numbers = #tpu.dot_dimension_numbers<[2], [1], [1], [2], [0, 0, 0, 1, 1, 2], [0], [0]>} : vector<1x16x16xbf16>, vector<1x16x8xbf16>, vector<1x16x8xf32> -> vector<1x16x8xf32>
    "tpu.trace_stop"() : () -> ()
    %138 = vector.shape_cast %137 : vector<1x16x8xf32> to vector<16x8xf32>
    %139 = arith.truncf %138 : vector<16x8xf32> to vector<16x8xbf16>
    %140 = vector.extract_strided_slice %45 {offsets = [16, 0], sizes = [8, 32], strides = [1, 1]} : vector<32x32xbf16> to vector<8x32xbf16>
    %cst_43 = arith.constant dense<0.000000e+00> : vector<16x32xf32>
    %141 = tpu.matmul %139, %140, %cst_43 {dimension_numbers = #tpu.dot_dimension_numbers<[1], [0], [0], [1], [0, 0, 1, 1], [], []>} : vector<16x8xbf16>, vector<8x32xbf16>, vector<16x32xf32> -> vector<16x32xf32>
    %142 = arith.addf %110, %141 : vector<16x32xf32>
    %143 = vector.extract_strided_slice %30 {offsets = [0, 24], sizes = [16, 8], strides = [1, 1]} : vector<16x96xf32> to vector<16x8xf32>
    %cst_44 = arith.constant 0.353553385 : f32
    %144 = vector.broadcast %cst_44 : f32 to vector<16x8xf32>
    %145 = arith.mulf %143, %144 : vector<16x8xf32>
    %146 = arith.truncf %145 : vector<16x8xf32> to vector<16x8xbf16>
    %147 = vector.extract_strided_slice %30 {offsets = [0, 56], sizes = [16, 8], strides = [1, 1]} : vector<16x96xf32> to vector<16x8xf32>
    %148 = arith.truncf %147 : vector<16x8xf32> to vector<16x8xbf16>
    %149 = vector.extract_strided_slice %30 {offsets = [0, 88], sizes = [16, 8], strides = [1, 1]} : vector<16x96xf32> to vector<16x8xf32>
    %150 = arith.truncf %149 : vector<16x8xf32> to vector<16x8xbf16>
    %151 = vector.shape_cast %146 : vector<16x8xbf16> to vector<1x16x8xbf16>
    %152 = vector.shape_cast %148 : vector<16x8xbf16> to vector<1x16x8xbf16>
    %153 = vector.shape_cast %150 : vector<16x8xbf16> to vector<1x16x8xbf16>
    "tpu.trace_start"() <{level = 10 : i32, message = "wnd,wmd->wnm"}> : () -> ()
    %cst_45 = arith.constant dense<0.000000e+00> : vector<1x16x16xf32>
    %154 = tpu.matmul %151, %152, %cst_45 {dimension_numbers = #tpu.dot_dimension_numbers<[2], [2], [1], [1], [0, 0, 0, 1, 1, 1], [0], [0]>} : vector<1x16x8xbf16>, vector<1x16x8xbf16>, vector<1x16x16xf32> -> vector<1x16x16xf32>
    "tpu.trace_stop"() : () -> ()
    %155 = vector.extract_strided_slice %44 {offsets = [0, 3, 0, 0], sizes = [1, 1, 16, 16], strides = [1, 1, 1, 1]} : vector<1x4x16x16xf32> to vector<1x1x16x16xf32>
    %156 = vector.shape_cast %155 : vector<1x1x16x16xf32> to vector<1x16x16xf32>
    %157 = arith.addf %154, %156 : vector<1x16x16xf32>
    %cst_46 = arith.constant dense<0xFF800000> : vector<1x16xf32>
    %158 = vector.multi_reduction <maximumf>, %157, %cst_46 [2] : vector<1x16x16xf32> to vector<1x16xf32>
    %159 = vector.shape_cast %158 : vector<1x16xf32> to vector<1x16x1xf32>
    %160 = vector.broadcast %159 : vector<1x16x1xf32> to vector<1x16x16xf32>
    %161 = arith.subf %157, %160 : vector<1x16x16xf32>
    %162 = math.exp %161 : vector<1x16x16xf32>
    %cst_47 = arith.constant dense<0.000000e+00> : vector<1x16xf32>
    %163 = vector.multi_reduction <add>, %162, %cst_47 [2] : vector<1x16x16xf32> to vector<1x16xf32>
    %164 = vector.shape_cast %163 : vector<1x16xf32> to vector<1x16x1xf32>
    %165 = tpu.reciprocal %164 {approx = true} : vector<1x16x1xf32> -> vector<1x16x1xf32>
    %166 = vector.broadcast %165 : vector<1x16x1xf32> to vector<1x16x16xf32>
    %167 = arith.mulf %162, %166 : vector<1x16x16xf32>
    %168 = arith.truncf %167 : vector<1x16x16xf32> to vector<1x16x16xbf16>
    "tpu.trace_start"() <{level = 10 : i32, message = "wnm,wmd->wnd"}> : () -> ()
    %cst_48 = arith.constant dense<0.000000e+00> : vector<1x16x8xf32>
    %169 = tpu.matmul %168, %153, %cst_48 {dimension_numbers = #tpu.dot_dimension_numbers<[2], [1], [1], [2], [0, 0, 0, 1, 1, 2], [0], [0]>} : vector<1x16x16xbf16>, vector<1x16x8xbf16>, vector<1x16x8xf32> -> vector<1x16x8xf32>
    "tpu.trace_stop"() : () -> ()
    %170 = vector.shape_cast %169 : vector<1x16x8xf32> to vector<16x8xf32>
    %171 = arith.truncf %170 : vector<16x8xf32> to vector<16x8xbf16>
    %172 = vector.extract_strided_slice %45 {offsets = [24, 0], sizes = [8, 32], strides = [1, 1]} : vector<32x32xbf16> to vector<8x32xbf16>
    %cst_49 = arith.constant dense<0.000000e+00> : vector<16x32xf32>
    %173 = tpu.matmul %171, %172, %cst_49 {dimension_numbers = #tpu.dot_dimension_numbers<[1], [0], [0], [1], [0, 0, 1, 1], [], []>} : vector<16x8xbf16>, vector<8x32xbf16>, vector<16x32xf32> -> vector<16x32xf32>
    %174 = arith.addf %142, %173 : vector<16x32xf32>
    %c0_50 = arith.constant 0 : index
    %c0_51 = arith.constant 0 : index
    %175 = vector.load %arg7[%c0_50, %c0_51] : memref<1x32xf32, #tpu.memory_space<vmem>>, vector<1x32xf32>
    %176 = vector.broadcast %175 : vector<1x32xf32> to vector<16x32xf32>
    %177 = arith.addf %174, %176 : vector<16x32xf32>
    %178 = vector.shape_cast %177 : vector<16x32xf32> to vector<1x16x32xf32>
    %179 = arith.truncf %178 : vector<1x16x32xf32> to vector<1x16x32xbf16>
    %c0_52 = arith.constant 0 : index
    %c0_53 = arith.constant 0 : index
    %c0_54 = arith.constant 0 : index
    %180 = vector.load %arg9[%c0_52, %c0_53, %c0_54] : memref<1x16x32xbf16, #tpu.memory_space<vmem>>, vector<1x16x32xbf16>
    tpu.vector_store %arg9[%c0_52, %c0_53, %c0_54], %179 {strides = array<i32>} : memref<1x16x32xbf16, #tpu.memory_space<vmem>>, vector<1x16x32xbf16>,
    return
  }
  func.func @transform_0(%arg0: i32) -> (i32, i32, i32) {
    %c0_i32 = arith.constant 0 : i32
    %c0_i32_0 = arith.constant 0 : i32
    %c0_i32_1 = arith.constant 0 : i32
    return %arg0, %c0_i32, %c0_i32_0 : i32, i32, i32
  }
  func.func @transform_1(%arg0: i32) -> (i32, i32) {
    %c0_i32 = arith.constant 0 : i32
    %c0_i32_0 = arith.constant 0 : i32
    %c0_i32_1 = arith.constant 0 : i32
    return %c0_i32, %c0_i32_0 : i32, i32
  }
  func.func @transform_2(%arg0: i32) -> (i32, i32) {
    %c0_i32 = arith.constant 0 : i32
    %c0_i32_0 = arith.constant 0 : i32
    %c0_i32_1 = arith.constant 0 : i32
    return %c0_i32, %c0_i32_0 : i32, i32
  }
  func.func @transform_3(%arg0: i32) -> (i32, i32) {
    %c0_i32 = arith.constant 0 : i32
    %c0_i32_0 = arith.constant 0 : i32
    %c0_i32_1 = arith.constant 0 : i32
    return %c0_i32, %c0_i32_0 : i32, i32
  }
  func.func @transform_4(%arg0: i32) -> (i32, i32) {
    %c0_i32 = arith.constant 0 : i32
    %c0_i32_0 = arith.constant 0 : i32
    %c0_i32_1 = arith.constant 0 : i32
    return %c0_i32, %c0_i32_0 : i32, i32
  }
  func.func @transform_5(%arg0: i32) -> (i32, i32) {
    %c0_i32 = arith.constant 0 : i32
    %c0_i32_0 = arith.constant 0 : i32
    %c0_i32_1 = arith.constant 0 : i32
    return %c0_i32, %c0_i32_0 : i32, i32
  }
  func.func @transform_6(%arg0: i32) -> (i32, i32) {
    %c0_i32 = arith.constant 0 : i32
    %c0_i32_0 = arith.constant 0 : i32
    %c0_i32_1 = arith.constant 0 : i32
    return %c0_i32, %c0_i32_0 : i32, i32
  }
  func.func @transform_7(%arg0: i32) -> (i32, i32, i32, i32) {
    %c0_i32 = arith.constant 0 : i32
    %c0_i32_0 = arith.constant 0 : i32
    %c0_i32_1 = arith.constant 0 : i32
    %c0_i32_2 = arith.constant 0 : i32
    %c0_i32_3 = arith.constant 0 : i32
    return %c0_i32, %c0_i32_0, %c0_i32_1, %c0_i32_2 : i32, i32, i32, i32
  }
  func.func @transform_8(%arg0: i32) -> (i32, i32, i32) {
    %c0_i32 = arith.constant 0 : i32
    %c0_i32_0 = arith.constant 0 : i32
    %c0_i32_1 = arith.constant 0 : i32
    return %arg0, %c0_i32, %c0_i32_0 : i32, i32, i32
  }
}

module attributes {stable_mosaic.version = 11 : i64} {
  func.func @_mlp_kernel(%arg0: i32, %arg1: i32, %arg2: memref<32x32xbf16, #tpu.memory_space<vmem>>, %arg3: memref<32x32xbf16, #tpu.memory_space<vmem>>, %arg4: memref<1x32xf32, #tpu.memory_space<vmem>>, %arg5: memref<1x32xf32, #tpu.memory_space<vmem>>, %arg6: memref<32x128xbf16, #tpu.memory_space<vmem>>, %arg7: memref<1x128xf32, #tpu.memory_space<vmem>>, %arg8: memref<128x32xbf16, #tpu.memory_space<vmem>>, %arg9: memref<1x32xf32, #tpu.memory_space<vmem>>, %arg10: memref<32x32xbf16, #tpu.memory_space<vmem>>, %arg11: memref<32x32xbf16, #tpu.memory_space<vmem>>, %arg12: memref<32x32xf32, #tpu.memory_space<vmem>>) attributes {dimension_semantics = [#tpu.dimension_semantics<parallel>, #tpu.dimension_semantics<arbitrary>], iteration_bounds = array<i64: 1, 1>, scalar_prefetch = 0 : i64, scratch_operands = 2 : i64, tpu.core_type = #tpu.core_type<tc>, window_params = [{transform_indices = @transform_0, window_bounds = array<i64: 32, 32>}, {transform_indices = @transform_1, window_bounds = array<i64: 32, 32>}, {pipeline_mode = #tpu.pipeline_mode<synchronous>, transform_indices = @transform_2, window_bounds = array<i64: 1, 32>}, {pipeline_mode = #tpu.pipeline_mode<synchronous>, transform_indices = @transform_3, window_bounds = array<i64: 1, 32>}, {transform_indices = @transform_4, window_bounds = array<i64: 32, 128>}, {transform_indices = @transform_5, window_bounds = array<i64: 1, 128>}, {transform_indices = @transform_6, window_bounds = array<i64: 128, 32>}, {pipeline_mode = #tpu.pipeline_mode<synchronous>, transform_indices = @transform_7, window_bounds = array<i64: 1, 32>}, {transform_indices = @transform_8, window_bounds = array<i64: 32, 32>}]} {
    %c0_i32 = arith.constant 0 : i32
    %0 = arith.cmpi eq, %arg1, %c0_i32 : i32
    %1 = arith.extui %0 : i1 to i32
    %c0_i32_0 = arith.constant 0 : i32
    %2 = arith.cmpi ne, %1, %c0_i32_0 : i32
    scf.if %2 {
      %c0_19 = arith.constant 0 : index
      %c0_20 = arith.constant 0 : index
      %31 = vector.load %arg2[%c0_19, %c0_20] : memref<32x32xbf16, #tpu.memory_space<vmem>>, vector<32x32xbf16>
      %32 = arith.extf %31 : vector<32x32xbf16> to vector<32x32xf32>
      %c0_21 = arith.constant 0 : index
      %c0_22 = arith.constant 0 : index
      %33 = vector.load %arg3[%c0_21, %c0_22] : memref<32x32xbf16, #tpu.memory_space<vmem>>, vector<32x32xbf16>
      %34 = arith.extf %33 : vector<32x32xbf16> to vector<32x32xf32>
      %35 = arith.addf %32, %34 : vector<32x32xf32>
      %c0_23 = arith.constant 0 : index
      %c0_24 = arith.constant 0 : index
      %36 = vector.load %arg4[%c0_23, %c0_24] : memref<1x32xf32, #tpu.memory_space<vmem>>, vector<1x32xf32>
      %c0_25 = arith.constant 0 : index
      %c0_26 = arith.constant 0 : index
      %37 = vector.load %arg5[%c0_25, %c0_26] : memref<1x32xf32, #tpu.memory_space<vmem>>, vector<1x32xf32>
      %cst_27 = arith.constant dense<0.000000e+00> : vector<32xf32>
      %38 = vector.multi_reduction <add>, %35, %cst_27 [1] : vector<32x32xf32> to vector<32xf32>
      %39 = vector.shape_cast %38 : vector<32xf32> to vector<32x1xf32>
      %cst_28 = arith.constant 3.200000e+01 : f32
      %40 = vector.broadcast %cst_28 : f32 to vector<32x1xf32>
      %41 = arith.divf %39, %40 : vector<32x1xf32>
      %42 = vector.broadcast %41 : vector<32x1xf32> to vector<32x32xf32>
      %43 = arith.subf %35, %42 : vector<32x32xf32>
      %44 = arith.mulf %43, %43 : vector<32x32xf32>
      %cst_29 = arith.constant dense<0.000000e+00> : vector<32xf32>
      %45 = vector.multi_reduction <add>, %44, %cst_29 [1] : vector<32x32xf32> to vector<32xf32>
      %46 = vector.shape_cast %45 : vector<32xf32> to vector<32x1xf32>
      %cst_30 = arith.constant 3.200000e+01 : f32
      %47 = vector.broadcast %cst_30 : f32 to vector<32x1xf32>
      %48 = arith.divf %46, %47 : vector<32x1xf32>
      %cst_31 = arith.constant 9.99999974E-6 : f32
      %49 = vector.broadcast %cst_31 : f32 to vector<32x1xf32>
      %50 = arith.addf %48, %49 : vector<32x1xf32>
      %51 = math.rsqrt %50 : vector<32x1xf32>
      %52 = vector.broadcast %51 : vector<32x1xf32> to vector<32x32xf32>
      %53 = arith.mulf %43, %52 : vector<32x32xf32>
      %54 = vector.broadcast %36 : vector<1x32xf32> to vector<32x32xf32>
      %55 = arith.mulf %53, %54 : vector<32x32xf32>
      %56 = vector.broadcast %37 : vector<1x32xf32> to vector<32x32xf32>
      %57 = arith.addf %55, %56 : vector<32x32xf32>
      %58 = arith.truncf %57 : vector<32x32xf32> to vector<32x32xbf16>
      %c0_32 = arith.constant 0 : index
      %c0_33 = arith.constant 0 : index
      %59 = vector.load %arg11[%c0_32, %c0_33] : memref<32x32xbf16, #tpu.memory_space<vmem>>, vector<32x32xbf16>
      tpu.vector_store %arg11[%c0_32, %c0_33], %58 {strides = array<i32>} : memref<32x32xbf16, #tpu.memory_space<vmem>>, vector<32x32xbf16>,
      %c0_34 = arith.constant 0 : index
      %c0_35 = arith.constant 0 : index
      %60 = vector.load %arg9[%c0_34, %c0_35] : memref<1x32xf32, #tpu.memory_space<vmem>>, vector<1x32xf32>
      %61 = vector.broadcast %60 : vector<1x32xf32> to vector<32x32xf32>
      %62 = arith.addf %35, %61 : vector<32x32xf32>
      %c0_36 = arith.constant 0 : index
      %c0_37 = arith.constant 0 : index
      %63 = vector.load %arg12[%c0_36, %c0_37] : memref<32x32xf32, #tpu.memory_space<vmem>>, vector<32x32xf32>
      tpu.vector_store %arg12[%c0_36, %c0_37], %62 {strides = array<i32>} : memref<32x32xf32, #tpu.memory_space<vmem>>, vector<32x32xf32>,
    } else {
    }
    %c0 = arith.constant 0 : index
    %c0_1 = arith.constant 0 : index
    %3 = vector.load %arg11[%c0, %c0_1] : memref<32x32xbf16, #tpu.memory_space<vmem>>, vector<32x32xbf16>
    %c0_2 = arith.constant 0 : index
    %c0_3 = arith.constant 0 : index
    %4 = vector.load %arg6[%c0_2, %c0_3] : memref<32x128xbf16, #tpu.memory_space<vmem>>, vector<32x128xbf16>
    %cst = arith.constant dense<0.000000e+00> : vector<32x128xf32>
    %5 = tpu.matmul %3, %4, %cst {dimension_numbers = #tpu.dot_dimension_numbers<[1], [0], [0], [1], [0, 0, 1, 1], [], []>} : vector<32x32xbf16>, vector<32x128xbf16>, vector<32x128xf32> -> vector<32x128xf32>
    %c0_4 = arith.constant 0 : index
    %c0_5 = arith.constant 0 : index
    %6 = vector.load %arg7[%c0_4, %c0_5] : memref<1x128xf32, #tpu.memory_space<vmem>>, vector<1x128xf32>
    %7 = vector.broadcast %6 : vector<1x128xf32> to vector<32x128xf32>
    %8 = arith.addf %5, %7 : vector<32x128xf32>
    %cst_6 = arith.constant 5.000000e-01 : f32
    %9 = vector.broadcast %cst_6 : f32 to vector<32x128xf32>
    %10 = arith.mulf %9, %8 : vector<32x128xf32>
    %cst_7 = arith.constant 4.471500e-02 : f32
    %11 = vector.broadcast %cst_7 : f32 to vector<32x128xf32>
    %12 = arith.mulf %11, %8 : vector<32x128xf32>
    %13 = arith.mulf %12, %8 : vector<32x128xf32>
    %14 = arith.mulf %13, %8 : vector<32x128xf32>
    %15 = arith.addf %8, %14 : vector<32x128xf32>
    %cst_8 = arith.constant 0.797884583 : f32
    %16 = vector.broadcast %cst_8 : f32 to vector<32x128xf32>
    %17 = arith.mulf %16, %15 : vector<32x128xf32>
    %18 = math.tanh %17 : vector<32x128xf32>
    %cst_9 = arith.constant 1.000000e+00 : f32
    %19 = vector.broadcast %cst_9 : f32 to vector<32x128xf32>
    %20 = arith.addf %19, %18 : vector<32x128xf32>
    %21 = arith.mulf %10, %20 : vector<32x128xf32>
    %c0_10 = arith.constant 0 : index
    %c0_11 = arith.constant 0 : index
    %22 = vector.load %arg12[%c0_10, %c0_11] : memref<32x32xf32, #tpu.memory_space<vmem>>, vector<32x32xf32>
    %23 = arith.truncf %21 : vector<32x128xf32> to vector<32x128xbf16>
    %c0_12 = arith.constant 0 : index
    %c0_13 = arith.constant 0 : index
    %24 = vector.load %arg8[%c0_12, %c0_13] : memref<128x32xbf16, #tpu.memory_space<vmem>>, vector<128x32xbf16>
    %cst_14 = arith.constant dense<0.000000e+00> : vector<32x32xf32>
    %25 = tpu.matmul %23, %24, %cst_14 {dimension_numbers = #tpu.dot_dimension_numbers<[1], [0], [0], [1], [0, 0, 1, 1], [], []>} : vector<32x128xbf16>, vector<128x32xbf16>, vector<32x32xf32> -> vector<32x32xf32>
    %26 = arith.addf %22, %25 : vector<32x32xf32>
    %c0_15 = arith.constant 0 : index
    %c0_16 = arith.constant 0 : index
    %27 = vector.load %arg12[%c0_15, %c0_16] : memref<32x32xf32, #tpu.memory_space<vmem>>, vector<32x32xf32>
    tpu.vector_store %arg12[%c0_15, %c0_16], %26 {strides = array<i32>} : memref<32x32xf32, #tpu.memory_space<vmem>>, vector<32x32xf32>,
    %c0_i32_17 = arith.constant 0 : i32
    %28 = arith.cmpi eq, %arg1, %c0_i32_17 : i32
    %29 = arith.extui %28 : i1 to i32
    %c0_i32_18 = arith.constant 0 : i32
    %30 = arith.cmpi ne, %29, %c0_i32_18 : i32
    scf.if %30 {
      %c0_19 = arith.constant 0 : index
      %c0_20 = arith.constant 0 : index
      %31 = vector.load %arg12[%c0_19, %c0_20] : memref<32x32xf32, #tpu.memory_space<vmem>>, vector<32x32xf32>
      %32 = arith.truncf %31 : vector<32x32xf32> to vector<32x32xbf16>
      %c0_21 = arith.constant 0 : index
      %c0_22 = arith.constant 0 : index
      %33 = vector.load %arg10[%c0_21, %c0_22] : memref<32x32xbf16, #tpu.memory_space<vmem>>, vector<32x32xbf16>
      tpu.vector_store %arg10[%c0_21, %c0_22], %32 {strides = array<i32>} : memref<32x32xbf16, #tpu.memory_space<vmem>>, vector<32x32xbf16>,
    } else {
    }
    return
  }
  func.func @transform_0(%arg0: i32, %arg1: i32) -> (i32, i32) {
    %c0_i32 = arith.constant 0 : i32
    %c0_i32_0 = arith.constant 0 : i32
    return %arg0, %c0_i32 : i32, i32
  }
  func.func @transform_1(%arg0: i32, %arg1: i32) -> (i32, i32) {
    %c0_i32 = arith.constant 0 : i32
    %c0_i32_0 = arith.constant 0 : i32
    return %arg0, %c0_i32 : i32, i32
  }
  func.func @transform_2(%arg0: i32, %arg1: i32) -> (i32, i32) {
    %c0_i32 = arith.constant 0 : i32
    %c0_i32_0 = arith.constant 0 : i32
    %c0_i32_1 = arith.constant 0 : i32
    return %c0_i32, %c0_i32_0 : i32, i32
  }
  func.func @transform_3(%arg0: i32, %arg1: i32) -> (i32, i32) {
    %c0_i32 = arith.constant 0 : i32
    %c0_i32_0 = arith.constant 0 : i32
    %c0_i32_1 = arith.constant 0 : i32
    return %c0_i32, %c0_i32_0 : i32, i32
  }
  func.func @transform_4(%arg0: i32, %arg1: i32) -> (i32, i32) {
    %c0_i32 = arith.constant 0 : i32
    %c0_i32_0 = arith.constant 0 : i32
    return %c0_i32, %arg1 : i32, i32
  }
  func.func @transform_5(%arg0: i32, %arg1: i32) -> (i32, i32) {
    %c0_i32 = arith.constant 0 : i32
    %c0_i32_0 = arith.constant 0 : i32
    return %c0_i32, %arg1 : i32, i32
  }
  func.func @transform_6(%arg0: i32, %arg1: i32) -> (i32, i32) {
    %c0_i32 = arith.constant 0 : i32
    %c0_i32_0 = arith.constant 0 : i32
    return %arg1, %c0_i32 : i32, i32
  }
  func.func @transform_7(%arg0: i32, %arg1: i32) -> (i32, i32) {
    %c0_i32 = arith.constant 0 : i32
    %c0_i32_0 = arith.constant 0 : i32
    %c0_i32_1 = arith.constant 0 : i32
    return %c0_i32, %c0_i32_0 : i32, i32
  }
  func.func @transform_8(%arg0: i32, %arg1: i32) -> (i32, i32) {
    %c0_i32 = arith.constant 0 : i32
    %c0_i32_0 = arith.constant 0 : i32
    return %arg0, %c0_i32 : i32, i32
  }
}

module attributes {stable_mosaic.version = 11 : i64} {
  func.func @_norm_pool_kernel(%arg0: memref<2x16x32xbf16, #tpu.memory_space<vmem>>, %arg1: memref<1x32xf32, #tpu.memory_space<vmem>>, %arg2: memref<1x32xf32, #tpu.memory_space<vmem>>, %arg3: memref<2x32xf32, #tpu.memory_space<vmem>>) attributes {dimension_semantics = [], scalar_prefetch = 0 : i64, scratch_operands = 0 : i64, tpu.core_type = #tpu.core_type<tc>} {
    %c0 = arith.constant 0 : index
    %c0_0 = arith.constant 0 : index
    %c0_1 = arith.constant 0 : index
    %0 = vector.load %arg0[%c0, %c0_0, %c0_1] : memref<2x16x32xbf16, #tpu.memory_space<vmem>>, vector<2x16x32xbf16>
    %1 = arith.extf %0 : vector<2x16x32xbf16> to vector<2x16x32xf32>
    %c0_2 = arith.constant 0 : index
    %c0_3 = arith.constant 0 : index
    %2 = vector.load %arg1[%c0_2, %c0_3] : memref<1x32xf32, #tpu.memory_space<vmem>>, vector<1x32xf32>
    %c0_4 = arith.constant 0 : index
    %c0_5 = arith.constant 0 : index
    %3 = vector.load %arg2[%c0_4, %c0_5] : memref<1x32xf32, #tpu.memory_space<vmem>>, vector<1x32xf32>
    %cst = arith.constant dense<0.000000e+00> : vector<2x16xf32>
    %4 = vector.multi_reduction <add>, %1, %cst [2] : vector<2x16x32xf32> to vector<2x16xf32>
    %5 = vector.shape_cast %4 : vector<2x16xf32> to vector<2x16x1xf32>
    %cst_6 = arith.constant 3.200000e+01 : f32
    %6 = vector.broadcast %cst_6 : f32 to vector<2x16x1xf32>
    %7 = arith.divf %5, %6 : vector<2x16x1xf32>
    %8 = vector.broadcast %7 : vector<2x16x1xf32> to vector<2x16x32xf32>
    %9 = arith.subf %1, %8 : vector<2x16x32xf32>
    %10 = arith.mulf %9, %9 : vector<2x16x32xf32>
    %cst_7 = arith.constant dense<0.000000e+00> : vector<2x16xf32>
    %11 = vector.multi_reduction <add>, %10, %cst_7 [2] : vector<2x16x32xf32> to vector<2x16xf32>
    %12 = vector.shape_cast %11 : vector<2x16xf32> to vector<2x16x1xf32>
    %cst_8 = arith.constant 3.200000e+01 : f32
    %13 = vector.broadcast %cst_8 : f32 to vector<2x16x1xf32>
    %14 = arith.divf %12, %13 : vector<2x16x1xf32>
    %cst_9 = arith.constant 9.99999974E-6 : f32
    %15 = vector.broadcast %cst_9 : f32 to vector<2x16x1xf32>
    %16 = arith.addf %14, %15 : vector<2x16x1xf32>
    %17 = math.rsqrt %16 : vector<2x16x1xf32>
    %18 = vector.broadcast %17 : vector<2x16x1xf32> to vector<2x16x32xf32>
    %19 = arith.mulf %9, %18 : vector<2x16x32xf32>
    %20 = vector.shape_cast %2 : vector<1x32xf32> to vector<1x1x32xf32>
    %21 = vector.broadcast %20 : vector<1x1x32xf32> to vector<2x16x32xf32>
    %22 = arith.mulf %19, %21 : vector<2x16x32xf32>
    %23 = vector.shape_cast %3 : vector<1x32xf32> to vector<1x1x32xf32>
    %24 = vector.broadcast %23 : vector<1x1x32xf32> to vector<2x16x32xf32>
    %25 = arith.addf %22, %24 : vector<2x16x32xf32>
    %cst_10 = arith.constant dense<0.000000e+00> : vector<2x32xf32>
    %26 = vector.multi_reduction <add>, %25, %cst_10 [1] : vector<2x16x32xf32> to vector<2x32xf32>
    %cst_11 = arith.constant 1.600000e+01 : f32
    %27 = vector.broadcast %cst_11 : f32 to vector<2x32xf32>
    %28 = arith.divf %26, %27 : vector<2x32xf32>
    %c0_12 = arith.constant 0 : index
    %c0_13 = arith.constant 0 : index
    %29 = vector.load %arg3[%c0_12, %c0_13] : memref<2x32xf32, #tpu.memory_space<vmem>>, vector<2x32xf32>
    tpu.vector_store %arg3[%c0_12, %c0_13], %28 {strides = array<i32>} : memref<2x32xf32, #tpu.memory_space<vmem>>, vector<2x32xf32>,
    return
  }
}

</mosaic_0001>

<llo_original>
// kernel: _lambda_.11
$region0: #{_lambda_.11}
  #allocation0 [shape = 'u32[]', space=smem, size = 0x4, offset = 0x4, fixed_abs, tag = 'smem constant byte address 0x4 - core index']
  #allocation1 [shape = 'u32[144,128]{1,0:T(1,128)}', space=vmem, size = 0x12000, scoped, tag = 'internal scratch']
  %s0 = inlined_call_operand.vmem [shape: f32[128,48], index: 0, kind: input, shape index: {}]
  %s1 = inlined_call_operand.vmem [shape: bf16[48,16], index: 1, kind: input, shape index: {}]
  %s2 = inlined_call_operand.vmem [shape: f32[1,16], index: 2, kind: input, shape index: {}]
  %s3 = inlined_call_operand.vmem [shape: f32[1,16], index: 3, kind: input, shape index: {}]
  %s4 = inlined_call_operand.vmem [shape: f32[1,16], index: 4, kind: input, shape index: {}]
  %s5 = inlined_call_operand.vmem [shape: bf16[128,16], index: 5, kind: output, shape index: {}]
  %s6 = sld [smem:[#allocation0]]
  $region30: #{_lambda_.11} parent=0
    _
  %s8 = ssub.s32 1, %s6
  %s9 = scalar_select 0, %s8, %s6
  // Predicated region
  $region2: #{_lambda_.11} parent=0 // pred_check
    _
  $region3: #{_lambda_.11} parent=0 // pred_check_branch
    %11 = sbr.rel (0) target = $region5
  $region4: #{_lambda_.11} parent=0 // pred_region
    _
  $region5: #{_lambda_.11} parent=0 // pred_fallthru
    _
  // Predicated region
  $region6: #{_lambda_.11} parent=0 // pred_check
    _
  $region7: #{_lambda_.11} parent=0 // pred_check_branch
    %13 = sbr.rel (0) target = $region9
  $region8: #{_lambda_.11} parent=0 // pred_region
    _
  $region9: #{_lambda_.11} parent=0 // pred_fallthru
    _
  // Predicated region
  $region10: #{_lambda_.11} parent=0 // pred_check
    _
  $region11: #{_lambda_.11} parent=0 // pred_check_branch
    %15 = sbr.rel (0) target = $region13
  $region12: #{_lambda_.11} parent=0 // pred_region
    _
  $region13: #{_lambda_.11} parent=0 // pred_fallthru
    _
  // Predicated region
  $region14: #{_lambda_.11} parent=0 // pred_check
    _
  $region15: #{_lambda_.11} parent=0 // pred_check_branch
    %17 = sbr.rel (0) target = $region17
  $region16: #{_lambda_.11} parent=0 // pred_region
    _
  $region17: #{_lambda_.11} parent=0 // pred_fallthru
    _
  // Predicated region
  $region18: #{_lambda_.11} parent=0 // pred_check
    _
  $region19: #{_lambda_.11} parent=0 // pred_check_branch
    %19 = sbr.rel (0) target = $region21
  $region20: #{_lambda_.11} parent=0 // pred_region
    _
  $region21: #{_lambda_.11} parent=0 // pred_fallthru
    _
  %v21 = vld [vmem:[%s0] sm:$0xff]
  %v22 = vld [vmem:[%s0 + $0x8] sm:$0xff]
  %v23 = vld [vmem:[%s0 + $0x10] sm:$0xff]
  %v24 = vld [vmem:[%s0 + $0x18] sm:$0xff]
  %v25 = vld [vmem:[%s0 + $0x20] sm:$0xff]
  %v26 = vld [vmem:[%s0 + $0x28] sm:$0xff]
  %v27 = vld [vmem:[%s0 + $0x30] sm:$0xff]
  %v28 = vld [vmem:[%s0 + $0x38] sm:$0xff]
  %v29 = vld [vmem:[%s0 + $0x40] sm:$0xff]
  %v30 = vld [vmem:[%s0 + $0x48] sm:$0xff]
  %v31 = vld [vmem:[%s0 + $0x50] sm:$0xff]
  %v32 = vld [vmem:[%s0 + $0x58] sm:$0xff]
  %v33 = vld [vmem:[%s0 + $0x60] sm:$0xff]
  %v34 = vld [vmem:[%s0 + $0x68] sm:$0xff]
  %v35 = vld [vmem:[%s0 + $0x70] sm:$0xff]
  %v36 = vld [vmem:[%s0 + $0x78] sm:$0xff]
  %v37 = vpack.c.bf16 %v22, %v21
  %v38 = vpack.c.bf16 %v24, %v23
  %v39 = vpack.c.bf16 %v26, %v25
  %v40 = vpack.c.bf16 %v28, %v27
  %v41 = vpack.c.bf16 %v30, %v29
  %v42 = vpack.c.bf16 %v32, %v31
  %v43 = vpack.c.bf16 %v34, %v33
  %v44 = vpack.c.bf16 %v36, %v35
  %v45 = vld [vmem:[%s1] sm:$0xf]
  %v46 = vld [vmem:[%s1 + $0x4] sm:$0xf]
  %v47 = vld [vmem:[%s1 + $0x8] sm:$0xf]
  %v48 = vld [vmem:[%s1 + $0xc] sm:$0xf]
  %v49 = vld [vmem:[%s1 + $0x10] sm:$0xf]
  %v50 = vld [vmem:[%s1 + $0x14] sm:$0xf]
  %v51 = vld [vmem:[%s2] sm:$0x1]
  %v53 = vlaneseq
  %v54 = vshrl.u32 %v53, 7
  %v55 = vsub.s32 0, %v54
  %v56 = vrot.slane %v51, %v55
  %v64 = vunpack.c.l.b16 %v45
  %v65 = vunpack.c.l.b16 %v46
  %v66 = vunpack.c.l.b16 %v47
  %v67 = vunpack.c.l.b16 %v48
  %v68 = vunpack.c.l.b16 %v49
  %v69 = vunpack.c.l.b16 %v50
  %v70 = vpack.c.b16 %v65, %v64
  %v71 = vpack.c.b16 %v67, %v66
  %v72 = vpack.c.b16 %v69, %v68
  %vm76 = vcmask 392192
  %v78 = vsel %vm76, %v37, 0
  %v81 = vsel %vm76, %v38, 0
  %v84 = vsel %vm76, %v39, 0
  %v87 = vsel %vm76, %v40, 0
  %v90 = vsel %vm76, %v41, 0
  %v93 = vsel %vm76, %v42, 0
  %v96 = vsel %vm76, %v43, 0
  %v99 = vsel %vm76, %v44, 0
  %101 = vmatprep.subr.bf16.mxu0 0
  %102 = vmatpush1.bf16.msra.mxu0 0
  %103 = vmatprep.subr.bf16.mxu0 0
  %104 = vmatpush1.bf16.msra.mxu0 0
  %105 = vmatprep.subr.bf16.mxu0 0
  %106 = vmatpush1.bf16.msra.mxu0 0
  %107 = vmatprep.subr.bf16.mxu0 0
  %108 = vmatpush1.bf16.msra.mxu0 0
  %109 = vmatprep.subr.bf16.mxu0 0
  %110 = vmatpush1.bf16.msra.mxu0 0
  %111 = vmatprep.subr.bf16.mxu0 0
  %112 = vmatpush1.bf16.msra.mxu0 %v72
  %113 = vmatprep.subr.bf16.mxu0 0
  %114 = vmatpush1.bf16.msra.mxu0 %v71
  %115 = vmatprep.subr.bf16.mxu0 0
  %116 = vmatpush1.bf16.msra.mxu0 %v70
  %117 = vmatprep.subr.bf16.mxu0 0
  %118 = vmatpush2.bf16.msra.mxu0 0
  %119 = vmatprep.subr.bf16.mxu0 0
  %120 = vmatpush2.bf16.msra.mxu0 0
  %121 = vmatprep.subr.bf16.mxu0 0
  %122 = vmatpush2.bf16.msra.mxu0 0
  %123 = vmatprep.subr.bf16.mxu0 0
  %124 = vmatpush2.bf16.msra.mxu0 0
  %125 = vmatprep.subr.bf16.mxu0 0
  %126 = vmatpush2.bf16.msra.mxu0 0
  %127 = vmatprep.subr.bf16.mxu0 0
  %128 = vmatpush2.bf16.msra.mxu0 0
  %129 = vmatprep.subr.bf16.mxu0 0
  %130 = vmatpush2.bf16.msra.mxu0 0
  %131 = vmatprep.subr.bf16.mxu0 0
  %132 = vmatpush2.bf16.msra.mxu0 0
  %133 = vmatprep.mubr.bf16.mxu0 0
  %134 = vmatmul.mubr.bf16.gmra.mxu0 %v78
  %v135 = vpop.f32.mrf.mxu0
  %v136 = vadd.f32 %v56, %v135
  %v137 = vpop.f32.mrf.mxu0
  %v138 = vpop.f32.mrf.mxu0
  %v139 = vadd.f32 %v56, %v138
  %v140 = vpop.f32.mrf.mxu0
  %141 = vmatprep.mubr.bf16.mxu0 0
  %142 = vmatmul.mubr.bf16.gmra.mxu0 %v81
  %v143 = vpop.f32.mrf.mxu0
  %v144 = vadd.f32 %v56, %v143
  %v145 = vpop.f32.mrf.mxu0
  %v146 = vpop.f32.mrf.mxu0
  %v147 = vadd.f32 %v56, %v146
  %v148 = vpop.f32.mrf.mxu0
  %149 = vmatprep.mubr.bf16.mxu0 0
  %150 = vmatmul.mubr.bf16.gmra.mxu0 %v84
  %v151 = vpop.f32.mrf.mxu0
  %v152 = vadd.f32 %v56, %v151
  %v153 = vpop.f32.mrf.mxu0
  %v154 = vpop.f32.mrf.mxu0
  %v155 = vadd.f32 %v56, %v154
  %v156 = vpop.f32.mrf.mxu0
  %157 = vmatprep.mubr.bf16.mxu0 0
  %158 = vmatmul.mubr.bf16.gmra.mxu0 %v87
  %v159 = vpop.f32.mrf.mxu0
  %v160 = vadd.f32 %v56, %v159
  %v161 = vpop.f32.mrf.mxu0
  %v162 = vpop.f32.mrf.mxu0
  %v163 = vadd.f32 %v56, %v162
  %v164 = vpop.f32.mrf.mxu0
  %165 = vmatprep.mubr.bf16.mxu0 0
  %166 = vmatmul.mubr.bf16.gmra.mxu0 %v90
  %v167 = vpop.f32.mrf.mxu0
  %v168 = vadd.f32 %v56, %v167
  %v169 = vpop.f32.mrf.mxu0
  %v170 = vpop.f32.mrf.mxu0
  %v171 = vadd.f32 %v56, %v170
  %v172 = vpop.f32.mrf.mxu0
  %173 = vmatprep.mubr.bf16.mxu0 0
  %174 = vmatmul.mubr.bf16.gmra.mxu0 %v93
  %v175 = vpop.f32.mrf.mxu0
  %v176 = vadd.f32 %v56, %v175
  %v177 = vpop.f32.mrf.mxu0
  %v178 = vpop.f32.mrf.mxu0
  %v179 = vadd.f32 %v56, %v178
  %v180 = vpop.f32.mrf.mxu0
  %181 = vmatprep.mubr.bf16.mxu0 0
  %182 = vmatmul.mubr.bf16.gmra.mxu0 %v96
  %v183 = vpop.f32.mrf.mxu0
  %v184 = vadd.f32 %v56, %v183
  %v185 = vpop.f32.mrf.mxu0
  %v186 = vpop.f32.mrf.mxu0
  %v187 = vadd.f32 %v56, %v186
  %v188 = vpop.f32.mrf.mxu0
  %189 = vmatprep.mubr.bf16.mxu0 0
  %190 = vmatmul.mubr.bf16.gmra.mxu0 %v99
  %v191 = vpop.f32.mrf.mxu0
  %v192 = vadd.f32 %v56, %v191
  %v193 = vpop.f32.mrf.mxu0
  %v194 = vpop.f32.mrf.mxu0
  %v195 = vadd.f32 %v56, %v194
  %v196 = vpop.f32.mrf.mxu0
  %197 = vdwg.mxu0
  %v198 = vld [vmem:[%s3] sm:$0x1]
  %v199 = vld [vmem:[%s4] sm:$0x1]
  %vm200 = vcmask 130048
  %v201 = vsel %vm200, %v136, 0.0
  %202 = vadd.xlane.f32.xlu0 %v201
  %v203 = vpop.xlane.xlu0 %202
  %v204 = vsel %vm200, %v139, 0.0
  %205 = vadd.xlane.f32.xlu0 %v204
  %v206 = vpop.xlane.xlu0 %205
  %v207 = vsel %vm200, %v144, 0.0
  %208 = vadd.xlane.f32.xlu0 %v207
  %v209 = vpop.xlane.xlu0 %208
  %v210 = vsel %vm200, %v147, 0.0
  %211 = vadd.xlane.f32.xlu0 %v210
  %v212 = vpop.xlane.xlu0 %211
  %v213 = vsel %vm200, %v152, 0.0
  %214 = vadd.xlane.f32.xlu0 %v213
  %v215 = vpop.xlane.xlu0 %214
  %v216 = vsel %vm200, %v155, 0.0
  %217 = vadd.xlane.f32.xlu0 %v216
  %v218 = vpop.xlane.xlu0 %217
  %v219 = vsel %vm200, %v160, 0.0
  %220 = vadd.xlane.f32.xlu0 %v219
  %v221 = vpop.xlane.xlu0 %220
  %v222 = vsel %vm200, %v163, 0.0
  %223 = vadd.xlane.f32.xlu0 %v222
  %v224 = vpop.xlane.xlu0 %223
  %v225 = vsel %vm200, %v168, 0.0
  %226 = vadd.xlane.f32.xlu0 %v225
  %v227 = vpop.xlane.xlu0 %226
  %v228 = vsel %vm200, %v171, 0.0
  %229 = vadd.xlane.f32.xlu0 %v228
  %v230 = vpop.xlane.xlu0 %229
  %v231 = vsel %vm200, %v176, 0.0
  %232 = vadd.xlane.f32.xlu0 %v231
  %v233 = vpop.xlane.xlu0 %232
  %v234 = vsel %vm200, %v179, 0.0
  %235 = vadd.xlane.f32.xlu0 %v234
  %v236 = vpop.xlane.xlu0 %235
  %v237 = vsel %vm200, %v184, 0.0
  %238 = vadd.xlane.f32.xlu0 %v237
  %v239 = vpop.xlane.xlu0 %238
  %v240 = vsel %vm200, %v187, 0.0
  %241 = vadd.xlane.f32.xlu0 %v240
  %v242 = vpop.xlane.xlu0 %241
  %v243 = vsel %vm200, %v192, 0.0
  %244 = vadd.xlane.f32.xlu0 %v243
  %v245 = vpop.xlane.xlu0 %244
  %v246 = vsel %vm200, %v195, 0.0
  %247 = vadd.xlane.f32.xlu0 %v246
  %v248 = vpop.xlane.xlu0 %247
  %v249 = vrcp.pop 16.0
  %v250 = vmul.f32 %v203, %v249
  %v251 = vmul.f32 %v206, %v249
  %v252 = vmul.f32 %v209, %v249
  %v253 = vmul.f32 %v212, %v249
  %v254 = vmul.f32 %v215, %v249
  %v255 = vmul.f32 %v218, %v249
  %v256 = vmul.f32 %v221, %v249
  %v257 = vmul.f32 %v224, %v249
  %v258 = vmul.f32 %v227, %v249
  %v259 = vmul.f32 %v230, %v249
  %v260 = vmul.f32 %v233, %v249
  %v261 = vmul.f32 %v236, %v249
  %v262 = vmul.f32 %v239, %v249
  %v263 = vmul.f32 %v242, %v249
  %v264 = vmul.f32 %v245, %v249
  %v265 = vmul.f32 %v248, %v249
  %v266 = vsub.f32 %v136, %v250
  %v267 = vsub.f32 %v139, %v251
  %v268 = vsub.f32 %v144, %v252
  %v269 = vsub.f32 %v147, %v253
  %v270 = vsub.f32 %v152, %v254
  %v271 = vsub.f32 %v155, %v255
  %v272 = vsub.f32 %v160, %v256
  %v273 = vsub.f32 %v163, %v257
  %v274 = vsub.f32 %v168, %v258
  %v275 = vsub.f32 %v171, %v259
  %v276 = vsub.f32 %v176, %v260
  %v277 = vsub.f32 %v179, %v261
  %v278 = vsub.f32 %v184, %v262
  %v279 = vsub.f32 %v187, %v263
  %v280 = vsub.f32 %v192, %v264
  %v281 = vsub.f32 %v195, %v265
  %v282 = vmul.f32 %v266, %v266
  %v283 = vmul.f32 %v267, %v267
  %v284 = vmul.f32 %v268, %v268
  %v285 = vmul.f32 %v269, %v269
  %v286 = vmul.f32 %v270, %v270
  %v287 = vmul.f32 %v271, %v271
  %v288 = vmul.f32 %v272, %v272
  %v289 = vmul.f32 %v273, %v273
  %v290 = vmul.f32 %v274, %v274
  %v291 = vmul.f32 %v275, %v275
  %v292 = vmul.f32 %v276, %v276
  %v293 = vmul.f32 %v277, %v277
  %v294 = vmul.f32 %v278, %v278
  %v295 = vmul.f32 %v279, %v279
  %v296 = vmul.f32 %v280, %v280
  %v297 = vmul.f32 %v281, %v281
  %v298 = vsel %vm200, %v282, 0.0
  %299 = vadd.xlane.f32.xlu0 %v298
  %v300 = vpop.xlane.xlu0 %299
  %v301 = vsel %vm200, %v283, 0.0
  %302 = vadd.xlane.f32.xlu0 %v301
  %v303 = vpop.xlane.xlu0 %302
  %v304 = vsel %vm200, %v284, 0.0
  %305 = vadd.xlane.f32.xlu0 %v304
  %v306 = vpop.xlane.xlu0 %305
  %v307 = vsel %vm200, %v285, 0.0
  %308 = vadd.xlane.f32.xlu0 %v307
  %v309 = vpop.xlane.xlu0 %308
  %v310 = vsel %vm200, %v286, 0.0
  %311 = vadd.xlane.f32.xlu0 %v310
  %v312 = vpop.xlane.xlu0 %311
  %v313 = vsel %vm200, %v287, 0.0
  %314 = vadd.xlane.f32.xlu0 %v313
  %v315 = vpop.xlane.xlu0 %314
  %v316 = vsel %vm200, %v288, 0.0
  %317 = vadd.xlane.f32.xlu0 %v316
  %v318 = vpop.xlane.xlu0 %317
  %v319 = vsel %vm200, %v289, 0.0
  %320 = vadd.xlane.f32.xlu0 %v319
  %v321 = vpop.xlane.xlu0 %320
  %v322 = vsel %vm200, %v290, 0.0
  %323 = vadd.xlane.f32.xlu0 %v322
  %v324 = vpop.xlane.xlu0 %323
  %v325 = vsel %vm200, %v291, 0.0
  %326 = vadd.xlane.f32.xlu0 %v325
  %v327 = vpop.xlane.xlu0 %326
  %v328 = vsel %vm200, %v292, 0.0
  %329 = vadd.xlane.f32.xlu0 %v328
  %v330 = vpop.xlane.xlu0 %329
  %v331 = vsel %vm200, %v293, 0.0
  %332 = vadd.xlane.f32.xlu0 %v331
  %v333 = vpop.xlane.xlu0 %332
  %v334 = vsel %vm200, %v294, 0.0
  %335 = vadd.xlane.f32.xlu0 %v334
  %v336 = vpop.xlane.xlu0 %335
  %v337 = vsel %vm200, %v295, 0.0
  %338 = vadd.xlane.f32.xlu0 %v337
  %v339 = vpop.xlane.xlu0 %338
  %v340 = vsel %vm200, %v296, 0.0
  %341 = vadd.xlane.f32.xlu0 %v340
  %v342 = vpop.xlane.xlu0 %341
  %v343 = vsel %vm200, %v297, 0.0
  %344 = vadd.xlane.f32.xlu0 %v343
  %v345 = vpop.xlane.xlu0 %344
  %v346 = vmul.f32 %v300, %v249
  %v347 = vmul.f32 %v303, %v249
  %v348 = vmul.f32 %v306, %v249
  %v349 = vmul.f32 %v309, %v249
  %v350 = vmul.f32 %v312, %v249
  %v351 = vmul.f32 %v315, %v249
  %v352 = vmul.f32 %v318, %v249
  %v353 = vmul.f32 %v321, %v249
  %v354 = vmul.f32 %v324, %v249
  %v355 = vmul.f32 %v327, %v249
  %v356 = vmul.f32 %v330, %v249
  %v357 = vmul.f32 %v333, %v249
  %v358 = vmul.f32 %v336, %v249
  %v359 = vmul.f32 %v339, %v249
  %v360 = vmul.f32 %v342, %v249
  %v361 = vmul.f32 %v345, %v249
  %v362 = vadd.f32 %v346, 1e-05
  %v363 = vadd.f32 %v347, 1e-05
  %v364 = vadd.f32 %v348, 1e-05
  %v365 = vadd.f32 %v349, 1e-05
  %v366 = vadd.f32 %v350, 1e-05
  %v367 = vadd.f32 %v351, 1e-05
  %v368 = vadd.f32 %v352, 1e-05
  %v369 = vadd.f32 %v353, 1e-05
  %v370 = vadd.f32 %v354, 1e-05
  %v371 = vadd.f32 %v355, 1e-05
  %v372 = vadd.f32 %v356, 1e-05
  %v373 = vadd.f32 %v357, 1e-05
  %v374 = vadd.f32 %v358, 1e-05
  %v375 = vadd.f32 %v359, 1e-05
  %v376 = vadd.f32 %v360, 1e-05
  %v377 = vadd.f32 %v361, 1e-05
  %v378 = vrsqrt.pop %v362
  %v379 = vrsqrt.pop %v363
  %v380 = vrsqrt.pop %v364
  %v381 = vrsqrt.pop %v365
  %v382 = vrsqrt.pop %v366
  %v383 = vrsqrt.pop %v367
  %v384 = vrsqrt.pop %v368
  %v385 = vrsqrt.pop %v369
  %v386 = vrsqrt.pop %v370
  %v387 = vrsqrt.pop %v371
  %v388 = vrsqrt.pop %v372
  %v389 = vrsqrt.pop %v373
  %v390 = vrsqrt.pop %v374
  %v391 = vrsqrt.pop %v375
  %v392 = vrsqrt.pop %v376
  %v393 = vrsqrt.pop %v377
  %v394 = vmul.f32 %v266, %v378
  %v395 = vmul.f32 %v267, %v379
  %v396 = vmul.f32 %v268, %v380
  %v397 = vmul.f32 %v269, %v381
  %v398 = vmul.f32 %v270, %v382
  %v399 = vmul.f32 %v271, %v383
  %v400 = vmul.f32 %v272, %v384
  %v401 = vmul.f32 %v273, %v385
  %v402 = vmul.f32 %v274, %v386
  %v403 = vmul.f32 %v275, %v387
  %v404 = vmul.f32 %v276, %v388
  %v405 = vmul.f32 %v277, %v389
  %v406 = vmul.f32 %v278, %v390
  %v407 = vmul.f32 %v279, %v391
  %v408 = vmul.f32 %v280, %v392
  %v409 = vmul.f32 %v281, %v393
  %v411 = vlaneseq
  %v412 = vshrl.u32 %v411, 7
  %v413 = vsub.s32 0, %v412
  %v414 = vrot.slane %v198, %v413
  %v416 = vmul.f32 %v394, %v414
  %v417 = vmul.f32 %v395, %v414
  %v418 = vmul.f32 %v396, %v414
  %v419 = vmul.f32 %v397, %v414
  %v420 = vmul.f32 %v398, %v414
  %v421 = vmul.f32 %v399, %v414
  %v422 = vmul.f32 %v400, %v414
  %v423 = vmul.f32 %v401, %v414
  %v424 = vmul.f32 %v402, %v414
  %v425 = vmul.f32 %v403, %v414
  %v426 = vmul.f32 %v404, %v414
  %v427 = vmul.f32 %v405, %v414
  %v428 = vmul.f32 %v406, %v414
  %v429 = vmul.f32 %v407, %v414
  %v430 = vmul.f32 %v408, %v414
  %v431 = vmul.f32 %v409, %v414
  %v433 = vlaneseq
  %v434 = vshrl.u32 %v433, 7
  %v435 = vsub.s32 0, %v434
  %v436 = vrot.slane %v199, %v435
  %v438 = vadd.f32 %v416, %v436
  %v439 = vadd.f32 %v417, %v436
  %v440 = vadd.f32 %v418, %v436
  %v441 = vadd.f32 %v419, %v436
  %v442 = vadd.f32 %v420, %v436
  %v443 = vadd.f32 %v421, %v436
  %v444 = vadd.f32 %v422, %v436
  %v445 = vadd.f32 %v423, %v436
  %v446 = vadd.f32 %v424, %v436
  %v447 = vadd.f32 %v425, %v436
  %v448 = vadd.f32 %v426, %v436
  %v449 = vadd.f32 %v427, %v436
  %v450 = vadd.f32 %v428, %v436
  %v451 = vadd.f32 %v429, %v436
  %v452 = vadd.f32 %v430, %v436
  %v453 = vadd.f32 %v431, %v436
  %v454 = vpack.c.bf16 %v439, %v438
  %v455 = vpack.c.bf16 %v441, %v440
  %v456 = vpack.c.bf16 %v443, %v442
  %v457 = vpack.c.bf16 %v445, %v444
  %v458 = vpack.c.bf16 %v447, %v446
  %v459 = vpack.c.bf16 %v449, %v448
  %v460 = vpack.c.bf16 %v451, %v450
  %v461 = vpack.c.bf16 %v453, %v452
  %v470 = vunpack.c.l.b16 %v454
  %v471 = vunpack.c.h.b16 %v454
  %v472 = vunpack.c.l.b16 %v455
  %v473 = vunpack.c.h.b16 %v455
  %v474 = vunpack.c.l.b16 %v456
  %v475 = vunpack.c.h.b16 %v456
  %v476 = vunpack.c.l.b16 %v457
  %v477 = vunpack.c.h.b16 %v457
  %v478 = vunpack.c.l.b16 %v458
  %v479 = vunpack.c.h.b16 %v458
  %v480 = vunpack.c.l.b16 %v459
  %v481 = vunpack.c.h.b16 %v459
  %v482 = vunpack.c.l.b16 %v460
  %v483 = vunpack.c.h.b16 %v460
  %v484 = vunpack.c.l.b16 %v461
  %v485 = vunpack.c.h.b16 %v461
  %v486 = vpack.c.b16 %v470, %v470
  %v487 = vpack.c.b16 %v471, %v471
  %v488 = vpack.c.b16 %v472, %v472
  %v489 = vpack.c.b16 %v473, %v473
  %v490 = vpack.c.b16 %v474, %v474
  %v491 = vpack.c.b16 %v475, %v475
  %v492 = vpack.c.b16 %v476, %v476
  %v493 = vpack.c.b16 %v477, %v477
  %v494 = vpack.c.b16 %v478, %v478
  %v495 = vpack.c.b16 %v479, %v479
  %v496 = vpack.c.b16 %v480, %v480
  %v497 = vpack.c.b16 %v481, %v481
  %v498 = vpack.c.b16 %v482, %v482
  %v499 = vpack.c.b16 %v483, %v483
  %v500 = vpack.c.b16 %v484, %v484
  %v501 = vpack.c.b16 %v485, %v485
  %vm518 = vcmask 125952
  %519 = vst.msk [vmem:[%s5] sm:$0xf] %vm518, %v486
  %520 = vst.msk [vmem:[%s5 + $0x4] sm:$0xf] %vm518, %v487
  %521 = vst.msk [vmem:[%s5 + $0x8] sm:$0xf] %vm518, %v488
  %522 = vst.msk [vmem:[%s5 + $0xc] sm:$0xf] %vm518, %v489
  %523 = vst.msk [vmem:[%s5 + $0x10] sm:$0xf] %vm518, %v490
  %524 = vst.msk [vmem:[%s5 + $0x14] sm:$0xf] %vm518, %v491
  %525 = vst.msk [vmem:[%s5 + $0x18] sm:$0xf] %vm518, %v492
  %526 = vst.msk [vmem:[%s5 + $0x1c] sm:$0xf] %vm518, %v493
  %527 = vst.msk [vmem:[%s5 + $0x20] sm:$0xf] %vm518, %v494
  %528 = vst.msk [vmem:[%s5 + $0x24] sm:$0xf] %vm518, %v495
  %529 = vst.msk [vmem:[%s5 + $0x28] sm:$0xf] %vm518, %v496
  %530 = vst.msk [vmem:[%s5 + $0x2c] sm:$0xf] %vm518, %v497
  %531 = vst.msk [vmem:[%s5 + $0x30] sm:$0xf] %vm518, %v498
  %532 = vst.msk [vmem:[%s5 + $0x34] sm:$0xf] %vm518, %v499
  %533 = vst.msk [vmem:[%s5 + $0x38] sm:$0xf] %vm518, %v500
  %534 = vst.msk [vmem:[%s5 + $0x3c] sm:$0xf] %vm518, %v501
  // Predicated region
  $region22: #{_lambda_.11} parent=0 // pred_check
    _
  $region23: #{_lambda_.11} parent=0 // pred_check_branch
    %536 = sbr.rel (0) target = $region25
  $region24: #{_lambda_.11} parent=0 // pred_region
    _
  $region25: #{_lambda_.11} parent=0 // pred_fallthru
    _
  // Predicated region
  $region26: #{_lambda_.11} parent=0 // pred_check
    _
  $region27: #{_lambda_.11} parent=0 // pred_check_branch
    %538 = sbr.rel (0) target = $region29
  $region28: #{_lambda_.11} parent=0 // pred_region
    _
  $region29: #{_lambda_.11} parent=0 // pred_fallthru
    _

// kernel: _lambda_.12
$region0: #{_lambda_.12}
  #allocation0 [shape = 'u32[]', space=smem, size = 0x4, offset = 0x4, fixed_abs, tag = 'smem constant byte address 0x4 - core index']
  #allocation1 [shape = 'u32[144,128]{1,0:T(1,128)}', space=vmem, size = 0x12000, scoped, tag = 'internal scratch']
  %s0 = inlined_call_operand.vmem [shape: bf16[8,16,16], index: 0, kind: input, shape index: {}]
  %s1 = inlined_call_operand.vmem [shape: f32[1,16], index: 1, kind: input, shape index: {}]
  %s2 = inlined_call_operand.vmem [shape: f32[1,16], index: 2, kind: input, shape index: {}]
  %s3 = inlined_call_operand.vmem [shape: bf16[16,48], index: 3, kind: input, shape index: {}]
  %s4 = inlined_call_operand.vmem [shape: f32[1,48], index: 4, kind: input, shape index: {}]
  %s5 = inlined_call_operand.vmem [shape: bf16[16,16], index: 5, kind: input, shape index: {}]
  %s6 = inlined_call_operand.vmem [shape: f32[1,16], index: 6, kind: input, shape index: {}]
  %s7 = inlined_call_operand.vmem [shape: bf16[4,2,16,16], index: 7, kind: input, shape index: {}]
  %s8 = inlined_call_operand.vmem [shape: bf16[8,16,16], index: 8, kind: output, shape index: {}]
  %s9 = sld [smem:[#allocation0]]
  $region65: #{_lambda_.12} parent=0
    _
  %s11 = ssub.s32 1, %s9
  %s12 = scalar_select 0, %s11, %s9
  loop: start=0, step=1, limit=4
  $region2: #{_lambda_.12} parent=0 // loop_pre_header
    _
  $region3: #{_lambda_.12} parent=0 // loop_header
    %s14 = sphi 0, %s18
    %p15 = scmp.ge.s32.totalorder %s14, 4
    %s24 = sphi 0, %s26
    %s27 = sphi 0, %s24
    %s28 = sphi 0, %s27
    %s44 = sphi 0, %s28
    %s48 = sphi 0, %s48
    %s50 = sphi 0, %s48
    %s51 = sphi 0, %s50
    %s65 = sphi 0, %s51
    %s69 = sphi 0, %s69
    %s71 = sphi 0, %s69
    %s72 = sphi 0, %s71
    %s86 = sphi 0, %s72
    %s90 = sphi 0, %s90
    %s92 = sphi 0, %s90
    %s93 = sphi 0, %s92
    %s107 = sphi 0, %s93
    %s111 = sphi 0, %s111
    %s113 = sphi 0, %s111
    %s114 = sphi 0, %s113
    %s128 = sphi 0, %s114
    %s132 = sphi 0, %s132
    %s134 = sphi 0, %s132
    %s135 = sphi 0, %s134
    %s149 = sphi 0, %s135
    %s153 = sphi 0, %s153
    %s155 = sphi 0, %s153
    %s156 = sphi 0, %s155
    %s170 = sphi 0, %s156
    %s174 = sphi 0, %s174
    %s176 = sphi 0, %s174
    %s177 = sphi 0, %s176
    %s191 = sphi 0, %s177
    %s197 = sphi 0, %s199
    %s200 = sphi 0, %s197
    %s201 = sphi 0, %s200
    %s217 = sphi 0, %s201
  $region4: #{_lambda_.12} parent=0 // loop_header_branch
    %17 = sbr.rel (%p15) target = $region8
  $region5: #{_lambda_.12} parent=0 // loop_body
    %s19 = ssub.s32 %s14, 1
    %s20 = ssub.s32 %s14, 2
    %s21 = sadd.s32 %s14, 1
    %s22 = ssub.s32 %s14, %s21
    %p23 = scmp.eq.s32.totalorder %s22, 0
    %s25 = sadd.s32 %s24, 1
    %s26 = scalar_select %p23, %s24, %s25
    %p29 = pneg %p23
    %p30 = scmp.eq.s32.totalorder %s14, 1
    %p31 = por %p29, %p30
    %p32 = scmp.ne.s32.totalorder %s24, %s27
    %p33 = scmp.eq.s32.totalorder %s14, 0
    %p34 = por %p32, %p33
    %p35 = scmp.ne.s32.totalorder %s24, %s27
    %p36 = scmp.eq.s32.totalorder %s19, 1
    %p37 = por %p35, %p36
    %p38 = scmp.ne.s32.totalorder %s27, %s28
    %p39 = scmp.eq.s32.totalorder %s19, 0
    %p40 = por %p38, %p39
    %p41 = scmp.ne.s32.totalorder %s27, %s28
    %p42 = scmp.eq.s32.totalorder %s20, 1
    %p43 = por %p41, %p42
    %p45 = scmp.ne.s32.totalorder %s28, %s44
    %p46 = scmp.eq.s32.totalorder %s20, 0
    %p47 = por %p45, %p46
    %s49 = sadd.s32 %s48, 1
    %p52 = scmp.eq.s32.totalorder %s14, 1
    %p53 = scmp.ne.s32.totalorder %s48, %s50
    %p54 = scmp.eq.s32.totalorder %s14, 0
    %p55 = por %p53, %p54
    %p56 = scmp.ne.s32.totalorder %s48, %s50
    %p57 = scmp.eq.s32.totalorder %s19, 1
    %p58 = por %p56, %p57
    %p59 = scmp.ne.s32.totalorder %s50, %s51
    %p60 = scmp.eq.s32.totalorder %s19, 0
    %p61 = por %p59, %p60
    %p62 = scmp.ne.s32.totalorder %s50, %s51
    %p63 = scmp.eq.s32.totalorder %s20, 1
    %p64 = por %p62, %p63
    %p66 = scmp.ne.s32.totalorder %s51, %s65
    %p67 = scmp.eq.s32.totalorder %s20, 0
    %p68 = por %p66, %p67
    %s70 = sadd.s32 %s69, 1
    %p73 = scmp.eq.s32.totalorder %s14, 1
    %p74 = scmp.ne.s32.totalorder %s69, %s71
    %p75 = scmp.eq.s32.totalorder %s14, 0
    %p76 = por %p74, %p75
    %p77 = scmp.ne.s32.totalorder %s69, %s71
    %p78 = scmp.eq.s32.totalorder %s19, 1
    %p79 = por %p77, %p78
    %p80 = scmp.ne.s32.totalorder %s71, %s72
    %p81 = scmp.eq.s32.totalorder %s19, 0
    %p82 = por %p80, %p81
    %p83 = scmp.ne.s32.totalorder %s71, %s72
    %p84 = scmp.eq.s32.totalorder %s20, 1
    %p85 = por %p83, %p84
    %p87 = scmp.ne.s32.totalorder %s72, %s86
    %p88 = scmp.eq.s32.totalorder %s20, 0
    %p89 = por %p87, %p88
    %s91 = sadd.s32 %s90, 1
    %p94 = scmp.eq.s32.totalorder %s14, 1
    %p95 = scmp.ne.s32.totalorder %s90, %s92
    %p96 = scmp.eq.s32.totalorder %s14, 0
    %p97 = por %p95, %p96
    %p98 = scmp.ne.s32.totalorder %s90, %s92
    %p99 = scmp.eq.s32.totalorder %s19, 1
    %p100 = por %p98, %p99
    %p101 = scmp.ne.s32.totalorder %s92, %s93
    %p102 = scmp.eq.s32.totalorder %s19, 0
    %p103 = por %p101, %p102
    %p104 = scmp.ne.s32.totalorder %s92, %s93
    %p105 = scmp.eq.s32.totalorder %s20, 1
    %p106 = por %p104, %p105
    %p108 = scmp.ne.s32.totalorder %s93, %s107
    %p109 = scmp.eq.s32.totalorder %s20, 0
    %p110 = por %p108, %p109
    %s112 = sadd.s32 %s111, 1
    %p115 = scmp.eq.s32.totalorder %s14, 1
    %p116 = scmp.ne.s32.totalorder %s111, %s113
    %p117 = scmp.eq.s32.totalorder %s14, 0
    %p118 = por %p116, %p117
    %p119 = scmp.ne.s32.totalorder %s111, %s113
    %p120 = scmp.eq.s32.totalorder %s19, 1
    %p121 = por %p119, %p120
    %p122 = scmp.ne.s32.totalorder %s113, %s114
    %p123 = scmp.eq.s32.totalorder %s19, 0
    %p124 = por %p122, %p123
    %p125 = scmp.ne.s32.totalorder %s113, %s114
    %p126 = scmp.eq.s32.totalorder %s20, 1
    %p127 = por %p125, %p126
    %p129 = scmp.ne.s32.totalorder %s114, %s128
    %p130 = scmp.eq.s32.totalorder %s20, 0
    %p131 = por %p129, %p130
    %s133 = sadd.s32 %s132, 1
    %p136 = scmp.eq.s32.totalorder %s14, 1
    %p137 = scmp.ne.s32.totalorder %s132, %s134
    %p138 = scmp.eq.s32.totalorder %s14, 0
    %p139 = por %p137, %p138
    %p140 = scmp.ne.s32.totalorder %s132, %s134
    %p141 = scmp.eq.s32.totalorder %s19, 1
    %p142 = por %p140, %p141
    %p143 = scmp.ne.s32.totalorder %s134, %s135
    %p144 = scmp.eq.s32.totalorder %s19, 0
    %p145 = por %p143, %p144
    %p146 = scmp.ne.s32.totalorder %s134, %s135
    %p147 = scmp.eq.s32.totalorder %s20, 1
    %p148 = por %p146, %p147
    %p150 = scmp.ne.s32.totalorder %s135, %s149
    %p151 = scmp.eq.s32.totalorder %s20, 0
    %p152 = por %p150, %p151
    %s154 = sadd.s32 %s153, 1
    %p157 = scmp.eq.s32.totalorder %s14, 1
    %p158 = scmp.ne.s32.totalorder %s153, %s155
    %p159 = scmp.eq.s32.totalorder %s14, 0
    %p160 = por %p158, %p159
    %p161 = scmp.ne.s32.totalorder %s153, %s155
    %p162 = scmp.eq.s32.totalorder %s19, 1
    %p163 = por %p161, %p162
    %p164 = scmp.ne.s32.totalorder %s155, %s156
    %p165 = scmp.eq.s32.totalorder %s19, 0
    %p166 = por %p164, %p165
    %p167 = scmp.ne.s32.totalorder %s155, %s156
    %p168 = scmp.eq.s32.totalorder %s20, 1
    %p169 = por %p167, %p168
    %p171 = scmp.ne.s32.totalorder %s156, %s170
    %p172 = scmp.eq.s32.totalorder %s20, 0
    %p173 = por %p171, %p172
    %s175 = sadd.s32 %s174, 1
    %p178 = scmp.eq.s32.totalorder %s14, 1
    %p179 = scmp.ne.s32.totalorder %s174, %s176
    %p180 = scmp.eq.s32.totalorder %s14, 0
    %p181 = por %p179, %p180
    %p182 = scmp.ne.s32.totalorder %s174, %s176
    %p183 = scmp.eq.s32.totalorder %s19, 1
    %p184 = por %p182, %p183
    %p185 = scmp.ne.s32.totalorder %s176, %s177
    %p186 = scmp.eq.s32.totalorder %s19, 0
    %p187 = por %p185, %p186
    %p188 = scmp.ne.s32.totalorder %s176, %s177
    %p189 = scmp.eq.s32.totalorder %s20, 1
    %p190 = por %p188, %p189
    %p192 = scmp.ne.s32.totalorder %s177, %s191
    %p193 = scmp.eq.s32.totalorder %s20, 0
    %p194 = por %p192, %p193
    %s195 = ssub.s32 %s14, %s21
    %p196 = scmp.eq.s32.totalorder %s195, 0
    %s198 = sadd.s32 %s197, 1
    %s199 = scalar_select %p196, %s197, %s198
    %p202 = pneg %p196
    %p203 = scmp.eq.s32.totalorder %s14, 1
    %p204 = por %p202, %p203
    %p205 = scmp.ne.s32.totalorder %s197, %s200
    %p206 = scmp.eq.s32.totalorder %s14, 0
    %p207 = por %p205, %p206
    %p208 = scmp.ne.s32.totalorder %s197, %s200
    %p209 = scmp.eq.s32.totalorder %s19, 1
    %p210 = por %p208, %p209
    %p211 = scmp.ne.s32.totalorder %s200, %s201
    %p212 = scmp.eq.s32.totalorder %s19, 0
    %p213 = por %p211, %p212
    %p214 = scmp.ne.s32.totalorder %s200, %s201
    %p215 = scmp.eq.s32.totalorder %s20, 1
    %p216 = por %p214, %p215
    %p218 = scmp.ne.s32.totalorder %s201, %s217
    %p219 = scmp.eq.s32.totalorder %s20, 0
    %p220 = por %p218, %p219
    %p221 = scmp.le.s32.totalorder 1, %s14
    %p222 = scmp.lt.s32.totalorder %s14, 3
    %p223 = pnand %p221, %p222
    %p224 = pneg %p223
    // Predicated region
    $region9: #{_lambda_.12} parent=5 // pred_check
      _
    $region10: #{_lambda_.12} parent=5 // pred_check_branch
      %226 = sbr.rel (%p223) target = $region12
    $region11: #{_lambda_.12} parent=5 // pred_region
      %s227 = ssub.s32 %s14, 1
      // Predicated region
      $region13: #{_lambda_.12} parent=11 // pred_check
        %p228 = pneg %p61
      $region14: #{_lambda_.12} parent=11 // pred_check_branch
        %230 = sbr.rel (%p228) target = $region16
      $region15: #{_lambda_.12} parent=11 // pred_region
        _
      $region16: #{_lambda_.12} parent=11 // pred_fallthru
        _
      // Predicated region
      $region17: #{_lambda_.12} parent=11 // pred_check
        %p231 = pneg %p82
      $region18: #{_lambda_.12} parent=11 // pred_check_branch
        %233 = sbr.rel (%p231) target = $region20
      $region19: #{_lambda_.12} parent=11 // pred_region
        _
      $region20: #{_lambda_.12} parent=11 // pred_fallthru
        _
      // Predicated region
      $region21: #{_lambda_.12} parent=11 // pred_check
        %p234 = pneg %p103
      $region22: #{_lambda_.12} parent=11 // pred_check_branch
        %236 = sbr.rel (%p234) target = $region24
      $region23: #{_lambda_.12} parent=11 // pred_region
        _
      $region24: #{_lambda_.12} parent=11 // pred_fallthru
        _
      // Predicated region
      $region25: #{_lambda_.12} parent=11 // pred_check
        %p237 = pneg %p124
      $region26: #{_lambda_.12} parent=11 // pred_check_branch
        %239 = sbr.rel (%p237) target = $region28
      $region27: #{_lambda_.12} parent=11 // pred_region
        _
      $region28: #{_lambda_.12} parent=11 // pred_fallthru
        _
      // Predicated region
      $region29: #{_lambda_.12} parent=11 // pred_check
        %p240 = pneg %p145
      $region30: #{_lambda_.12} parent=11 // pred_check_branch
        %242 = sbr.rel (%p240) target = $region32
      $region31: #{_lambda_.12} parent=11 // pred_region
        _
      $region32: #{_lambda_.12} parent=11 // pred_fallthru
        _
      // Predicated region
      $region33: #{_lambda_.12} parent=11 // pred_check
        %p243 = pneg %p166
      $region34: #{_lambda_.12} parent=11 // pred_check_branch
        %245 = sbr.rel (%p243) target = $region36
      $region35: #{_lambda_.12} parent=11 // pred_region
        _
      $region36: #{_lambda_.12} parent=11 // pred_fallthru
        _
      // Predicated region
      $region37: #{_lambda_.12} parent=11 // pred_check
        %p246 = pneg %p187
      $region38: #{_lambda_.12} parent=11 // pred_check_branch
        %248 = sbr.rel (%p246) target = $region40
      $region39: #{_lambda_.12} parent=11 // pred_region
        _
      $region40: #{_lambda_.12} parent=11 // pred_fallthru
        _
    $region12: #{_lambda_.12} parent=5 // pred_fallthru
      _
    %p249 = scmp.lt.s32.totalorder %s14, 2
    // Predicated region
    $region41: #{_lambda_.12} parent=5 // pred_check
      %p250 = pneg %p249
    $region42: #{_lambda_.12} parent=5 // pred_check_branch
      %252 = sbr.rel (%p250) target = $region44
    $region43: #{_lambda_.12} parent=5 // pred_region
      // Predicated region
      $region45: #{_lambda_.12} parent=43 // pred_check
        %p253 = pneg %p34
      $region46: #{_lambda_.12} parent=43 // pred_check_branch
        %255 = sbr.rel (%p253) target = $region48
      $region47: #{_lambda_.12} parent=43 // pred_region
        %s256 = smul.u32 4, %s14
        %p257 = scmp.lt.s32.totalorder %s256, 7
        %s258 = scalar_select %p257, %s256, 7
        %s259 = smul.addr %s258, 2
        %s260 = smul.addr %s259, 4
        %s261 = scalar_lea.vmem %s0, %s260
        %s262 = smul.u32 4, %s14
      $region48: #{_lambda_.12} parent=43 // pred_fallthru
        _
    $region44: #{_lambda_.12} parent=5 // pred_fallthru
      _
    %p263 = scmp.le.s32.totalorder 1, %s14
    %p264 = scmp.lt.s32.totalorder %s14, 3
    %p265 = pnand %p263, %p264
    %p266 = pneg %p265
    // Predicated region
    $region49: #{_lambda_.12} parent=5 // pred_check
      _
    $region50: #{_lambda_.12} parent=5 // pred_check_branch
      %268 = sbr.rel (%p265) target = $region52
    $region51: #{_lambda_.12} parent=5 // pred_region
      %s269 = ssub.s32 %s14, 1
      %s270 = smul.u32 4, %s19
      %p271 = scmp.lt.s32.totalorder %s270, 7
      %s272 = scalar_select %p271, %s270, 7
      %s273 = smul.addr %s272, 2
      %s274 = smul.addr %s273, 4
      %s275 = scalar_lea.vmem %s0, %s274
      %p276 = pneg %p40
      %p277 = pneg %p37
      %p278 = pneg %p61
      %p279 = pneg %p58
      %p280 = pneg %p82
      %p281 = pneg %p79
      %p282 = pneg %p103
      %p283 = pneg %p100
      %p284 = pneg %p124
      %p285 = pneg %p121
      %p286 = pneg %p145
      %p287 = pneg %p142
      %p288 = pneg %p166
      %p289 = pneg %p163
      %p290 = pneg %p187
      %p291 = pneg %p184
      %p292 = pneg %p213
      %p293 = pneg %p210
      %s294 = smul.u32 4, %s19
      %p295 = scmp.lt.s32.totalorder %s294, 7
      %s296 = scalar_select %p295, %s294, 7
      %s297 = smul.addr %s296, 2
      %s298 = smul.addr %s297, 4
      %s299 = scalar_lea.vmem %s8, %s298
      %s300 = smul.u32 4, %s19
      %p301 = scmp.lt.s32.totalorder %s300, 7
      %s302 = scalar_select %p301, %s300, 7
      %s303 = smul.addr %s302, 2
      %s304 = smul.addr %s303, 4
      %s305 = scalar_lea.vmem %s0, %s304
      %s306 = smul.u32 4, %s19
      %s307 = smul.u32 4, %s19
      %p308 = scmp.lt.s32.totalorder %s307, 7
      %s309 = scalar_select %p308, %s307, 7
      %s310 = smul.addr %s309, 2
      %s311 = smul.addr %s310, 4
      %s312 = scalar_lea.vmem %s8, %s311
      %s313 = smul.u32 4, %s19
      %v315 = vld [vmem:[%s305] sm:$0xf]
      %v316 = vld [vmem:[%s305 + $0x4] sm:$0xf]
      %v317 = vld [vmem:[%s305 + $0x8] sm:$0xf]
      %v318 = vld [vmem:[%s305 + $0xc] sm:$0xf]
      %v319 = vld [vmem:[%s305 + $0x10] sm:$0xf]
      %v320 = vld [vmem:[%s305 + $0x14] sm:$0xf]
      %v321 = vld [vmem:[%s305 + $0x18] sm:$0xf]
      %v322 = vld [vmem:[%s305 + $0x1c] sm:$0xf]
      %v323 = vunpack.c.l.bf16 %v315
      %v324 = vunpack.c.l.bf16 %v316
      %v325 = vunpack.c.l.bf16 %v317
      %v326 = vunpack.c.l.bf16 %v318
      %v327 = vunpack.c.l.bf16 %v319
      %v328 = vunpack.c.l.bf16 %v320
      %v329 = vunpack.c.l.bf16 %v321
      %v330 = vunpack.c.l.bf16 %v322
      %v331 = vld [vmem:[%s1] sm:$0x1]
      %v332 = vld [vmem:[%s2] sm:$0x1]
      %vm333 = vcmask 130048
      %v334 = vsel %vm333, %v323, 0.0
      %335 = vadd.xlane.f32.xlu0 %v334
      %v336 = vpop.xlane.xlu0 %335
      %v337 = vsel %vm333, %v324, 0.0
      %338 = vadd.xlane.f32.xlu0 %v337
      %v339 = vpop.xlane.xlu0 %338
      %v340 = vsel %vm333, %v325, 0.0
      %341 = vadd.xlane.f32.xlu0 %v340
      %v342 = vpop.xlane.xlu0 %341
      %v343 = vsel %vm333, %v326, 0.0
      %344 = vadd.xlane.f32.xlu0 %v343
      %v345 = vpop.xlane.xlu0 %344
      %v346 = vsel %vm333, %v327, 0.0
      %347 = vadd.xlane.f32.xlu0 %v346
      %v348 = vpop.xlane.xlu0 %347
      %v349 = vsel %vm333, %v328, 0.0
      %350 = vadd.xlane.f32.xlu0 %v349
      %v351 = vpop.xlane.xlu0 %350
      %v352 = vsel %vm333, %v329, 0.0
      %353 = vadd.xlane.f32.xlu0 %v352
      %v354 = vpop.xlane.xlu0 %353
      %v355 = vsel %vm333, %v330, 0.0
      %356 = vadd.xlane.f32.xlu0 %v355
      %v357 = vpop.xlane.xlu0 %356
      %v358 = vrcp.pop 16.0
      %v359 = vmul.f32 %v336, %v358
      %v360 = vmul.f32 %v339, %v358
      %v361 = vmul.f32 %v342, %v358
      %v362 = vmul.f32 %v345, %v358
      %v363 = vmul.f32 %v348, %v358
      %v364 = vmul.f32 %v351, %v358
      %v365 = vmul.f32 %v354, %v358
      %v366 = vmul.f32 %v357, %v358
      %v367 = vsub.f32 %v323, %v359
      %v368 = vsub.f32 %v324, %v360
      %v369 = vsub.f32 %v325, %v361
      %v370 = vsub.f32 %v326, %v362
      %v371 = vsub.f32 %v327, %v363
      %v372 = vsub.f32 %v328, %v364
      %v373 = vsub.f32 %v329, %v365
      %v374 = vsub.f32 %v330, %v366
      %v375 = vmul.f32 %v367, %v367
      %v376 = vmul.f32 %v368, %v368
      %v377 = vmul.f32 %v369, %v369
      %v378 = vmul.f32 %v370, %v370
      %v379 = vmul.f32 %v371, %v371
      %v380 = vmul.f32 %v372, %v372
      %v381 = vmul.f32 %v373, %v373
      %v382 = vmul.f32 %v374, %v374
      %v383 = vsel %vm333, %v375, 0.0
      %384 = vadd.xlane.f32.xlu0 %v383
      %v385 = vpop.xlane.xlu0 %384
      %v386 = vsel %vm333, %v376, 0.0
      %387 = vadd.xlane.f32.xlu0 %v386
      %v388 = vpop.xlane.xlu0 %387
      %v389 = vsel %vm333, %v377, 0.0
      %390 = vadd.xlane.f32.xlu0 %v389
      %v391 = vpop.xlane.xlu0 %390
      %v392 = vsel %vm333, %v378, 0.0
      %393 = vadd.xlane.f32.xlu0 %v392
      %v394 = vpop.xlane.xlu0 %393
      %v395 = vsel %vm333, %v379, 0.0
      %396 = vadd.xlane.f32.xlu0 %v395
      %v397 = vpop.xlane.xlu0 %396
      %v398 = vsel %vm333, %v380, 0.0
      %399 = vadd.xlane.f32.xlu0 %v398
      %v400 = vpop.xlane.xlu0 %399
      %v401 = vsel %vm333, %v381, 0.0
      %402 = vadd.xlane.f32.xlu0 %v401
      %v403 = vpop.xlane.xlu0 %402
      %v404 = vsel %vm333, %v382, 0.0
      %405 = vadd.xlane.f32.xlu0 %v404
      %v406 = vpop.xlane.xlu0 %405
      %v407 = vmul.f32 %v385, %v358
      %v408 = vmul.f32 %v388, %v358
      %v409 = vmul.f32 %v391, %v358
      %v410 = vmul.f32 %v394, %v358
      %v411 = vmul.f32 %v397, %v358
      %v412 = vmul.f32 %v400, %v358
      %v413 = vmul.f32 %v403, %v358
      %v414 = vmul.f32 %v406, %v358
      %v415 = vadd.f32 %v407, 1e-05
      %v416 = vadd.f32 %v408, 1e-05
      %v417 = vadd.f32 %v409, 1e-05
      %v418 = vadd.f32 %v410, 1e-05
      %v419 = vadd.f32 %v411, 1e-05
      %v420 = vadd.f32 %v412, 1e-05
      %v421 = vadd.f32 %v413, 1e-05
      %v422 = vadd.f32 %v414, 1e-05
      %v423 = vrsqrt.pop %v415
      %v424 = vrsqrt.pop %v416
      %v425 = vrsqrt.pop %v417
      %v426 = vrsqrt.pop %v418
      %v427 = vrsqrt.pop %v419
      %v428 = vrsqrt.pop %v420
      %v429 = vrsqrt.pop %v421
      %v430 = vrsqrt.pop %v422
      %v431 = vmul.f32 %v367, %v423
      %v432 = vmul.f32 %v368, %v424
      %v433 = vmul.f32 %v369, %v425
      %v434 = vmul.f32 %v370, %v426
      %v435 = vmul.f32 %v371, %v427
      %v436 = vmul.f32 %v372, %v428
      %v437 = vmul.f32 %v373, %v429
      %v438 = vmul.f32 %v374, %v430
      %v440 = vlaneseq
      %v441 = vshrl.u32 %v440, 7
      %v442 = vsub.s32 0, %v441
      %v443 = vrot.slane %v331, %v442
      %v445 = vmul.f32 %v431, %v443
      %v446 = vmul.f32 %v432, %v443
      %v447 = vmul.f32 %v433, %v443
      %v448 = vmul.f32 %v434, %v443
      %v449 = vmul.f32 %v435, %v443
      %v450 = vmul.f32 %v436, %v443
      %v451 = vmul.f32 %v437, %v443
      %v452 = vmul.f32 %v438, %v443
      %v454 = vlaneseq
      %v455 = vshrl.u32 %v454, 7
      %v456 = vsub.s32 0, %v455
      %v457 = vrot.slane %v332, %v456
      %v459 = vadd.f32 %v445, %v457
      %v460 = vadd.f32 %v446, %v457
      %v461 = vadd.f32 %v447, %v457
      %v462 = vadd.f32 %v448, %v457
      %v463 = vadd.f32 %v449, %v457
      %v464 = vadd.f32 %v450, %v457
      %v465 = vadd.f32 %v451, %v457
      %v466 = vadd.f32 %v452, %v457
      %v467 = vpack.c.bf16 %v460, %v459
      %v468 = vpack.c.bf16 %v462, %v461
      %v469 = vpack.c.bf16 %v464, %v463
      %v470 = vpack.c.bf16 %v466, %v465
      %v471 = vld [vmem:[%s3] sm:$0xf]
      %v472 = vld [vmem:[%s3 + $0x4] sm:$0xf]
      %v473 = vld [vmem:[%s4] sm:$0x1]
      %v475 = vlaneseq
      %v476 = vshrl.u32 %v475, 7
      %v477 = vsub.s32 0, %v476
      %v478 = vrot.slane %v473, %v477
      %v482 = vunpack.c.l.b16 %v471
      %v483 = vunpack.c.l.b16 %v472
      %v484 = vpack.c.b16 %v483, %v482
      %v487 = vsel %vm333, %v467, 0
      %v490 = vsel %vm333, %v468, 0
      %v493 = vsel %vm333, %v469, 0
      %v496 = vsel %vm333, %v470, 0
      %498 = vmatprep.subr.bf16.mxu0 0
      %499 = vmatpush1.bf16.msra.mxu0 0
      %500 = vmatprep.subr.bf16.mxu0 0
      %501 = vmatpush1.bf16.msra.mxu0 0
      %502 = vmatprep.subr.bf16.mxu0 0
      %503 = vmatpush1.bf16.msra.mxu0 0
      %504 = vmatprep.subr.bf16.mxu0 0
      %505 = vmatpush1.bf16.msra.mxu0 0
      %506 = vmatprep.subr.bf16.mxu0 0
      %507 = vmatpush1.bf16.msra.mxu0 0
      %508 = vmatprep.subr.bf16.mxu0 0
      %509 = vmatpush1.bf16.msra.mxu0 0
      %510 = vmatprep.subr.bf16.mxu0 0
      %511 = vmatpush1.bf16.msra.mxu0 0
      %512 = vmatprep.subr.bf16.mxu0 0
      %513 = vmatpush1.bf16.msra.mxu0 %v484
      %514 = vmatprep.subr.bf16.mxu0 0
      %515 = vmatpush2.bf16.msra.mxu0 0
      %516 = vmatprep.subr.bf16.mxu0 0
      %517 = vmatpush2.bf16.msra.mxu0 0
      %518 = vmatprep.subr.bf16.mxu0 0
      %519 = vmatpush2.bf16.msra.mxu0 0
      %520 = vmatprep.subr.bf16.mxu0 0
      %521 = vmatpush2.bf16.msra.mxu0 0
      %522 = vmatprep.subr.bf16.mxu0 0
      %523 = vmatpush2.bf16.msra.mxu0 0
      %524 = vmatprep.subr.bf16.mxu0 0
      %525 = vmatpush2.bf16.msra.mxu0 0
      %526 = vmatprep.subr.bf16.mxu0 0
      %527 = vmatpush2.bf16.msra.mxu0 0
      %528 = vmatprep.subr.bf16.mxu0 0
      %529 = vmatpush2.bf16.msra.mxu0 0
      %530 = vmatprep.mubr.bf16.mxu0 0
      %531 = vmatmul.mubr.bf16.gmra.mxu0 %v487
      %v532 = vpop.f32.mrf.mxu0
      %v533 = vadd.f32 %v478, %v532
      %v534 = vpop.f32.mrf.mxu0
      %v535 = vpop.f32.mrf.mxu0
      %v536 = vadd.f32 %v478, %v535
      %v537 = vpop.f32.mrf.mxu0
      %538 = vmatprep.mubr.bf16.mxu0 0
      %539 = vmatmul.mubr.bf16.gmra.mxu0 %v490
      %v540 = vpop.f32.mrf.mxu0
      %v541 = vadd.f32 %v478, %v540
      %v542 = vpop.f32.mrf.mxu0
      %v543 = vpop.f32.mrf.mxu0
      %v544 = vadd.f32 %v478, %v543
      %v545 = vpop.f32.mrf.mxu0
      %546 = vmatprep.mubr.bf16.mxu0 0
      %547 = vmatmul.mubr.bf16.gmra.mxu0 %v493
      %v548 = vpop.f32.mrf.mxu0
      %v549 = vadd.f32 %v478, %v548
      %v550 = vpop.f32.mrf.mxu0
      %v551 = vpop.f32.mrf.mxu0
      %v552 = vadd.f32 %v478, %v551
      %v553 = vpop.f32.mrf.mxu0
      %554 = vmatprep.mubr.bf16.mxu0 0
      %555 = vmatmul.mubr.bf16.gmra.mxu0 %v496
      %v556 = vpop.f32.mrf.mxu0
      %v557 = vadd.f32 %v478, %v556
      %v558 = vpop.f32.mrf.mxu0
      %v559 = vpop.f32.mrf.mxu0
      %v560 = vadd.f32 %v478, %v559
      %v561 = vpop.f32.mrf.mxu0
      %562 = vdwg.mxu0
      %v563 = vld [vmem:[%s7] sm:$0xf]
      %v564 = vld [vmem:[%s7 + $0x4] sm:$0xf]
      %v565 = vld [vmem:[%s7 + $0x8] sm:$0xf]
      %v566 = vld [vmem:[%s7 + $0xc] sm:$0xf]
      %v567 = vld [vmem:[%s7 + $0x10] sm:$0xf]
      %v568 = vld [vmem:[%s7 + $0x14] sm:$0xf]
      %v569 = vld [vmem:[%s7 + $0x18] sm:$0xf]
      %v570 = vld [vmem:[%s7 + $0x1c] sm:$0xf]
      %v571 = vld [vmem:[%s7 + $0x20] sm:$0xf]
      %v572 = vld [vmem:[%s7 + $0x24] sm:$0xf]
      %v573 = vld [vmem:[%s7 + $0x28] sm:$0xf]
      %v574 = vld [vmem:[%s7 + $0x2c] sm:$0xf]
      %v575 = vld [vmem:[%s7 + $0x30] sm:$0xf]
      %v576 = vld [vmem:[%s7 + $0x34] sm:$0xf]
      %v577 = vld [vmem:[%s7 + $0x38] sm:$0xf]
      %v578 = vld [vmem:[%s7 + $0x3c] sm:$0xf]
      %v579 = vunpack.c.l.bf16 %v563
      %v580 = vunpack.c.l.bf16 %v564
      %v581 = vunpack.c.l.bf16 %v565
      %v582 = vunpack.c.l.bf16 %v566
      %v583 = vunpack.c.l.bf16 %v567
      %v584 = vunpack.c.l.bf16 %v568
      %v585 = vunpack.c.l.bf16 %v569
      %v586 = vunpack.c.l.bf16 %v570
      %v587 = vunpack.c.l.bf16 %v571
      %v588 = vunpack.c.l.bf16 %v572
      %v589 = vunpack.c.l.bf16 %v573
      %v590 = vunpack.c.l.bf16 %v574
      %v591 = vunpack.c.l.bf16 %v575
      %v592 = vunpack.c.l.bf16 %v576
      %v593 = vunpack.c.l.bf16 %v577
      %v594 = vunpack.c.l.bf16 %v578
      %v595 = vld [vmem:[%s5] sm:$0xf]
      %v596 = vld [vmem:[%s5 + $0x4] sm:$0xf]
      %v597 = vmul.f32 %v533, 0.35355338
      %v598 = vmul.f32 %v536, 0.35355338
      %v599 = vmul.f32 %v541, 0.35355338
      %v600 = vmul.f32 %v544, 0.35355338
      %v601 = vmul.f32 %v549, 0.35355338
      %v602 = vmul.f32 %v552, 0.35355338
      %v603 = vmul.f32 %v557, 0.35355338
      %v604 = vmul.f32 %v560, 0.35355338
      %v605 = vpack.c.bf16 %v598, %v597
      %v606 = vpack.c.bf16 %v600, %v599
      %v607 = vpack.c.bf16 %v602, %v601
      %v608 = vpack.c.bf16 %v604, %v603
      %v609 = vpack.c.bf16 %v536, %v533
      %v610 = vpack.c.bf16 %v544, %v541
      %v611 = vpack.c.bf16 %v552, %v549
      %v612 = vpack.c.bf16 %v560, %v557
      %614 = vrot.lane.b32.xlu0 %v609, 112
      %v615 = vpop.permute.xlu0 %614
      %vm616 = vcmask 64512
      %v618 = vsel %vm616, %v605, 0
      %v621 = vsel %vm616, %v615, 0
      %623 = vmatprep.subr.bf16.mxu0 0
      %624 = vmatpush1.bf16.xpose.msra.mxu0 0
      %625 = vmatprep.subr.bf16.mxu0 0
      %626 = vmatpush1.bf16.xpose.msra.mxu0 0
      %627 = vmatprep.subr.bf16.mxu0 0
      %628 = vmatpush1.bf16.xpose.msra.mxu0 0
      %629 = vmatprep.subr.bf16.mxu0 0
      %630 = vmatpush1.bf16.xpose.msra.mxu0 0
      %631 = vmatprep.subr.bf16.mxu0 0
      %632 = vmatpush1.bf16.xpose.msra.mxu0 0
      %633 = vmatprep.subr.bf16.mxu0 0
      %634 = vmatpush1.bf16.xpose.msra.mxu0 0
      %635 = vmatprep.subr.bf16.mxu0 0
      %636 = vmatpush1.bf16.xpose.msra.mxu0 0
      %637 = vmatprep.subr.bf16.mxu0 0
      %638 = vmatpush1.bf16.xpose.msra.mxu0 %v621
      %639 = vmatprep.subr.bf16.mxu0 0
      %640 = vmatpush2.bf16.xpose.msra.mxu0 0
      %641 = vmatprep.subr.bf16.mxu0 0
      %642 = vmatpush2.bf16.xpose.msra.mxu0 0
      %643 = vmatprep.subr.bf16.mxu0 0
      %644 = vmatpush2.bf16.xpose.msra.mxu0 0
      %645 = vmatprep.subr.bf16.mxu0 0
      %646 = vmatpush2.bf16.xpose.msra.mxu0 0
      %647 = vmatprep.subr.bf16.mxu0 0
      %648 = vmatpush2.bf16.xpose.msra.mxu0 0
      %649 = vmatprep.subr.bf16.mxu0 0
      %650 = vmatpush2.bf16.xpose.msra.mxu0 0
      %651 = vmatprep.subr.bf16.mxu0 0
      %652 = vmatpush2.bf16.xpose.msra.mxu0 0
      %653 = vmatprep.subr.bf16.mxu0 0
      %654 = vmatpush2.bf16.xpose.msra.mxu0 0
      %655 = vmatprep.mubr.bf16.mxu0 0
      %656 = vmatmul.mubr.bf16.gmra.mxu0 %v618
      %v657 = vpop.f32.mrf.mxu0
      %v658 = vadd.f32 %v579, %v657
      %v659 = vpop.f32.mrf.mxu0
      %v660 = vpop.f32.mrf.mxu0
      %v661 = vadd.f32 %v580, %v660
      %v662 = vpop.f32.mrf.mxu0
      %663 = vdwg.mxu0
      %665 = vrot.lane.b32.xlu0 %v610, 112
      %v666 = vpop.permute.xlu0 %665
      %v668 = vsel %vm616, %v606, 0
      %v671 = vsel %vm616, %v666, 0
      %673 = vmatprep.subr.bf16.mxu0 0
      %674 = vmatpush1.bf16.xpose.msra.mxu0 0
      %675 = vmatprep.subr.bf16.mxu0 0
      %676 = vmatpush1.bf16.xpose.msra.mxu0 0
      %677 = vmatprep.subr.bf16.mxu0 0
      %678 = vmatpush1.bf16.xpose.msra.mxu0 0
      %679 = vmatprep.subr.bf16.mxu0 0
      %680 = vmatpush1.bf16.xpose.msra.mxu0 0
      %681 = vmatprep.subr.bf16.mxu0 0
      %682 = vmatpush1.bf16.xpose.msra.mxu0 0
      %683 = vmatprep.subr.bf16.mxu0 0
      %684 = vmatpush1.bf16.xpose.msra.mxu0 0
      %685 = vmatprep.subr.bf16.mxu0 0
      %686 = vmatpush1.bf16.xpose.msra.mxu0 0
      %687 = vmatprep.subr.bf16.mxu0 0
      %688 = vmatpush1.bf16.xpose.msra.mxu0 %v671
      %689 = vmatprep.subr.bf16.mxu0 0
      %690 = vmatpush2.bf16.xpose.msra.mxu0 0
      %691 = vmatprep.subr.bf16.mxu0 0
      %692 = vmatpush2.bf16.xpose.msra.mxu0 0
      %693 = vmatprep.subr.bf16.mxu0 0
      %694 = vmatpush2.bf16.xpose.msra.mxu0 0
      %695 = vmatprep.subr.bf16.mxu0 0
      %696 = vmatpush2.bf16.xpose.msra.mxu0 0
      %697 = vmatprep.subr.bf16.mxu0 0
      %698 = vmatpush2.bf16.xpose.msra.mxu0 0
      %699 = vmatprep.subr.bf16.mxu0 0
      %700 = vmatpush2.bf16.xpose.msra.mxu0 0
      %701 = vmatprep.subr.bf16.mxu0 0
      %702 = vmatpush2.bf16.xpose.msra.mxu0 0
      %703 = vmatprep.subr.bf16.mxu0 0
      %704 = vmatpush2.bf16.xpose.msra.mxu0 0
      %705 = vmatprep.mubr.bf16.mxu0 0
      %706 = vmatmul.mubr.bf16.gmra.mxu0 %v668
      %v707 = vpop.f32.mrf.mxu0
      %v708 = vadd.f32 %v583, %v707
      %v709 = vpop.f32.mrf.mxu0
      %v710 = vpop.f32.mrf.mxu0
      %v711 = vadd.f32 %v584, %v710
      %v712 = vpop.f32.mrf.mxu0
      %713 = vdwg.mxu0
      %715 = vrot.lane.b32.xlu0 %v611, 112
      %v716 = vpop.permute.xlu0 %715
      %v718 = vsel %vm616, %v607, 0
      %v721 = vsel %vm616, %v716, 0
      %723 = vmatprep.subr.bf16.mxu0 0
      %724 = vmatpush1.bf16.xpose.msra.mxu0 0
      %725 = vmatprep.subr.bf16.mxu0 0
      %726 = vmatpush1.bf16.xpose.msra.mxu0 0
      %727 = vmatprep.subr.bf16.mxu0 0
      %728 = vmatpush1.bf16.xpose.msra.mxu0 0
      %729 = vmatprep.subr.bf16.mxu0 0
      %730 = vmatpush1.bf16.xpose.msra.mxu0 0
      %731 = vmatprep.subr.bf16.mxu0 0
      %732 = vmatpush1.bf16.xpose.msra.mxu0 0
      %733 = vmatprep.subr.bf16.mxu0 0
      %734 = vmatpush1.bf16.xpose.msra.mxu0 0
      %735 = vmatprep.subr.bf16.mxu0 0
      %736 = vmatpush1.bf16.xpose.msra.mxu0 0
      %737 = vmatprep.subr.bf16.mxu0 0
      %738 = vmatpush1.bf16.xpose.msra.mxu0 %v721
      %739 = vmatprep.subr.bf16.mxu0 0
      %740 = vmatpush2.bf16.xpose.msra.mxu0 0
      %741 = vmatprep.subr.bf16.mxu0 0
      %742 = vmatpush2.bf16.xpose.msra.mxu0 0
      %743 = vmatprep.subr.bf16.mxu0 0
      %744 = vmatpush2.bf16.xpose.msra.mxu0 0
      %745 = vmatprep.subr.bf16.mxu0 0
      %746 = vmatpush2.bf16.xpose.msra.mxu0 0
      %747 = vmatprep.subr.bf16.mxu0 0
      %748 = vmatpush2.bf16.xpose.msra.mxu0 0
      %749 = vmatprep.subr.bf16.mxu0 0
      %750 = vmatpush2.bf16.xpose.msra.mxu0 0
      %751 = vmatprep.subr.bf16.mxu0 0
      %752 = vmatpush2.bf16.xpose.msra.mxu0 0
      %753 = vmatprep.subr.bf16.mxu0 0
      %754 = vmatpush2.bf16.xpose.msra.mxu0 0
      %755 = vmatprep.mubr.bf16.mxu0 0
      %756 = vmatmul.mubr.bf16.gmra.mxu0 %v718
      %v757 = vpop.f32.mrf.mxu0
      %v758 = vadd.f32 %v587, %v757
      %v759 = vpop.f32.mrf.mxu0
      %v760 = vpop.f32.mrf.mxu0
      %v761 = vadd.f32 %v588, %v760
      %v762 = vpop.f32.mrf.mxu0
      %763 = vdwg.mxu0
      %765 = vrot.lane.b32.xlu0 %v612, 112
      %v766 = vpop.permute.xlu0 %765
      %v768 = vsel %vm616, %v608, 0
      %v771 = vsel %vm616, %v766, 0
      %773 = vmatprep.subr.bf16.mxu0 0
      %774 = vmatpush1.bf16.xpose.msra.mxu0 0
      %775 = vmatprep.subr.bf16.mxu0 0
      %776 = vmatpush1.bf16.xpose.msra.mxu0 0
      %777 = vmatprep.subr.bf16.mxu0 0
      %778 = vmatpush1.bf16.xpose.msra.mxu0 0
      %779 = vmatprep.subr.bf16.mxu0 0
      %780 = vmatpush1.bf16.xpose.msra.mxu0 0
      %781 = vmatprep.subr.bf16.mxu0 0
      %782 = vmatpush1.bf16.xpose.msra.mxu0 0
      %783 = vmatprep.subr.bf16.mxu0 0
      %784 = vmatpush1.bf16.xpose.msra.mxu0 0
      %785 = vmatprep.subr.bf16.mxu0 0
      %786 = vmatpush1.bf16.xpose.msra.mxu0 0
      %787 = vmatprep.subr.bf16.mxu0 0
      %788 = vmatpush1.bf16.xpose.msra.mxu0 %v771
      %789 = vmatprep.subr.bf16.mxu0 0
      %790 = vmatpush2.bf16.xpose.msra.mxu0 0
      %791 = vmatprep.subr.bf16.mxu0 0
      %792 = vmatpush2.bf16.xpose.msra.mxu0 0
      %793 = vmatprep.subr.bf16.mxu0 0
      %794 = vmatpush2.bf16.xpose.msra.mxu0 0
      %795 = vmatprep.subr.bf16.mxu0 0
      %796 = vmatpush2.bf16.xpose.msra.mxu0 0
      %797 = vmatprep.subr.bf16.mxu0 0
      %798 = vmatpush2.bf16.xpose.msra.mxu0 0
      %799 = vmatprep.subr.bf16.mxu0 0
      %800 = vmatpush2.bf16.xpose.msra.mxu0 0
      %801 = vmatprep.subr.bf16.mxu0 0
      %802 = vmatpush2.bf16.xpose.msra.mxu0 0
      %803 = vmatprep.subr.bf16.mxu0 0
      %804 = vmatpush2.bf16.xpose.msra.mxu0 0
      %805 = vmatprep.mubr.bf16.mxu0 0
      %806 = vmatmul.mubr.bf16.gmra.mxu0 %v768
      %v807 = vpop.f32.mrf.mxu0
      %v808 = vadd.f32 %v591, %v807
      %v809 = vpop.f32.mrf.mxu0
      %v810 = vpop.f32.mrf.mxu0
      %v811 = vadd.f32 %v592, %v810
      %v812 = vpop.f32.mrf.mxu0
      %813 = vdwg.mxu0
      %v814 = vsel %vm333, %v658, -inf
      %815 = vmax.xlane.f32.xlu0 %v814
      %v816 = vpop.xlane.xlu0 %815
      %v817 = vsel %vm333, %v661, -inf
      %818 = vmax.xlane.f32.xlu0 %v817
      %v819 = vpop.xlane.xlu0 %818
      %v820 = vsel %vm333, %v708, -inf
      %821 = vmax.xlane.f32.xlu0 %v820
      %v822 = vpop.xlane.xlu0 %821
      %v823 = vsel %vm333, %v711, -inf
      %824 = vmax.xlane.f32.xlu0 %v823
      %v825 = vpop.xlane.xlu0 %824
      %v826 = vsel %vm333, %v758, -inf
      %827 = vmax.xlane.f32.xlu0 %v826
      %v828 = vpop.xlane.xlu0 %827
      %v829 = vsel %vm333, %v761, -inf
      %830 = vmax.xlane.f32.xlu0 %v829
      %v831 = vpop.xlane.xlu0 %830
      %v832 = vsel %vm333, %v808, -inf
      %833 = vmax.xlane.f32.xlu0 %v832
      %v834 = vpop.xlane.xlu0 %833
      %v835 = vsel %vm333, %v811, -inf
      %836 = vmax.xlane.f32.xlu0 %v835
      %v837 = vpop.xlane.xlu0 %836
      %v838 = vsub.f32 %v658, %v816
      %v839 = vsub.f32 %v661, %v819
      %v840 = vsub.f32 %v708, %v822
      %v841 = vsub.f32 %v711, %v825
      %v842 = vsub.f32 %v758, %v828
      %v843 = vsub.f32 %v761, %v831
      %v844 = vsub.f32 %v808, %v834
      %v845 = vsub.f32 %v811, %v837
      %v846 = vmul.f32 %v838, 1.442695
      %v847 = vpow.pop %v846
      %v848 = vmul.f32 %v839, 1.442695
      %v849 = vpow.pop %v848
      %v850 = vmul.f32 %v840, 1.442695
      %v851 = vpow.pop %v850
      %v852 = vmul.f32 %v841, 1.442695
      %v853 = vpow.pop %v852
      %v854 = vmul.f32 %v842, 1.442695
      %v855 = vpow.pop %v854
      %v856 = vmul.f32 %v843, 1.442695
      %v857 = vpow.pop %v856
      %v858 = vmul.f32 %v844, 1.442695
      %v859 = vpow.pop %v858
      %v860 = vmul.f32 %v845, 1.442695
      %v861 = vpow.pop %v860
      %v862 = vsel %vm333, %v847, 0.0
      %863 = vadd.xlane.f32.xlu0 %v862
      %v864 = vpop.xlane.xlu0 %863
      %v865 = vsel %vm333, %v849, 0.0
      %866 = vadd.xlane.f32.xlu0 %v865
      %v867 = vpop.xlane.xlu0 %866
      %v868 = vsel %vm333, %v851, 0.0
      %869 = vadd.xlane.f32.xlu0 %v868
      %v870 = vpop.xlane.xlu0 %869
      %v871 = vsel %vm333, %v853, 0.0
      %872 = vadd.xlane.f32.xlu0 %v871
      %v873 = vpop.xlane.xlu0 %872
      %v874 = vsel %vm333, %v855, 0.0
      %875 = vadd.xlane.f32.xlu0 %v874
      %v876 = vpop.xlane.xlu0 %875
      %v877 = vsel %vm333, %v857, 0.0
      %878 = vadd.xlane.f32.xlu0 %v877
      %v879 = vpop.xlane.xlu0 %878
      %v880 = vsel %vm333, %v859, 0.0
      %881 = vadd.xlane.f32.xlu0 %v880
      %v882 = vpop.xlane.xlu0 %881
      %v883 = vsel %vm333, %v861, 0.0
      %884 = vadd.xlane.f32.xlu0 %v883
      %v885 = vpop.xlane.xlu0 %884
      %v886 = vrcp.pop %v864
      %v887 = vrcp.pop %v867
      %v888 = vrcp.pop %v870
      %v889 = vrcp.pop %v873
      %v890 = vrcp.pop %v876
      %v891 = vrcp.pop %v879
      %v892 = vrcp.pop %v882
      %v893 = vrcp.pop %v885
      %v894 = vmul.f32 %v847, %v886
      %v895 = vmul.f32 %v849, %v887
      %v896 = vmul.f32 %v851, %v888
      %v897 = vmul.f32 %v853, %v889
      %v898 = vmul.f32 %v855, %v890
      %v899 = vmul.f32 %v857, %v891
      %v900 = vmul.f32 %v859, %v892
      %v901 = vmul.f32 %v861, %v893
      %v902 = vpack.c.bf16 %v895, %v894
      %v903 = vpack.c.bf16 %v897, %v896
      %v904 = vpack.c.bf16 %v899, %v898
      %v905 = vpack.c.bf16 %v901, %v900
      %906 = vrot.lane.b32.xlu0 %v609, 96
      %v907 = vpop.permute.xlu0 %906
      %v910 = vsel %vm333, %v902, 0
      %912 = vmatprep.subr.bf16.mxu0 0
      %913 = vmatpush1.bf16.msra.mxu0 0
      %914 = vmatprep.subr.bf16.mxu0 0
      %915 = vmatpush1.bf16.msra.mxu0 0
      %916 = vmatprep.subr.bf16.mxu0 0
      %917 = vmatpush1.bf16.msra.mxu0 0
      %918 = vmatprep.subr.bf16.mxu0 0
      %919 = vmatpush1.bf16.msra.mxu0 0
      %920 = vmatprep.subr.bf16.mxu0 0
      %921 = vmatpush1.bf16.msra.mxu0 0
      %922 = vmatprep.subr.bf16.mxu0 0
      %923 = vmatpush1.bf16.msra.mxu0 0
      %924 = vmatprep.subr.bf16.mxu0 0
      %925 = vmatpush1.bf16.msra.mxu0 0
      %926 = vmatprep.subr.bf16.mxu0 0
      %927 = vmatpush1.bf16.msra.mxu0 %v907
      %928 = vmatprep.subr.bf16.mxu0 0
      %929 = vmatpush2.bf16.msra.mxu0 0
      %930 = vmatprep.subr.bf16.mxu0 0
      %931 = vmatpush2.bf16.msra.mxu0 0
      %932 = vmatprep.subr.bf16.mxu0 0
      %933 = vmatpush2.bf16.msra.mxu0 0
      %934 = vmatprep.subr.bf16.mxu0 0
      %935 = vmatpush2.bf16.msra.mxu0 0
      %936 = vmatprep.subr.bf16.mxu0 0
      %937 = vmatpush2.bf16.msra.mxu0 0
      %938 = vmatprep.subr.bf16.mxu0 0
      %939 = vmatpush2.bf16.msra.mxu0 0
      %940 = vmatprep.subr.bf16.mxu0 0
      %941 = vmatpush2.bf16.msra.mxu0 0
      %942 = vmatprep.subr.bf16.mxu0 0
      %943 = vmatpush2.bf16.msra.mxu0 0
      %944 = vmatprep.mubr.bf16.mxu0 0
      %945 = vmatmul.mubr.bf16.gmra.mxu0 %v910
      %v946 = vpop.f32.mrf.mxu0
      %v947 = vadd.f32 0.0, %v946
      %v948 = vpop.f32.mrf.mxu0
      %v949 = vpop.f32.mrf.mxu0
      %v950 = vadd.f32 0.0, %v949
      %v951 = vpop.f32.mrf.mxu0
      %952 = vdwg.mxu0
      %953 = vrot.lane.b32.xlu0 %v610, 96
      %v954 = vpop.permute.xlu0 %953
      %v957 = vsel %vm333, %v903, 0
      %959 = vmatprep.subr.bf16.mxu0 0
      %960 = vmatpush1.bf16.msra.mxu0 0
      %961 = vmatprep.subr.bf16.mxu0 0
      %962 = vmatpush1.bf16.msra.mxu0 0
      %963 = vmatprep.subr.bf16.mxu0 0
      %964 = vmatpush1.bf16.msra.mxu0 0
      %965 = vmatprep.subr.bf16.mxu0 0
      %966 = vmatpush1.bf16.msra.mxu0 0
      %967 = vmatprep.subr.bf16.mxu0 0
      %968 = vmatpush1.bf16.msra.mxu0 0
      %969 = vmatprep.subr.bf16.mxu0 0
      %970 = vmatpush1.bf16.msra.mxu0 0
      %971 = vmatprep.subr.bf16.mxu0 0
      %972 = vmatpush1.bf16.msra.mxu0 0
      %973 = vmatprep.subr.bf16.mxu0 0
      %974 = vmatpush1.bf16.msra.mxu0 %v954
      %975 = vmatprep.subr.bf16.mxu0 0
      %976 = vmatpush2.bf16.msra.mxu0 0
      %977 = vmatprep.subr.bf16.mxu0 0
      %978 = vmatpush2.bf16.msra.mxu0 0
      %979 = vmatprep.subr.bf16.mxu0 0
      %980 = vmatpush2.bf16.msra.mxu0 0
      %981 = vmatprep.subr.bf16.mxu0 0
      %982 = vmatpush2.bf16.msra.mxu0 0
      %983 = vmatprep.subr.bf16.mxu0 0
      %984 = vmatpush2.bf16.msra.mxu0 0
      %985 = vmatprep.subr.bf16.mxu0 0
      %986 = vmatpush2.bf16.msra.mxu0 0
      %987 = vmatprep.subr.bf16.mxu0 0
      %988 = vmatpush2.bf16.msra.mxu0 0
      %989 = vmatprep.subr.bf16.mxu0 0
      %990 = vmatpush2.bf16.msra.mxu0 0
      %991 = vmatprep.mubr.bf16.mxu0 0
      %992 = vmatmul.mubr.bf16.gmra.mxu0 %v957
      %v993 = vpop.f32.mrf.mxu0
      %v994 = vadd.f32 0.0, %v993
      %v995 = vpop.f32.mrf.mxu0
      %v996 = vpop.f32.mrf.mxu0
      %v997 = vadd.f32 0.0, %v996
      %v998 = vpop.f32.mrf.mxu0
      %999 = vdwg.mxu0
      %1000 = vrot.lane.b32.xlu0 %v611, 96
      %v1001 = vpop.permute.xlu0 %1000
      %v1004 = vsel %vm333, %v904, 0
      %1006 = vmatprep.subr.bf16.mxu0 0
      %1007 = vmatpush1.bf16.msra.mxu0 0
      %1008 = vmatprep.subr.bf16.mxu0 0
      %1009 = vmatpush1.bf16.msra.mxu0 0
      %1010 = vmatprep.subr.bf16.mxu0 0
      %1011 = vmatpush1.bf16.msra.mxu0 0
      %1012 = vmatprep.subr.bf16.mxu0 0
      %1013 = vmatpush1.bf16.msra.mxu0 0
      %1014 = vmatprep.subr.bf16.mxu0 0
      %1015 = vmatpush1.bf16.msra.mxu0 0
      %1016 = vmatprep.subr.bf16.mxu0 0
      %1017 = vmatpush1.bf16.msra.mxu0 0
      %1018 = vmatprep.subr.bf16.mxu0 0
      %1019 = vmatpush1.bf16.msra.mxu0 0
      %1020 = vmatprep.subr.bf16.mxu0 0
      %1021 = vmatpush1.bf16.msra.mxu0 %v1001
      %1022 = vmatprep.subr.bf16.mxu0 0
      %1023 = vmatpush2.bf16.msra.mxu0 0
      %1024 = vmatprep.subr.bf16.mxu0 0
      %1025 = vmatpush2.bf16.msra.mxu0 0
      %1026 = vmatprep.subr.bf16.mxu0 0
      %1027 = vmatpush2.bf16.msra.mxu0 0
      %1028 = vmatprep.subr.bf16.mxu0 0
      %1029 = vmatpush2.bf16.msra.mxu0 0
      %1030 = vmatprep.subr.bf16.mxu0 0
      %1031 = vmatpush2.bf16.msra.mxu0 0
      %1032 = vmatprep.subr.bf16.mxu0 0
      %1033 = vmatpush2.bf16.msra.mxu0 0
      %1034 = vmatprep.subr.bf16.mxu0 0
      %1035 = vmatpush2.bf16.msra.mxu0 0
      %1036 = vmatprep.subr.bf16.mxu0 0
      %1037 = vmatpush2.bf16.msra.mxu0 0
      %1038 = vmatprep.mubr.bf16.mxu0 0
      %1039 = vmatmul.mubr.bf16.gmra.mxu0 %v1004
      %v1040 = vpop.f32.mrf.mxu0
      %v1041 = vadd.f32 0.0, %v1040
      %v1042 = vpop.f32.mrf.mxu0
      %v1043 = vpop.f32.mrf.mxu0
      %v1044 = vadd.f32 0.0, %v1043
      %v1045 = vpop.f32.mrf.mxu0
      %1046 = vdwg.mxu0
      %1047 = vrot.lane.b32.xlu0 %v612, 96
      %v1048 = vpop.permute.xlu0 %1047
      %v1051 = vsel %vm333, %v905, 0
      %1053 = vmatprep.subr.bf16.mxu0 0
      %1054 = vmatpush1.bf16.msra.mxu0 0
      %1055 = vmatprep.subr.bf16.mxu0 0
      %1056 = vmatpush1.bf16.msra.mxu0 0
      %1057 = vmatprep.subr.bf16.mxu0 0
      %1058 = vmatpush1.bf16.msra.mxu0 0
      %1059 = vmatprep.subr.bf16.mxu0 0
      %1060 = vmatpush1.bf16.msra.mxu0 0
      %1061 = vmatprep.subr.bf16.mxu0 0
      %1062 = vmatpush1.bf16.msra.mxu0 0
      %1063 = vmatprep.subr.bf16.mxu0 0
      %1064 = vmatpush1.bf16.msra.mxu0 0
      %1065 = vmatprep.subr.bf16.mxu0 0
      %1066 = vmatpush1.bf16.msra.mxu0 0
      %1067 = vmatprep.subr.bf16.mxu0 0
      %1068 = vmatpush1.bf16.msra.mxu0 %v1048
      %1069 = vmatprep.subr.bf16.mxu0 0
      %1070 = vmatpush2.bf16.msra.mxu0 0
      %1071 = vmatprep.subr.bf16.mxu0 0
      %1072 = vmatpush2.bf16.msra.mxu0 0
      %1073 = vmatprep.subr.bf16.mxu0 0
      %1074 = vmatpush2.bf16.msra.mxu0 0
      %1075 = vmatprep.subr.bf16.mxu0 0
      %1076 = vmatpush2.bf16.msra.mxu0 0
      %1077 = vmatprep.subr.bf16.mxu0 0
      %1078 = vmatpush2.bf16.msra.mxu0 0
      %1079 = vmatprep.subr.bf16.mxu0 0
      %1080 = vmatpush2.bf16.msra.mxu0 0
      %1081 = vmatprep.subr.bf16.mxu0 0
      %1082 = vmatpush2.bf16.msra.mxu0 0
      %1083 = vmatprep.subr.bf16.mxu0 0
      %1084 = vmatpush2.bf16.msra.mxu0 0
      %1085 = vmatprep.mubr.bf16.mxu0 0
      %1086 = vmatmul.mubr.bf16.gmra.mxu0 %v1051
      %v1087 = vpop.f32.mrf.mxu0
      %v1088 = vadd.f32 0.0, %v1087
      %v1089 = vpop.f32.mrf.mxu0
      %v1090 = vpop.f32.mrf.mxu0
      %v1091 = vadd.f32 0.0, %v1090
      %v1092 = vpop.f32.mrf.mxu0
      %1093 = vdwg.mxu0
      %v1094 = vpack.c.bf16 %v950, %v947
      %v1095 = vpack.c.bf16 %v997, %v994
      %v1096 = vpack.c.bf16 %v1044, %v1041
      %v1097 = vpack.c.bf16 %v1091, %v1088
      %1099 = vrot.lane.b32.xlu0 %v605, 120
      %v1100 = vpop.permute.xlu0 %1099
      %1101 = vrot.lane.b32.xlu0 %v609, 104
      %v1102 = vpop.permute.xlu0 %1101
      %v1104 = vsel %vm616, %v1100, 0
      %v1107 = vsel %vm616, %v1102, 0
      %1109 = vmatprep.subr.bf16.mxu0 0
      %1110 = vmatpush1.bf16.xpose.msra.mxu0 0
      %1111 = vmatprep.subr.bf16.mxu0 0
      %1112 = vmatpush1.bf16.xpose.msra.mxu0 0
      %1113 = vmatprep.subr.bf16.mxu0 0
      %1114 = vmatpush1.bf16.xpose.msra.mxu0 0
      %1115 = vmatprep.subr.bf16.mxu0 0
      %1116 = vmatpush1.bf16.xpose.msra.mxu0 0
      %1117 = vmatprep.subr.bf16.mxu0 0
      %1118 = vmatpush1.bf16.xpose.msra.mxu0 0
      %1119 = vmatprep.subr.bf16.mxu0 0
      %1120 = vmatpush1.bf16.xpose.msra.mxu0 0
      %1121 = vmatprep.subr.bf16.mxu0 0
      %1122 = vmatpush1.bf16.xpose.msra.mxu0 0
      %1123 = vmatprep.subr.bf16.mxu0 0
      %1124 = vmatpush1.bf16.xpose.msra.mxu0 %v1107
      %1125 = vmatprep.subr.bf16.mxu0 0
      %1126 = vmatpush2.bf16.xpose.msra.mxu0 0
      %1127 = vmatprep.subr.bf16.mxu0 0
      %1128 = vmatpush2.bf16.xpose.msra.mxu0 0
      %1129 = vmatprep.subr.bf16.mxu0 0
      %1130 = vmatpush2.bf16.xpose.msra.mxu0 0
      %1131 = vmatprep.subr.bf16.mxu0 0
      %1132 = vmatpush2.bf16.xpose.msra.mxu0 0
      %1133 = vmatprep.subr.bf16.mxu0 0
      %1134 = vmatpush2.bf16.xpose.msra.mxu0 0
      %1135 = vmatprep.subr.bf16.mxu0 0
      %1136 = vmatpush2.bf16.xpose.msra.mxu0 0
      %1137 = vmatprep.subr.bf16.mxu0 0
      %1138 = vmatpush2.bf16.xpose.msra.mxu0 0
      %1139 = vmatprep.subr.bf16.mxu0 0
      %1140 = vmatpush2.bf16.xpose.msra.mxu0 0
      %1141 = vmatprep.mubr.bf16.mxu0 0
      %1142 = vmatmul.mubr.bf16.gmra.mxu0 %v1104
      %v1143 = vpop.f32.mrf.mxu0
      %v1144 = vadd.f32 %v581, %v1143
      %v1145 = vpop.f32.mrf.mxu0
      %v1146 = vpop.f32.mrf.mxu0
      %v1147 = vadd.f32 %v582, %v1146
      %v1148 = vpop.f32.mrf.mxu0
      %1149 = vdwg.mxu0
      %1151 = vrot.lane.b32.xlu0 %v606, 120
      %v1152 = vpop.permute.xlu0 %1151
      %1153 = vrot.lane.b32.xlu0 %v610, 104
      %v1154 = vpop.permute.xlu0 %1153
      %v1156 = vsel %vm616, %v1152, 0
      %v1159 = vsel %vm616, %v1154, 0
      %1161 = vmatprep.subr.bf16.mxu0 0
      %1162 = vmatpush1.bf16.xpose.msra.mxu0 0
      %1163 = vmatprep.subr.bf16.mxu0 0
      %1164 = vmatpush1.bf16.xpose.msra.mxu0 0
      %1165 = vmatprep.subr.bf16.mxu0 0
      %1166 = vmatpush1.bf16.xpose.msra.mxu0 0
      %1167 = vmatprep.subr.bf16.mxu0 0
      %1168 = vmatpush1.bf16.xpose.msra.mxu0 0
      %1169 = vmatprep.subr.bf16.mxu0 0
      %1170 = vmatpush1.bf16.xpose.msra.mxu0 0
      %1171 = vmatprep.subr.bf16.mxu0 0
      %1172 = vmatpush1.bf16.xpose.msra.mxu0 0
      %1173 = vmatprep.subr.bf16.mxu0 0
      %1174 = vmatpush1.bf16.xpose.msra.mxu0 0
      %1175 = vmatprep.subr.bf16.mxu0 0
      %1176 = vmatpush1.bf16.xpose.msra.mxu0 %v1159
      %1177 = vmatprep.subr.bf16.mxu0 0
      %1178 = vmatpush2.bf16.xpose.msra.mxu0 0
      %1179 = vmatprep.subr.bf16.mxu0 0
      %1180 = vmatpush2.bf16.xpose.msra.mxu0 0
      %1181 = vmatprep.subr.bf16.mxu0 0
      %1182 = vmatpush2.bf16.xpose.msra.mxu0 0
      %1183 = vmatprep.subr.bf16.mxu0 0
      %1184 = vmatpush2.bf16.xpose.msra.mxu0 0
      %1185 = vmatprep.subr.bf16.mxu0 0
      %1186 = vmatpush2.bf16.xpose.msra.mxu0 0
      %1187 = vmatprep.subr.bf16.mxu0 0
      %1188 = vmatpush2.bf16.xpose.msra.mxu0 0
      %1189 = vmatprep.subr.bf16.mxu0 0
      %1190 = vmatpush2.bf16.xpose.msra.mxu0 0
      %1191 = vmatprep.subr.bf16.mxu0 0
      %1192 = vmatpush2.bf16.xpose.msra.mxu0 0
      %1193 = vmatprep.mubr.bf16.mxu0 0
      %1194 = vmatmul.mubr.bf16.gmra.mxu0 %v1156
      %v1195 = vpop.f32.mrf.mxu0
      %v1196 = vadd.f32 %v585, %v1195
      %v1197 = vpop.f32.mrf.mxu0
      %v1198 = vpop.f32.mrf.mxu0
      %v1199 = vadd.f32 %v586, %v1198
      %v1200 = vpop.f32.mrf.mxu0
      %1201 = vdwg.mxu0
      %1203 = vrot.lane.b32.xlu0 %v607, 120
      %v1204 = vpop.permute.xlu0 %1203
      %1205 = vrot.lane.b32.xlu0 %v611, 104
      %v1206 = vpop.permute.xlu0 %1205
      %v1208 = vsel %vm616, %v1204, 0
      %v1211 = vsel %vm616, %v1206, 0
      %1213 = vmatprep.subr.bf16.mxu0 0
      %1214 = vmatpush1.bf16.xpose.msra.mxu0 0
      %1215 = vmatprep.subr.bf16.mxu0 0
      %1216 = vmatpush1.bf16.xpose.msra.mxu0 0
      %1217 = vmatprep.subr.bf16.mxu0 0
      %1218 = vmatpush1.bf16.xpose.msra.mxu0 0
      %1219 = vmatprep.subr.bf16.mxu0 0
      %1220 = vmatpush1.bf16.xpose.msra.mxu0 0
      %1221 = vmatprep.subr.bf16.mxu0 0
      %1222 = vmatpush1.bf16.xpose.msra.mxu0 0
      %1223 = vmatprep.subr.bf16.mxu0 0
      %1224 = vmatpush1.bf16.xpose.msra.mxu0 0
      %1225 = vmatprep.subr.bf16.mxu0 0
      %1226 = vmatpush1.bf16.xpose.msra.mxu0 0
      %1227 = vmatprep.subr.bf16.mxu0 0
      %1228 = vmatpush1.bf16.xpose.msra.mxu0 %v1211
      %1229 = vmatprep.subr.bf16.mxu0 0
      %1230 = vmatpush2.bf16.xpose.msra.mxu0 0
      %1231 = vmatprep.subr.bf16.mxu0 0
      %1232 = vmatpush2.bf16.xpose.msra.mxu0 0
      %1233 = vmatprep.subr.bf16.mxu0 0
      %1234 = vmatpush2.bf16.xpose.msra.mxu0 0
      %1235 = vmatprep.subr.bf16.mxu0 0
      %1236 = vmatpush2.bf16.xpose.msra.mxu0 0
      %1237 = vmatprep.subr.bf16.mxu0 0
      %1238 = vmatpush2.bf16.xpose.msra.mxu0 0
      %1239 = vmatprep.subr.bf16.mxu0 0
      %1240 = vmatpush2.bf16.xpose.msra.mxu0 0
      %1241 = vmatprep.subr.bf16.mxu0 0
      %1242 = vmatpush2.bf16.xpose.msra.mxu0 0
      %1243 = vmatprep.subr.bf16.mxu0 0
      %1244 = vmatpush2.bf16.xpose.msra.mxu0 0
      %1245 = vmatprep.mubr.bf16.mxu0 0
      %1246 = vmatmul.mubr.bf16.gmra.mxu0 %v1208
      %v1247 = vpop.f32.mrf.mxu0
      %v1248 = vadd.f32 %v589, %v1247
      %v1249 = vpop.f32.mrf.mxu0
      %v1250 = vpop.f32.mrf.mxu0
      %v1251 = vadd.f32 %v590, %v1250
      %v1252 = vpop.f32.mrf.mxu0
      %1253 = vdwg.mxu0
      %1255 = vrot.lane.b32.xlu0 %v608, 120
      %v1256 = vpop.permute.xlu0 %1255
      %1257 = vrot.lane.b32.xlu0 %v612, 104
      %v1258 = vpop.permute.xlu0 %1257
      %v1260 = vsel %vm616, %v1256, 0
      %v1263 = vsel %vm616, %v1258, 0
      %1265 = vmatprep.subr.bf16.mxu0 0
      %1266 = vmatpush1.bf16.xpose.msra.mxu0 0
      %1267 = vmatprep.subr.bf16.mxu0 0
      %1268 = vmatpush1.bf16.xpose.msra.mxu0 0
      %1269 = vmatprep.subr.bf16.mxu0 0
      %1270 = vmatpush1.bf16.xpose.msra.mxu0 0
      %1271 = vmatprep.subr.bf16.mxu0 0
      %1272 = vmatpush1.bf16.xpose.msra.mxu0 0
      %1273 = vmatprep.subr.bf16.mxu0 0
      %1274 = vmatpush1.bf16.xpose.msra.mxu0 0
      %1275 = vmatprep.subr.bf16.mxu0 0
      %1276 = vmatpush1.bf16.xpose.msra.mxu0 0
      %1277 = vmatprep.subr.bf16.mxu0 0
      %1278 = vmatpush1.bf16.xpose.msra.mxu0 0
      %1279 = vmatprep.subr.bf16.mxu0 0
      %1280 = vmatpush1.bf16.xpose.msra.mxu0 %v1263
      %1281 = vmatprep.subr.bf16.mxu0 0
      %1282 = vmatpush2.bf16.xpose.msra.mxu0 0
      %1283 = vmatprep.subr.bf16.mxu0 0
      %1284 = vmatpush2.bf16.xpose.msra.mxu0 0
      %1285 = vmatprep.subr.bf16.mxu0 0
      %1286 = vmatpush2.bf16.xpose.msra.mxu0 0
      %1287 = vmatprep.subr.bf16.mxu0 0
      %1288 = vmatpush2.bf16.xpose.msra.mxu0 0
      %1289 = vmatprep.subr.bf16.mxu0 0
      %1290 = vmatpush2.bf16.xpose.msra.mxu0 0
      %1291 = vmatprep.subr.bf16.mxu0 0
      %1292 = vmatpush2.bf16.xpose.msra.mxu0 0
      %1293 = vmatprep.subr.bf16.mxu0 0
      %1294 = vmatpush2.bf16.xpose.msra.mxu0 0
      %1295 = vmatprep.subr.bf16.mxu0 0
      %1296 = vmatpush2.bf16.xpose.msra.mxu0 0
      %1297 = vmatprep.mubr.bf16.mxu0 0
      %1298 = vmatmul.mubr.bf16.gmra.mxu0 %v1260
      %v1299 = vpop.f32.mrf.mxu0
      %v1300 = vadd.f32 %v593, %v1299
      %v1301 = vpop.f32.mrf.mxu0
      %v1302 = vpop.f32.mrf.mxu0
      %v1303 = vadd.f32 %v594, %v1302
      %v1304 = vpop.f32.mrf.mxu0
      %1305 = vdwg.mxu0
      %v1306 = vsel %vm333, %v1144, -inf
      %1307 = vmax.xlane.f32.xlu0 %v1306
      %v1308 = vpop.xlane.xlu0 %1307
      %v1309 = vsel %vm333, %v1147, -inf
      %1310 = vmax.xlane.f32.xlu0 %v1309
      %v1311 = vpop.xlane.xlu0 %1310
      %v1312 = vsel %vm333, %v1196, -inf
      %1313 = vmax.xlane.f32.xlu0 %v1312
      %v1314 = vpop.xlane.xlu0 %1313
      %v1315 = vsel %vm333, %v1199, -inf
      %1316 = vmax.xlane.f32.xlu0 %v1315
      %v1317 = vpop.xlane.xlu0 %1316
      %v1318 = vsel %vm333, %v1248, -inf
      %1319 = vmax.xlane.f32.xlu0 %v1318
      %v1320 = vpop.xlane.xlu0 %1319
      %v1321 = vsel %vm333, %v1251, -inf
      %1322 = vmax.xlane.f32.xlu0 %v1321
      %v1323 = vpop.xlane.xlu0 %1322
      %v1324 = vsel %vm333, %v1300, -inf
      %1325 = vmax.xlane.f32.xlu0 %v1324
      %v1326 = vpop.xlane.xlu0 %1325
      %v1327 = vsel %vm333, %v1303, -inf
      %1328 = vmax.xlane.f32.xlu0 %v1327
      %v1329 = vpop.xlane.xlu0 %1328
      %v1330 = vsub.f32 %v1144, %v1308
      %v1331 = vsub.f32 %v1147, %v1311
      %v1332 = vsub.f32 %v1196, %v1314
      %v1333 = vsub.f32 %v1199, %v1317
      %v1334 = vsub.f32 %v1248, %v1320
      %v1335 = vsub.f32 %v1251, %v1323
      %v1336 = vsub.f32 %v1300, %v1326
      %v1337 = vsub.f32 %v1303, %v1329
      %v1338 = vmul.f32 %v1330, 1.442695
      %v1339 = vpow.pop %v1338
      %v1340 = vmul.f32 %v1331, 1.442695
      %v1341 = vpow.pop %v1340
      %v1342 = vmul.f32 %v1332, 1.442695
      %v1343 = vpow.pop %v1342
      %v1344 = vmul.f32 %v1333, 1.442695
      %v1345 = vpow.pop %v1344
      %v1346 = vmul.f32 %v1334, 1.442695
      %v1347 = vpow.pop %v1346
      %v1348 = vmul.f32 %v1335, 1.442695
      %v1349 = vpow.pop %v1348
      %v1350 = vmul.f32 %v1336, 1.442695
      %v1351 = vpow.pop %v1350
      %v1352 = vmul.f32 %v1337, 1.442695
      %v1353 = vpow.pop %v1352
      %v1354 = vsel %vm333, %v1339, 0.0
      %1355 = vadd.xlane.f32.xlu0 %v1354
      %v1356 = vpop.xlane.xlu0 %1355
      %v1357 = vsel %vm333, %v1341, 0.0
      %1358 = vadd.xlane.f32.xlu0 %v1357
      %v1359 = vpop.xlane.xlu0 %1358
      %v1360 = vsel %vm333, %v1343, 0.0
      %1361 = vadd.xlane.f32.xlu0 %v1360
      %v1362 = vpop.xlane.xlu0 %1361
      %v1363 = vsel %vm333, %v1345, 0.0
      %1364 = vadd.xlane.f32.xlu0 %v1363
      %v1365 = vpop.xlane.xlu0 %1364
      %v1366 = vsel %vm333, %v1347, 0.0
      %1367 = vadd.xlane.f32.xlu0 %v1366
      %v1368 = vpop.xlane.xlu0 %1367
      %v1369 = vsel %vm333, %v1349, 0.0
      %1370 = vadd.xlane.f32.xlu0 %v1369
      %v1371 = vpop.xlane.xlu0 %1370
      %v1372 = vsel %vm333, %v1351, 0.0
      %1373 = vadd.xlane.f32.xlu0 %v1372
      %v1374 = vpop.xlane.xlu0 %1373
      %v1375 = vsel %vm333, %v1353, 0.0
      %1376 = vadd.xlane.f32.xlu0 %v1375
      %v1377 = vpop.xlane.xlu0 %1376
      %v1378 = vrcp.pop %v1356
      %v1379 = vrcp.pop %v1359
      %v1380 = vrcp.pop %v1362
      %v1381 = vrcp.pop %v1365
      %v1382 = vrcp.pop %v1368
      %v1383 = vrcp.pop %v1371
      %v1384 = vrcp.pop %v1374
      %v1385 = vrcp.pop %v1377
      %v1386 = vmul.f32 %v1339, %v1378
      %v1387 = vmul.f32 %v1341, %v1379
      %v1388 = vmul.f32 %v1343, %v1380
      %v1389 = vmul.f32 %v1345, %v1381
      %v1390 = vmul.f32 %v1347, %v1382
      %v1391 = vmul.f32 %v1349, %v1383
      %v1392 = vmul.f32 %v1351, %v1384
      %v1393 = vmul.f32 %v1353, %v1385
      %v1394 = vpack.c.bf16 %v1387, %v1386
      %v1395 = vpack.c.bf16 %v1389, %v1388
      %v1396 = vpack.c.bf16 %v1391, %v1390
      %v1397 = vpack.c.bf16 %v1393, %v1392
      %1398 = vrot.lane.b32.xlu0 %v609, 88
      %v1399 = vpop.permute.xlu0 %1398
      %v1402 = vsel %vm333, %v1394, 0
      %1404 = vmatprep.subr.bf16.mxu0 0
      %1405 = vmatpush1.bf16.msra.mxu0 0
      %1406 = vmatprep.subr.bf16.mxu0 0
      %1407 = vmatpush1.bf16.msra.mxu0 0
      %1408 = vmatprep.subr.bf16.mxu0 0
      %1409 = vmatpush1.bf16.msra.mxu0 0
      %1410 = vmatprep.subr.bf16.mxu0 0
      %1411 = vmatpush1.bf16.msra.mxu0 0
      %1412 = vmatprep.subr.bf16.mxu0 0
      %1413 = vmatpush1.bf16.msra.mxu0 0
      %1414 = vmatprep.subr.bf16.mxu0 0
      %1415 = vmatpush1.bf16.msra.mxu0 0
      %1416 = vmatprep.subr.bf16.mxu0 0
      %1417 = vmatpush1.bf16.msra.mxu0 0
      %1418 = vmatprep.subr.bf16.mxu0 0
      %1419 = vmatpush1.bf16.msra.mxu0 %v1399
      %1420 = vmatprep.subr.bf16.mxu0 0
      %1421 = vmatpush2.bf16.msra.mxu0 0
      %1422 = vmatprep.subr.bf16.mxu0 0
      %1423 = vmatpush2.bf16.msra.mxu0 0
      %1424 = vmatprep.subr.bf16.mxu0 0
      %1425 = vmatpush2.bf16.msra.mxu0 0
      %1426 = vmatprep.subr.bf16.mxu0 0
      %1427 = vmatpush2.bf16.msra.mxu0 0
      %1428 = vmatprep.subr.bf16.mxu0 0
      %1429 = vmatpush2.bf16.msra.mxu0 0
      %1430 = vmatprep.subr.bf16.mxu0 0
      %1431 = vmatpush2.bf16.msra.mxu0 0
      %1432 = vmatprep.subr.bf16.mxu0 0
      %1433 = vmatpush2.bf16.msra.mxu0 0
      %1434 = vmatprep.subr.bf16.mxu0 0
      %1435 = vmatpush2.bf16.msra.mxu0 0
      %1436 = vmatprep.mubr.bf16.mxu0 0
      %1437 = vmatmul.mubr.bf16.gmra.mxu0 %v1402
      %v1438 = vpop.f32.mrf.mxu0
      %v1439 = vadd.f32 0.0, %v1438
      %v1440 = vpop.f32.mrf.mxu0
      %v1441 = vpop.f32.mrf.mxu0
      %v1442 = vadd.f32 0.0, %v1441
      %v1443 = vpop.f32.mrf.mxu0
      %1444 = vdwg.mxu0
      %1445 = vrot.lane.b32.xlu0 %v610, 88
      %v1446 = vpop.permute.xlu0 %1445
      %v1449 = vsel %vm333, %v1395, 0
      %1451 = vmatprep.subr.bf16.mxu0 0
      %1452 = vmatpush1.bf16.msra.mxu0 0
      %1453 = vmatprep.subr.bf16.mxu0 0
      %1454 = vmatpush1.bf16.msra.mxu0 0
      %1455 = vmatprep.subr.bf16.mxu0 0
      %1456 = vmatpush1.bf16.msra.mxu0 0
      %1457 = vmatprep.subr.bf16.mxu0 0
      %1458 = vmatpush1.bf16.msra.mxu0 0
      %1459 = vmatprep.subr.bf16.mxu0 0
      %1460 = vmatpush1.bf16.msra.mxu0 0
      %1461 = vmatprep.subr.bf16.mxu0 0
      %1462 = vmatpush1.bf16.msra.mxu0 0
      %1463 = vmatprep.subr.bf16.mxu0 0
      %1464 = vmatpush1.bf16.msra.mxu0 0
      %1465 = vmatprep.subr.bf16.mxu0 0
      %1466 = vmatpush1.bf16.msra.mxu0 %v1446
      %1467 = vmatprep.subr.bf16.mxu0 0
      %1468 = vmatpush2.bf16.msra.mxu0 0
      %1469 = vmatprep.subr.bf16.mxu0 0
      %1470 = vmatpush2.bf16.msra.mxu0 0
      %1471 = vmatprep.subr.bf16.mxu0 0
      %1472 = vmatpush2.bf16.msra.mxu0 0
      %1473 = vmatprep.subr.bf16.mxu0 0
      %1474 = vmatpush2.bf16.msra.mxu0 0
      %1475 = vmatprep.subr.bf16.mxu0 0
      %1476 = vmatpush2.bf16.msra.mxu0 0
      %1477 = vmatprep.subr.bf16.mxu0 0
      %1478 = vmatpush2.bf16.msra.mxu0 0
      %1479 = vmatprep.subr.bf16.mxu0 0
      %1480 = vmatpush2.bf16.msra.mxu0 0
      %1481 = vmatprep.subr.bf16.mxu0 0
      %1482 = vmatpush2.bf16.msra.mxu0 0
      %1483 = vmatprep.mubr.bf16.mxu0 0
      %1484 = vmatmul.mubr.bf16.gmra.mxu0 %v1449
      %v1485 = vpop.f32.mrf.mxu0
      %v1486 = vadd.f32 0.0, %v1485
      %v1487 = vpop.f32.mrf.mxu0
      %v1488 = vpop.f32.mrf.mxu0
      %v1489 = vadd.f32 0.0, %v1488
      %v1490 = vpop.f32.mrf.mxu0
      %1491 = vdwg.mxu0
      %1492 = vrot.lane.b32.xlu0 %v611, 88
      %v1493 = vpop.permute.xlu0 %1492
      %v1496 = vsel %vm333, %v1396, 0
      %1498 = vmatprep.subr.bf16.mxu0 0
      %1499 = vmatpush1.bf16.msra.mxu0 0
      %1500 = vmatprep.subr.bf16.mxu0 0
      %1501 = vmatpush1.bf16.msra.mxu0 0
      %1502 = vmatprep.subr.bf16.mxu0 0
      %1503 = vmatpush1.bf16.msra.mxu0 0
      %1504 = vmatprep.subr.bf16.mxu0 0
      %1505 = vmatpush1.bf16.msra.mxu0 0
      %1506 = vmatprep.subr.bf16.mxu0 0
      %1507 = vmatpush1.bf16.msra.mxu0 0
      %1508 = vmatprep.subr.bf16.mxu0 0
      %1509 = vmatpush1.bf16.msra.mxu0 0
      %1510 = vmatprep.subr.bf16.mxu0 0
      %1511 = vmatpush1.bf16.msra.mxu0 0
      %1512 = vmatprep.subr.bf16.mxu0 0
      %1513 = vmatpush1.bf16.msra.mxu0 %v1493
      %1514 = vmatprep.subr.bf16.mxu0 0
      %1515 = vmatpush2.bf16.msra.mxu0 0
      %1516 = vmatprep.subr.bf16.mxu0 0
      %1517 = vmatpush2.bf16.msra.mxu0 0
      %1518 = vmatprep.subr.bf16.mxu0 0
      %1519 = vmatpush2.bf16.msra.mxu0 0
      %1520 = vmatprep.subr.bf16.mxu0 0
      %1521 = vmatpush2.bf16.msra.mxu0 0
      %1522 = vmatprep.subr.bf16.mxu0 0
      %1523 = vmatpush2.bf16.msra.mxu0 0
      %1524 = vmatprep.subr.bf16.mxu0 0
      %1525 = vmatpush2.bf16.msra.mxu0 0
      %1526 = vmatprep.subr.bf16.mxu0 0
      %1527 = vmatpush2.bf16.msra.mxu0 0
      %1528 = vmatprep.subr.bf16.mxu0 0
      %1529 = vmatpush2.bf16.msra.mxu0 0
      %1530 = vmatprep.mubr.bf16.mxu0 0
      %1531 = vmatmul.mubr.bf16.gmra.mxu0 %v1496
      %v1532 = vpop.f32.mrf.mxu0
      %v1533 = vadd.f32 0.0, %v1532
      %v1534 = vpop.f32.mrf.mxu0
      %v1535 = vpop.f32.mrf.mxu0
      %v1536 = vadd.f32 0.0, %v1535
      %v1537 = vpop.f32.mrf.mxu0
      %1538 = vdwg.mxu0
      %1539 = vrot.lane.b32.xlu0 %v612, 88
      %v1540 = vpop.permute.xlu0 %1539
      %v1543 = vsel %vm333, %v1397, 0
      %1545 = vmatprep.subr.bf16.mxu0 0
      %1546 = vmatpush1.bf16.msra.mxu0 0
      %1547 = vmatprep.subr.bf16.mxu0 0
      %1548 = vmatpush1.bf16.msra.mxu0 0
      %1549 = vmatprep.subr.bf16.mxu0 0
      %1550 = vmatpush1.bf16.msra.mxu0 0
      %1551 = vmatprep.subr.bf16.mxu0 0
      %1552 = vmatpush1.bf16.msra.mxu0 0
      %1553 = vmatprep.subr.bf16.mxu0 0
      %1554 = vmatpush1.bf16.msra.mxu0 0
      %1555 = vmatprep.subr.bf16.mxu0 0
      %1556 = vmatpush1.bf16.msra.mxu0 0
      %1557 = vmatprep.subr.bf16.mxu0 0
      %1558 = vmatpush1.bf16.msra.mxu0 0
      %1559 = vmatprep.subr.bf16.mxu0 0
      %1560 = vmatpush1.bf16.msra.mxu0 %v1540
      %1561 = vmatprep.subr.bf16.mxu0 0
      %1562 = vmatpush2.bf16.msra.mxu0 0
      %1563 = vmatprep.subr.bf16.mxu0 0
      %1564 = vmatpush2.bf16.msra.mxu0 0
      %1565 = vmatprep.subr.bf16.mxu0 0
      %1566 = vmatpush2.bf16.msra.mxu0 0
      %1567 = vmatprep.subr.bf16.mxu0 0
      %1568 = vmatpush2.bf16.msra.mxu0 0
      %1569 = vmatprep.subr.bf16.mxu0 0
      %1570 = vmatpush2.bf16.msra.mxu0 0
      %1571 = vmatprep.subr.bf16.mxu0 0
      %1572 = vmatpush2.bf16.msra.mxu0 0
      %1573 = vmatprep.subr.bf16.mxu0 0
      %1574 = vmatpush2.bf16.msra.mxu0 0
      %1575 = vmatprep.subr.bf16.mxu0 0
      %1576 = vmatpush2.bf16.msra.mxu0 0
      %1577 = vmatprep.mubr.bf16.mxu0 0
      %1578 = vmatmul.mubr.bf16.gmra.mxu0 %v1543
      %v1579 = vpop.f32.mrf.mxu0
      %v1580 = vadd.f32 0.0, %v1579
      %v1581 = vpop.f32.mrf.mxu0
      %v1582 = vpop.f32.mrf.mxu0
      %v1583 = vadd.f32 0.0, %v1582
      %v1584 = vpop.f32.mrf.mxu0
      %1585 = vdwg.mxu0
      %v1586 = vpack.c.bf16 %v1442, %v1439
      %v1587 = vpack.c.bf16 %v1489, %v1486
      %v1588 = vpack.c.bf16 %v1536, %v1533
      %v1589 = vpack.c.bf16 %v1583, %v1580
      %v1591 = vsel %vm616, %v1586, 0
      %v1594 = vsel %vm616, %v1587, 0
      %v1597 = vsel %vm616, %v1588, 0
      %v1600 = vsel %vm616, %v1589, 0
      %vm1602 = vcmask 1043456
      %v1604 = vsel %vm1602, %v596, 0
      %1606 = vmatprep.subr.bf16.mxu0 0
      %1607 = vmatpush1.bf16.msra.mxu0 0
      %1608 = vmatprep.subr.bf16.mxu0 0
      %1609 = vmatpush1.bf16.msra.mxu0 0
      %1610 = vmatprep.subr.bf16.mxu0 0
      %1611 = vmatpush1.bf16.msra.mxu0 0
      %1612 = vmatprep.subr.bf16.mxu0 0
      %1613 = vmatpush1.bf16.msra.mxu0 0
      %1614 = vmatprep.subr.bf16.mxu0 0
      %1615 = vmatpush1.bf16.msra.mxu0 0
      %1616 = vmatprep.subr.bf16.mxu0 0
      %1617 = vmatpush1.bf16.msra.mxu0 0
      %1618 = vmatprep.subr.bf16.mxu0 0
      %1619 = vmatpush1.bf16.msra.mxu0 0
      %1620 = vmatprep.subr.bf16.mxu0 0
      %1621 = vmatpush1.bf16.msra.mxu0 %v1604
      %1622 = vmatprep.subr.bf16.mxu0 0
      %1623 = vmatpush2.bf16.msra.mxu0 0
      %1624 = vmatprep.subr.bf16.mxu0 0
      %1625 = vmatpush2.bf16.msra.mxu0 0
      %1626 = vmatprep.subr.bf16.mxu0 0
      %1627 = vmatpush2.bf16.msra.mxu0 0
      %1628 = vmatprep.subr.bf16.mxu0 0
      %1629 = vmatpush2.bf16.msra.mxu0 0
      %1630 = vmatprep.subr.bf16.mxu0 0
      %1631 = vmatpush2.bf16.msra.mxu0 0
      %1632 = vmatprep.subr.bf16.mxu0 0
      %1633 = vmatpush2.bf16.msra.mxu0 0
      %1634 = vmatprep.subr.bf16.mxu0 0
      %1635 = vmatpush2.bf16.msra.mxu0 0
      %1636 = vmatprep.subr.bf16.mxu0 0
      %1637 = vmatpush2.bf16.msra.mxu0 0
      %1638 = vmatprep.mubr.bf16.mxu0 0
      %1639 = vmatmul.mubr.bf16.gmra.mxu0 %v1591
      %v1640 = vpop.f32.mrf.mxu0
      %v1641 = vadd.f32 0.0, %v1640
      %v1642 = vpop.f32.mrf.mxu0
      %v1643 = vpop.f32.mrf.mxu0
      %v1644 = vadd.f32 0.0, %v1643
      %v1645 = vpop.f32.mrf.mxu0
      %1646 = vmatprep.mubr.bf16.mxu0 0
      %1647 = vmatmul.mubr.bf16.gmra.mxu0 %v1594
      %v1648 = vpop.f32.mrf.mxu0
      %v1649 = vadd.f32 0.0, %v1648
      %v1650 = vpop.f32.mrf.mxu0
      %v1651 = vpop.f32.mrf.mxu0
      %v1652 = vadd.f32 0.0, %v1651
      %v1653 = vpop.f32.mrf.mxu0
      %1654 = vmatprep.mubr.bf16.mxu0 0
      %1655 = vmatmul.mubr.bf16.gmra.mxu0 %v1597
      %v1656 = vpop.f32.mrf.mxu0
      %v1657 = vadd.f32 0.0, %v1656
      %v1658 = vpop.f32.mrf.mxu0
      %v1659 = vpop.f32.mrf.mxu0
      %v1660 = vadd.f32 0.0, %v1659
      %v1661 = vpop.f32.mrf.mxu0
      %1662 = vmatprep.mubr.bf16.mxu0 0
      %1663 = vmatmul.mubr.bf16.gmra.mxu0 %v1600
      %v1664 = vpop.f32.mrf.mxu0
      %v1665 = vadd.f32 0.0, %v1664
      %v1666 = vpop.f32.mrf.mxu0
      %v1667 = vpop.f32.mrf.mxu0
      %v1668 = vadd.f32 0.0, %v1667
      %v1669 = vpop.f32.mrf.mxu0
      %1670 = vdwg.mxu0
      %v1672 = vsel %vm616, %v1094, 0
      %v1675 = vsel %vm616, %v1095, 0
      %v1678 = vsel %vm616, %v1096, 0
      %v1681 = vsel %vm616, %v1097, 0
      %v1684 = vsel %vm1602, %v595, 0
      %1686 = vmatprep.subr.bf16.mxu0 0
      %1687 = vmatpush1.bf16.msra.mxu0 0
      %1688 = vmatprep.subr.bf16.mxu0 0
      %1689 = vmatpush1.bf16.msra.mxu0 0
      %1690 = vmatprep.subr.bf16.mxu0 0
      %1691 = vmatpush1.bf16.msra.mxu0 0
      %1692 = vmatprep.subr.bf16.mxu0 0
      %1693 = vmatpush1.bf16.msra.mxu0 0
      %1694 = vmatprep.subr.bf16.mxu0 0
      %1695 = vmatpush1.bf16.msra.mxu0 0
      %1696 = vmatprep.subr.bf16.mxu0 0
      %1697 = vmatpush1.bf16.msra.mxu0 0
      %1698 = vmatprep.subr.bf16.mxu0 0
      %1699 = vmatpush1.bf16.msra.mxu0 0
      %1700 = vmatprep.subr.bf16.mxu0 0
      %1701 = vmatpush1.bf16.msra.mxu0 %v1684
      %1702 = vmatprep.subr.bf16.mxu0 0
      %1703 = vmatpush2.bf16.msra.mxu0 0
      %1704 = vmatprep.subr.bf16.mxu0 0
      %1705 = vmatpush2.bf16.msra.mxu0 0
      %1706 = vmatprep.subr.bf16.mxu0 0
      %1707 = vmatpush2.bf16.msra.mxu0 0
      %1708 = vmatprep.subr.bf16.mxu0 0
      %1709 = vmatpush2.bf16.msra.mxu0 0
      %1710 = vmatprep.subr.bf16.mxu0 0
      %1711 = vmatpush2.bf16.msra.mxu0 0
      %1712 = vmatprep.subr.bf16.mxu0 0
      %1713 = vmatpush2.bf16.msra.mxu0 0
      %1714 = vmatprep.subr.bf16.mxu0 0
      %1715 = vmatpush2.bf16.msra.mxu0 0
      %1716 = vmatprep.subr.bf16.mxu0 0
      %1717 = vmatpush2.bf16.msra.mxu0 0
      %1718 = vmatprep.mubr.bf16.mxu0 0
      %1719 = vmatmul.mubr.bf16.gmra.mxu0 %v1672
      %v1720 = vpop.f32.mrf.mxu0
      %v1721 = vadd.f32 %v1641, %v1720
      %v1722 = vpop.f32.mrf.mxu0
      %v1723 = vpop.f32.mrf.mxu0
      %v1724 = vadd.f32 %v1644, %v1723
      %v1725 = vpop.f32.mrf.mxu0
      %1726 = vmatprep.mubr.bf16.mxu0 0
      %1727 = vmatmul.mubr.bf16.gmra.mxu0 %v1675
      %v1728 = vpop.f32.mrf.mxu0
      %v1729 = vadd.f32 %v1649, %v1728
      %v1730 = vpop.f32.mrf.mxu0
      %v1731 = vpop.f32.mrf.mxu0
      %v1732 = vadd.f32 %v1652, %v1731
      %v1733 = vpop.f32.mrf.mxu0
      %1734 = vmatprep.mubr.bf16.mxu0 0
      %1735 = vmatmul.mubr.bf16.gmra.mxu0 %v1678
      %v1736 = vpop.f32.mrf.mxu0
      %v1737 = vadd.f32 %v1657, %v1736
      %v1738 = vpop.f32.mrf.mxu0
      %v1739 = vpop.f32.mrf.mxu0
      %v1740 = vadd.f32 %v1660, %v1739
      %v1741 = vpop.f32.mrf.mxu0
      %1742 = vmatprep.mubr.bf16.mxu0 0
      %1743 = vmatmul.mubr.bf16.gmra.mxu0 %v1681
      %v1744 = vpop.f32.mrf.mxu0
      %v1745 = vadd.f32 %v1665, %v1744
      %v1746 = vpop.f32.mrf.mxu0
      %v1747 = vpop.f32.mrf.mxu0
      %v1748 = vadd.f32 %v1668, %v1747
      %v1749 = vpop.f32.mrf.mxu0
      %1750 = vdwg.mxu0
      %v1751 = vld [vmem:[%s6] sm:$0x1]
      %v1753 = vlaneseq
      %v1754 = vshrl.u32 %v1753, 7
      %v1755 = vsub.s32 0, %v1754
      %v1756 = vrot.slane %v1751, %v1755
      %v1758 = vadd.f32 %v1721, %v1756
      %v1759 = vadd.f32 %v1724, %v1756
      %v1760 = vadd.f32 %v1729, %v1756
      %v1761 = vadd.f32 %v1732, %v1756
      %v1762 = vadd.f32 %v1737, %v1756
      %v1763 = vadd.f32 %v1740, %v1756
      %v1764 = vadd.f32 %v1745, %v1756
      %v1765 = vadd.f32 %v1748, %v1756
      %v1766 = vpack.c.bf16 %v1759, %v1758
      %v1767 = vpack.c.bf16 %v1761, %v1760
      %v1768 = vpack.c.bf16 %v1763, %v1762
      %v1769 = vpack.c.bf16 %v1765, %v1764
      %v1774 = vunpack.c.l.b16 %v1766
      %v1775 = vunpack.c.h.b16 %v1766
      %v1776 = vunpack.c.l.b16 %v1767
      %v1777 = vunpack.c.h.b16 %v1767
      %v1778 = vunpack.c.l.b16 %v1768
      %v1779 = vunpack.c.h.b16 %v1768
      %v1780 = vunpack.c.l.b16 %v1769
      %v1781 = vunpack.c.h.b16 %v1769
      %v1782 = vpack.c.b16 %v1774, %v1774
      %v1783 = vpack.c.b16 %v1775, %v1775
      %v1784 = vpack.c.b16 %v1776, %v1776
      %v1785 = vpack.c.b16 %v1777, %v1777
      %v1786 = vpack.c.b16 %v1778, %v1778
      %v1787 = vpack.c.b16 %v1779, %v1779
      %v1788 = vpack.c.b16 %v1780, %v1780
      %v1789 = vpack.c.b16 %v1781, %v1781
      %vm1798 = vcmask 125952
      %1799 = vst.msk [vmem:[%s312] sm:$0xf] %vm1798, %v1782
      %1800 = vst.msk [vmem:[%s312 + $0x4] sm:$0xf] %vm1798, %v1783
      %1801 = vst.msk [vmem:[%s312 + $0x8] sm:$0xf] %vm1798, %v1784
      %1802 = vst.msk [vmem:[%s312 + $0xc] sm:$0xf] %vm1798, %v1785
      %1803 = vst.msk [vmem:[%s312 + $0x10] sm:$0xf] %vm1798, %v1786
      %1804 = vst.msk [vmem:[%s312 + $0x14] sm:$0xf] %vm1798, %v1787
      %1805 = vst.msk [vmem:[%s312 + $0x18] sm:$0xf] %vm1798, %v1788
      %1806 = vst.msk [vmem:[%s312 + $0x1c] sm:$0xf] %vm1798, %v1789
      %s1807 = smul.u32 4, %s19
      %p1808 = scmp.lt.s32.totalorder %s1807, 7
      %s1809 = scalar_select %p1808, %s1807, 7
      %s1810 = smul.addr %s1809, 2
      %s1811 = smul.addr %s1810, 4
      %s1812 = scalar_lea.vmem %s8, %s1811
      // Predicated region
      $region53: #{_lambda_.12} parent=51 // pred_check
        %p1813 = pneg %p210
      $region54: #{_lambda_.12} parent=51 // pred_check_branch
        %1815 = sbr.rel (%p1813) target = $region56
      $region55: #{_lambda_.12} parent=51 // pred_region
        %s1816 = smul.u32 4, %s19
      $region56: #{_lambda_.12} parent=51 // pred_fallthru
        _
    $region52: #{_lambda_.12} parent=5 // pred_fallthru
      _
    %p1817 = scmp.le.s32.totalorder 2, %s14
    // Predicated region
    $region57: #{_lambda_.12} parent=5 // pred_check
      %p1818 = pneg %p1817
    $region58: #{_lambda_.12} parent=5 // pred_check_branch
      %1820 = sbr.rel (%p1818) target = $region60
    $region59: #{_lambda_.12} parent=5 // pred_region
      %s1821 = ssub.s32 %s14, 2
      // Predicated region
      $region61: #{_lambda_.12} parent=59 // pred_check
        %p1822 = pneg %p216
      $region62: #{_lambda_.12} parent=59 // pred_check_branch
        %1824 = sbr.rel (%p1822) target = $region64
      $region63: #{_lambda_.12} parent=59 // pred_region
        %s1825 = smul.u32 4, %s20
        %p1826 = scmp.lt.s32.totalorder %s1825, 7
        %s1827 = scalar_select %p1826, %s1825, 7
        %s1828 = smul.addr %s1827, 2
        %s1829 = smul.addr %s1828, 4
        %s1830 = scalar_lea.vmem %s8, %s1829
      $region64: #{_lambda_.12} parent=59 // pred_fallthru
        _
    $region60: #{_lambda_.12} parent=5 // pred_fallthru
      _
  $region6: #{_lambda_.12} parent=0 // loop_footer
    %s18 = sadd.s32 1, %s14
  $region7: #{_lambda_.12} parent=0 // loop_footer_branch
    %13 = sbr.rel target = $region3
  $region8: #{_lambda_.12} parent=0 // loop_exit
    _

// kernel: _lambda_.13
$region0: #{_lambda_.13}
  #allocation0 [shape = 'u32[]', space=smem, size = 0x4, offset = 0x4, fixed_abs, tag = 'smem constant byte address 0x4 - core index']
  #allocation1 [shape = 'u32[144,128]{1,0:T(1,128)}', space=vmem, size = 0x12000, scoped, tag = 'internal scratch']
  #allocation2 [shape = 'bf16[128,16]{1,0:T(8,128)(2,1)}', space=vmem, size = 0x8000, scoped, tag = 'scratch operand']
  #allocation3 [shape = 'f32[128,16]{1,0:T(8,128)}', space=vmem, size = 0x10000, scoped, tag = 'scratch operand']
  %s0 = inlined_call_operand.vmem [shape: bf16[128,16], index: 0, kind: input, shape index: {}]
  %s1 = inlined_call_operand.vmem [shape: bf16[128,16], index: 1, kind: input, shape index: {}]
  %s2 = inlined_call_operand.vmem [shape: f32[1,16], index: 2, kind: input, shape index: {}]
  %s3 = inlined_call_operand.vmem [shape: f32[1,16], index: 3, kind: input, shape index: {}]
  %s4 = inlined_call_operand.vmem [shape: bf16[16,64], index: 4, kind: input, shape index: {}]
  %s5 = inlined_call_operand.vmem [shape: f32[1,64], index: 5, kind: input, shape index: {}]
  %s6 = inlined_call_operand.vmem [shape: bf16[64,16], index: 6, kind: input, shape index: {}]
  %s7 = inlined_call_operand.vmem [shape: f32[1,16], index: 7, kind: input, shape index: {}]
  %s8 = inlined_call_operand.vmem [shape: bf16[128,16], index: 8, kind: output, shape index: {}]
  %s9 = sld [smem:[#allocation0]]
  $region50: #{_lambda_.13} parent=0
    _
  %s11 = ssub.s32 1, %s9
  %s12 = scalar_select 0, %s11, %s9
  // Predicated region
  $region2: #{_lambda_.13} parent=0 // pred_check
    _
  $region3: #{_lambda_.13} parent=0 // pred_check_branch
    %14 = sbr.rel (0) target = $region5
  $region4: #{_lambda_.13} parent=0 // pred_region
    _
  $region5: #{_lambda_.13} parent=0 // pred_fallthru
    _
  // Predicated region
  $region6: #{_lambda_.13} parent=0 // pred_check
    _
  $region7: #{_lambda_.13} parent=0 // pred_check_branch
    %16 = sbr.rel (0) target = $region9
  $region8: #{_lambda_.13} parent=0 // pred_region
    _
  $region9: #{_lambda_.13} parent=0 // pred_fallthru
    _
  // Predicated region
  $region10: #{_lambda_.13} parent=0 // pred_check
    _
  $region11: #{_lambda_.13} parent=0 // pred_check_branch
    %18 = sbr.rel (0) target = $region13
  $region12: #{_lambda_.13} parent=0 // pred_region
    _
  $region13: #{_lambda_.13} parent=0 // pred_fallthru
    _
  // Predicated region
  $region14: #{_lambda_.13} parent=0 // pred_check
    _
  $region15: #{_lambda_.13} parent=0 // pred_check_branch
    %20 = sbr.rel (0) target = $region17
  $region16: #{_lambda_.13} parent=0 // pred_region
    _
  $region17: #{_lambda_.13} parent=0 // pred_fallthru
    _
  // Predicated region
  $region18: #{_lambda_.13} parent=0 // pred_check
    _
  $region19: #{_lambda_.13} parent=0 // pred_check_branch
    %22 = sbr.rel (0) target = $region21
  $region20: #{_lambda_.13} parent=0 // pred_region
    _
  $region21: #{_lambda_.13} parent=0 // pred_fallthru
    _
  // Predicated region
  $region22: #{_lambda_.13} parent=0 // pred_check
    _
  $region23: #{_lambda_.13} parent=0 // pred_check_branch
    %24 = sbr.rel (0) target = $region25
  $region24: #{_lambda_.13} parent=0 // pred_region
    _
  $region25: #{_lambda_.13} parent=0 // pred_fallthru
    _
  // Predicated region
  $region26: #{_lambda_.13} parent=0 // pred_check
    _
  $region27: #{_lambda_.13} parent=0 // pred_check_branch
    %26 = sbr.rel (0) target = $region29
  $region28: #{_lambda_.13} parent=0 // pred_region
    _
  $region29: #{_lambda_.13} parent=0 // pred_fallthru
    _
  // Predicated region
  $region30: #{_lambda_.13} parent=0 // pred_check
    _
  $region31: #{_lambda_.13} parent=0 // pred_check_branch
    %28 = sbr.rel (0) target = $region33
  $region32: #{_lambda_.13} parent=0 // pred_region
    _
  $region33: #{_lambda_.13} parent=0 // pred_fallthru
    _
  %p30 = scmp.eq.s32.totalorder 0, 0
  // Predicated region
  $region34: #{_lambda_.13} parent=0 // pred_check
    %p31 = pneg %p30
  $region35: #{_lambda_.13} parent=0 // pred_check_branch
    %33 = sbr.rel (%p31) target = $region37
  $region36: #{_lambda_.13} parent=0 // pred_region
    %v34 = vld [vmem:[%s0] sm:$0xf]
    %v35 = vld [vmem:[%s0 + $0x4] sm:$0xf]
    %v36 = vld [vmem:[%s0 + $0x8] sm:$0xf]
    %v37 = vld [vmem:[%s0 + $0xc] sm:$0xf]
    %v38 = vld [vmem:[%s0 + $0x10] sm:$0xf]
    %v39 = vld [vmem:[%s0 + $0x14] sm:$0xf]
    %v40 = vld [vmem:[%s0 + $0x18] sm:$0xf]
    %v41 = vld [vmem:[%s0 + $0x1c] sm:$0xf]
    %v42 = vld [vmem:[%s0 + $0x20] sm:$0xf]
    %v43 = vld [vmem:[%s0 + $0x24] sm:$0xf]
    %v44 = vld [vmem:[%s0 + $0x28] sm:$0xf]
    %v45 = vld [vmem:[%s0 + $0x2c] sm:$0xf]
    %v46 = vld [vmem:[%s0 + $0x30] sm:$0xf]
    %v47 = vld [vmem:[%s0 + $0x34] sm:$0xf]
    %v48 = vld [vmem:[%s0 + $0x38] sm:$0xf]
    %v49 = vld [vmem:[%s0 + $0x3c] sm:$0xf]
    %v50 = vunpack.c.l.bf16 %v34
    %v51 = vunpack.c.l.bf16 %v35
    %v52 = vunpack.c.l.bf16 %v36
    %v53 = vunpack.c.l.bf16 %v37
    %v54 = vunpack.c.l.bf16 %v38
    %v55 = vunpack.c.l.bf16 %v39
    %v56 = vunpack.c.l.bf16 %v40
    %v57 = vunpack.c.l.bf16 %v41
    %v58 = vunpack.c.l.bf16 %v42
    %v59 = vunpack.c.l.bf16 %v43
    %v60 = vunpack.c.l.bf16 %v44
    %v61 = vunpack.c.l.bf16 %v45
    %v62 = vunpack.c.l.bf16 %v46
    %v63 = vunpack.c.l.bf16 %v47
    %v64 = vunpack.c.l.bf16 %v48
    %v65 = vunpack.c.l.bf16 %v49
    %v66 = vld [vmem:[%s1] sm:$0xf]
    %v67 = vld [vmem:[%s1 + $0x4] sm:$0xf]
    %v68 = vld [vmem:[%s1 + $0x8] sm:$0xf]
    %v69 = vld [vmem:[%s1 + $0xc] sm:$0xf]
    %v70 = vld [vmem:[%s1 + $0x10] sm:$0xf]
    %v71 = vld [vmem:[%s1 + $0x14] sm:$0xf]
    %v72 = vld [vmem:[%s1 + $0x18] sm:$0xf]
    %v73 = vld [vmem:[%s1 + $0x1c] sm:$0xf]
    %v74 = vld [vmem:[%s1 + $0x20] sm:$0xf]
    %v75 = vld [vmem:[%s1 + $0x24] sm:$0xf]
    %v76 = vld [vmem:[%s1 + $0x28] sm:$0xf]
    %v77 = vld [vmem:[%s1 + $0x2c] sm:$0xf]
    %v78 = vld [vmem:[%s1 + $0x30] sm:$0xf]
    %v79 = vld [vmem:[%s1 + $0x34] sm:$0xf]
    %v80 = vld [vmem:[%s1 + $0x38] sm:$0xf]
    %v81 = vld [vmem:[%s1 + $0x3c] sm:$0xf]
    %v82 = vunpack.c.l.bf16 %v66
    %v83 = vunpack.c.l.bf16 %v67
    %v84 = vunpack.c.l.bf16 %v68
    %v85 = vunpack.c.l.bf16 %v69
    %v86 = vunpack.c.l.bf16 %v70
    %v87 = vunpack.c.l.bf16 %v71
    %v88 = vunpack.c.l.bf16 %v72
    %v89 = vunpack.c.l.bf16 %v73
    %v90 = vunpack.c.l.bf16 %v74
    %v91 = vunpack.c.l.bf16 %v75
    %v92 = vunpack.c.l.bf16 %v76
    %v93 = vunpack.c.l.bf16 %v77
    %v94 = vunpack.c.l.bf16 %v78
    %v95 = vunpack.c.l.bf16 %v79
    %v96 = vunpack.c.l.bf16 %v80
    %v97 = vunpack.c.l.bf16 %v81
    %v98 = vadd.f32 %v50, %v82
    %v99 = vadd.f32 %v51, %v83
    %v100 = vadd.f32 %v52, %v84
    %v101 = vadd.f32 %v53, %v85
    %v102 = vadd.f32 %v54, %v86
    %v103 = vadd.f32 %v55, %v87
    %v104 = vadd.f32 %v56, %v88
    %v105 = vadd.f32 %v57, %v89
    %v106 = vadd.f32 %v58, %v90
    %v107 = vadd.f32 %v59, %v91
    %v108 = vadd.f32 %v60, %v92
    %v109 = vadd.f32 %v61, %v93
    %v110 = vadd.f32 %v62, %v94
    %v111 = vadd.f32 %v63, %v95
    %v112 = vadd.f32 %v64, %v96
    %v113 = vadd.f32 %v65, %v97
    %v114 = vld [vmem:[%s2] sm:$0x1]
    %v115 = vld [vmem:[%s3] sm:$0x1]
    %vm116 = vcmask 130048
    %v117 = vsel %vm116, %v98, 0.0
    %118 = vadd.xlane.f32.xlu0 %v117
    %v119 = vpop.xlane.xlu0 %118
    %v120 = vsel %vm116, %v99, 0.0
    %121 = vadd.xlane.f32.xlu0 %v120
    %v122 = vpop.xlane.xlu0 %121
    %v123 = vsel %vm116, %v100, 0.0
    %124 = vadd.xlane.f32.xlu0 %v123
    %v125 = vpop.xlane.xlu0 %124
    %v126 = vsel %vm116, %v101, 0.0
    %127 = vadd.xlane.f32.xlu0 %v126
    %v128 = vpop.xlane.xlu0 %127
    %v129 = vsel %vm116, %v102, 0.0
    %130 = vadd.xlane.f32.xlu0 %v129
    %v131 = vpop.xlane.xlu0 %130
    %v132 = vsel %vm116, %v103, 0.0
    %133 = vadd.xlane.f32.xlu0 %v132
    %v134 = vpop.xlane.xlu0 %133
    %v135 = vsel %vm116, %v104, 0.0
    %136 = vadd.xlane.f32.xlu0 %v135
    %v137 = vpop.xlane.xlu0 %136
    %v138 = vsel %vm116, %v105, 0.0
    %139 = vadd.xlane.f32.xlu0 %v138
    %v140 = vpop.xlane.xlu0 %139
    %v141 = vsel %vm116, %v106, 0.0
    %142 = vadd.xlane.f32.xlu0 %v141
    %v143 = vpop.xlane.xlu0 %142
    %v144 = vsel %vm116, %v107, 0.0
    %145 = vadd.xlane.f32.xlu0 %v144
    %v146 = vpop.xlane.xlu0 %145
    %v147 = vsel %vm116, %v108, 0.0
    %148 = vadd.xlane.f32.xlu0 %v147
    %v149 = vpop.xlane.xlu0 %148
    %v150 = vsel %vm116, %v109, 0.0
    %151 = vadd.xlane.f32.xlu0 %v150
    %v152 = vpop.xlane.xlu0 %151
    %v153 = vsel %vm116, %v110, 0.0
    %154 = vadd.xlane.f32.xlu0 %v153
    %v155 = vpop.xlane.xlu0 %154
    %v156 = vsel %vm116, %v111, 0.0
    %157 = vadd.xlane.f32.xlu0 %v156
    %v158 = vpop.xlane.xlu0 %157
    %v159 = vsel %vm116, %v112, 0.0
    %160 = vadd.xlane.f32.xlu0 %v159
    %v161 = vpop.xlane.xlu0 %160
    %v162 = vsel %vm116, %v113, 0.0
    %163 = vadd.xlane.f32.xlu0 %v162
    %v164 = vpop.xlane.xlu0 %163
    %v165 = vrcp.pop 16.0
    %v166 = vmul.f32 %v119, %v165
    %v167 = vmul.f32 %v122, %v165
    %v168 = vmul.f32 %v125, %v165
    %v169 = vmul.f32 %v128, %v165
    %v170 = vmul.f32 %v131, %v165
    %v171 = vmul.f32 %v134, %v165
    %v172 = vmul.f32 %v137, %v165
    %v173 = vmul.f32 %v140, %v165
    %v174 = vmul.f32 %v143, %v165
    %v175 = vmul.f32 %v146, %v165
    %v176 = vmul.f32 %v149, %v165
    %v177 = vmul.f32 %v152, %v165
    %v178 = vmul.f32 %v155, %v165
    %v179 = vmul.f32 %v158, %v165
    %v180 = vmul.f32 %v161, %v165
    %v181 = vmul.f32 %v164, %v165
    %v182 = vsub.f32 %v98, %v166
    %v183 = vsub.f32 %v99, %v167
    %v184 = vsub.f32 %v100, %v168
    %v185 = vsub.f32 %v101, %v169
    %v186 = vsub.f32 %v102, %v170
    %v187 = vsub.f32 %v103, %v171
    %v188 = vsub.f32 %v104, %v172
    %v189 = vsub.f32 %v105, %v173
    %v190 = vsub.f32 %v106, %v174
    %v191 = vsub.f32 %v107, %v175
    %v192 = vsub.f32 %v108, %v176
    %v193 = vsub.f32 %v109, %v177
    %v194 = vsub.f32 %v110, %v178
    %v195 = vsub.f32 %v111, %v179
    %v196 = vsub.f32 %v112, %v180
    %v197 = vsub.f32 %v113, %v181
    %v198 = vmul.f32 %v182, %v182
    %v199 = vmul.f32 %v183, %v183
    %v200 = vmul.f32 %v184, %v184
    %v201 = vmul.f32 %v185, %v185
    %v202 = vmul.f32 %v186, %v186
    %v203 = vmul.f32 %v187, %v187
    %v204 = vmul.f32 %v188, %v188
    %v205 = vmul.f32 %v189, %v189
    %v206 = vmul.f32 %v190, %v190
    %v207 = vmul.f32 %v191, %v191
    %v208 = vmul.f32 %v192, %v192
    %v209 = vmul.f32 %v193, %v193
    %v210 = vmul.f32 %v194, %v194
    %v211 = vmul.f32 %v195, %v195
    %v212 = vmul.f32 %v196, %v196
    %v213 = vmul.f32 %v197, %v197
    %v214 = vsel %vm116, %v198, 0.0
    %215 = vadd.xlane.f32.xlu0 %v214
    %v216 = vpop.xlane.xlu0 %215
    %v217 = vsel %vm116, %v199, 0.0
    %218 = vadd.xlane.f32.xlu0 %v217
    %v219 = vpop.xlane.xlu0 %218
    %v220 = vsel %vm116, %v200, 0.0
    %221 = vadd.xlane.f32.xlu0 %v220
    %v222 = vpop.xlane.xlu0 %221
    %v223 = vsel %vm116, %v201, 0.0
    %224 = vadd.xlane.f32.xlu0 %v223
    %v225 = vpop.xlane.xlu0 %224
    %v226 = vsel %vm116, %v202, 0.0
    %227 = vadd.xlane.f32.xlu0 %v226
    %v228 = vpop.xlane.xlu0 %227
    %v229 = vsel %vm116, %v203, 0.0
    %230 = vadd.xlane.f32.xlu0 %v229
    %v231 = vpop.xlane.xlu0 %230
    %v232 = vsel %vm116, %v204, 0.0
    %233 = vadd.xlane.f32.xlu0 %v232
    %v234 = vpop.xlane.xlu0 %233
    %v235 = vsel %vm116, %v205, 0.0
    %236 = vadd.xlane.f32.xlu0 %v235
    %v237 = vpop.xlane.xlu0 %236
    %v238 = vsel %vm116, %v206, 0.0
    %239 = vadd.xlane.f32.xlu0 %v238
    %v240 = vpop.xlane.xlu0 %239
    %v241 = vsel %vm116, %v207, 0.0
    %242 = vadd.xlane.f32.xlu0 %v241
    %v243 = vpop.xlane.xlu0 %242
    %v244 = vsel %vm116, %v208, 0.0
    %245 = vadd.xlane.f32.xlu0 %v244
    %v246 = vpop.xlane.xlu0 %245
    %v247 = vsel %vm116, %v209, 0.0
    %248 = vadd.xlane.f32.xlu0 %v247
    %v249 = vpop.xlane.xlu0 %248
    %v250 = vsel %vm116, %v210, 0.0
    %251 = vadd.xlane.f32.xlu0 %v250
    %v252 = vpop.xlane.xlu0 %251
    %v253 = vsel %vm116, %v211, 0.0
    %254 = vadd.xlane.f32.xlu0 %v253
    %v255 = vpop.xlane.xlu0 %254
    %v256 = vsel %vm116, %v212, 0.0
    %257 = vadd.xlane.f32.xlu0 %v256
    %v258 = vpop.xlane.xlu0 %257
    %v259 = vsel %vm116, %v213, 0.0
    %260 = vadd.xlane.f32.xlu0 %v259
    %v261 = vpop.xlane.xlu0 %260
    %v262 = vmul.f32 %v216, %v165
    %v263 = vmul.f32 %v219, %v165
    %v264 = vmul.f32 %v222, %v165
    %v265 = vmul.f32 %v225, %v165
    %v266 = vmul.f32 %v228, %v165
    %v267 = vmul.f32 %v231, %v165
    %v268 = vmul.f32 %v234, %v165
    %v269 = vmul.f32 %v237, %v165
    %v270 = vmul.f32 %v240, %v165
    %v271 = vmul.f32 %v243, %v165
    %v272 = vmul.f32 %v246, %v165
    %v273 = vmul.f32 %v249, %v165
    %v274 = vmul.f32 %v252, %v165
    %v275 = vmul.f32 %v255, %v165
    %v276 = vmul.f32 %v258, %v165
    %v277 = vmul.f32 %v261, %v165
    %v278 = vadd.f32 %v262, 1e-05
    %v279 = vadd.f32 %v263, 1e-05
    %v280 = vadd.f32 %v264, 1e-05
    %v281 = vadd.f32 %v265, 1e-05
    %v282 = vadd.f32 %v266, 1e-05
    %v283 = vadd.f32 %v267, 1e-05
    %v284 = vadd.f32 %v268, 1e-05
    %v285 = vadd.f32 %v269, 1e-05
    %v286 = vadd.f32 %v270, 1e-05
    %v287 = vadd.f32 %v271, 1e-05
    %v288 = vadd.f32 %v272, 1e-05
    %v289 = vadd.f32 %v273, 1e-05
    %v290 = vadd.f32 %v274, 1e-05
    %v291 = vadd.f32 %v275, 1e-05
    %v292 = vadd.f32 %v276, 1e-05
    %v293 = vadd.f32 %v277, 1e-05
    %v294 = vrsqrt.pop %v278
    %v295 = vrsqrt.pop %v279
    %v296 = vrsqrt.pop %v280
    %v297 = vrsqrt.pop %v281
    %v298 = vrsqrt.pop %v282
    %v299 = vrsqrt.pop %v283
    %v300 = vrsqrt.pop %v284
    %v301 = vrsqrt.pop %v285
    %v302 = vrsqrt.pop %v286
    %v303 = vrsqrt.pop %v287
    %v304 = vrsqrt.pop %v288
    %v305 = vrsqrt.pop %v289
    %v306 = vrsqrt.pop %v290
    %v307 = vrsqrt.pop %v291
    %v308 = vrsqrt.pop %v292
    %v309 = vrsqrt.pop %v293
    %v310 = vmul.f32 %v182, %v294
    %v311 = vmul.f32 %v183, %v295
    %v312 = vmul.f32 %v184, %v296
    %v313 = vmul.f32 %v185, %v297
    %v314 = vmul.f32 %v186, %v298
    %v315 = vmul.f32 %v187, %v299
    %v316 = vmul.f32 %v188, %v300
    %v317 = vmul.f32 %v189, %v301
    %v318 = vmul.f32 %v190, %v302
    %v319 = vmul.f32 %v191, %v303
    %v320 = vmul.f32 %v192, %v304
    %v321 = vmul.f32 %v193, %v305
    %v322 = vmul.f32 %v194, %v306
    %v323 = vmul.f32 %v195, %v307
    %v324 = vmul.f32 %v196, %v308
    %v325 = vmul.f32 %v197, %v309
    %v327 = vlaneseq
    %v328 = vshrl.u32 %v327, 7
    %v329 = vsub.s32 0, %v328
    %v330 = vrot.slane %v114, %v329
    %v332 = vmul.f32 %v310, %v330
    %v333 = vmul.f32 %v311, %v330
    %v334 = vmul.f32 %v312, %v330
    %v335 = vmul.f32 %v313, %v330
    %v336 = vmul.f32 %v314, %v330
    %v337 = vmul.f32 %v315, %v330
    %v338 = vmul.f32 %v316, %v330
    %v339 = vmul.f32 %v317, %v330
    %v340 = vmul.f32 %v318, %v330
    %v341 = vmul.f32 %v319, %v330
    %v342 = vmul.f32 %v320, %v330
    %v343 = vmul.f32 %v321, %v330
    %v344 = vmul.f32 %v322, %v330
    %v345 = vmul.f32 %v323, %v330
    %v346 = vmul.f32 %v324, %v330
    %v347 = vmul.f32 %v325, %v330
    %v349 = vlaneseq
    %v350 = vshrl.u32 %v349, 7
    %v351 = vsub.s32 0, %v350
    %v352 = vrot.slane %v115, %v351
    %v354 = vadd.f32 %v332, %v352
    %v355 = vadd.f32 %v333, %v352
    %v356 = vadd.f32 %v334, %v352
    %v357 = vadd.f32 %v335, %v352
    %v358 = vadd.f32 %v336, %v352
    %v359 = vadd.f32 %v337, %v352
    %v360 = vadd.f32 %v338, %v352
    %v361 = vadd.f32 %v339, %v352
    %v362 = vadd.f32 %v340, %v352
    %v363 = vadd.f32 %v341, %v352
    %v364 = vadd.f32 %v342, %v352
    %v365 = vadd.f32 %v343, %v352
    %v366 = vadd.f32 %v344, %v352
    %v367 = vadd.f32 %v345, %v352
    %v368 = vadd.f32 %v346, %v352
    %v369 = vadd.f32 %v347, %v352
    %v370 = vpack.c.bf16 %v355, %v354
    %v371 = vpack.c.bf16 %v357, %v356
    %v372 = vpack.c.bf16 %v359, %v358
    %v373 = vpack.c.bf16 %v361, %v360
    %v374 = vpack.c.bf16 %v363, %v362
    %v375 = vpack.c.bf16 %v365, %v364
    %v376 = vpack.c.bf16 %v367, %v366
    %v377 = vpack.c.bf16 %v369, %v368
    %v386 = vunpack.c.l.b16 %v370
    %v387 = vunpack.c.h.b16 %v370
    %v388 = vunpack.c.l.b16 %v371
    %v389 = vunpack.c.h.b16 %v371
    %v390 = vunpack.c.l.b16 %v372
    %v391 = vunpack.c.h.b16 %v372
    %v392 = vunpack.c.l.b16 %v373
    %v393 = vunpack.c.h.b16 %v373
    %v394 = vunpack.c.l.b16 %v374
    %v395 = vunpack.c.h.b16 %v374
    %v396 = vunpack.c.l.b16 %v375
    %v397 = vunpack.c.h.b16 %v375
    %v398 = vunpack.c.l.b16 %v376
    %v399 = vunpack.c.h.b16 %v376
    %v400 = vunpack.c.l.b16 %v377
    %v401 = vunpack.c.h.b16 %v377
    %v402 = vpack.c.b16 %v386, %v386
    %v403 = vpack.c.b16 %v387, %v387
    %v404 = vpack.c.b16 %v388, %v388
    %v405 = vpack.c.b16 %v389, %v389
    %v406 = vpack.c.b16 %v390, %v390
    %v407 = vpack.c.b16 %v391, %v391
    %v408 = vpack.c.b16 %v392, %v392
    %v409 = vpack.c.b16 %v393, %v393
    %v410 = vpack.c.b16 %v394, %v394
    %v411 = vpack.c.b16 %v395, %v395
    %v412 = vpack.c.b16 %v396, %v396
    %v413 = vpack.c.b16 %v397, %v397
    %v414 = vpack.c.b16 %v398, %v398
    %v415 = vpack.c.b16 %v399, %v399
    %v416 = vpack.c.b16 %v400, %v400
    %v417 = vpack.c.b16 %v401, %v401
    %vm434 = vcmask 125952
    %435 = vst.msk [vmem:[#allocation2] sm:$0xf] %vm434, %v402
    %436 = vst.msk [vmem:[#allocation2 + $0x4] sm:$0xf] %vm434, %v403
    %437 = vst.msk [vmem:[#allocation2 + $0x8] sm:$0xf] %vm434, %v404
    %438 = vst.msk [vmem:[#allocation2 + $0xc] sm:$0xf] %vm434, %v405
    %439 = vst.msk [vmem:[#allocation2 + $0x10] sm:$0xf] %vm434, %v406
    %440 = vst.msk [vmem:[#allocation2 + $0x14] sm:$0xf] %vm434, %v407
    %441 = vst.msk [vmem:[#allocation2 + $0x18] sm:$0xf] %vm434, %v408
    %442 = vst.msk [vmem:[#allocation2 + $0x1c] sm:$0xf] %vm434, %v409
    %443 = vst.msk [vmem:[#allocation2 + $0x20] sm:$0xf] %vm434, %v410
    %444 = vst.msk [vmem:[#allocation2 + $0x24] sm:$0xf] %vm434, %v411
    %445 = vst.msk [vmem:[#allocation2 + $0x28] sm:$0xf] %vm434, %v412
    %446 = vst.msk [vmem:[#allocation2 + $0x2c] sm:$0xf] %vm434, %v413
    %447 = vst.msk [vmem:[#allocation2 + $0x30] sm:$0xf] %vm434, %v414
    %448 = vst.msk [vmem:[#allocation2 + $0x34] sm:$0xf] %vm434, %v415
    %449 = vst.msk [vmem:[#allocation2 + $0x38] sm:$0xf] %vm434, %v416
    %450 = vst.msk [vmem:[#allocation2 + $0x3c] sm:$0xf] %vm434, %v417
    %v451 = vld [vmem:[%s7] sm:$0x1]
    %v453 = vlaneseq
    %v454 = vshrl.u32 %v453, 7
    %v455 = vsub.s32 0, %v454
    %v456 = vrot.slane %v451, %v455
    %v458 = vadd.f32 %v98, %v456
    %v459 = vadd.f32 %v99, %v456
    %v460 = vadd.f32 %v100, %v456
    %v461 = vadd.f32 %v101, %v456
    %v462 = vadd.f32 %v102, %v456
    %v463 = vadd.f32 %v103, %v456
    %v464 = vadd.f32 %v104, %v456
    %v465 = vadd.f32 %v105, %v456
    %v466 = vadd.f32 %v106, %v456
    %v467 = vadd.f32 %v107, %v456
    %v468 = vadd.f32 %v108, %v456
    %v469 = vadd.f32 %v109, %v456
    %v470 = vadd.f32 %v110, %v456
    %v471 = vadd.f32 %v111, %v456
    %v472 = vadd.f32 %v112, %v456
    %v473 = vadd.f32 %v113, %v456
    %474 = vst.msk [vmem:[#allocation3] sm:$0xff] %vm116, %v458
    %475 = vst.msk [vmem:[#allocation3 + $0x8] sm:$0xff] %vm116, %v459
    %476 = vst.msk [vmem:[#allocation3 + $0x10] sm:$0xff] %vm116, %v460
    %477 = vst.msk [vmem:[#allocation3 + $0x18] sm:$0xff] %vm116, %v461
    %478 = vst.msk [vmem:[#allocation3 + $0x20] sm:$0xff] %vm116, %v462
    %479 = vst.msk [vmem:[#allocation3 + $0x28] sm:$0xff] %vm116, %v463
    %480 = vst.msk [vmem:[#allocation3 + $0x30] sm:$0xff] %vm116, %v464
    %481 = vst.msk [vmem:[#allocation3 + $0x38] sm:$0xff] %vm116, %v465
    %482 = vst.msk [vmem:[#allocation3 + $0x40] sm:$0xff] %vm116, %v466
    %483 = vst.msk [vmem:[#allocation3 + $0x48] sm:$0xff] %vm116, %v467
    %484 = vst.msk [vmem:[#allocation3 + $0x50] sm:$0xff] %vm116, %v468
    %485 = vst.msk [vmem:[#allocation3 + $0x58] sm:$0xff] %vm116, %v469
    %486 = vst.msk [vmem:[#allocation3 + $0x60] sm:$0xff] %vm116, %v470
    %487 = vst.msk [vmem:[#allocation3 + $0x68] sm:$0xff] %vm116, %v471
    %488 = vst.msk [vmem:[#allocation3 + $0x70] sm:$0xff] %vm116, %v472
    %489 = vst.msk [vmem:[#allocation3 + $0x78] sm:$0xff] %vm116, %v473
  $region37: #{_lambda_.13} parent=0 // pred_fallthru
    _
  %v490 = vld [vmem:[#allocation2] sm:$0xf]
  %v491 = vld [vmem:[#allocation2 + $0x4] sm:$0xf]
  %v492 = vld [vmem:[#allocation2 + $0x8] sm:$0xf]
  %v493 = vld [vmem:[#allocation2 + $0xc] sm:$0xf]
  %v494 = vld [vmem:[#allocation2 + $0x10] sm:$0xf]
  %v495 = vld [vmem:[#allocation2 + $0x14] sm:$0xf]
  %v496 = vld [vmem:[#allocation2 + $0x18] sm:$0xf]
  %v497 = vld [vmem:[#allocation2 + $0x1c] sm:$0xf]
  %v498 = vld [vmem:[#allocation2 + $0x20] sm:$0xf]
  %v499 = vld [vmem:[#allocation2 + $0x24] sm:$0xf]
  %v500 = vld [vmem:[#allocation2 + $0x28] sm:$0xf]
  %v501 = vld [vmem:[#allocation2 + $0x2c] sm:$0xf]
  %v502 = vld [vmem:[#allocation2 + $0x30] sm:$0xf]
  %v503 = vld [vmem:[#allocation2 + $0x34] sm:$0xf]
  %v504 = vld [vmem:[#allocation2 + $0x38] sm:$0xf]
  %v505 = vld [vmem:[#allocation2 + $0x3c] sm:$0xf]
  %v506 = vld [vmem:[%s4] sm:$0xf]
  %v507 = vld [vmem:[%s4 + $0x4] sm:$0xf]
  %v508 = vld [vmem:[%s5] sm:$0x1]
  %v510 = vlaneseq
  %v511 = vshrl.u32 %v510, 7
  %v512 = vsub.s32 0, %v511
  %v513 = vrot.slane %v508, %v512
  %v531 = vunpack.c.l.b16 %v490
  %v532 = vunpack.c.l.b16 %v491
  %v533 = vunpack.c.l.b16 %v492
  %v534 = vunpack.c.l.b16 %v493
  %v535 = vunpack.c.l.b16 %v494
  %v536 = vunpack.c.l.b16 %v495
  %v537 = vunpack.c.l.b16 %v496
  %v538 = vunpack.c.l.b16 %v497
  %v539 = vunpack.c.l.b16 %v498
  %v540 = vunpack.c.l.b16 %v499
  %v541 = vunpack.c.l.b16 %v500
  %v542 = vunpack.c.l.b16 %v501
  %v543 = vunpack.c.l.b16 %v502
  %v544 = vunpack.c.l.b16 %v503
  %v545 = vunpack.c.l.b16 %v504
  %v546 = vunpack.c.l.b16 %v505
  %v547 = vpack.c.b16 %v532, %v531
  %v548 = vpack.c.b16 %v534, %v533
  %v549 = vpack.c.b16 %v536, %v535
  %v550 = vpack.c.b16 %v538, %v537
  %v551 = vpack.c.b16 %v540, %v539
  %v552 = vpack.c.b16 %v542, %v541
  %v553 = vpack.c.b16 %v544, %v543
  %v554 = vpack.c.b16 %v546, %v545
  %v557 = vunpack.c.l.b16 %v506
  %v558 = vunpack.c.l.b16 %v507
  %v559 = vpack.c.b16 %v558, %v557
  %vm561 = vcmask 130048
  %v563 = vsel %vm561, %v547, 0
  %v566 = vsel %vm561, %v548, 0
  %v569 = vsel %vm561, %v549, 0
  %v572 = vsel %vm561, %v550, 0
  %v575 = vsel %vm561, %v551, 0
  %v578 = vsel %vm561, %v552, 0
  %v581 = vsel %vm561, %v553, 0
  %v584 = vsel %vm561, %v554, 0
  %586 = vmatprep.subr.bf16.mxu0 0
  %587 = vmatpush1.bf16.msra.mxu0 0
  %588 = vmatprep.subr.bf16.mxu0 0
  %589 = vmatpush1.bf16.msra.mxu0 0
  %590 = vmatprep.subr.bf16.mxu0 0
  %591 = vmatpush1.bf16.msra.mxu0 0
  %592 = vmatprep.subr.bf16.mxu0 0
  %593 = vmatpush1.bf16.msra.mxu0 0
  %594 = vmatprep.subr.bf16.mxu0 0
  %595 = vmatpush1.bf16.msra.mxu0 0
  %596 = vmatprep.subr.bf16.mxu0 0
  %597 = vmatpush1.bf16.msra.mxu0 0
  %598 = vmatprep.subr.bf16.mxu0 0
  %599 = vmatpush1.bf16.msra.mxu0 0
  %600 = vmatprep.subr.bf16.mxu0 0
  %601 = vmatpush1.bf16.msra.mxu0 %v559
  %602 = vmatprep.subr.bf16.mxu0 0
  %603 = vmatpush2.bf16.msra.mxu0 0
  %604 = vmatprep.subr.bf16.mxu0 0
  %605 = vmatpush2.bf16.msra.mxu0 0
  %606 = vmatprep.subr.bf16.mxu0 0
  %607 = vmatpush2.bf16.msra.mxu0 0
  %608 = vmatprep.subr.bf16.mxu0 0
  %609 = vmatpush2.bf16.msra.mxu0 0
  %610 = vmatprep.subr.bf16.mxu0 0
  %611 = vmatpush2.bf16.msra.mxu0 0
  %612 = vmatprep.subr.bf16.mxu0 0
  %613 = vmatpush2.bf16.msra.mxu0 0
  %614 = vmatprep.subr.bf16.mxu0 0
  %615 = vmatpush2.bf16.msra.mxu0 0
  %616 = vmatprep.subr.bf16.mxu0 0
  %617 = vmatpush2.bf16.msra.mxu0 0
  %618 = vmatprep.mubr.bf16.mxu0 0
  %619 = vmatmul.mubr.bf16.gmra.mxu0 %v563
  %v620 = vpop.f32.mrf.mxu0
  %v621 = vadd.f32 %v513, %v620
  %v622 = vpop.f32.mrf.mxu0
  %v623 = vpop.f32.mrf.mxu0
  %v624 = vadd.f32 %v513, %v623
  %v625 = vpop.f32.mrf.mxu0
  %626 = vmatprep.mubr.bf16.mxu0 0
  %627 = vmatmul.mubr.bf16.gmra.mxu0 %v566
  %v628 = vpop.f32.mrf.mxu0
  %v629 = vadd.f32 %v513, %v628
  %v630 = vpop.f32.mrf.mxu0
  %v631 = vpop.f32.mrf.mxu0
  %v632 = vadd.f32 %v513, %v631
  %v633 = vpop.f32.mrf.mxu0
  %634 = vmatprep.mubr.bf16.mxu0 0
  %635 = vmatmul.mubr.bf16.gmra.mxu0 %v569
  %v636 = vpop.f32.mrf.mxu0
  %v637 = vadd.f32 %v513, %v636
  %v638 = vpop.f32.mrf.mxu0
  %v639 = vpop.f32.mrf.mxu0
  %v640 = vadd.f32 %v513, %v639
  %v641 = vpop.f32.mrf.mxu0
  %642 = vmatprep.mubr.bf16.mxu0 0
  %643 = vmatmul.mubr.bf16.gmra.mxu0 %v572
  %v644 = vpop.f32.mrf.mxu0
  %v645 = vadd.f32 %v513, %v644
  %v646 = vpop.f32.mrf.mxu0
  %v647 = vpop.f32.mrf.mxu0
  %v648 = vadd.f32 %v513, %v647
  %v649 = vpop.f32.mrf.mxu0
  %650 = vmatprep.mubr.bf16.mxu0 0
  %651 = vmatmul.mubr.bf16.gmra.mxu0 %v575
  %v652 = vpop.f32.mrf.mxu0
  %v653 = vadd.f32 %v513, %v652
  %v654 = vpop.f32.mrf.mxu0
  %v655 = vpop.f32.mrf.mxu0
  %v656 = vadd.f32 %v513, %v655
  %v657 = vpop.f32.mrf.mxu0
  %658 = vmatprep.mubr.bf16.mxu0 0
  %659 = vmatmul.mubr.bf16.gmra.mxu0 %v578
  %v660 = vpop.f32.mrf.mxu0
  %v661 = vadd.f32 %v513, %v660
  %v662 = vpop.f32.mrf.mxu0
  %v663 = vpop.f32.mrf.mxu0
  %v664 = vadd.f32 %v513, %v663
  %v665 = vpop.f32.mrf.mxu0
  %666 = vmatprep.mubr.bf16.mxu0 0
  %667 = vmatmul.mubr.bf16.gmra.mxu0 %v581
  %v668 = vpop.f32.mrf.mxu0
  %v669 = vadd.f32 %v513, %v668
  %v670 = vpop.f32.mrf.mxu0
  %v671 = vpop.f32.mrf.mxu0
  %v672 = vadd.f32 %v513, %v671
  %v673 = vpop.f32.mrf.mxu0
  %674 = vmatprep.mubr.bf16.mxu0 0
  %675 = vmatmul.mubr.bf16.gmra.mxu0 %v584
  %v676 = vpop.f32.mrf.mxu0
  %v677 = vadd.f32 %v513, %v676
  %v678 = vpop.f32.mrf.mxu0
  %v679 = vpop.f32.mrf.mxu0
  %v680 = vadd.f32 %v513, %v679
  %v681 = vpop.f32.mrf.mxu0
  %682 = vdwg.mxu0
  %v683 = vmul.f32 %v621, 0.5
  %v684 = vmul.f32 %v624, 0.5
  %v685 = vmul.f32 %v629, 0.5
  %v686 = vmul.f32 %v632, 0.5
  %v687 = vmul.f32 %v637, 0.5
  %v688 = vmul.f32 %v640, 0.5
  %v689 = vmul.f32 %v645, 0.5
  %v690 = vmul.f32 %v648, 0.5
  %v691 = vmul.f32 %v653, 0.5
  %v692 = vmul.f32 %v656, 0.5
  %v693 = vmul.f32 %v661, 0.5
  %v694 = vmul.f32 %v664, 0.5
  %v695 = vmul.f32 %v669, 0.5
  %v696 = vmul.f32 %v672, 0.5
  %v697 = vmul.f32 %v677, 0.5
  %v698 = vmul.f32 %v680, 0.5
  %v699 = vmul.f32 %v621, 0.044715
  %v700 = vmul.f32 %v624, 0.044715
  %v701 = vmul.f32 %v629, 0.044715
  %v702 = vmul.f32 %v632, 0.044715
  %v703 = vmul.f32 %v637, 0.044715
  %v704 = vmul.f32 %v640, 0.044715
  %v705 = vmul.f32 %v645, 0.044715
  %v706 = vmul.f32 %v648, 0.044715
  %v707 = vmul.f32 %v653, 0.044715
  %v708 = vmul.f32 %v656, 0.044715
  %v709 = vmul.f32 %v661, 0.044715
  %v710 = vmul.f32 %v664, 0.044715
  %v711 = vmul.f32 %v669, 0.044715
  %v712 = vmul.f32 %v672, 0.044715
  %v713 = vmul.f32 %v677, 0.044715
  %v714 = vmul.f32 %v680, 0.044715
  %v715 = vmul.f32 %v699, %v621
  %v716 = vmul.f32 %v700, %v624
  %v717 = vmul.f32 %v701, %v629
  %v718 = vmul.f32 %v702, %v632
  %v719 = vmul.f32 %v703, %v637
  %v720 = vmul.f32 %v704, %v640
  %v721 = vmul.f32 %v705, %v645
  %v722 = vmul.f32 %v706, %v648
  %v723 = vmul.f32 %v707, %v653
  %v724 = vmul.f32 %v708, %v656
  %v725 = vmul.f32 %v709, %v661
  %v726 = vmul.f32 %v710, %v664
  %v727 = vmul.f32 %v711, %v669
  %v728 = vmul.f32 %v712, %v672
  %v729 = vmul.f32 %v713, %v677
  %v730 = vmul.f32 %v714, %v680
  %v731 = vmul.f32 %v715, %v621
  %v732 = vmul.f32 %v716, %v624
  %v733 = vmul.f32 %v717, %v629
  %v734 = vmul.f32 %v718, %v632
  %v735 = vmul.f32 %v719, %v637
  %v736 = vmul.f32 %v720, %v640
  %v737 = vmul.f32 %v721, %v645
  %v738 = vmul.f32 %v722, %v648
  %v739 = vmul.f32 %v723, %v653
  %v740 = vmul.f32 %v724, %v656
  %v741 = vmul.f32 %v725, %v661
  %v742 = vmul.f32 %v726, %v664
  %v743 = vmul.f32 %v727, %v669
  %v744 = vmul.f32 %v728, %v672
  %v745 = vmul.f32 %v729, %v677
  %v746 = vmul.f32 %v730, %v680
  %v747 = vadd.f32 %v621, %v731
  %v748 = vadd.f32 %v624, %v732
  %v749 = vadd.f32 %v629, %v733
  %v750 = vadd.f32 %v632, %v734
  %v751 = vadd.f32 %v637, %v735
  %v752 = vadd.f32 %v640, %v736
  %v753 = vadd.f32 %v645, %v737
  %v754 = vadd.f32 %v648, %v738
  %v755 = vadd.f32 %v653, %v739
  %v756 = vadd.f32 %v656, %v740
  %v757 = vadd.f32 %v661, %v741
  %v758 = vadd.f32 %v664, %v742
  %v759 = vadd.f32 %v669, %v743
  %v760 = vadd.f32 %v672, %v744
  %v761 = vadd.f32 %v677, %v745
  %v762 = vadd.f32 %v680, %v746
  %v763 = vmul.f32 %v747, 0.7978846
  %v764 = vmul.f32 %v748, 0.7978846
  %v765 = vmul.f32 %v749, 0.7978846
  %v766 = vmul.f32 %v750, 0.7978846
  %v767 = vmul.f32 %v751, 0.7978846
  %v768 = vmul.f32 %v752, 0.7978846
  %v769 = vmul.f32 %v753, 0.7978846
  %v770 = vmul.f32 %v754, 0.7978846
  %v771 = vmul.f32 %v755, 0.7978846
  %v772 = vmul.f32 %v756, 0.7978846
  %v773 = vmul.f32 %v757, 0.7978846
  %v774 = vmul.f32 %v758, 0.7978846
  %v775 = vmul.f32 %v759, 0.7978846
  %v776 = vmul.f32 %v760, 0.7978846
  %v777 = vmul.f32 %v761, 0.7978846
  %v778 = vmul.f32 %v762, 0.7978846
  %v779 = vtanh.pop %v763
  %v780 = vtanh.pop %v764
  %v781 = vtanh.pop %v765
  %v782 = vtanh.pop %v766
  %v783 = vtanh.pop %v767
  %v784 = vtanh.pop %v768
  %v785 = vtanh.pop %v769
  %v786 = vtanh.pop %v770
  %v787 = vtanh.pop %v771
  %v788 = vtanh.pop %v772
  %v789 = vtanh.pop %v773
  %v790 = vtanh.pop %v774
  %v791 = vtanh.pop %v775
  %v792 = vtanh.pop %v776
  %v793 = vtanh.pop %v777
  %v794 = vtanh.pop %v778
  %v795 = vadd.f32 %v779, 1.0
  %v796 = vadd.f32 %v780, 1.0
  %v797 = vadd.f32 %v781, 1.0
  %v798 = vadd.f32 %v782, 1.0
  %v799 = vadd.f32 %v783, 1.0
  %v800 = vadd.f32 %v784, 1.0
  %v801 = vadd.f32 %v785, 1.0
  %v802 = vadd.f32 %v786, 1.0
  %v803 = vadd.f32 %v787, 1.0
  %v804 = vadd.f32 %v788, 1.0
  %v805 = vadd.f32 %v789, 1.0
  %v806 = vadd.f32 %v790, 1.0
  %v807 = vadd.f32 %v791, 1.0
  %v808 = vadd.f32 %v792, 1.0
  %v809 = vadd.f32 %v793, 1.0
  %v810 = vadd.f32 %v794, 1.0
  %v811 = vmul.f32 %v683, %v795
  %v812 = vmul.f32 %v684, %v796
  %v813 = vmul.f32 %v685, %v797
  %v814 = vmul.f32 %v686, %v798
  %v815 = vmul.f32 %v687, %v799
  %v816 = vmul.f32 %v688, %v800
  %v817 = vmul.f32 %v689, %v801
  %v818 = vmul.f32 %v690, %v802
  %v819 = vmul.f32 %v691, %v803
  %v820 = vmul.f32 %v692, %v804
  %v821 = vmul.f32 %v693, %v805
  %v822 = vmul.f32 %v694, %v806
  %v823 = vmul.f32 %v695, %v807
  %v824 = vmul.f32 %v696, %v808
  %v825 = vmul.f32 %v697, %v809
  %v826 = vmul.f32 %v698, %v810
  %v827 = vld [vmem:[#allocation3] sm:$0xff]
  %v828 = vld [vmem:[#allocation3 + $0x8] sm:$0xff]
  %v829 = vld [vmem:[#allocation3 + $0x10] sm:$0xff]
  %v830 = vld [vmem:[#allocation3 + $0x18] sm:$0xff]
  %v831 = vld [vmem:[#allocation3 + $0x20] sm:$0xff]
  %v832 = vld [vmem:[#allocation3 + $0x28] sm:$0xff]
  %v833 = vld [vmem:[#allocation3 + $0x30] sm:$0xff]
  %v834 = vld [vmem:[#allocation3 + $0x38] sm:$0xff]
  %v835 = vld [vmem:[#allocation3 + $0x40] sm:$0xff]
  %v836 = vld [vmem:[#allocation3 + $0x48] sm:$0xff]
  %v837 = vld [vmem:[#allocation3 + $0x50] sm:$0xff]
  %v838 = vld [vmem:[#allocation3 + $0x58] sm:$0xff]
  %v839 = vld [vmem:[#allocation3 + $0x60] sm:$0xff]
  %v840 = vld [vmem:[#allocation3 + $0x68] sm:$0xff]
  %v841 = vld [vmem:[#allocation3 + $0x70] sm:$0xff]
  %v842 = vld [vmem:[#allocation3 + $0x78] sm:$0xff]
  %v843 = vpack.c.bf16 %v812, %v811
  %v844 = vpack.c.bf16 %v814, %v813
  %v845 = vpack.c.bf16 %v816, %v815
  %v846 = vpack.c.bf16 %v818, %v817
  %v847 = vpack.c.bf16 %v820, %v819
  %v848 = vpack.c.bf16 %v822, %v821
  %v849 = vpack.c.bf16 %v824, %v823
  %v850 = vpack.c.bf16 %v826, %v825
  %v851 = vld [vmem:[%s6] sm:$0xf]
  %v852 = vld [vmem:[%s6 + $0x4] sm:$0xf]
  %v853 = vld [vmem:[%s6 + $0x8] sm:$0xf]
  %v854 = vld [vmem:[%s6 + $0xc] sm:$0xf]
  %v855 = vld [vmem:[%s6 + $0x10] sm:$0xf]
  %v856 = vld [vmem:[%s6 + $0x14] sm:$0xf]
  %v857 = vld [vmem:[%s6 + $0x18] sm:$0xf]
  %v858 = vld [vmem:[%s6 + $0x1c] sm:$0xf]
  %v867 = vunpack.c.l.b16 %v851
  %v868 = vunpack.c.l.b16 %v852
  %v869 = vunpack.c.l.b16 %v853
  %v870 = vunpack.c.l.b16 %v854
  %v871 = vunpack.c.l.b16 %v855
  %v872 = vunpack.c.l.b16 %v856
  %v873 = vunpack.c.l.b16 %v857
  %v874 = vunpack.c.l.b16 %v858
  %v875 = vpack.c.b16 %v868, %v867
  %v876 = vpack.c.b16 %v870, %v869
  %v877 = vpack.c.b16 %v872, %v871
  %v878 = vpack.c.b16 %v874, %v873
  %vm883 = vcmask 523264
  %v885 = vsel %vm883, %v843, 0
  %v888 = vsel %vm883, %v844, 0
  %v891 = vsel %vm883, %v845, 0
  %v894 = vsel %vm883, %v846, 0
  %v897 = vsel %vm883, %v847, 0
  %v900 = vsel %vm883, %v848, 0
  %v903 = vsel %vm883, %v849, 0
  %v906 = vsel %vm883, %v850, 0
  %908 = vmatprep.subr.bf16.mxu0 0
  %909 = vmatpush1.bf16.msra.mxu0 0
  %910 = vmatprep.subr.bf16.mxu0 0
  %911 = vmatpush1.bf16.msra.mxu0 0
  %912 = vmatprep.subr.bf16.mxu0 0
  %913 = vmatpush1.bf16.msra.mxu0 0
  %914 = vmatprep.subr.bf16.mxu0 0
  %915 = vmatpush1.bf16.msra.mxu0 0
  %916 = vmatprep.subr.bf16.mxu0 0
  %917 = vmatpush1.bf16.msra.mxu0 %v878
  %918 = vmatprep.subr.bf16.mxu0 0
  %919 = vmatpush1.bf16.msra.mxu0 %v877
  %920 = vmatprep.subr.bf16.mxu0 0
  %921 = vmatpush1.bf16.msra.mxu0 %v876
  %922 = vmatprep.subr.bf16.mxu0 0
  %923 = vmatpush1.bf16.msra.mxu0 %v875
  %924 = vmatprep.subr.bf16.mxu0 0
  %925 = vmatpush2.bf16.msra.mxu0 0
  %926 = vmatprep.subr.bf16.mxu0 0
  %927 = vmatpush2.bf16.msra.mxu0 0
  %928 = vmatprep.subr.bf16.mxu0 0
  %929 = vmatpush2.bf16.msra.mxu0 0
  %930 = vmatprep.subr.bf16.mxu0 0
  %931 = vmatpush2.bf16.msra.mxu0 0
  %932 = vmatprep.subr.bf16.mxu0 0
  %933 = vmatpush2.bf16.msra.mxu0 0
  %934 = vmatprep.subr.bf16.mxu0 0
  %935 = vmatpush2.bf16.msra.mxu0 0
  %936 = vmatprep.subr.bf16.mxu0 0
  %937 = vmatpush2.bf16.msra.mxu0 0
  %938 = vmatprep.subr.bf16.mxu0 0
  %939 = vmatpush2.bf16.msra.mxu0 0
  %940 = vmatprep.mubr.bf16.mxu0 0
  %941 = vmatmul.mubr.bf16.gmra.mxu0 %v885
  %v942 = vpop.f32.mrf.mxu0
  %v943 = vadd.f32 0.0, %v942
  %v944 = vpop.f32.mrf.mxu0
  %v945 = vpop.f32.mrf.mxu0
  %v946 = vadd.f32 0.0, %v945
  %v947 = vpop.f32.mrf.mxu0
  %948 = vmatprep.mubr.bf16.mxu0 0
  %949 = vmatmul.mubr.bf16.gmra.mxu0 %v888
  %v950 = vpop.f32.mrf.mxu0
  %v951 = vadd.f32 0.0, %v950
  %v952 = vpop.f32.mrf.mxu0
  %v953 = vpop.f32.mrf.mxu0
  %v954 = vadd.f32 0.0, %v953
  %v955 = vpop.f32.mrf.mxu0
  %956 = vmatprep.mubr.bf16.mxu0 0
  %957 = vmatmul.mubr.bf16.gmra.mxu0 %v891
  %v958 = vpop.f32.mrf.mxu0
  %v959 = vadd.f32 0.0, %v958
  %v960 = vpop.f32.mrf.mxu0
  %v961 = vpop.f32.mrf.mxu0
  %v962 = vadd.f32 0.0, %v961
  %v963 = vpop.f32.mrf.mxu0
  %964 = vmatprep.mubr.bf16.mxu0 0
  %965 = vmatmul.mubr.bf16.gmra.mxu0 %v894
  %v966 = vpop.f32.mrf.mxu0
  %v967 = vadd.f32 0.0, %v966
  %v968 = vpop.f32.mrf.mxu0
  %v969 = vpop.f32.mrf.mxu0
  %v970 = vadd.f32 0.0, %v969
  %v971 = vpop.f32.mrf.mxu0
  %972 = vmatprep.mubr.bf16.mxu0 0
  %973 = vmatmul.mubr.bf16.gmra.mxu0 %v897
  %v974 = vpop.f32.mrf.mxu0
  %v975 = vadd.f32 0.0, %v974
  %v976 = vpop.f32.mrf.mxu0
  %v977 = vpop.f32.mrf.mxu0
  %v978 = vadd.f32 0.0, %v977
  %v979 = vpop.f32.mrf.mxu0
  %980 = vmatprep.mubr.bf16.mxu0 0
  %981 = vmatmul.mubr.bf16.gmra.mxu0 %v900
  %v982 = vpop.f32.mrf.mxu0
  %v983 = vadd.f32 0.0, %v982
  %v984 = vpop.f32.mrf.mxu0
  %v985 = vpop.f32.mrf.mxu0
  %v986 = vadd.f32 0.0, %v985
  %v987 = vpop.f32.mrf.mxu0
  %988 = vmatprep.mubr.bf16.mxu0 0
  %989 = vmatmul.mubr.bf16.gmra.mxu0 %v903
  %v990 = vpop.f32.mrf.mxu0
  %v991 = vadd.f32 0.0, %v990
  %v992 = vpop.f32.mrf.mxu0
  %v993 = vpop.f32.mrf.mxu0
  %v994 = vadd.f32 0.0, %v993
  %v995 = vpop.f32.mrf.mxu0
  %996 = vmatprep.mubr.bf16.mxu0 0
  %997 = vmatmul.mubr.bf16.gmra.mxu0 %v906
  %v998 = vpop.f32.mrf.mxu0
  %v999 = vadd.f32 0.0, %v998
  %v1000 = vpop.f32.mrf.mxu0
  %v1001 = vpop.f32.mrf.mxu0
  %v1002 = vadd.f32 0.0, %v1001
  %v1003 = vpop.f32.mrf.mxu0
  %1004 = vdwg.mxu0
  %v1005 = vadd.f32 %v827, %v943
  %v1006 = vadd.f32 %v828, %v946
  %v1007 = vadd.f32 %v829, %v951
  %v1008 = vadd.f32 %v830, %v954
  %v1009 = vadd.f32 %v831, %v959
  %v1010 = vadd.f32 %v832, %v962
  %v1011 = vadd.f32 %v833, %v967
  %v1012 = vadd.f32 %v834, %v970
  %v1013 = vadd.f32 %v835, %v975
  %v1014 = vadd.f32 %v836, %v978
  %v1015 = vadd.f32 %v837, %v983
  %v1016 = vadd.f32 %v838, %v986
  %v1017 = vadd.f32 %v839, %v991
  %v1018 = vadd.f32 %v840, %v994
  %v1019 = vadd.f32 %v841, %v999
  %v1020 = vadd.f32 %v842, %v1002
  %1021 = vst.msk [vmem:[#allocation3] sm:$0xff] %vm561, %v1005
  %1022 = vst.msk [vmem:[#allocation3 + $0x8] sm:$0xff] %vm561, %v1006
  %1023 = vst.msk [vmem:[#allocation3 + $0x10] sm:$0xff] %vm561, %v1007
  %1024 = vst.msk [vmem:[#allocation3 + $0x18] sm:$0xff] %vm561, %v1008
  %1025 = vst.msk [vmem:[#allocation3 + $0x20] sm:$0xff] %vm561, %v1009
  %1026 = vst.msk [vmem:[#allocation3 + $0x28] sm:$0xff] %vm561, %v1010
  %1027 = vst.msk [vmem:[#allocation3 + $0x30] sm:$0xff] %vm561, %v1011
  %1028 = vst.msk [vmem:[#allocation3 + $0x38] sm:$0xff] %vm561, %v1012
  %1029 = vst.msk [vmem:[#allocation3 + $0x40] sm:$0xff] %vm561, %v1013
  %1030 = vst.msk [vmem:[#allocation3 + $0x48] sm:$0xff] %vm561, %v1014
  %1031 = vst.msk [vmem:[#allocation3 + $0x50] sm:$0xff] %vm561, %v1015
  %1032 = vst.msk [vmem:[#allocation3 + $0x58] sm:$0xff] %vm561, %v1016
  %1033 = vst.msk [vmem:[#allocation3 + $0x60] sm:$0xff] %vm561, %v1017
  %1034 = vst.msk [vmem:[#allocation3 + $0x68] sm:$0xff] %vm561, %v1018
  %1035 = vst.msk [vmem:[#allocation3 + $0x70] sm:$0xff] %vm561, %v1019
  %1036 = vst.msk [vmem:[#allocation3 + $0x78] sm:$0xff] %vm561, %v1020
  // Predicated region
  $region38: #{_lambda_.13} parent=0 // pred_check
    %p1037 = pneg %p30
  $region39: #{_lambda_.13} parent=0 // pred_check_branch
    %1039 = sbr.rel (%p1037) target = $region41
  $region40: #{_lambda_.13} parent=0 // pred_region
    %v1040 = vld [vmem:[#allocation3] sm:$0xff]
    %v1041 = vld [vmem:[#allocation3 + $0x8] sm:$0xff]
    %v1042 = vld [vmem:[#allocation3 + $0x10] sm:$0xff]
    %v1043 = vld [vmem:[#allocation3 + $0x18] sm:$0xff]
    %v1044 = vld [vmem:[#allocation3 + $0x20] sm:$0xff]
    %v1045 = vld [vmem:[#allocation3 + $0x28] sm:$0xff]
    %v1046 = vld [vmem:[#allocation3 + $0x30] sm:$0xff]
    %v1047 = vld [vmem:[#allocation3 + $0x38] sm:$0xff]
    %v1048 = vld [vmem:[#allocation3 + $0x40] sm:$0xff]
    %v1049 = vld [vmem:[#allocation3 + $0x48] sm:$0xff]
    %v1050 = vld [vmem:[#allocation3 + $0x50] sm:$0xff]
    %v1051 = vld [vmem:[#allocation3 + $0x58] sm:$0xff]
    %v1052 = vld [vmem:[#allocation3 + $0x60] sm:$0xff]
    %v1053 = vld [vmem:[#allocation3 + $0x68] sm:$0xff]
    %v1054 = vld [vmem:[#allocation3 + $0x70] sm:$0xff]
    %v1055 = vld [vmem:[#allocation3 + $0x78] sm:$0xff]
    %v1056 = vpack.c.bf16 %v1041, %v1040
    %v1057 = vpack.c.bf16 %v1043, %v1042
    %v1058 = vpack.c.bf16 %v1045, %v1044
    %v1059 = vpack.c.bf16 %v1047, %v1046
    %v1060 = vpack.c.bf16 %v1049, %v1048
    %v1061 = vpack.c.bf16 %v1051, %v1050
    %v1062 = vpack.c.bf16 %v1053, %v1052
    %v1063 = vpack.c.bf16 %v1055, %v1054
    %v1072 = vunpack.c.l.b16 %v1056
    %v1073 = vunpack.c.h.b16 %v1056
    %v1074 = vunpack.c.l.b16 %v1057
    %v1075 = vunpack.c.h.b16 %v1057
    %v1076 = vunpack.c.l.b16 %v1058
    %v1077 = vunpack.c.h.b16 %v1058
    %v1078 = vunpack.c.l.b16 %v1059
    %v1079 = vunpack.c.h.b16 %v1059
    %v1080 = vunpack.c.l.b16 %v1060
    %v1081 = vunpack.c.h.b16 %v1060
    %v1082 = vunpack.c.l.b16 %v1061
    %v1083 = vunpack.c.h.b16 %v1061
    %v1084 = vunpack.c.l.b16 %v1062
    %v1085 = vunpack.c.h.b16 %v1062
    %v1086 = vunpack.c.l.b16 %v1063
    %v1087 = vunpack.c.h.b16 %v1063
    %v1088 = vpack.c.b16 %v1072, %v1072
    %v1089 = vpack.c.b16 %v1073, %v1073
    %v1090 = vpack.c.b16 %v1074, %v1074
    %v1091 = vpack.c.b16 %v1075, %v1075
    %v1092 = vpack.c.b16 %v1076, %v1076
    %v1093 = vpack.c.b16 %v1077, %v1077
    %v1094 = vpack.c.b16 %v1078, %v1078
    %v1095 = vpack.c.b16 %v1079, %v1079
    %v1096 = vpack.c.b16 %v1080, %v1080
    %v1097 = vpack.c.b16 %v1081, %v1081
    %v1098 = vpack.c.b16 %v1082, %v1082
    %v1099 = vpack.c.b16 %v1083, %v1083
    %v1100 = vpack.c.b16 %v1084, %v1084
    %v1101 = vpack.c.b16 %v1085, %v1085
    %v1102 = vpack.c.b16 %v1086, %v1086
    %v1103 = vpack.c.b16 %v1087, %v1087
    %vm1120 = vcmask 125952
    %1121 = vst.msk [vmem:[%s8] sm:$0xf] %vm1120, %v1088
    %1122 = vst.msk [vmem:[%s8 + $0x4] sm:$0xf] %vm1120, %v1089
    %1123 = vst.msk [vmem:[%s8 + $0x8] sm:$0xf] %vm1120, %v1090
    %1124 = vst.msk [vmem:[%s8 + $0xc] sm:$0xf] %vm1120, %v1091
    %1125 = vst.msk [vmem:[%s8 + $0x10] sm:$0xf] %vm1120, %v1092
    %1126 = vst.msk [vmem:[%s8 + $0x14] sm:$0xf] %vm1120, %v1093
    %1127 = vst.msk [vmem:[%s8 + $0x18] sm:$0xf] %vm1120, %v1094
    %1128 = vst.msk [vmem:[%s8 + $0x1c] sm:$0xf] %vm1120, %v1095
    %1129 = vst.msk [vmem:[%s8 + $0x20] sm:$0xf] %vm1120, %v1096
    %1130 = vst.msk [vmem:[%s8 + $0x24] sm:$0xf] %vm1120, %v1097
    %1131 = vst.msk [vmem:[%s8 + $0x28] sm:$0xf] %vm1120, %v1098
    %1132 = vst.msk [vmem:[%s8 + $0x2c] sm:$0xf] %vm1120, %v1099
    %1133 = vst.msk [vmem:[%s8 + $0x30] sm:$0xf] %vm1120, %v1100
    %1134 = vst.msk [vmem:[%s8 + $0x34] sm:$0xf] %vm1120, %v1101
    %1135 = vst.msk [vmem:[%s8 + $0x38] sm:$0xf] %vm1120, %v1102
    %1136 = vst.msk [vmem:[%s8 + $0x3c] sm:$0xf] %vm1120, %v1103
  $region41: #{_lambda_.13} parent=0 // pred_fallthru
    _
  // Predicated region
  $region42: #{_lambda_.13} parent=0 // pred_check
    _
  $region43: #{_lambda_.13} parent=0 // pred_check_branch
    %1138 = sbr.rel (0) target = $region45
  $region44: #{_lambda_.13} parent=0 // pred_region
    _
  $region45: #{_lambda_.13} parent=0 // pred_fallthru
    _
  // Predicated region
  $region46: #{_lambda_.13} parent=0 // pred_check
    _
  $region47: #{_lambda_.13} parent=0 // pred_check_branch
    %1140 = sbr.rel (0) target = $region49
  $region48: #{_lambda_.13} parent=0 // pred_region
    _
  $region49: #{_lambda_.13} parent=0 // pred_fallthru
    _

// kernel: _lambda_.16
$region0: #{_lambda_.16}
  #allocation0 [shape = 'u32[]', space=smem, size = 0x4, offset = 0x4, fixed_abs, tag = 'smem constant byte address 0x4 - core index']
  #allocation1 [shape = 'u32[144,128]{1,0:T(1,128)}', space=vmem, size = 0x12000, scoped, tag = 'internal scratch']
  %s0 = inlined_call_operand.vmem [shape: bf16[32,64], index: 0, kind: input, shape index: {}]
  %s1 = inlined_call_operand.vmem [shape: f32[1,64], index: 1, kind: input, shape index: {}]
  %s2 = inlined_call_operand.vmem [shape: f32[1,64], index: 2, kind: input, shape index: {}]
  %s3 = inlined_call_operand.vmem [shape: bf16[64,32], index: 3, kind: input, shape index: {}]
  %s4 = inlined_call_operand.vmem [shape: bf16[32,32], index: 4, kind: output, shape index: {}]
  %s5 = sld [smem:[#allocation0]]
  $region26: #{_lambda_.16} parent=0
    _
  %s7 = ssub.s32 1, %s5
  %s8 = scalar_select 0, %s7, %s5
  // Predicated region
  $region2: #{_lambda_.16} parent=0 // pred_check
    _
  $region3: #{_lambda_.16} parent=0 // pred_check_branch
    %10 = sbr.rel (0) target = $region5
  $region4: #{_lambda_.16} parent=0 // pred_region
    _
  $region5: #{_lambda_.16} parent=0 // pred_fallthru
    _
  // Predicated region
  $region6: #{_lambda_.16} parent=0 // pred_check
    _
  $region7: #{_lambda_.16} parent=0 // pred_check_branch
    %12 = sbr.rel (0) target = $region9
  $region8: #{_lambda_.16} parent=0 // pred_region
    _
  $region9: #{_lambda_.16} parent=0 // pred_fallthru
    _
  // Predicated region
  $region10: #{_lambda_.16} parent=0 // pred_check
    _
  $region11: #{_lambda_.16} parent=0 // pred_check_branch
    %14 = sbr.rel (0) target = $region13
  $region12: #{_lambda_.16} parent=0 // pred_region
    _
  $region13: #{_lambda_.16} parent=0 // pred_fallthru
    _
  // Predicated region
  $region14: #{_lambda_.16} parent=0 // pred_check
    _
  $region15: #{_lambda_.16} parent=0 // pred_check_branch
    %16 = sbr.rel (0) target = $region17
  $region16: #{_lambda_.16} parent=0 // pred_region
    _
  $region17: #{_lambda_.16} parent=0 // pred_fallthru
    _
  %v18 = vld [vmem:[%s0] sm:$0xf]
  %v19 = vld [vmem:[%s0 + $0x4] sm:$0xf]
  %v20 = vld [vmem:[%s0 + $0x8] sm:$0xf]
  %v21 = vld [vmem:[%s0 + $0xc] sm:$0xf]
  %v22 = vunpack.c.l.bf16 %v18
  %v23 = vunpack.c.l.bf16 %v19
  %v24 = vunpack.c.l.bf16 %v20
  %v25 = vunpack.c.l.bf16 %v21
  %v26 = vld [vmem:[%s1] sm:$0x1]
  %v27 = vld [vmem:[%s2] sm:$0x1]
  %vm28 = vcmask 523264
  %v29 = vsel %vm28, %v22, 0.0
  %30 = vadd.xlane.f32.xlu0 %v29
  %v31 = vpop.xlane.xlu0 %30
  %v32 = vsel %vm28, %v23, 0.0
  %33 = vadd.xlane.f32.xlu0 %v32
  %v34 = vpop.xlane.xlu0 %33
  %v35 = vsel %vm28, %v24, 0.0
  %36 = vadd.xlane.f32.xlu0 %v35
  %v37 = vpop.xlane.xlu0 %36
  %v38 = vsel %vm28, %v25, 0.0
  %39 = vadd.xlane.f32.xlu0 %v38
  %v40 = vpop.xlane.xlu0 %39
  %v41 = vrcp.pop 64.0
  %v42 = vmul.f32 %v31, %v41
  %v43 = vmul.f32 %v34, %v41
  %v44 = vmul.f32 %v37, %v41
  %v45 = vmul.f32 %v40, %v41
  %v46 = vsub.f32 %v22, %v42
  %v47 = vsub.f32 %v23, %v43
  %v48 = vsub.f32 %v24, %v44
  %v49 = vsub.f32 %v25, %v45
  %v50 = vmul.f32 %v46, %v46
  %v51 = vmul.f32 %v47, %v47
  %v52 = vmul.f32 %v48, %v48
  %v53 = vmul.f32 %v49, %v49
  %v54 = vsel %vm28, %v50, 0.0
  %55 = vadd.xlane.f32.xlu0 %v54
  %v56 = vpop.xlane.xlu0 %55
  %v57 = vsel %vm28, %v51, 0.0
  %58 = vadd.xlane.f32.xlu0 %v57
  %v59 = vpop.xlane.xlu0 %58
  %v60 = vsel %vm28, %v52, 0.0
  %61 = vadd.xlane.f32.xlu0 %v60
  %v62 = vpop.xlane.xlu0 %61
  %v63 = vsel %vm28, %v53, 0.0
  %64 = vadd.xlane.f32.xlu0 %v63
  %v65 = vpop.xlane.xlu0 %64
  %v66 = vmul.f32 %v56, %v41
  %v67 = vmul.f32 %v59, %v41
  %v68 = vmul.f32 %v62, %v41
  %v69 = vmul.f32 %v65, %v41
  %v70 = vadd.f32 %v66, 1e-05
  %v71 = vadd.f32 %v67, 1e-05
  %v72 = vadd.f32 %v68, 1e-05
  %v73 = vadd.f32 %v69, 1e-05
  %v74 = vrsqrt.pop %v70
  %v75 = vrsqrt.pop %v71
  %v76 = vrsqrt.pop %v72
  %v77 = vrsqrt.pop %v73
  %v78 = vmul.f32 %v46, %v74
  %v79 = vmul.f32 %v47, %v75
  %v80 = vmul.f32 %v48, %v76
  %v81 = vmul.f32 %v49, %v77
  %v83 = vlaneseq
  %v84 = vshrl.u32 %v83, 7
  %v85 = vsub.s32 0, %v84
  %v86 = vrot.slane %v26, %v85
  %v88 = vmul.f32 %v78, %v86
  %v89 = vmul.f32 %v79, %v86
  %v90 = vmul.f32 %v80, %v86
  %v91 = vmul.f32 %v81, %v86
  %v93 = vlaneseq
  %v94 = vshrl.u32 %v93, 7
  %v95 = vsub.s32 0, %v94
  %v96 = vrot.slane %v27, %v95
  %v98 = vadd.f32 %v88, %v96
  %v99 = vadd.f32 %v89, %v96
  %v100 = vadd.f32 %v90, %v96
  %v101 = vadd.f32 %v91, %v96
  %v102 = vpack.c.bf16 %v99, %v98
  %v103 = vpack.c.bf16 %v101, %v100
  %v104 = vld [vmem:[%s3] sm:$0xf]
  %v105 = vld [vmem:[%s3 + $0x4] sm:$0xf]
  %v106 = vld [vmem:[%s3 + $0x8] sm:$0xf]
  %v107 = vld [vmem:[%s3 + $0xc] sm:$0xf]
  %v108 = vld [vmem:[%s3 + $0x10] sm:$0xf]
  %v109 = vld [vmem:[%s3 + $0x14] sm:$0xf]
  %v110 = vld [vmem:[%s3 + $0x18] sm:$0xf]
  %v111 = vld [vmem:[%s3 + $0x1c] sm:$0xf]
  %v120 = vunpack.c.l.b16 %v104
  %v121 = vunpack.c.l.b16 %v105
  %v122 = vunpack.c.l.b16 %v106
  %v123 = vunpack.c.l.b16 %v107
  %v124 = vunpack.c.l.b16 %v108
  %v125 = vunpack.c.l.b16 %v109
  %v126 = vunpack.c.l.b16 %v110
  %v127 = vunpack.c.l.b16 %v111
  %v128 = vpack.c.b16 %v121, %v120
  %v129 = vpack.c.b16 %v123, %v122
  %v130 = vpack.c.b16 %v125, %v124
  %v131 = vpack.c.b16 %v127, %v126
  %v137 = vsel %vm28, %v102, 0
  %v140 = vsel %vm28, %v103, 0
  %142 = vmatprep.subr.bf16.mxu0 0
  %143 = vmatpush1.bf16.msra.mxu0 0
  %144 = vmatprep.subr.bf16.mxu0 0
  %145 = vmatpush1.bf16.msra.mxu0 0
  %146 = vmatprep.subr.bf16.mxu0 0
  %147 = vmatpush1.bf16.msra.mxu0 0
  %148 = vmatprep.subr.bf16.mxu0 0
  %149 = vmatpush1.bf16.msra.mxu0 0
  %150 = vmatprep.subr.bf16.mxu0 0
  %151 = vmatpush1.bf16.msra.mxu0 %v131
  %152 = vmatprep.subr.bf16.mxu0 0
  %153 = vmatpush1.bf16.msra.mxu0 %v130
  %154 = vmatprep.subr.bf16.mxu0 0
  %155 = vmatpush1.bf16.msra.mxu0 %v129
  %156 = vmatprep.subr.bf16.mxu0 0
  %157 = vmatpush1.bf16.msra.mxu0 %v128
  %158 = vmatprep.subr.bf16.mxu0 0
  %159 = vmatpush2.bf16.msra.mxu0 0
  %160 = vmatprep.subr.bf16.mxu0 0
  %161 = vmatpush2.bf16.msra.mxu0 0
  %162 = vmatprep.subr.bf16.mxu0 0
  %163 = vmatpush2.bf16.msra.mxu0 0
  %164 = vmatprep.subr.bf16.mxu0 0
  %165 = vmatpush2.bf16.msra.mxu0 0
  %166 = vmatprep.subr.bf16.mxu0 0
  %167 = vmatpush2.bf16.msra.mxu0 0
  %168 = vmatprep.subr.bf16.mxu0 0
  %169 = vmatpush2.bf16.msra.mxu0 0
  %170 = vmatprep.subr.bf16.mxu0 0
  %171 = vmatpush2.bf16.msra.mxu0 0
  %172 = vmatprep.subr.bf16.mxu0 0
  %173 = vmatpush2.bf16.msra.mxu0 0
  %174 = vmatprep.mubr.bf16.mxu0 0
  %175 = vmatmul.mubr.bf16.gmra.mxu0 %v137
  %v176 = vpop.f32.mrf.mxu0
  %v177 = vadd.f32 0.0, %v176
  %v178 = vpop.f32.mrf.mxu0
  %v179 = vpop.f32.mrf.mxu0
  %v180 = vadd.f32 0.0, %v179
  %v181 = vpop.f32.mrf.mxu0
  %182 = vmatprep.mubr.bf16.mxu0 0
  %183 = vmatmul.mubr.bf16.gmra.mxu0 %v140
  %v184 = vpop.f32.mrf.mxu0
  %v185 = vadd.f32 0.0, %v184
  %v186 = vpop.f32.mrf.mxu0
  %v187 = vpop.f32.mrf.mxu0
  %v188 = vadd.f32 0.0, %v187
  %v189 = vpop.f32.mrf.mxu0
  %190 = vdwg.mxu0
  %v191 = vpack.c.bf16 %v180, %v177
  %v192 = vpack.c.bf16 %v188, %v185
  %v195 = vunpack.c.l.b16 %v191
  %v196 = vunpack.c.h.b16 %v191
  %v197 = vunpack.c.l.b16 %v192
  %v198 = vunpack.c.h.b16 %v192
  %v199 = vpack.c.b16 %v195, %v195
  %v200 = vpack.c.b16 %v196, %v196
  %v201 = vpack.c.b16 %v197, %v197
  %v202 = vpack.c.b16 %v198, %v198
  %vm207 = vcmask 257024
  %208 = vst.msk [vmem:[%s4] sm:$0xf] %vm207, %v199
  %209 = vst.msk [vmem:[%s4 + $0x4] sm:$0xf] %vm207, %v200
  %210 = vst.msk [vmem:[%s4 + $0x8] sm:$0xf] %vm207, %v201
  %211 = vst.msk [vmem:[%s4 + $0xc] sm:$0xf] %vm207, %v202
  // Predicated region
  $region18: #{_lambda_.16} parent=0 // pred_check
    _
  $region19: #{_lambda_.16} parent=0 // pred_check_branch
    %213 = sbr.rel (0) target = $region21
  $region20: #{_lambda_.16} parent=0 // pred_region
    _
  $region21: #{_lambda_.16} parent=0 // pred_fallthru
    _
  // Predicated region
  $region22: #{_lambda_.16} parent=0 // pred_check
    _
  $region23: #{_lambda_.16} parent=0 // pred_check_branch
    %215 = sbr.rel (0) target = $region25
  $region24: #{_lambda_.16} parent=0 // pred_region
    _
  $region25: #{_lambda_.16} parent=0 // pred_fallthru
    _

// kernel: _lambda_.21
$region0: #{_lambda_.21}
  #allocation0 [shape = 'u32[]', space=smem, size = 0x4, offset = 0x4, fixed_abs, tag = 'smem constant byte address 0x4 - core index']
  #allocation1 [shape = 'u32[144,128]{1,0:T(1,128)}', space=vmem, size = 0x12000, scoped, tag = 'internal scratch']
  %s0 = inlined_call_operand.vmem [shape: bf16[2,16,32], index: 0, kind: input, shape index: {}]
  %s1 = inlined_call_operand.vmem [shape: f32[1,32], index: 1, kind: input, shape index: {}]
  %s2 = inlined_call_operand.vmem [shape: f32[1,32], index: 2, kind: input, shape index: {}]
  %s3 = inlined_call_operand.hbm [shape: f32[2,32], index: 3, kind: output, shape index: {}]
  %s4 = sld [smem:[#allocation0]]
  $region22: #{_lambda_.21} parent=0
    _
  %s6 = ssub.s32 1, %s4
  %s7 = scalar_select 0, %s6, %s4
  $region1: #{_lambda_.21} parent=0
    #allocation2 [shape = 'u8[1024]{0}', space=vmem, size = 0x400, scoped, tag = 'output window, operand 0, single buffered']
    #allocation3 [shape = 's32[1]{0}', space=sflag, size = 0x4, scoped, tag = 'scoped memory for _lambda_.21']
    %8 = vsyncpa [#allocation3], 0
    // Predicated region
    $region2: #{_lambda_.21} parent=1 // pred_check
      _
    $region3: #{_lambda_.21} parent=1 // pred_check_branch
      %10 = sbr.rel (0) target = $region5
    $region4: #{_lambda_.21} parent=1 // pred_region
      _
    $region5: #{_lambda_.21} parent=1 // pred_fallthru
      _
    // Predicated region
    $region6: #{_lambda_.21} parent=1 // pred_check
      _
    $region7: #{_lambda_.21} parent=1 // pred_check_branch
      %12 = sbr.rel (0) target = $region9
    $region8: #{_lambda_.21} parent=1 // pred_region
      _
    $region9: #{_lambda_.21} parent=1 // pred_fallthru
      _
    // Predicated region
    $region10: #{_lambda_.21} parent=1 // pred_check
      _
    $region11: #{_lambda_.21} parent=1 // pred_check_branch
      %14 = sbr.rel (0) target = $region13
    $region12: #{_lambda_.21} parent=1 // pred_region
      _
    $region13: #{_lambda_.21} parent=1 // pred_fallthru
      _
    %v15 = vld [vmem:[%s0] sm:$0xf]
    %v16 = vld [vmem:[%s0 + $0x4] sm:$0xf]
    %v17 = vld [vmem:[%s0 + $0x8] sm:$0xf]
    %v18 = vld [vmem:[%s0 + $0xc] sm:$0xf]
    %v19 = vunpack.c.l.bf16 %v15
    %v20 = vunpack.c.l.bf16 %v16
    %v21 = vunpack.c.l.bf16 %v17
    %v22 = vunpack.c.l.bf16 %v18
    %v23 = vld [vmem:[%s1] sm:$0x1]
    %v24 = vld [vmem:[%s2] sm:$0x1]
    %vm25 = vcmask 261120
    %v26 = vsel %vm25, %v19, 0.0
    %27 = vadd.xlane.f32.xlu0 %v26
    %v28 = vpop.xlane.xlu0 %27
    %v29 = vsel %vm25, %v20, 0.0
    %30 = vadd.xlane.f32.xlu0 %v29
    %v31 = vpop.xlane.xlu0 %30
    %v32 = vsel %vm25, %v21, 0.0
    %33 = vadd.xlane.f32.xlu0 %v32
    %v34 = vpop.xlane.xlu0 %33
    %v35 = vsel %vm25, %v22, 0.0
    %36 = vadd.xlane.f32.xlu0 %v35
    %v37 = vpop.xlane.xlu0 %36
    %v38 = vrcp.pop 32.0
    %v39 = vmul.f32 %v28, %v38
    %v40 = vmul.f32 %v31, %v38
    %v41 = vmul.f32 %v34, %v38
    %v42 = vmul.f32 %v37, %v38
    %v43 = vsub.f32 %v19, %v39
    %v44 = vsub.f32 %v20, %v40
    %v45 = vsub.f32 %v21, %v41
    %v46 = vsub.f32 %v22, %v42
    %v47 = vmul.f32 %v43, %v43
    %v48 = vmul.f32 %v44, %v44
    %v49 = vmul.f32 %v45, %v45
    %v50 = vmul.f32 %v46, %v46
    %v51 = vsel %vm25, %v47, 0.0
    %52 = vadd.xlane.f32.xlu0 %v51
    %v53 = vpop.xlane.xlu0 %52
    %v54 = vsel %vm25, %v48, 0.0
    %55 = vadd.xlane.f32.xlu0 %v54
    %v56 = vpop.xlane.xlu0 %55
    %v57 = vsel %vm25, %v49, 0.0
    %58 = vadd.xlane.f32.xlu0 %v57
    %v59 = vpop.xlane.xlu0 %58
    %v60 = vsel %vm25, %v50, 0.0
    %61 = vadd.xlane.f32.xlu0 %v60
    %v62 = vpop.xlane.xlu0 %61
    %v63 = vmul.f32 %v53, %v38
    %v64 = vmul.f32 %v56, %v38
    %v65 = vmul.f32 %v59, %v38
    %v66 = vmul.f32 %v62, %v38
    %v67 = vadd.f32 %v63, 1e-05
    %v68 = vadd.f32 %v64, 1e-05
    %v69 = vadd.f32 %v65, 1e-05
    %v70 = vadd.f32 %v66, 1e-05
    %v71 = vrsqrt.pop %v67
    %v72 = vrsqrt.pop %v68
    %v73 = vrsqrt.pop %v69
    %v74 = vrsqrt.pop %v70
    %v75 = vmul.f32 %v43, %v71
    %v76 = vmul.f32 %v44, %v72
    %v77 = vmul.f32 %v45, %v73
    %v78 = vmul.f32 %v46, %v74
    %v80 = vlaneseq
    %v81 = vshrl.u32 %v80, 7
    %v82 = vsub.s32 0, %v81
    %v83 = vrot.slane %v23, %v82
    %v85 = vmul.f32 %v75, %v83
    %v86 = vmul.f32 %v76, %v83
    %v87 = vmul.f32 %v77, %v83
    %v88 = vmul.f32 %v78, %v83
    %v90 = vlaneseq
    %v91 = vshrl.u32 %v90, 7
    %v92 = vsub.s32 0, %v91
    %v93 = vrot.slane %v24, %v92
    %v95 = vadd.f32 %v85, %v93
    %v96 = vadd.f32 %v86, %v93
    %v97 = vadd.f32 %v87, %v93
    %v98 = vadd.f32 %v88, %v93
    %v99 = vsel %vm25, %v95, 0.0
    %v100 = vsel %vm25, %v96, 0.0
    %v101 = vadd.f32 %v99, %v100
    %v102 = vrot.slane %v101, 4
    %v103 = vadd.f32 %v101, %v102
    %v104 = vrot.slane %v103, 2
    %v105 = vadd.f32 %v103, %v104
    %v106 = vrot.slane %v105, 1
    %v107 = vadd.f32 %v105, %v106
    %v108 = vsel %vm25, %v97, 0.0
    %v109 = vsel %vm25, %v98, 0.0
    %v110 = vadd.f32 %v108, %v109
    %v111 = vrot.slane %v110, 4
    %v112 = vadd.f32 %v110, %v111
    %v113 = vrot.slane %v112, 2
    %v114 = vadd.f32 %v112, %v113
    %v115 = vrot.slane %v114, 1
    %v116 = vadd.f32 %v114, %v115
    %v117 = vrcp.pop 16.0
    %v118 = vmul.f32 %v107, %v117
    %v119 = vmul.f32 %v116, %v117
    %vm122 = vcmask 1041409
    %v123 = vsel %vm122, %v119, %v118
    %vm125 = vcmask 254976
    %126 = vst.msk [vmem:[#allocation2] sm:$0x3] %vm125, %v123
    // Predicated region
    $region14: #{_lambda_.21} parent=1 // pred_check
      _
    $region15: #{_lambda_.21} parent=1 // pred_check_branch
      %128 = sbr.rel (0) target = $region17
    $region16: #{_lambda_.21} parent=1 // pred_region
      %s130 = ssub.s32 32, 32
      %131 = vsyncadd [#allocation3], %s130
      %s133 = sshll.u32 [#allocation2], 4
      %s134 = int_to_ptr.vmem [resolvable:$true] %s133
      %136 = dma.vmem_to_hbm [thread:$0]  %s134, 32, %s3, [#allocation3]
    $region17: #{_lambda_.21} parent=1 // pred_fallthru
      _
    // Predicated region
    $region18: #{_lambda_.21} parent=1 // pred_check
      _
    $region19: #{_lambda_.21} parent=1 // pred_check_branch
      %138 = sbr.rel (0) target = $region21
    $region20: #{_lambda_.21} parent=1 // pred_region
      %139 = dma.done [#allocation3], 32
    $region21: #{_lambda_.21} parent=1 // pred_fallthru
      _
    %140 = vsyncpa [#allocation3], 1

// kernel: _lambda_.18
$region0: #{_lambda_.18}
  #allocation0 [shape = 'u32[]', space=smem, size = 0x4, offset = 0x4, fixed_abs, tag = 'smem constant byte address 0x4 - core index']
  #allocation1 [shape = 'u32[144,128]{1,0:T(1,128)}', space=vmem, size = 0x12000, scoped, tag = 'internal scratch']
  #allocation2 [shape = 'bf16[32,32]{1,0:T(8,128)(2,1)}', space=vmem, size = 0x2000, scoped, tag = 'scratch operand']
  #allocation3 [shape = 'f32[32,32]{1,0:T(8,128)}', space=vmem, size = 0x4000, scoped, tag = 'scratch operand']
  %s0 = inlined_call_operand.vmem [shape: bf16[32,32], index: 0, kind: input, shape index: {}]
  %s1 = inlined_call_operand.vmem [shape: bf16[32,32], index: 1, kind: input, shape index: {}]
  %s2 = inlined_call_operand.vmem [shape: f32[1,32], index: 2, kind: input, shape index: {}]
  %s3 = inlined_call_operand.vmem [shape: f32[1,32], index: 3, kind: input, shape index: {}]
  %s4 = inlined_call_operand.vmem [shape: bf16[32,128], index: 4, kind: input, shape index: {}]
  %s5 = inlined_call_operand.vmem [shape: f32[1,128], index: 5, kind: input, shape index: {}]
  %s6 = inlined_call_operand.vmem [shape: bf16[128,32], index: 6, kind: input, shape index: {}]
  %s7 = inlined_call_operand.vmem [shape: f32[1,32], index: 7, kind: input, shape index: {}]
  %s8 = inlined_call_operand.vmem [shape: bf16[32,32], index: 8, kind: output, shape index: {}]
  %s9 = sld [smem:[#allocation0]]
  $region50: #{_lambda_.18} parent=0
    _
  %s11 = ssub.s32 1, %s9
  %s12 = scalar_select 0, %s11, %s9
  // Predicated region
  $region2: #{_lambda_.18} parent=0 // pred_check
    _
  $region3: #{_lambda_.18} parent=0 // pred_check_branch
    %14 = sbr.rel (0) target = $region5
  $region4: #{_lambda_.18} parent=0 // pred_region
    _
  $region5: #{_lambda_.18} parent=0 // pred_fallthru
    _
  // Predicated region
  $region6: #{_lambda_.18} parent=0 // pred_check
    _
  $region7: #{_lambda_.18} parent=0 // pred_check_branch
    %16 = sbr.rel (0) target = $region9
  $region8: #{_lambda_.18} parent=0 // pred_region
    _
  $region9: #{_lambda_.18} parent=0 // pred_fallthru
    _
  // Predicated region
  $region10: #{_lambda_.18} parent=0 // pred_check
    _
  $region11: #{_lambda_.18} parent=0 // pred_check_branch
    %18 = sbr.rel (0) target = $region13
  $region12: #{_lambda_.18} parent=0 // pred_region
    _
  $region13: #{_lambda_.18} parent=0 // pred_fallthru
    _
  // Predicated region
  $region14: #{_lambda_.18} parent=0 // pred_check
    _
  $region15: #{_lambda_.18} parent=0 // pred_check_branch
    %20 = sbr.rel (0) target = $region17
  $region16: #{_lambda_.18} parent=0 // pred_region
    _
  $region17: #{_lambda_.18} parent=0 // pred_fallthru
    _
  // Predicated region
  $region18: #{_lambda_.18} parent=0 // pred_check
    _
  $region19: #{_lambda_.18} parent=0 // pred_check_branch
    %22 = sbr.rel (0) target = $region21
  $region20: #{_lambda_.18} parent=0 // pred_region
    _
  $region21: #{_lambda_.18} parent=0 // pred_fallthru
    _
  // Predicated region
  $region22: #{_lambda_.18} parent=0 // pred_check
    _
  $region23: #{_lambda_.18} parent=0 // pred_check_branch
    %24 = sbr.rel (0) target = $region25
  $region24: #{_lambda_.18} parent=0 // pred_region
    _
  $region25: #{_lambda_.18} parent=0 // pred_fallthru
    _
  // Predicated region
  $region26: #{_lambda_.18} parent=0 // pred_check
    _
  $region27: #{_lambda_.18} parent=0 // pred_check_branch
    %26 = sbr.rel (0) target = $region29
  $region28: #{_lambda_.18} parent=0 // pred_region
    _
  $region29: #{_lambda_.18} parent=0 // pred_fallthru
    _
  // Predicated region
  $region30: #{_lambda_.18} parent=0 // pred_check
    _
  $region31: #{_lambda_.18} parent=0 // pred_check_branch
    %28 = sbr.rel (0) target = $region33
  $region32: #{_lambda_.18} parent=0 // pred_region
    _
  $region33: #{_lambda_.18} parent=0 // pred_fallthru
    _
  %p30 = scmp.eq.s32.totalorder 0, 0
  // Predicated region
  $region34: #{_lambda_.18} parent=0 // pred_check
    %p31 = pneg %p30
  $region35: #{_lambda_.18} parent=0 // pred_check_branch
    %33 = sbr.rel (%p31) target = $region37
  $region36: #{_lambda_.18} parent=0 // pred_region
    %v34 = vld [vmem:[%s0] sm:$0xf]
    %v35 = vld [vmem:[%s0 + $0x4] sm:$0xf]
    %v36 = vld [vmem:[%s0 + $0x8] sm:$0xf]
    %v37 = vld [vmem:[%s0 + $0xc] sm:$0xf]
    %v38 = vunpack.c.l.bf16 %v34
    %v39 = vunpack.c.l.bf16 %v35
    %v40 = vunpack.c.l.bf16 %v36
    %v41 = vunpack.c.l.bf16 %v37
    %v42 = vld [vmem:[%s1] sm:$0xf]
    %v43 = vld [vmem:[%s1 + $0x4] sm:$0xf]
    %v44 = vld [vmem:[%s1 + $0x8] sm:$0xf]
    %v45 = vld [vmem:[%s1 + $0xc] sm:$0xf]
    %v46 = vunpack.c.l.bf16 %v42
    %v47 = vunpack.c.l.bf16 %v43
    %v48 = vunpack.c.l.bf16 %v44
    %v49 = vunpack.c.l.bf16 %v45
    %v50 = vadd.f32 %v38, %v46
    %v51 = vadd.f32 %v39, %v47
    %v52 = vadd.f32 %v40, %v48
    %v53 = vadd.f32 %v41, %v49
    %v54 = vld [vmem:[%s2] sm:$0x1]
    %v55 = vld [vmem:[%s3] sm:$0x1]
    %vm56 = vcmask 261120
    %v57 = vsel %vm56, %v50, 0.0
    %58 = vadd.xlane.f32.xlu0 %v57
    %v59 = vpop.xlane.xlu0 %58
    %v60 = vsel %vm56, %v51, 0.0
    %61 = vadd.xlane.f32.xlu0 %v60
    %v62 = vpop.xlane.xlu0 %61
    %v63 = vsel %vm56, %v52, 0.0
    %64 = vadd.xlane.f32.xlu0 %v63
    %v65 = vpop.xlane.xlu0 %64
    %v66 = vsel %vm56, %v53, 0.0
    %67 = vadd.xlane.f32.xlu0 %v66
    %v68 = vpop.xlane.xlu0 %67
    %v69 = vrcp.pop 32.0
    %v70 = vmul.f32 %v59, %v69
    %v71 = vmul.f32 %v62, %v69
    %v72 = vmul.f32 %v65, %v69
    %v73 = vmul.f32 %v68, %v69
    %v74 = vsub.f32 %v50, %v70
    %v75 = vsub.f32 %v51, %v71
    %v76 = vsub.f32 %v52, %v72
    %v77 = vsub.f32 %v53, %v73
    %v78 = vmul.f32 %v74, %v74
    %v79 = vmul.f32 %v75, %v75
    %v80 = vmul.f32 %v76, %v76
    %v81 = vmul.f32 %v77, %v77
    %v82 = vsel %vm56, %v78, 0.0
    %83 = vadd.xlane.f32.xlu0 %v82
    %v84 = vpop.xlane.xlu0 %83
    %v85 = vsel %vm56, %v79, 0.0
    %86 = vadd.xlane.f32.xlu0 %v85
    %v87 = vpop.xlane.xlu0 %86
    %v88 = vsel %vm56, %v80, 0.0
    %89 = vadd.xlane.f32.xlu0 %v88
    %v90 = vpop.xlane.xlu0 %89
    %v91 = vsel %vm56, %v81, 0.0
    %92 = vadd.xlane.f32.xlu0 %v91
    %v93 = vpop.xlane.xlu0 %92
    %v94 = vmul.f32 %v84, %v69
    %v95 = vmul.f32 %v87, %v69
    %v96 = vmul.f32 %v90, %v69
    %v97 = vmul.f32 %v93, %v69
    %v98 = vadd.f32 %v94, 1e-05
    %v99 = vadd.f32 %v95, 1e-05
    %v100 = vadd.f32 %v96, 1e-05
    %v101 = vadd.f32 %v97, 1e-05
    %v102 = vrsqrt.pop %v98
    %v103 = vrsqrt.pop %v99
    %v104 = vrsqrt.pop %v100
    %v105 = vrsqrt.pop %v101
    %v106 = vmul.f32 %v74, %v102
    %v107 = vmul.f32 %v75, %v103
    %v108 = vmul.f32 %v76, %v104
    %v109 = vmul.f32 %v77, %v105
    %v111 = vlaneseq
    %v112 = vshrl.u32 %v111, 7
    %v113 = vsub.s32 0, %v112
    %v114 = vrot.slane %v54, %v113
    %v116 = vmul.f32 %v106, %v114
    %v117 = vmul.f32 %v107, %v114
    %v118 = vmul.f32 %v108, %v114
    %v119 = vmul.f32 %v109, %v114
    %v121 = vlaneseq
    %v122 = vshrl.u32 %v121, 7
    %v123 = vsub.s32 0, %v122
    %v124 = vrot.slane %v55, %v123
    %v126 = vadd.f32 %v116, %v124
    %v127 = vadd.f32 %v117, %v124
    %v128 = vadd.f32 %v118, %v124
    %v129 = vadd.f32 %v119, %v124
    %v130 = vpack.c.bf16 %v127, %v126
    %v131 = vpack.c.bf16 %v129, %v128
    %v134 = vunpack.c.l.b16 %v130
    %v135 = vunpack.c.h.b16 %v130
    %v136 = vunpack.c.l.b16 %v131
    %v137 = vunpack.c.h.b16 %v131
    %v138 = vpack.c.b16 %v134, %v134
    %v139 = vpack.c.b16 %v135, %v135
    %v140 = vpack.c.b16 %v136, %v136
    %v141 = vpack.c.b16 %v137, %v137
    %vm146 = vcmask 257024
    %147 = vst.msk [vmem:[#allocation2] sm:$0xf] %vm146, %v138
    %148 = vst.msk [vmem:[#allocation2 + $0x4] sm:$0xf] %vm146, %v139
    %149 = vst.msk [vmem:[#allocation2 + $0x8] sm:$0xf] %vm146, %v140
    %150 = vst.msk [vmem:[#allocation2 + $0xc] sm:$0xf] %vm146, %v141
    %v151 = vld [vmem:[%s7] sm:$0x1]
    %v153 = vlaneseq
    %v154 = vshrl.u32 %v153, 7
    %v155 = vsub.s32 0, %v154
    %v156 = vrot.slane %v151, %v155
    %v158 = vadd.f32 %v50, %v156
    %v159 = vadd.f32 %v51, %v156
    %v160 = vadd.f32 %v52, %v156
    %v161 = vadd.f32 %v53, %v156
    %162 = vst.msk [vmem:[#allocation3] sm:$0xff] %vm56, %v158
    %163 = vst.msk [vmem:[#allocation3 + $0x8] sm:$0xff] %vm56, %v159
    %164 = vst.msk [vmem:[#allocation3 + $0x10] sm:$0xff] %vm56, %v160
    %165 = vst.msk [vmem:[#allocation3 + $0x18] sm:$0xff] %vm56, %v161
  $region37: #{_lambda_.18} parent=0 // pred_fallthru
    _
  %v166 = vld [vmem:[#allocation2] sm:$0xf]
  %v167 = vld [vmem:[#allocation2 + $0x4] sm:$0xf]
  %v168 = vld [vmem:[#allocation2 + $0x8] sm:$0xf]
  %v169 = vld [vmem:[#allocation2 + $0xc] sm:$0xf]
  %v170 = vld [vmem:[%s4] sm:$0xf]
  %v171 = vld [vmem:[%s4 + $0x4] sm:$0xf]
  %v172 = vld [vmem:[%s4 + $0x8] sm:$0xf]
  %v173 = vld [vmem:[%s4 + $0xc] sm:$0xf]
  %v174 = vld [vmem:[%s5] sm:$0x1]
  %v176 = vlaneseq
  %v177 = vshrl.u32 %v176, 7
  %v178 = vsub.s32 0, %v177
  %v179 = vrot.slane %v174, %v178
  %v185 = vunpack.c.l.b16 %v166
  %v186 = vunpack.c.l.b16 %v167
  %v187 = vunpack.c.l.b16 %v168
  %v188 = vunpack.c.l.b16 %v169
  %v189 = vpack.c.b16 %v186, %v185
  %v190 = vpack.c.b16 %v188, %v187
  %v195 = vunpack.c.l.b16 %v170
  %v196 = vunpack.c.l.b16 %v171
  %v197 = vunpack.c.l.b16 %v172
  %v198 = vunpack.c.l.b16 %v173
  %v199 = vpack.c.b16 %v196, %v195
  %v200 = vpack.c.b16 %v198, %v197
  %vm203 = vcmask 261120
  %v205 = vsel %vm203, %v189, 0
  %v208 = vsel %vm203, %v190, 0
  %210 = vmatprep.subr.bf16.mxu0 0
  %211 = vmatpush1.bf16.msra.mxu0 0
  %212 = vmatprep.subr.bf16.mxu0 0
  %213 = vmatpush1.bf16.msra.mxu0 0
  %214 = vmatprep.subr.bf16.mxu0 0
  %215 = vmatpush1.bf16.msra.mxu0 0
  %216 = vmatprep.subr.bf16.mxu0 0
  %217 = vmatpush1.bf16.msra.mxu0 0
  %218 = vmatprep.subr.bf16.mxu0 0
  %219 = vmatpush1.bf16.msra.mxu0 0
  %220 = vmatprep.subr.bf16.mxu0 0
  %221 = vmatpush1.bf16.msra.mxu0 0
  %222 = vmatprep.subr.bf16.mxu0 0
  %223 = vmatpush1.bf16.msra.mxu0 %v200
  %224 = vmatprep.subr.bf16.mxu0 0
  %225 = vmatpush1.bf16.msra.mxu0 %v199
  %226 = vmatprep.subr.bf16.mxu0 0
  %227 = vmatpush2.bf16.msra.mxu0 0
  %228 = vmatprep.subr.bf16.mxu0 0
  %229 = vmatpush2.bf16.msra.mxu0 0
  %230 = vmatprep.subr.bf16.mxu0 0
  %231 = vmatpush2.bf16.msra.mxu0 0
  %232 = vmatprep.subr.bf16.mxu0 0
  %233 = vmatpush2.bf16.msra.mxu0 0
  %234 = vmatprep.subr.bf16.mxu0 0
  %235 = vmatpush2.bf16.msra.mxu0 0
  %236 = vmatprep.subr.bf16.mxu0 0
  %237 = vmatpush2.bf16.msra.mxu0 0
  %238 = vmatprep.subr.bf16.mxu0 0
  %239 = vmatpush2.bf16.msra.mxu0 0
  %240 = vmatprep.subr.bf16.mxu0 0
  %241 = vmatpush2.bf16.msra.mxu0 0
  %242 = vmatprep.mubr.bf16.mxu0 0
  %243 = vmatmul.mubr.bf16.gmra.mxu0 %v205
  %v244 = vpop.f32.mrf.mxu0
  %v245 = vadd.f32 %v179, %v244
  %v246 = vpop.f32.mrf.mxu0
  %v247 = vpop.f32.mrf.mxu0
  %v248 = vadd.f32 %v179, %v247
  %v249 = vpop.f32.mrf.mxu0
  %250 = vmatprep.mubr.bf16.mxu0 0
  %251 = vmatmul.mubr.bf16.gmra.mxu0 %v208
  %v252 = vpop.f32.mrf.mxu0
  %v253 = vadd.f32 %v179, %v252
  %v254 = vpop.f32.mrf.mxu0
  %v255 = vpop.f32.mrf.mxu0
  %v256 = vadd.f32 %v179, %v255
  %v257 = vpop.f32.mrf.mxu0
  %258 = vdwg.mxu0
  %v259 = vmul.f32 %v245, 0.5
  %v260 = vmul.f32 %v248, 0.5
  %v261 = vmul.f32 %v253, 0.5
  %v262 = vmul.f32 %v256, 0.5
  %v263 = vmul.f32 %v245, 0.044715
  %v264 = vmul.f32 %v248, 0.044715
  %v265 = vmul.f32 %v253, 0.044715
  %v266 = vmul.f32 %v256, 0.044715
  %v267 = vmul.f32 %v263, %v245
  %v268 = vmul.f32 %v264, %v248
  %v269 = vmul.f32 %v265, %v253
  %v270 = vmul.f32 %v266, %v256
  %v271 = vmul.f32 %v267, %v245
  %v272 = vmul.f32 %v268, %v248
  %v273 = vmul.f32 %v269, %v253
  %v274 = vmul.f32 %v270, %v256
  %v275 = vadd.f32 %v245, %v271
  %v276 = vadd.f32 %v248, %v272
  %v277 = vadd.f32 %v253, %v273
  %v278 = vadd.f32 %v256, %v274
  %v279 = vmul.f32 %v275, 0.7978846
  %v280 = vmul.f32 %v276, 0.7978846
  %v281 = vmul.f32 %v277, 0.7978846
  %v282 = vmul.f32 %v278, 0.7978846
  %v283 = vtanh.pop %v279
  %v284 = vtanh.pop %v280
  %v285 = vtanh.pop %v281
  %v286 = vtanh.pop %v282
  %v287 = vadd.f32 %v283, 1.0
  %v288 = vadd.f32 %v284, 1.0
  %v289 = vadd.f32 %v285, 1.0
  %v290 = vadd.f32 %v286, 1.0
  %v291 = vmul.f32 %v259, %v287
  %v292 = vmul.f32 %v260, %v288
  %v293 = vmul.f32 %v261, %v289
  %v294 = vmul.f32 %v262, %v290
  %v295 = vld [vmem:[#allocation3] sm:$0xff]
  %v296 = vld [vmem:[#allocation3 + $0x8] sm:$0xff]
  %v297 = vld [vmem:[#allocation3 + $0x10] sm:$0xff]
  %v298 = vld [vmem:[#allocation3 + $0x18] sm:$0xff]
  %v299 = vpack.c.bf16 %v292, %v291
  %v300 = vpack.c.bf16 %v294, %v293
  %v301 = vld [vmem:[%s6] sm:$0xf]
  %v302 = vld [vmem:[%s6 + $0x4] sm:$0xf]
  %v303 = vld [vmem:[%s6 + $0x8] sm:$0xf]
  %v304 = vld [vmem:[%s6 + $0xc] sm:$0xf]
  %v305 = vld [vmem:[%s6 + $0x10] sm:$0xf]
  %v306 = vld [vmem:[%s6 + $0x14] sm:$0xf]
  %v307 = vld [vmem:[%s6 + $0x18] sm:$0xf]
  %v308 = vld [vmem:[%s6 + $0x1c] sm:$0xf]
  %v309 = vld [vmem:[%s6 + $0x20] sm:$0xf]
  %v310 = vld [vmem:[%s6 + $0x24] sm:$0xf]
  %v311 = vld [vmem:[%s6 + $0x28] sm:$0xf]
  %v312 = vld [vmem:[%s6 + $0x2c] sm:$0xf]
  %v313 = vld [vmem:[%s6 + $0x30] sm:$0xf]
  %v314 = vld [vmem:[%s6 + $0x34] sm:$0xf]
  %v315 = vld [vmem:[%s6 + $0x38] sm:$0xf]
  %v316 = vld [vmem:[%s6 + $0x3c] sm:$0xf]
  %v333 = vunpack.c.l.b16 %v301
  %v334 = vunpack.c.l.b16 %v302
  %v335 = vunpack.c.l.b16 %v303
  %v336 = vunpack.c.l.b16 %v304
  %v337 = vunpack.c.l.b16 %v305
  %v338 = vunpack.c.l.b16 %v306
  %v339 = vunpack.c.l.b16 %v307
  %v340 = vunpack.c.l.b16 %v308
  %v341 = vunpack.c.l.b16 %v309
  %v342 = vunpack.c.l.b16 %v310
  %v343 = vunpack.c.l.b16 %v311
  %v344 = vunpack.c.l.b16 %v312
  %v345 = vunpack.c.l.b16 %v313
  %v346 = vunpack.c.l.b16 %v314
  %v347 = vunpack.c.l.b16 %v315
  %v348 = vunpack.c.l.b16 %v316
  %v349 = vpack.c.b16 %v334, %v333
  %v350 = vpack.c.b16 %v336, %v335
  %v351 = vpack.c.b16 %v338, %v337
  %v352 = vpack.c.b16 %v340, %v339
  %v353 = vpack.c.b16 %v342, %v341
  %v354 = vpack.c.b16 %v344, %v343
  %v355 = vpack.c.b16 %v346, %v345
  %v356 = vpack.c.b16 %v348, %v347
  %365 = vmatprep.subr.bf16.mxu0 0
  %366 = vmatpush1.bf16.msra.mxu0 %v356
  %367 = vmatprep.subr.bf16.mxu0 0
  %368 = vmatpush1.bf16.msra.mxu0 %v355
  %369 = vmatprep.subr.bf16.mxu0 0
  %370 = vmatpush1.bf16.msra.mxu0 %v354
  %371 = vmatprep.subr.bf16.mxu0 0
  %372 = vmatpush1.bf16.msra.mxu0 %v353
  %373 = vmatprep.subr.bf16.mxu0 0
  %374 = vmatpush1.bf16.msra.mxu0 %v352
  %375 = vmatprep.subr.bf16.mxu0 0
  %376 = vmatpush1.bf16.msra.mxu0 %v351
  %377 = vmatprep.subr.bf16.mxu0 0
  %378 = vmatpush1.bf16.msra.mxu0 %v350
  %379 = vmatprep.subr.bf16.mxu0 0
  %380 = vmatpush1.bf16.msra.mxu0 %v349
  %381 = vmatprep.subr.bf16.mxu0 0
  %382 = vmatpush2.bf16.msra.mxu0 0
  %383 = vmatprep.subr.bf16.mxu0 0
  %384 = vmatpush2.bf16.msra.mxu0 0
  %385 = vmatprep.subr.bf16.mxu0 0
  %386 = vmatpush2.bf16.msra.mxu0 0
  %387 = vmatprep.subr.bf16.mxu0 0
  %388 = vmatpush2.bf16.msra.mxu0 0
  %389 = vmatprep.subr.bf16.mxu0 0
  %390 = vmatpush2.bf16.msra.mxu0 0
  %391 = vmatprep.subr.bf16.mxu0 0
  %392 = vmatpush2.bf16.msra.mxu0 0
  %393 = vmatprep.subr.bf16.mxu0 0
  %394 = vmatpush2.bf16.msra.mxu0 0
  %395 = vmatprep.subr.bf16.mxu0 0
  %396 = vmatpush2.bf16.msra.mxu0 0
  %397 = vmatprep.mubr.bf16.mxu0 0
  %398 = vmatmul.mubr.bf16.gmra.mxu0 %v299
  %v399 = vpop.f32.mrf.mxu0
  %v400 = vadd.f32 0.0, %v399
  %v401 = vpop.f32.mrf.mxu0
  %v402 = vpop.f32.mrf.mxu0
  %v403 = vadd.f32 0.0, %v402
  %v404 = vpop.f32.mrf.mxu0
  %405 = vmatprep.mubr.bf16.mxu0 0
  %406 = vmatmul.mubr.bf16.gmra.mxu0 %v300
  %v407 = vpop.f32.mrf.mxu0
  %v408 = vadd.f32 0.0, %v407
  %v409 = vpop.f32.mrf.mxu0
  %v410 = vpop.f32.mrf.mxu0
  %v411 = vadd.f32 0.0, %v410
  %v412 = vpop.f32.mrf.mxu0
  %413 = vdwg.mxu0
  %v414 = vadd.f32 %v295, %v400
  %v415 = vadd.f32 %v296, %v403
  %v416 = vadd.f32 %v297, %v408
  %v417 = vadd.f32 %v298, %v411
  %418 = vst.msk [vmem:[#allocation3] sm:$0xff] %vm203, %v414
  %419 = vst.msk [vmem:[#allocation3 + $0x8] sm:$0xff] %vm203, %v415
  %420 = vst.msk [vmem:[#allocation3 + $0x10] sm:$0xff] %vm203, %v416
  %421 = vst.msk [vmem:[#allocation3 + $0x18] sm:$0xff] %vm203, %v417
  // Predicated region
  $region38: #{_lambda_.18} parent=0 // pred_check
    %p422 = pneg %p30
  $region39: #{_lambda_.18} parent=0 // pred_check_branch
    %424 = sbr.rel (%p422) target = $region41
  $region40: #{_lambda_.18} parent=0 // pred_region
    %v425 = vld [vmem:[#allocation3] sm:$0xff]
    %v426 = vld [vmem:[#allocation3 + $0x8] sm:$0xff]
    %v427 = vld [vmem:[#allocation3 + $0x10] sm:$0xff]
    %v428 = vld [vmem:[#allocation3 + $0x18] sm:$0xff]
    %v429 = vpack.c.bf16 %v426, %v425
    %v430 = vpack.c.bf16 %v428, %v427
    %v433 = vunpack.c.l.b16 %v429
    %v434 = vunpack.c.h.b16 %v429
    %v435 = vunpack.c.l.b16 %v430
    %v436 = vunpack.c.h.b16 %v430
    %v437 = vpack.c.b16 %v433, %v433
    %v438 = vpack.c.b16 %v434, %v434
    %v439 = vpack.c.b16 %v435, %v435
    %v440 = vpack.c.b16 %v436, %v436
    %vm445 = vcmask 257024
    %446 = vst.msk [vmem:[%s8] sm:$0xf] %vm445, %v437
    %447 = vst.msk [vmem:[%s8 + $0x4] sm:$0xf] %vm445, %v438
    %448 = vst.msk [vmem:[%s8 + $0x8] sm:$0xf] %vm445, %v439
    %449 = vst.msk [vmem:[%s8 + $0xc] sm:$0xf] %vm445, %v440
  $region41: #{_lambda_.18} parent=0 // pred_fallthru
    _
  // Predicated region
  $region42: #{_lambda_.18} parent=0 // pred_check
    _
  $region43: #{_lambda_.18} parent=0 // pred_check_branch
    %451 = sbr.rel (0) target = $region45
  $region44: #{_lambda_.18} parent=0 // pred_region
    _
  $region45: #{_lambda_.18} parent=0 // pred_fallthru
    _
  // Predicated region
  $region46: #{_lambda_.18} parent=0 // pred_check
    _
  $region47: #{_lambda_.18} parent=0 // pred_check_branch
    %453 = sbr.rel (0) target = $region49
  $region48: #{_lambda_.18} parent=0 // pred_region
    _
  $region49: #{_lambda_.18} parent=0 // pred_fallthru
    _

// kernel: _lambda_.17
$region0: #{_lambda_.17}
  #allocation0 [shape = 'u32[]', space=smem, size = 0x4, offset = 0x4, fixed_abs, tag = 'smem constant byte address 0x4 - core index']
  #allocation1 [shape = 'u32[144,128]{1,0:T(1,128)}', space=vmem, size = 0x12000, scoped, tag = 'internal scratch']
  %s0 = inlined_call_operand.vmem [shape: bf16[2,16,32], index: 0, kind: input, shape index: {}]
  %s1 = inlined_call_operand.vmem [shape: f32[1,32], index: 1, kind: input, shape index: {}]
  %s2 = inlined_call_operand.vmem [shape: f32[1,32], index: 2, kind: input, shape index: {}]
  %s3 = inlined_call_operand.vmem [shape: bf16[32,96], index: 3, kind: input, shape index: {}]
  %s4 = inlined_call_operand.vmem [shape: f32[1,96], index: 4, kind: input, shape index: {}]
  %s5 = inlined_call_operand.vmem [shape: bf16[32,32], index: 5, kind: input, shape index: {}]
  %s6 = inlined_call_operand.vmem [shape: f32[1,32], index: 6, kind: input, shape index: {}]
  %s7 = inlined_call_operand.vmem [shape: bf16[1,4,16,16], index: 7, kind: input, shape index: {}]
  %s8 = inlined_call_operand.vmem [shape: bf16[2,16,32], index: 8, kind: output, shape index: {}]
  %s9 = sld [smem:[#allocation0]]
  $region65: #{_lambda_.17} parent=0
    _
  %s11 = ssub.s32 1, %s9
  %s12 = scalar_select 0, %s11, %s9
  loop: start=0, step=1, limit=4
  $region2: #{_lambda_.17} parent=0 // loop_pre_header
    _
  $region3: #{_lambda_.17} parent=0 // loop_header
    %s14 = sphi 0, %s18
    %p15 = scmp.ge.s32.totalorder %s14, 4
    %s24 = sphi 0, %s26
    %s27 = sphi 0, %s24
    %s28 = sphi 0, %s27
    %s44 = sphi 0, %s28
    %s48 = sphi 0, %s48
    %s50 = sphi 0, %s48
    %s51 = sphi 0, %s50
    %s65 = sphi 0, %s51
    %s69 = sphi 0, %s69
    %s71 = sphi 0, %s69
    %s72 = sphi 0, %s71
    %s86 = sphi 0, %s72
    %s90 = sphi 0, %s90
    %s92 = sphi 0, %s90
    %s93 = sphi 0, %s92
    %s107 = sphi 0, %s93
    %s111 = sphi 0, %s111
    %s113 = sphi 0, %s111
    %s114 = sphi 0, %s113
    %s128 = sphi 0, %s114
    %s132 = sphi 0, %s132
    %s134 = sphi 0, %s132
    %s135 = sphi 0, %s134
    %s149 = sphi 0, %s135
    %s153 = sphi 0, %s153
    %s155 = sphi 0, %s153
    %s156 = sphi 0, %s155
    %s170 = sphi 0, %s156
    %s174 = sphi 0, %s174
    %s176 = sphi 0, %s174
    %s177 = sphi 0, %s176
    %s191 = sphi 0, %s177
    %s197 = sphi 0, %s199
    %s200 = sphi 0, %s197
    %s201 = sphi 0, %s200
    %s217 = sphi 0, %s201
  $region4: #{_lambda_.17} parent=0 // loop_header_branch
    %17 = sbr.rel (%p15) target = $region8
  $region5: #{_lambda_.17} parent=0 // loop_body
    %s19 = ssub.s32 %s14, 1
    %s20 = ssub.s32 %s14, 2
    %s21 = sadd.s32 %s14, 1
    %s22 = ssub.s32 %s14, %s21
    %p23 = scmp.eq.s32.totalorder %s22, 0
    %s25 = sadd.s32 %s24, 1
    %s26 = scalar_select %p23, %s24, %s25
    %p29 = pneg %p23
    %p30 = scmp.eq.s32.totalorder %s14, 1
    %p31 = por %p29, %p30
    %p32 = scmp.ne.s32.totalorder %s24, %s27
    %p33 = scmp.eq.s32.totalorder %s14, 0
    %p34 = por %p32, %p33
    %p35 = scmp.ne.s32.totalorder %s24, %s27
    %p36 = scmp.eq.s32.totalorder %s19, 1
    %p37 = por %p35, %p36
    %p38 = scmp.ne.s32.totalorder %s27, %s28
    %p39 = scmp.eq.s32.totalorder %s19, 0
    %p40 = por %p38, %p39
    %p41 = scmp.ne.s32.totalorder %s27, %s28
    %p42 = scmp.eq.s32.totalorder %s20, 1
    %p43 = por %p41, %p42
    %p45 = scmp.ne.s32.totalorder %s28, %s44
    %p46 = scmp.eq.s32.totalorder %s20, 0
    %p47 = por %p45, %p46
    %s49 = sadd.s32 %s48, 1
    %p52 = scmp.eq.s32.totalorder %s14, 1
    %p53 = scmp.ne.s32.totalorder %s48, %s50
    %p54 = scmp.eq.s32.totalorder %s14, 0
    %p55 = por %p53, %p54
    %p56 = scmp.ne.s32.totalorder %s48, %s50
    %p57 = scmp.eq.s32.totalorder %s19, 1
    %p58 = por %p56, %p57
    %p59 = scmp.ne.s32.totalorder %s50, %s51
    %p60 = scmp.eq.s32.totalorder %s19, 0
    %p61 = por %p59, %p60
    %p62 = scmp.ne.s32.totalorder %s50, %s51
    %p63 = scmp.eq.s32.totalorder %s20, 1
    %p64 = por %p62, %p63
    %p66 = scmp.ne.s32.totalorder %s51, %s65
    %p67 = scmp.eq.s32.totalorder %s20, 0
    %p68 = por %p66, %p67
    %s70 = sadd.s32 %s69, 1
    %p73 = scmp.eq.s32.totalorder %s14, 1
    %p74 = scmp.ne.s32.totalorder %s69, %s71
    %p75 = scmp.eq.s32.totalorder %s14, 0
    %p76 = por %p74, %p75
    %p77 = scmp.ne.s32.totalorder %s69, %s71
    %p78 = scmp.eq.s32.totalorder %s19, 1
    %p79 = por %p77, %p78
    %p80 = scmp.ne.s32.totalorder %s71, %s72
    %p81 = scmp.eq.s32.totalorder %s19, 0
    %p82 = por %p80, %p81
    %p83 = scmp.ne.s32.totalorder %s71, %s72
    %p84 = scmp.eq.s32.totalorder %s20, 1
    %p85 = por %p83, %p84
    %p87 = scmp.ne.s32.totalorder %s72, %s86
    %p88 = scmp.eq.s32.totalorder %s20, 0
    %p89 = por %p87, %p88
    %s91 = sadd.s32 %s90, 1
    %p94 = scmp.eq.s32.totalorder %s14, 1
    %p95 = scmp.ne.s32.totalorder %s90, %s92
    %p96 = scmp.eq.s32.totalorder %s14, 0
    %p97 = por %p95, %p96
    %p98 = scmp.ne.s32.totalorder %s90, %s92
    %p99 = scmp.eq.s32.totalorder %s19, 1
    %p100 = por %p98, %p99
    %p101 = scmp.ne.s32.totalorder %s92, %s93
    %p102 = scmp.eq.s32.totalorder %s19, 0
    %p103 = por %p101, %p102
    %p104 = scmp.ne.s32.totalorder %s92, %s93
    %p105 = scmp.eq.s32.totalorder %s20, 1
    %p106 = por %p104, %p105
    %p108 = scmp.ne.s32.totalorder %s93, %s107
    %p109 = scmp.eq.s32.totalorder %s20, 0
    %p110 = por %p108, %p109
    %s112 = sadd.s32 %s111, 1
    %p115 = scmp.eq.s32.totalorder %s14, 1
    %p116 = scmp.ne.s32.totalorder %s111, %s113
    %p117 = scmp.eq.s32.totalorder %s14, 0
    %p118 = por %p116, %p117
    %p119 = scmp.ne.s32.totalorder %s111, %s113
    %p120 = scmp.eq.s32.totalorder %s19, 1
    %p121 = por %p119, %p120
    %p122 = scmp.ne.s32.totalorder %s113, %s114
    %p123 = scmp.eq.s32.totalorder %s19, 0
    %p124 = por %p122, %p123
    %p125 = scmp.ne.s32.totalorder %s113, %s114
    %p126 = scmp.eq.s32.totalorder %s20, 1
    %p127 = por %p125, %p126
    %p129 = scmp.ne.s32.totalorder %s114, %s128
    %p130 = scmp.eq.s32.totalorder %s20, 0
    %p131 = por %p129, %p130
    %s133 = sadd.s32 %s132, 1
    %p136 = scmp.eq.s32.totalorder %s14, 1
    %p137 = scmp.ne.s32.totalorder %s132, %s134
    %p138 = scmp.eq.s32.totalorder %s14, 0
    %p139 = por %p137, %p138
    %p140 = scmp.ne.s32.totalorder %s132, %s134
    %p141 = scmp.eq.s32.totalorder %s19, 1
    %p142 = por %p140, %p141
    %p143 = scmp.ne.s32.totalorder %s134, %s135
    %p144 = scmp.eq.s32.totalorder %s19, 0
    %p145 = por %p143, %p144
    %p146 = scmp.ne.s32.totalorder %s134, %s135
    %p147 = scmp.eq.s32.totalorder %s20, 1
    %p148 = por %p146, %p147
    %p150 = scmp.ne.s32.totalorder %s135, %s149
    %p151 = scmp.eq.s32.totalorder %s20, 0
    %p152 = por %p150, %p151
    %s154 = sadd.s32 %s153, 1
    %p157 = scmp.eq.s32.totalorder %s14, 1
    %p158 = scmp.ne.s32.totalorder %s153, %s155
    %p159 = scmp.eq.s32.totalorder %s14, 0
    %p160 = por %p158, %p159
    %p161 = scmp.ne.s32.totalorder %s153, %s155
    %p162 = scmp.eq.s32.totalorder %s19, 1
    %p163 = por %p161, %p162
    %p164 = scmp.ne.s32.totalorder %s155, %s156
    %p165 = scmp.eq.s32.totalorder %s19, 0
    %p166 = por %p164, %p165
    %p167 = scmp.ne.s32.totalorder %s155, %s156
    %p168 = scmp.eq.s32.totalorder %s20, 1
    %p169 = por %p167, %p168
    %p171 = scmp.ne.s32.totalorder %s156, %s170
    %p172 = scmp.eq.s32.totalorder %s20, 0
    %p173 = por %p171, %p172
    %s175 = sadd.s32 %s174, 1
    %p178 = scmp.eq.s32.totalorder %s14, 1
    %p179 = scmp.ne.s32.totalorder %s174, %s176
    %p180 = scmp.eq.s32.totalorder %s14, 0
    %p181 = por %p179, %p180
    %p182 = scmp.ne.s32.totalorder %s174, %s176
    %p183 = scmp.eq.s32.totalorder %s19, 1
    %p184 = por %p182, %p183
    %p185 = scmp.ne.s32.totalorder %s176, %s177
    %p186 = scmp.eq.s32.totalorder %s19, 0
    %p187 = por %p185, %p186
    %p188 = scmp.ne.s32.totalorder %s176, %s177
    %p189 = scmp.eq.s32.totalorder %s20, 1
    %p190 = por %p188, %p189
    %p192 = scmp.ne.s32.totalorder %s177, %s191
    %p193 = scmp.eq.s32.totalorder %s20, 0
    %p194 = por %p192, %p193
    %s195 = ssub.s32 %s14, %s21
    %p196 = scmp.eq.s32.totalorder %s195, 0
    %s198 = sadd.s32 %s197, 1
    %s199 = scalar_select %p196, %s197, %s198
    %p202 = pneg %p196
    %p203 = scmp.eq.s32.totalorder %s14, 1
    %p204 = por %p202, %p203
    %p205 = scmp.ne.s32.totalorder %s197, %s200
    %p206 = scmp.eq.s32.totalorder %s14, 0
    %p207 = por %p205, %p206
    %p208 = scmp.ne.s32.totalorder %s197, %s200
    %p209 = scmp.eq.s32.totalorder %s19, 1
    %p210 = por %p208, %p209
    %p211 = scmp.ne.s32.totalorder %s200, %s201
    %p212 = scmp.eq.s32.totalorder %s19, 0
    %p213 = por %p211, %p212
    %p214 = scmp.ne.s32.totalorder %s200, %s201
    %p215 = scmp.eq.s32.totalorder %s20, 1
    %p216 = por %p214, %p215
    %p218 = scmp.ne.s32.totalorder %s201, %s217
    %p219 = scmp.eq.s32.totalorder %s20, 0
    %p220 = por %p218, %p219
    %p221 = scmp.le.s32.totalorder 1, %s14
    %p222 = scmp.lt.s32.totalorder %s14, 3
    %p223 = pnand %p221, %p222
    %p224 = pneg %p223
    // Predicated region
    $region9: #{_lambda_.17} parent=5 // pred_check
      _
    $region10: #{_lambda_.17} parent=5 // pred_check_branch
      %226 = sbr.rel (%p223) target = $region12
    $region11: #{_lambda_.17} parent=5 // pred_region
      %s227 = ssub.s32 %s14, 1
      // Predicated region
      $region13: #{_lambda_.17} parent=11 // pred_check
        %p228 = pneg %p61
      $region14: #{_lambda_.17} parent=11 // pred_check_branch
        %230 = sbr.rel (%p228) target = $region16
      $region15: #{_lambda_.17} parent=11 // pred_region
        _
      $region16: #{_lambda_.17} parent=11 // pred_fallthru
        _
      // Predicated region
      $region17: #{_lambda_.17} parent=11 // pred_check
        %p231 = pneg %p82
      $region18: #{_lambda_.17} parent=11 // pred_check_branch
        %233 = sbr.rel (%p231) target = $region20
      $region19: #{_lambda_.17} parent=11 // pred_region
        _
      $region20: #{_lambda_.17} parent=11 // pred_fallthru
        _
      // Predicated region
      $region21: #{_lambda_.17} parent=11 // pred_check
        %p234 = pneg %p103
      $region22: #{_lambda_.17} parent=11 // pred_check_branch
        %236 = sbr.rel (%p234) target = $region24
      $region23: #{_lambda_.17} parent=11 // pred_region
        _
      $region24: #{_lambda_.17} parent=11 // pred_fallthru
        _
      // Predicated region
      $region25: #{_lambda_.17} parent=11 // pred_check
        %p237 = pneg %p124
      $region26: #{_lambda_.17} parent=11 // pred_check_branch
        %239 = sbr.rel (%p237) target = $region28
      $region27: #{_lambda_.17} parent=11 // pred_region
        _
      $region28: #{_lambda_.17} parent=11 // pred_fallthru
        _
      // Predicated region
      $region29: #{_lambda_.17} parent=11 // pred_check
        %p240 = pneg %p145
      $region30: #{_lambda_.17} parent=11 // pred_check_branch
        %242 = sbr.rel (%p240) target = $region32
      $region31: #{_lambda_.17} parent=11 // pred_region
        _
      $region32: #{_lambda_.17} parent=11 // pred_fallthru
        _
      // Predicated region
      $region33: #{_lambda_.17} parent=11 // pred_check
        %p243 = pneg %p166
      $region34: #{_lambda_.17} parent=11 // pred_check_branch
        %245 = sbr.rel (%p243) target = $region36
      $region35: #{_lambda_.17} parent=11 // pred_region
        _
      $region36: #{_lambda_.17} parent=11 // pred_fallthru
        _
      // Predicated region
      $region37: #{_lambda_.17} parent=11 // pred_check
        %p246 = pneg %p187
      $region38: #{_lambda_.17} parent=11 // pred_check_branch
        %248 = sbr.rel (%p246) target = $region40
      $region39: #{_lambda_.17} parent=11 // pred_region
        _
      $region40: #{_lambda_.17} parent=11 // pred_fallthru
        _
    $region12: #{_lambda_.17} parent=5 // pred_fallthru
      _
    %p249 = scmp.lt.s32.totalorder %s14, 2
    // Predicated region
    $region41: #{_lambda_.17} parent=5 // pred_check
      %p250 = pneg %p249
    $region42: #{_lambda_.17} parent=5 // pred_check_branch
      %252 = sbr.rel (%p250) target = $region44
    $region43: #{_lambda_.17} parent=5 // pred_region
      // Predicated region
      $region45: #{_lambda_.17} parent=43 // pred_check
        %p253 = pneg %p34
      $region46: #{_lambda_.17} parent=43 // pred_check_branch
        %255 = sbr.rel (%p253) target = $region48
      $region47: #{_lambda_.17} parent=43 // pred_region
        %p256 = scmp.lt.s32.totalorder %s14, 1
        %s257 = scalar_select %p256, %s14, 1
        %s258 = smul.addr %s257, 2
        %s259 = smul.addr %s258, 4
        %s260 = scalar_lea.vmem %s0, %s259
      $region48: #{_lambda_.17} parent=43 // pred_fallthru
        _
    $region44: #{_lambda_.17} parent=5 // pred_fallthru
      _
    %p261 = scmp.le.s32.totalorder 1, %s14
    %p262 = scmp.lt.s32.totalorder %s14, 3
    %p263 = pnand %p261, %p262
    %p264 = pneg %p263
    // Predicated region
    $region49: #{_lambda_.17} parent=5 // pred_check
      _
    $region50: #{_lambda_.17} parent=5 // pred_check_branch
      %266 = sbr.rel (%p263) target = $region52
    $region51: #{_lambda_.17} parent=5 // pred_region
      %s267 = ssub.s32 %s14, 1
      %p268 = scmp.lt.s32.totalorder %s19, 1
      %s269 = scalar_select %p268, %s19, 1
      %s270 = smul.addr %s269, 2
      %s271 = smul.addr %s270, 4
      %s272 = scalar_lea.vmem %s0, %s271
      %p273 = pneg %p40
      %p274 = pneg %p37
      %p275 = pneg %p61
      %p276 = pneg %p58
      %p277 = pneg %p82
      %p278 = pneg %p79
      %p279 = pneg %p103
      %p280 = pneg %p100
      %p281 = pneg %p124
      %p282 = pneg %p121
      %p283 = pneg %p145
      %p284 = pneg %p142
      %p285 = pneg %p166
      %p286 = pneg %p163
      %p287 = pneg %p187
      %p288 = pneg %p184
      %p289 = pneg %p213
      %p290 = pneg %p210
      %p291 = scmp.lt.s32.totalorder %s19, 1
      %s292 = scalar_select %p291, %s19, 1
      %s293 = smul.addr %s292, 2
      %s294 = smul.addr %s293, 4
      %s295 = scalar_lea.vmem %s8, %s294
      %p296 = scmp.lt.s32.totalorder %s19, 1
      %s297 = scalar_select %p296, %s19, 1
      %s298 = smul.addr %s297, 2
      %s299 = smul.addr %s298, 4
      %s300 = scalar_lea.vmem %s0, %s299
      %p301 = scmp.lt.s32.totalorder %s19, 1
      %s302 = scalar_select %p301, %s19, 1
      %s303 = smul.addr %s302, 2
      %s304 = smul.addr %s303, 4
      %s305 = scalar_lea.vmem %s8, %s304
      %v307 = vld [vmem:[%s300] sm:$0xf]
      %v308 = vld [vmem:[%s300 + $0x4] sm:$0xf]
      %v309 = vunpack.c.l.bf16 %v307
      %v310 = vunpack.c.l.bf16 %v308
      %v311 = vld [vmem:[%s1] sm:$0x1]
      %v312 = vld [vmem:[%s2] sm:$0x1]
      %vm313 = vcmask 261120
      %v314 = vsel %vm313, %v309, 0.0
      %315 = vadd.xlane.f32.xlu0 %v314
      %v316 = vpop.xlane.xlu0 %315
      %v317 = vsel %vm313, %v310, 0.0
      %318 = vadd.xlane.f32.xlu0 %v317
      %v319 = vpop.xlane.xlu0 %318
      %v320 = vrcp.pop 32.0
      %v321 = vmul.f32 %v316, %v320
      %v322 = vmul.f32 %v319, %v320
      %v323 = vsub.f32 %v309, %v321
      %v324 = vsub.f32 %v310, %v322
      %v325 = vmul.f32 %v323, %v323
      %v326 = vmul.f32 %v324, %v324
      %v327 = vsel %vm313, %v325, 0.0
      %328 = vadd.xlane.f32.xlu0 %v327
      %v329 = vpop.xlane.xlu0 %328
      %v330 = vsel %vm313, %v326, 0.0
      %331 = vadd.xlane.f32.xlu0 %v330
      %v332 = vpop.xlane.xlu0 %331
      %v333 = vmul.f32 %v329, %v320
      %v334 = vmul.f32 %v332, %v320
      %v335 = vadd.f32 %v333, 1e-05
      %v336 = vadd.f32 %v334, 1e-05
      %v337 = vrsqrt.pop %v335
      %v338 = vrsqrt.pop %v336
      %v339 = vmul.f32 %v323, %v337
      %v340 = vmul.f32 %v324, %v338
      %v342 = vlaneseq
      %v343 = vshrl.u32 %v342, 7
      %v344 = vsub.s32 0, %v343
      %v345 = vrot.slane %v311, %v344
      %v347 = vmul.f32 %v339, %v345
      %v348 = vmul.f32 %v340, %v345
      %v350 = vlaneseq
      %v351 = vshrl.u32 %v350, 7
      %v352 = vsub.s32 0, %v351
      %v353 = vrot.slane %v312, %v352
      %v355 = vadd.f32 %v347, %v353
      %v356 = vadd.f32 %v348, %v353
      %v357 = vpack.c.bf16 %v356, %v355
      %v358 = vld [vmem:[%s3] sm:$0xf]
      %v359 = vld [vmem:[%s3 + $0x4] sm:$0xf]
      %v360 = vld [vmem:[%s3 + $0x8] sm:$0xf]
      %v361 = vld [vmem:[%s3 + $0xc] sm:$0xf]
      %v362 = vld [vmem:[%s4] sm:$0x1]
      %v364 = vlaneseq
      %v365 = vshrl.u32 %v364, 7
      %v366 = vsub.s32 0, %v365
      %v367 = vrot.slane %v362, %v366
      %v373 = vunpack.c.l.b16 %v358
      %v374 = vunpack.c.l.b16 %v359
      %v375 = vunpack.c.l.b16 %v360
      %v376 = vunpack.c.l.b16 %v361
      %v377 = vpack.c.b16 %v374, %v373
      %v378 = vpack.c.b16 %v376, %v375
      %v382 = vsel %vm313, %v357, 0
      %384 = vmatprep.subr.bf16.mxu0 0
      %385 = vmatpush1.bf16.msra.mxu0 0
      %386 = vmatprep.subr.bf16.mxu0 0
      %387 = vmatpush1.bf16.msra.mxu0 0
      %388 = vmatprep.subr.bf16.mxu0 0
      %389 = vmatpush1.bf16.msra.mxu0 0
      %390 = vmatprep.subr.bf16.mxu0 0
      %391 = vmatpush1.bf16.msra.mxu0 0
      %392 = vmatprep.subr.bf16.mxu0 0
      %393 = vmatpush1.bf16.msra.mxu0 0
      %394 = vmatprep.subr.bf16.mxu0 0
      %395 = vmatpush1.bf16.msra.mxu0 0
      %396 = vmatprep.subr.bf16.mxu0 0
      %397 = vmatpush1.bf16.msra.mxu0 %v378
      %398 = vmatprep.subr.bf16.mxu0 0
      %399 = vmatpush1.bf16.msra.mxu0 %v377
      %400 = vmatprep.subr.bf16.mxu0 0
      %401 = vmatpush2.bf16.msra.mxu0 0
      %402 = vmatprep.subr.bf16.mxu0 0
      %403 = vmatpush2.bf16.msra.mxu0 0
      %404 = vmatprep.subr.bf16.mxu0 0
      %405 = vmatpush2.bf16.msra.mxu0 0
      %406 = vmatprep.subr.bf16.mxu0 0
      %407 = vmatpush2.bf16.msra.mxu0 0
      %408 = vmatprep.subr.bf16.mxu0 0
      %409 = vmatpush2.bf16.msra.mxu0 0
      %410 = vmatprep.subr.bf16.mxu0 0
      %411 = vmatpush2.bf16.msra.mxu0 0
      %412 = vmatprep.subr.bf16.mxu0 0
      %413 = vmatpush2.bf16.msra.mxu0 0
      %414 = vmatprep.subr.bf16.mxu0 0
      %415 = vmatpush2.bf16.msra.mxu0 0
      %416 = vmatprep.mubr.bf16.mxu0 0
      %417 = vmatmul.mubr.bf16.gmra.mxu0 %v382
      %v418 = vpop.f32.mrf.mxu0
      %v419 = vadd.f32 %v367, %v418
      %v420 = vpop.f32.mrf.mxu0
      %v421 = vpop.f32.mrf.mxu0
      %v422 = vadd.f32 %v367, %v421
      %v423 = vpop.f32.mrf.mxu0
      %424 = vdwg.mxu0
      %v425 = vld [vmem:[%s7] sm:$0xf]
      %v426 = vld [vmem:[%s7 + $0x4] sm:$0xf]
      %v427 = vld [vmem:[%s7 + $0x8] sm:$0xf]
      %v428 = vld [vmem:[%s7 + $0xc] sm:$0xf]
      %v429 = vld [vmem:[%s7 + $0x10] sm:$0xf]
      %v430 = vld [vmem:[%s7 + $0x14] sm:$0xf]
      %v431 = vld [vmem:[%s7 + $0x18] sm:$0xf]
      %v432 = vld [vmem:[%s7 + $0x1c] sm:$0xf]
      %v433 = vunpack.c.l.bf16 %v425
      %v434 = vunpack.c.l.bf16 %v426
      %v435 = vunpack.c.l.bf16 %v427
      %v436 = vunpack.c.l.bf16 %v428
      %v437 = vunpack.c.l.bf16 %v429
      %v438 = vunpack.c.l.bf16 %v430
      %v439 = vunpack.c.l.bf16 %v431
      %v440 = vunpack.c.l.bf16 %v432
      %v441 = vld [vmem:[%s5] sm:$0xf]
      %v442 = vld [vmem:[%s5 + $0x4] sm:$0xf]
      %v443 = vld [vmem:[%s5 + $0x8] sm:$0xf]
      %v444 = vld [vmem:[%s5 + $0xc] sm:$0xf]
      %v445 = vmul.f32 %v419, 0.35355338
      %v446 = vmul.f32 %v422, 0.35355338
      %v447 = vpack.c.bf16 %v446, %v445
      %v448 = vpack.c.bf16 %v422, %v419
      %450 = vrot.lane.b32.xlu0 %v448, 96
      %v451 = vpop.permute.xlu0 %450
      %vm452 = vcmask 64512
      %v454 = vsel %vm452, %v447, 0
      %v457 = vsel %vm452, %v451, 0
      %459 = vmatprep.subr.bf16.mxu0 0
      %460 = vmatpush1.bf16.xpose.msra.mxu0 0
      %461 = vmatprep.subr.bf16.mxu0 0
      %462 = vmatpush1.bf16.xpose.msra.mxu0 0
      %463 = vmatprep.subr.bf16.mxu0 0
      %464 = vmatpush1.bf16.xpose.msra.mxu0 0
      %465 = vmatprep.subr.bf16.mxu0 0
      %466 = vmatpush1.bf16.xpose.msra.mxu0 0
      %467 = vmatprep.subr.bf16.mxu0 0
      %468 = vmatpush1.bf16.xpose.msra.mxu0 0
      %469 = vmatprep.subr.bf16.mxu0 0
      %470 = vmatpush1.bf16.xpose.msra.mxu0 0
      %471 = vmatprep.subr.bf16.mxu0 0
      %472 = vmatpush1.bf16.xpose.msra.mxu0 0
      %473 = vmatprep.subr.bf16.mxu0 0
      %474 = vmatpush1.bf16.xpose.msra.mxu0 %v457
      %475 = vmatprep.subr.bf16.mxu0 0
      %476 = vmatpush2.bf16.xpose.msra.mxu0 0
      %477 = vmatprep.subr.bf16.mxu0 0
      %478 = vmatpush2.bf16.xpose.msra.mxu0 0
      %479 = vmatprep.subr.bf16.mxu0 0
      %480 = vmatpush2.bf16.xpose.msra.mxu0 0
      %481 = vmatprep.subr.bf16.mxu0 0
      %482 = vmatpush2.bf16.xpose.msra.mxu0 0
      %483 = vmatprep.subr.bf16.mxu0 0
      %484 = vmatpush2.bf16.xpose.msra.mxu0 0
      %485 = vmatprep.subr.bf16.mxu0 0
      %486 = vmatpush2.bf16.xpose.msra.mxu0 0
      %487 = vmatprep.subr.bf16.mxu0 0
      %488 = vmatpush2.bf16.xpose.msra.mxu0 0
      %489 = vmatprep.subr.bf16.mxu0 0
      %490 = vmatpush2.bf16.xpose.msra.mxu0 0
      %491 = vmatprep.mubr.bf16.mxu0 0
      %492 = vmatmul.mubr.bf16.gmra.mxu0 %v454
      %v493 = vpop.f32.mrf.mxu0
      %v494 = vadd.f32 %v433, %v493
      %v495 = vpop.f32.mrf.mxu0
      %v496 = vpop.f32.mrf.mxu0
      %v497 = vadd.f32 %v434, %v496
      %v498 = vpop.f32.mrf.mxu0
      %499 = vdwg.mxu0
      %vm500 = vcmask 130048
      %v501 = vsel %vm500, %v494, -inf
      %502 = vmax.xlane.f32.xlu0 %v501
      %v503 = vpop.xlane.xlu0 %502
      %v504 = vsel %vm500, %v497, -inf
      %505 = vmax.xlane.f32.xlu0 %v504
      %v506 = vpop.xlane.xlu0 %505
      %v507 = vsub.f32 %v494, %v503
      %v508 = vsub.f32 %v497, %v506
      %v509 = vmul.f32 %v507, 1.442695
      %v510 = vpow.pop %v509
      %v511 = vmul.f32 %v508, 1.442695
      %v512 = vpow.pop %v511
      %v513 = vsel %vm500, %v510, 0.0
      %514 = vadd.xlane.f32.xlu0 %v513
      %v515 = vpop.xlane.xlu0 %514
      %v516 = vsel %vm500, %v512, 0.0
      %517 = vadd.xlane.f32.xlu0 %v516
      %v518 = vpop.xlane.xlu0 %517
      %v519 = vrcp.pop %v515
      %v520 = vrcp.pop %v518
      %v521 = vmul.f32 %v510, %v519
      %v522 = vmul.f32 %v512, %v520
      %v523 = vpack.c.bf16 %v522, %v521
      %524 = vrot.lane.b32.xlu0 %v448, 64
      %v525 = vpop.permute.xlu0 %524
      %v528 = vsel %vm500, %v523, 0
      %530 = vmatprep.subr.bf16.mxu0 0
      %531 = vmatpush1.bf16.msra.mxu0 0
      %532 = vmatprep.subr.bf16.mxu0 0
      %533 = vmatpush1.bf16.msra.mxu0 0
      %534 = vmatprep.subr.bf16.mxu0 0
      %535 = vmatpush1.bf16.msra.mxu0 0
      %536 = vmatprep.subr.bf16.mxu0 0
      %537 = vmatpush1.bf16.msra.mxu0 0
      %538 = vmatprep.subr.bf16.mxu0 0
      %539 = vmatpush1.bf16.msra.mxu0 0
      %540 = vmatprep.subr.bf16.mxu0 0
      %541 = vmatpush1.bf16.msra.mxu0 0
      %542 = vmatprep.subr.bf16.mxu0 0
      %543 = vmatpush1.bf16.msra.mxu0 0
      %544 = vmatprep.subr.bf16.mxu0 0
      %545 = vmatpush1.bf16.msra.mxu0 %v525
      %546 = vmatprep.subr.bf16.mxu0 0
      %547 = vmatpush2.bf16.msra.mxu0 0
      %548 = vmatprep.subr.bf16.mxu0 0
      %549 = vmatpush2.bf16.msra.mxu0 0
      %550 = vmatprep.subr.bf16.mxu0 0
      %551 = vmatpush2.bf16.msra.mxu0 0
      %552 = vmatprep.subr.bf16.mxu0 0
      %553 = vmatpush2.bf16.msra.mxu0 0
      %554 = vmatprep.subr.bf16.mxu0 0
      %555 = vmatpush2.bf16.msra.mxu0 0
      %556 = vmatprep.subr.bf16.mxu0 0
      %557 = vmatpush2.bf16.msra.mxu0 0
      %558 = vmatprep.subr.bf16.mxu0 0
      %559 = vmatpush2.bf16.msra.mxu0 0
      %560 = vmatprep.subr.bf16.mxu0 0
      %561 = vmatpush2.bf16.msra.mxu0 0
      %562 = vmatprep.mubr.bf16.mxu0 0
      %563 = vmatmul.mubr.bf16.gmra.mxu0 %v528
      %v564 = vpop.f32.mrf.mxu0
      %v565 = vadd.f32 0.0, %v564
      %v566 = vpop.f32.mrf.mxu0
      %v567 = vpop.f32.mrf.mxu0
      %v568 = vadd.f32 0.0, %v567
      %v569 = vpop.f32.mrf.mxu0
      %570 = vdwg.mxu0
      %v571 = vpack.c.bf16 %v568, %v565
      %573 = vrot.lane.b32.xlu0 %v447, 120
      %v574 = vpop.permute.xlu0 %573
      %575 = vrot.lane.b32.xlu0 %v448, 88
      %v576 = vpop.permute.xlu0 %575
      %v578 = vsel %vm452, %v574, 0
      %v581 = vsel %vm452, %v576, 0
      %583 = vmatprep.subr.bf16.mxu0 0
      %584 = vmatpush1.bf16.xpose.msra.mxu0 0
      %585 = vmatprep.subr.bf16.mxu0 0
      %586 = vmatpush1.bf16.xpose.msra.mxu0 0
      %587 = vmatprep.subr.bf16.mxu0 0
      %588 = vmatpush1.bf16.xpose.msra.mxu0 0
      %589 = vmatprep.subr.bf16.mxu0 0
      %590 = vmatpush1.bf16.xpose.msra.mxu0 0
      %591 = vmatprep.subr.bf16.mxu0 0
      %592 = vmatpush1.bf16.xpose.msra.mxu0 0
      %593 = vmatprep.subr.bf16.mxu0 0
      %594 = vmatpush1.bf16.xpose.msra.mxu0 0
      %595 = vmatprep.subr.bf16.mxu0 0
      %596 = vmatpush1.bf16.xpose.msra.mxu0 0
      %597 = vmatprep.subr.bf16.mxu0 0
      %598 = vmatpush1.bf16.xpose.msra.mxu0 %v581
      %599 = vmatprep.subr.bf16.mxu0 0
      %600 = vmatpush2.bf16.xpose.msra.mxu0 0
      %601 = vmatprep.subr.bf16.mxu0 0
      %602 = vmatpush2.bf16.xpose.msra.mxu0 0
      %603 = vmatprep.subr.bf16.mxu0 0
      %604 = vmatpush2.bf16.xpose.msra.mxu0 0
      %605 = vmatprep.subr.bf16.mxu0 0
      %606 = vmatpush2.bf16.xpose.msra.mxu0 0
      %607 = vmatprep.subr.bf16.mxu0 0
      %608 = vmatpush2.bf16.xpose.msra.mxu0 0
      %609 = vmatprep.subr.bf16.mxu0 0
      %610 = vmatpush2.bf16.xpose.msra.mxu0 0
      %611 = vmatprep.subr.bf16.mxu0 0
      %612 = vmatpush2.bf16.xpose.msra.mxu0 0
      %613 = vmatprep.subr.bf16.mxu0 0
      %614 = vmatpush2.bf16.xpose.msra.mxu0 0
      %615 = vmatprep.mubr.bf16.mxu0 0
      %616 = vmatmul.mubr.bf16.gmra.mxu0 %v578
      %v617 = vpop.f32.mrf.mxu0
      %v618 = vadd.f32 %v435, %v617
      %v619 = vpop.f32.mrf.mxu0
      %v620 = vpop.f32.mrf.mxu0
      %v621 = vadd.f32 %v436, %v620
      %v622 = vpop.f32.mrf.mxu0
      %623 = vdwg.mxu0
      %v624 = vsel %vm500, %v618, -inf
      %625 = vmax.xlane.f32.xlu0 %v624
      %v626 = vpop.xlane.xlu0 %625
      %v627 = vsel %vm500, %v621, -inf
      %628 = vmax.xlane.f32.xlu0 %v627
      %v629 = vpop.xlane.xlu0 %628
      %v630 = vsub.f32 %v618, %v626
      %v631 = vsub.f32 %v621, %v629
      %v632 = vmul.f32 %v630, 1.442695
      %v633 = vpow.pop %v632
      %v634 = vmul.f32 %v631, 1.442695
      %v635 = vpow.pop %v634
      %v636 = vsel %vm500, %v633, 0.0
      %637 = vadd.xlane.f32.xlu0 %v636
      %v638 = vpop.xlane.xlu0 %637
      %v639 = vsel %vm500, %v635, 0.0
      %640 = vadd.xlane.f32.xlu0 %v639
      %v641 = vpop.xlane.xlu0 %640
      %v642 = vrcp.pop %v638
      %v643 = vrcp.pop %v641
      %v644 = vmul.f32 %v633, %v642
      %v645 = vmul.f32 %v635, %v643
      %v646 = vpack.c.bf16 %v645, %v644
      %647 = vrot.lane.b32.xlu0 %v448, 56
      %v648 = vpop.permute.xlu0 %647
      %v651 = vsel %vm500, %v646, 0
      %653 = vmatprep.subr.bf16.mxu0 0
      %654 = vmatpush1.bf16.msra.mxu0 0
      %655 = vmatprep.subr.bf16.mxu0 0
      %656 = vmatpush1.bf16.msra.mxu0 0
      %657 = vmatprep.subr.bf16.mxu0 0
      %658 = vmatpush1.bf16.msra.mxu0 0
      %659 = vmatprep.subr.bf16.mxu0 0
      %660 = vmatpush1.bf16.msra.mxu0 0
      %661 = vmatprep.subr.bf16.mxu0 0
      %662 = vmatpush1.bf16.msra.mxu0 0
      %663 = vmatprep.subr.bf16.mxu0 0
      %664 = vmatpush1.bf16.msra.mxu0 0
      %665 = vmatprep.subr.bf16.mxu0 0
      %666 = vmatpush1.bf16.msra.mxu0 0
      %667 = vmatprep.subr.bf16.mxu0 0
      %668 = vmatpush1.bf16.msra.mxu0 %v648
      %669 = vmatprep.subr.bf16.mxu0 0
      %670 = vmatpush2.bf16.msra.mxu0 0
      %671 = vmatprep.subr.bf16.mxu0 0
      %672 = vmatpush2.bf16.msra.mxu0 0
      %673 = vmatprep.subr.bf16.mxu0 0
      %674 = vmatpush2.bf16.msra.mxu0 0
      %675 = vmatprep.subr.bf16.mxu0 0
      %676 = vmatpush2.bf16.msra.mxu0 0
      %677 = vmatprep.subr.bf16.mxu0 0
      %678 = vmatpush2.bf16.msra.mxu0 0
      %679 = vmatprep.subr.bf16.mxu0 0
      %680 = vmatpush2.bf16.msra.mxu0 0
      %681 = vmatprep.subr.bf16.mxu0 0
      %682 = vmatpush2.bf16.msra.mxu0 0
      %683 = vmatprep.subr.bf16.mxu0 0
      %684 = vmatpush2.bf16.msra.mxu0 0
      %685 = vmatprep.mubr.bf16.mxu0 0
      %686 = vmatmul.mubr.bf16.gmra.mxu0 %v651
      %v687 = vpop.f32.mrf.mxu0
      %v688 = vadd.f32 0.0, %v687
      %v689 = vpop.f32.mrf.mxu0
      %v690 = vpop.f32.mrf.mxu0
      %v691 = vadd.f32 0.0, %v690
      %v692 = vpop.f32.mrf.mxu0
      %693 = vdwg.mxu0
      %v694 = vpack.c.bf16 %v691, %v688
      %v696 = vsel %vm452, %v694, 0
      %vm698 = vcmask 1043456
      %v700 = vsel %vm698, %v442, 0
      %702 = vmatprep.subr.bf16.mxu0 0
      %703 = vmatpush1.bf16.msra.mxu0 0
      %704 = vmatprep.subr.bf16.mxu0 0
      %705 = vmatpush1.bf16.msra.mxu0 0
      %706 = vmatprep.subr.bf16.mxu0 0
      %707 = vmatpush1.bf16.msra.mxu0 0
      %708 = vmatprep.subr.bf16.mxu0 0
      %709 = vmatpush1.bf16.msra.mxu0 0
      %710 = vmatprep.subr.bf16.mxu0 0
      %711 = vmatpush1.bf16.msra.mxu0 0
      %712 = vmatprep.subr.bf16.mxu0 0
      %713 = vmatpush1.bf16.msra.mxu0 0
      %714 = vmatprep.subr.bf16.mxu0 0
      %715 = vmatpush1.bf16.msra.mxu0 0
      %716 = vmatprep.subr.bf16.mxu0 0
      %717 = vmatpush1.bf16.msra.mxu0 %v700
      %718 = vmatprep.subr.bf16.mxu0 0
      %719 = vmatpush2.bf16.msra.mxu0 0
      %720 = vmatprep.subr.bf16.mxu0 0
      %721 = vmatpush2.bf16.msra.mxu0 0
      %722 = vmatprep.subr.bf16.mxu0 0
      %723 = vmatpush2.bf16.msra.mxu0 0
      %724 = vmatprep.subr.bf16.mxu0 0
      %725 = vmatpush2.bf16.msra.mxu0 0
      %726 = vmatprep.subr.bf16.mxu0 0
      %727 = vmatpush2.bf16.msra.mxu0 0
      %728 = vmatprep.subr.bf16.mxu0 0
      %729 = vmatpush2.bf16.msra.mxu0 0
      %730 = vmatprep.subr.bf16.mxu0 0
      %731 = vmatpush2.bf16.msra.mxu0 0
      %732 = vmatprep.subr.bf16.mxu0 0
      %733 = vmatpush2.bf16.msra.mxu0 0
      %734 = vmatprep.mubr.bf16.mxu0 0
      %735 = vmatmul.mubr.bf16.gmra.mxu0 %v696
      %v736 = vpop.f32.mrf.mxu0
      %v737 = vadd.f32 0.0, %v736
      %v738 = vpop.f32.mrf.mxu0
      %v739 = vpop.f32.mrf.mxu0
      %v740 = vadd.f32 0.0, %v739
      %v741 = vpop.f32.mrf.mxu0
      %742 = vdwg.mxu0
      %v744 = vsel %vm452, %v571, 0
      %v747 = vsel %vm698, %v441, 0
      %749 = vmatprep.subr.bf16.mxu0 0
      %750 = vmatpush1.bf16.msra.mxu0 0
      %751 = vmatprep.subr.bf16.mxu0 0
      %752 = vmatpush1.bf16.msra.mxu0 0
      %753 = vmatprep.subr.bf16.mxu0 0
      %754 = vmatpush1.bf16.msra.mxu0 0
      %755 = vmatprep.subr.bf16.mxu0 0
      %756 = vmatpush1.bf16.msra.mxu0 0
      %757 = vmatprep.subr.bf16.mxu0 0
      %758 = vmatpush1.bf16.msra.mxu0 0
      %759 = vmatprep.subr.bf16.mxu0 0
      %760 = vmatpush1.bf16.msra.mxu0 0
      %761 = vmatprep.subr.bf16.mxu0 0
      %762 = vmatpush1.bf16.msra.mxu0 0
      %763 = vmatprep.subr.bf16.mxu0 0
      %764 = vmatpush1.bf16.msra.mxu0 %v747
      %765 = vmatprep.subr.bf16.mxu0 0
      %766 = vmatpush2.bf16.msra.mxu0 0
      %767 = vmatprep.subr.bf16.mxu0 0
      %768 = vmatpush2.bf16.msra.mxu0 0
      %769 = vmatprep.subr.bf16.mxu0 0
      %770 = vmatpush2.bf16.msra.mxu0 0
      %771 = vmatprep.subr.bf16.mxu0 0
      %772 = vmatpush2.bf16.msra.mxu0 0
      %773 = vmatprep.subr.bf16.mxu0 0
      %774 = vmatpush2.bf16.msra.mxu0 0
      %775 = vmatprep.subr.bf16.mxu0 0
      %776 = vmatpush2.bf16.msra.mxu0 0
      %777 = vmatprep.subr.bf16.mxu0 0
      %778 = vmatpush2.bf16.msra.mxu0 0
      %779 = vmatprep.subr.bf16.mxu0 0
      %780 = vmatpush2.bf16.msra.mxu0 0
      %781 = vmatprep.mubr.bf16.mxu0 0
      %782 = vmatmul.mubr.bf16.gmra.mxu0 %v744
      %v783 = vpop.f32.mrf.mxu0
      %v784 = vadd.f32 %v737, %v783
      %v785 = vpop.f32.mrf.mxu0
      %v786 = vpop.f32.mrf.mxu0
      %v787 = vadd.f32 %v740, %v786
      %v788 = vpop.f32.mrf.mxu0
      %789 = vdwg.mxu0
      %790 = vrot.lane.b32.xlu0 %v447, 112
      %v791 = vpop.permute.xlu0 %790
      %792 = vrot.lane.b32.xlu0 %v448, 80
      %v793 = vpop.permute.xlu0 %792
      %v795 = vsel %vm452, %v791, 0
      %v798 = vsel %vm452, %v793, 0
      %800 = vmatprep.subr.bf16.mxu0 0
      %801 = vmatpush1.bf16.xpose.msra.mxu0 0
      %802 = vmatprep.subr.bf16.mxu0 0
      %803 = vmatpush1.bf16.xpose.msra.mxu0 0
      %804 = vmatprep.subr.bf16.mxu0 0
      %805 = vmatpush1.bf16.xpose.msra.mxu0 0
      %806 = vmatprep.subr.bf16.mxu0 0
      %807 = vmatpush1.bf16.xpose.msra.mxu0 0
      %808 = vmatprep.subr.bf16.mxu0 0
      %809 = vmatpush1.bf16.xpose.msra.mxu0 0
      %810 = vmatprep.subr.bf16.mxu0 0
      %811 = vmatpush1.bf16.xpose.msra.mxu0 0
      %812 = vmatprep.subr.bf16.mxu0 0
      %813 = vmatpush1.bf16.xpose.msra.mxu0 0
      %814 = vmatprep.subr.bf16.mxu0 0
      %815 = vmatpush1.bf16.xpose.msra.mxu0 %v798
      %816 = vmatprep.subr.bf16.mxu0 0
      %817 = vmatpush2.bf16.xpose.msra.mxu0 0
      %818 = vmatprep.subr.bf16.mxu0 0
      %819 = vmatpush2.bf16.xpose.msra.mxu0 0
      %820 = vmatprep.subr.bf16.mxu0 0
      %821 = vmatpush2.bf16.xpose.msra.mxu0 0
      %822 = vmatprep.subr.bf16.mxu0 0
      %823 = vmatpush2.bf16.xpose.msra.mxu0 0
      %824 = vmatprep.subr.bf16.mxu0 0
      %825 = vmatpush2.bf16.xpose.msra.mxu0 0
      %826 = vmatprep.subr.bf16.mxu0 0
      %827 = vmatpush2.bf16.xpose.msra.mxu0 0
      %828 = vmatprep.subr.bf16.mxu0 0
      %829 = vmatpush2.bf16.xpose.msra.mxu0 0
      %830 = vmatprep.subr.bf16.mxu0 0
      %831 = vmatpush2.bf16.xpose.msra.mxu0 0
      %832 = vmatprep.mubr.bf16.mxu0 0
      %833 = vmatmul.mubr.bf16.gmra.mxu0 %v795
      %v834 = vpop.f32.mrf.mxu0
      %v835 = vadd.f32 %v437, %v834
      %v836 = vpop.f32.mrf.mxu0
      %v837 = vpop.f32.mrf.mxu0
      %v838 = vadd.f32 %v438, %v837
      %v839 = vpop.f32.mrf.mxu0
      %840 = vdwg.mxu0
      %v841 = vsel %vm500, %v835, -inf
      %842 = vmax.xlane.f32.xlu0 %v841
      %v843 = vpop.xlane.xlu0 %842
      %v844 = vsel %vm500, %v838, -inf
      %845 = vmax.xlane.f32.xlu0 %v844
      %v846 = vpop.xlane.xlu0 %845
      %v847 = vsub.f32 %v835, %v843
      %v848 = vsub.f32 %v838, %v846
      %v849 = vmul.f32 %v847, 1.442695
      %v850 = vpow.pop %v849
      %v851 = vmul.f32 %v848, 1.442695
      %v852 = vpow.pop %v851
      %v853 = vsel %vm500, %v850, 0.0
      %854 = vadd.xlane.f32.xlu0 %v853
      %v855 = vpop.xlane.xlu0 %854
      %v856 = vsel %vm500, %v852, 0.0
      %857 = vadd.xlane.f32.xlu0 %v856
      %v858 = vpop.xlane.xlu0 %857
      %v859 = vrcp.pop %v855
      %v860 = vrcp.pop %v858
      %v861 = vmul.f32 %v850, %v859
      %v862 = vmul.f32 %v852, %v860
      %v863 = vpack.c.bf16 %v862, %v861
      %864 = vrot.lane.b32.xlu0 %v448, 48
      %v865 = vpop.permute.xlu0 %864
      %v868 = vsel %vm500, %v863, 0
      %870 = vmatprep.subr.bf16.mxu0 0
      %871 = vmatpush1.bf16.msra.mxu0 0
      %872 = vmatprep.subr.bf16.mxu0 0
      %873 = vmatpush1.bf16.msra.mxu0 0
      %874 = vmatprep.subr.bf16.mxu0 0
      %875 = vmatpush1.bf16.msra.mxu0 0
      %876 = vmatprep.subr.bf16.mxu0 0
      %877 = vmatpush1.bf16.msra.mxu0 0
      %878 = vmatprep.subr.bf16.mxu0 0
      %879 = vmatpush1.bf16.msra.mxu0 0
      %880 = vmatprep.subr.bf16.mxu0 0
      %881 = vmatpush1.bf16.msra.mxu0 0
      %882 = vmatprep.subr.bf16.mxu0 0
      %883 = vmatpush1.bf16.msra.mxu0 0
      %884 = vmatprep.subr.bf16.mxu0 0
      %885 = vmatpush1.bf16.msra.mxu0 %v865
      %886 = vmatprep.subr.bf16.mxu0 0
      %887 = vmatpush2.bf16.msra.mxu0 0
      %888 = vmatprep.subr.bf16.mxu0 0
      %889 = vmatpush2.bf16.msra.mxu0 0
      %890 = vmatprep.subr.bf16.mxu0 0
      %891 = vmatpush2.bf16.msra.mxu0 0
      %892 = vmatprep.subr.bf16.mxu0 0
      %893 = vmatpush2.bf16.msra.mxu0 0
      %894 = vmatprep.subr.bf16.mxu0 0
      %895 = vmatpush2.bf16.msra.mxu0 0
      %896 = vmatprep.subr.bf16.mxu0 0
      %897 = vmatpush2.bf16.msra.mxu0 0
      %898 = vmatprep.subr.bf16.mxu0 0
      %899 = vmatpush2.bf16.msra.mxu0 0
      %900 = vmatprep.subr.bf16.mxu0 0
      %901 = vmatpush2.bf16.msra.mxu0 0
      %902 = vmatprep.mubr.bf16.mxu0 0
      %903 = vmatmul.mubr.bf16.gmra.mxu0 %v868
      %v904 = vpop.f32.mrf.mxu0
      %v905 = vadd.f32 0.0, %v904
      %v906 = vpop.f32.mrf.mxu0
      %v907 = vpop.f32.mrf.mxu0
      %v908 = vadd.f32 0.0, %v907
      %v909 = vpop.f32.mrf.mxu0
      %910 = vdwg.mxu0
      %v911 = vpack.c.bf16 %v908, %v905
      %v913 = vsel %vm452, %v911, 0
      %v916 = vsel %vm698, %v443, 0
      %918 = vmatprep.subr.bf16.mxu0 0
      %919 = vmatpush1.bf16.msra.mxu0 0
      %920 = vmatprep.subr.bf16.mxu0 0
      %921 = vmatpush1.bf16.msra.mxu0 0
      %922 = vmatprep.subr.bf16.mxu0 0
      %923 = vmatpush1.bf16.msra.mxu0 0
      %924 = vmatprep.subr.bf16.mxu0 0
      %925 = vmatpush1.bf16.msra.mxu0 0
      %926 = vmatprep.subr.bf16.mxu0 0
      %927 = vmatpush1.bf16.msra.mxu0 0
      %928 = vmatprep.subr.bf16.mxu0 0
      %929 = vmatpush1.bf16.msra.mxu0 0
      %930 = vmatprep.subr.bf16.mxu0 0
      %931 = vmatpush1.bf16.msra.mxu0 0
      %932 = vmatprep.subr.bf16.mxu0 0
      %933 = vmatpush1.bf16.msra.mxu0 %v916
      %934 = vmatprep.subr.bf16.mxu0 0
      %935 = vmatpush2.bf16.msra.mxu0 0
      %936 = vmatprep.subr.bf16.mxu0 0
      %937 = vmatpush2.bf16.msra.mxu0 0
      %938 = vmatprep.subr.bf16.mxu0 0
      %939 = vmatpush2.bf16.msra.mxu0 0
      %940 = vmatprep.subr.bf16.mxu0 0
      %941 = vmatpush2.bf16.msra.mxu0 0
      %942 = vmatprep.subr.bf16.mxu0 0
      %943 = vmatpush2.bf16.msra.mxu0 0
      %944 = vmatprep.subr.bf16.mxu0 0
      %945 = vmatpush2.bf16.msra.mxu0 0
      %946 = vmatprep.subr.bf16.mxu0 0
      %947 = vmatpush2.bf16.msra.mxu0 0
      %948 = vmatprep.subr.bf16.mxu0 0
      %949 = vmatpush2.bf16.msra.mxu0 0
      %950 = vmatprep.mubr.bf16.mxu0 0
      %951 = vmatmul.mubr.bf16.gmra.mxu0 %v913
      %v952 = vpop.f32.mrf.mxu0
      %v953 = vadd.f32 0.0, %v952
      %v954 = vpop.f32.mrf.mxu0
      %v955 = vpop.f32.mrf.mxu0
      %v956 = vadd.f32 0.0, %v955
      %v957 = vpop.f32.mrf.mxu0
      %958 = vdwg.mxu0
      %v959 = vadd.f32 %v784, %v953
      %v960 = vadd.f32 %v787, %v956
      %961 = vrot.lane.b32.xlu0 %v447, 104
      %v962 = vpop.permute.xlu0 %961
      %963 = vrot.lane.b32.xlu0 %v448, 72
      %v964 = vpop.permute.xlu0 %963
      %v966 = vsel %vm452, %v962, 0
      %v969 = vsel %vm452, %v964, 0
      %971 = vmatprep.subr.bf16.mxu0 0
      %972 = vmatpush1.bf16.xpose.msra.mxu0 0
      %973 = vmatprep.subr.bf16.mxu0 0
      %974 = vmatpush1.bf16.xpose.msra.mxu0 0
      %975 = vmatprep.subr.bf16.mxu0 0
      %976 = vmatpush1.bf16.xpose.msra.mxu0 0
      %977 = vmatprep.subr.bf16.mxu0 0
      %978 = vmatpush1.bf16.xpose.msra.mxu0 0
      %979 = vmatprep.subr.bf16.mxu0 0
      %980 = vmatpush1.bf16.xpose.msra.mxu0 0
      %981 = vmatprep.subr.bf16.mxu0 0
      %982 = vmatpush1.bf16.xpose.msra.mxu0 0
      %983 = vmatprep.subr.bf16.mxu0 0
      %984 = vmatpush1.bf16.xpose.msra.mxu0 0
      %985 = vmatprep.subr.bf16.mxu0 0
      %986 = vmatpush1.bf16.xpose.msra.mxu0 %v969
      %987 = vmatprep.subr.bf16.mxu0 0
      %988 = vmatpush2.bf16.xpose.msra.mxu0 0
      %989 = vmatprep.subr.bf16.mxu0 0
      %990 = vmatpush2.bf16.xpose.msra.mxu0 0
      %991 = vmatprep.subr.bf16.mxu0 0
      %992 = vmatpush2.bf16.xpose.msra.mxu0 0
      %993 = vmatprep.subr.bf16.mxu0 0
      %994 = vmatpush2.bf16.xpose.msra.mxu0 0
      %995 = vmatprep.subr.bf16.mxu0 0
      %996 = vmatpush2.bf16.xpose.msra.mxu0 0
      %997 = vmatprep.subr.bf16.mxu0 0
      %998 = vmatpush2.bf16.xpose.msra.mxu0 0
      %999 = vmatprep.subr.bf16.mxu0 0
      %1000 = vmatpush2.bf16.xpose.msra.mxu0 0
      %1001 = vmatprep.subr.bf16.mxu0 0
      %1002 = vmatpush2.bf16.xpose.msra.mxu0 0
      %1003 = vmatprep.mubr.bf16.mxu0 0
      %1004 = vmatmul.mubr.bf16.gmra.mxu0 %v966
      %v1005 = vpop.f32.mrf.mxu0
      %v1006 = vadd.f32 %v439, %v1005
      %v1007 = vpop.f32.mrf.mxu0
      %v1008 = vpop.f32.mrf.mxu0
      %v1009 = vadd.f32 %v440, %v1008
      %v1010 = vpop.f32.mrf.mxu0
      %1011 = vdwg.mxu0
      %v1012 = vsel %vm500, %v1006, -inf
      %1013 = vmax.xlane.f32.xlu0 %v1012
      %v1014 = vpop.xlane.xlu0 %1013
      %v1015 = vsel %vm500, %v1009, -inf
      %1016 = vmax.xlane.f32.xlu0 %v1015
      %v1017 = vpop.xlane.xlu0 %1016
      %v1018 = vsub.f32 %v1006, %v1014
      %v1019 = vsub.f32 %v1009, %v1017
      %v1020 = vmul.f32 %v1018, 1.442695
      %v1021 = vpow.pop %v1020
      %v1022 = vmul.f32 %v1019, 1.442695
      %v1023 = vpow.pop %v1022
      %v1024 = vsel %vm500, %v1021, 0.0
      %1025 = vadd.xlane.f32.xlu0 %v1024
      %v1026 = vpop.xlane.xlu0 %1025
      %v1027 = vsel %vm500, %v1023, 0.0
      %1028 = vadd.xlane.f32.xlu0 %v1027
      %v1029 = vpop.xlane.xlu0 %1028
      %v1030 = vrcp.pop %v1026
      %v1031 = vrcp.pop %v1029
      %v1032 = vmul.f32 %v1021, %v1030
      %v1033 = vmul.f32 %v1023, %v1031
      %v1034 = vpack.c.bf16 %v1033, %v1032
      %1035 = vrot.lane.b32.xlu0 %v448, 40
      %v1036 = vpop.permute.xlu0 %1035
      %v1039 = vsel %vm500, %v1034, 0
      %1041 = vmatprep.subr.bf16.mxu0 0
      %1042 = vmatpush1.bf16.msra.mxu0 0
      %1043 = vmatprep.subr.bf16.mxu0 0
      %1044 = vmatpush1.bf16.msra.mxu0 0
      %1045 = vmatprep.subr.bf16.mxu0 0
      %1046 = vmatpush1.bf16.msra.mxu0 0
      %1047 = vmatprep.subr.bf16.mxu0 0
      %1048 = vmatpush1.bf16.msra.mxu0 0
      %1049 = vmatprep.subr.bf16.mxu0 0
      %1050 = vmatpush1.bf16.msra.mxu0 0
      %1051 = vmatprep.subr.bf16.mxu0 0
      %1052 = vmatpush1.bf16.msra.mxu0 0
      %1053 = vmatprep.subr.bf16.mxu0 0
      %1054 = vmatpush1.bf16.msra.mxu0 0
      %1055 = vmatprep.subr.bf16.mxu0 0
      %1056 = vmatpush1.bf16.msra.mxu0 %v1036
      %1057 = vmatprep.subr.bf16.mxu0 0
      %1058 = vmatpush2.bf16.msra.mxu0 0
      %1059 = vmatprep.subr.bf16.mxu0 0
      %1060 = vmatpush2.bf16.msra.mxu0 0
      %1061 = vmatprep.subr.bf16.mxu0 0
      %1062 = vmatpush2.bf16.msra.mxu0 0
      %1063 = vmatprep.subr.bf16.mxu0 0
      %1064 = vmatpush2.bf16.msra.mxu0 0
      %1065 = vmatprep.subr.bf16.mxu0 0
      %1066 = vmatpush2.bf16.msra.mxu0 0
      %1067 = vmatprep.subr.bf16.mxu0 0
      %1068 = vmatpush2.bf16.msra.mxu0 0
      %1069 = vmatprep.subr.bf16.mxu0 0
      %1070 = vmatpush2.bf16.msra.mxu0 0
      %1071 = vmatprep.subr.bf16.mxu0 0
      %1072 = vmatpush2.bf16.msra.mxu0 0
      %1073 = vmatprep.mubr.bf16.mxu0 0
      %1074 = vmatmul.mubr.bf16.gmra.mxu0 %v1039
      %v1075 = vpop.f32.mrf.mxu0
      %v1076 = vadd.f32 0.0, %v1075
      %v1077 = vpop.f32.mrf.mxu0
      %v1078 = vpop.f32.mrf.mxu0
      %v1079 = vadd.f32 0.0, %v1078
      %v1080 = vpop.f32.mrf.mxu0
      %1081 = vdwg.mxu0
      %v1082 = vpack.c.bf16 %v1079, %v1076
      %v1084 = vsel %vm452, %v1082, 0
      %v1087 = vsel %vm698, %v444, 0
      %1089 = vmatprep.subr.bf16.mxu0 0
      %1090 = vmatpush1.bf16.msra.mxu0 0
      %1091 = vmatprep.subr.bf16.mxu0 0
      %1092 = vmatpush1.bf16.msra.mxu0 0
      %1093 = vmatprep.subr.bf16.mxu0 0
      %1094 = vmatpush1.bf16.msra.mxu0 0
      %1095 = vmatprep.subr.bf16.mxu0 0
      %1096 = vmatpush1.bf16.msra.mxu0 0
      %1097 = vmatprep.subr.bf16.mxu0 0
      %1098 = vmatpush1.bf16.msra.mxu0 0
      %1099 = vmatprep.subr.bf16.mxu0 0
      %1100 = vmatpush1.bf16.msra.mxu0 0
      %1101 = vmatprep.subr.bf16.mxu0 0
      %1102 = vmatpush1.bf16.msra.mxu0 0
      %1103 = vmatprep.subr.bf16.mxu0 0
      %1104 = vmatpush1.bf16.msra.mxu0 %v1087
      %1105 = vmatprep.subr.bf16.mxu0 0
      %1106 = vmatpush2.bf16.msra.mxu0 0
      %1107 = vmatprep.subr.bf16.mxu0 0
      %1108 = vmatpush2.bf16.msra.mxu0 0
      %1109 = vmatprep.subr.bf16.mxu0 0
      %1110 = vmatpush2.bf16.msra.mxu0 0
      %1111 = vmatprep.subr.bf16.mxu0 0
      %1112 = vmatpush2.bf16.msra.mxu0 0
      %1113 = vmatprep.subr.bf16.mxu0 0
      %1114 = vmatpush2.bf16.msra.mxu0 0
      %1115 = vmatprep.subr.bf16.mxu0 0
      %1116 = vmatpush2.bf16.msra.mxu0 0
      %1117 = vmatprep.subr.bf16.mxu0 0
      %1118 = vmatpush2.bf16.msra.mxu0 0
      %1119 = vmatprep.subr.bf16.mxu0 0
      %1120 = vmatpush2.bf16.msra.mxu0 0
      %1121 = vmatprep.mubr.bf16.mxu0 0
      %1122 = vmatmul.mubr.bf16.gmra.mxu0 %v1084
      %v1123 = vpop.f32.mrf.mxu0
      %v1124 = vadd.f32 0.0, %v1123
      %v1125 = vpop.f32.mrf.mxu0
      %v1126 = vpop.f32.mrf.mxu0
      %v1127 = vadd.f32 0.0, %v1126
      %v1128 = vpop.f32.mrf.mxu0
      %1129 = vdwg.mxu0
      %v1130 = vadd.f32 %v959, %v1124
      %v1131 = vadd.f32 %v960, %v1127
      %v1132 = vld [vmem:[%s6] sm:$0x1]
      %v1134 = vlaneseq
      %v1135 = vshrl.u32 %v1134, 7
      %v1136 = vsub.s32 0, %v1135
      %v1137 = vrot.slane %v1132, %v1136
      %v1139 = vadd.f32 %v1130, %v1137
      %v1140 = vadd.f32 %v1131, %v1137
      %v1141 = vpack.c.bf16 %v1140, %v1139
      %v1143 = vunpack.c.l.b16 %v1141
      %v1144 = vunpack.c.h.b16 %v1141
      %v1145 = vpack.c.b16 %v1143, %v1143
      %v1146 = vpack.c.b16 %v1144, %v1144
      %vm1149 = vcmask 257024
      %1150 = vst.msk [vmem:[%s305] sm:$0xf] %vm1149, %v1145
      %1151 = vst.msk [vmem:[%s305 + $0x4] sm:$0xf] %vm1149, %v1146
      %p1152 = scmp.lt.s32.totalorder %s19, 1
      %s1153 = scalar_select %p1152, %s19, 1
      %s1154 = smul.addr %s1153, 2
      %s1155 = smul.addr %s1154, 4
      %s1156 = scalar_lea.vmem %s8, %s1155
      // Predicated region
      $region53: #{_lambda_.17} parent=51 // pred_check
        %p1157 = pneg %p210
      $region54: #{_lambda_.17} parent=51 // pred_check_branch
        %1159 = sbr.rel (%p1157) target = $region56
      $region55: #{_lambda_.17} parent=51 // pred_region
        _
      $region56: #{_lambda_.17} parent=51 // pred_fallthru
        _
    $region52: #{_lambda_.17} parent=5 // pred_fallthru
      _
    %p1160 = scmp.le.s32.totalorder 2, %s14
    // Predicated region
    $region57: #{_lambda_.17} parent=5 // pred_check
      %p1161 = pneg %p1160
    $region58: #{_lambda_.17} parent=5 // pred_check_branch
      %1163 = sbr.rel (%p1161) target = $region60
    $region59: #{_lambda_.17} parent=5 // pred_region
      %s1164 = ssub.s32 %s14, 2
      // Predicated region
      $region61: #{_lambda_.17} parent=59 // pred_check
        %p1165 = pneg %p216
      $region62: #{_lambda_.17} parent=59 // pred_check_branch
        %1167 = sbr.rel (%p1165) target = $region64
      $region63: #{_lambda_.17} parent=59 // pred_region
        %p1168 = scmp.lt.s32.totalorder %s20, 1
        %s1169 = scalar_select %p1168, %s20, 1
        %s1170 = smul.addr %s1169, 2
        %s1171 = smul.addr %s1170, 4
        %s1172 = scalar_lea.vmem %s8, %s1171
      $region64: #{_lambda_.17} parent=59 // pred_fallthru
        _
    $region60: #{_lambda_.17} parent=5 // pred_fallthru
      _
  $region6: #{_lambda_.17} parent=0 // loop_footer
    %s18 = sadd.s32 1, %s14
  $region7: #{_lambda_.17} parent=0 // loop_footer_branch
    %13 = sbr.rel target = $region3
  $region8: #{_lambda_.17} parent=0 // loop_exit
    _

</llo_original>
